<compile_context>
chip_gen: v7x
topology: tpu7x:2x2x1
jax: 0.10.0
libtpu: 0.0.40
codegen_flags: <defaults>
</compile_context>

<pallas_src>
import functools

import jax
import jax.numpy as jnp
from jax.experimental import pallas as pl
from jax.experimental.pallas import tpu as pltpu

KSIZE = 8
HIDDEN = 64
BOTTLENECK = 16
FINAL_CH = 4
DILATIONS = [2 ** i for i in range(1, 7)]   # [2, 4, 8, 16, 32, 64]
N_BLOCKS = 1 + len(DILATIONS)               # 7
CAT_CH = BOTTLENECK * N_BLOCKS              # 112


# ----------------------------------------------------------------------------
# Fused Pallas kernel (one batch element per grid step)
# ----------------------------------------------------------------------------
def _encoder_kernel(x_ref, w1i_ref, w1r_ref, b1_ref, w2_ref, b2_ref, wf_ref, bf_ref,
                    o_ref, slab_ref, prev_ref, y_ref, *, L, cin0, pool):
    """Fused TCNAE encoder forward for one batch element.

    x_ref   : (1, L, cin0)                    channel-last input
    w1i_ref : (8*cin0, 64)                    packed init dilated-conv weight
    w1r_ref : (6, 8*16, 64)                   packed dilated-conv weights (d=2..64)
    b1_ref  : (7, 1, 64)                      dilated-conv biases
    w2_ref  : (7, 64, 16)  b2_ref: (7, 1, 16) pointwise conv weights / biases
    wf_ref  : (112, 4)     bf_ref: (1, 4)     final 1x1 conv
    o_ref   : (1, L//pool, 4)                 pooled output
    slab_ref: VMEM (L, 8*max(cin0,16)) f32    packed-tap activation slab
    prev_ref: VMEM (L, 16) f32                previous block's 16-ch output
    y_ref   : VMEM (L, 4)  f32                staging buffer for strided pooling
    """
    L_out = L // pool
    dilations = [1] + DILATIONS

    # Incremental final 1x1 conv accumulator (kept as a value; it is only 4 lanes wide).
    y_acc = jnp.zeros((L, FINAL_CH), jnp.float32)

    for blk, d in enumerate(dilations):
        cin = cin0 if blk == 0 else BOTTLENECK
        kw = KSIZE * cin
        total = d * (KSIZE - 1)
        left = total // 2                       # PyTorch 'same' convention

        # Pack the 8 shifted taps side-by-side along lanes -> one K = 8*cin matmul.
        # Zero ONLY the boundary rows a tap never writes (they act as 'same' padding);
        # the in-range rows [a, b) are fully overwritten below.
        for j in range(KSIZE):
            off = j * d - left                  # input row feeding output row t is t+off
            a = max(0, -off)                    # first output row with a valid input
            b = min(L, L - off)                 # one past the last valid output row
            c0, c1 = j * cin, (j + 1) * cin
            if b <= a:                          # this tap only ever sees padding
                slab_ref[:, c0:c1] = jnp.zeros((L, cin), jnp.float32)
                continue
            if a > 0:
                slab_ref[0:a, c0:c1] = jnp.zeros((a, cin), jnp.float32)
            if b < L:
                slab_ref[b:L, c0:c1] = jnp.zeros((L - b, cin), jnp.float32)
            if blk == 0:
                slab_ref[a:b, c0:c1] = x_ref[0, a + off:b + off, :]
            else:
                slab_ref[a:b, c0:c1] = prev_ref[a + off:b + off, :]

        w1 = w1i_ref[...] if blk == 0 else w1r_ref[blk - 1]
        h = jnp.dot(slab_ref[:, :kw], w1, preferred_element_type=jnp.float32) + b1_ref[blk]
        h = jnp.maximum(h, 0.0)                 # ReLU
        out = jnp.dot(h, w2_ref[blk], preferred_element_type=jnp.float32) + b2_ref[blk]

        if blk < N_BLOCKS - 1:                  # last block's output only feeds the 1x1 conv
            prev_ref[...] = out

        # Incremental final 1x1 conv (exact: the 1x1 conv is linear in its input slice).
        y_acc = y_acc + jnp.dot(
            out, wf_ref[blk * BOTTLENECK:(blk + 1) * BOTTLENECK, :],
            preferred_element_type=jnp.float32)

    # AvgPool1d on the narrow 4-channel accumulator (strided sublane reads, floor length).
    if pool == 1:
        pooled = y_acc
    else:
        y_ref[...] = y_acc
        pooled = y_ref[pl.ds(0, L_out, stride=pool), :]
        for p in range(1, pool):
            pooled = pooled + y_ref[pl.ds(p, L_out, stride=pool), :]
        pooled = pooled * (1.0 / pool)

    o_ref[0] = pooled + bf_ref[...]             # bias is row-constant, add after pooling


# ----------------------------------------------------------------------------
# Wrapper: weight packing + pallas_call plumbing (NCL in, NCL out)
# ----------------------------------------------------------------------------
def _estimate_vmem_bytes(L, L_out, cin0, slab_w):
    scratch = 4 * L * (slab_w + BOTTLENECK + FINAL_CH)
    io = 4 * 2 * (L * cin0 + L_out * FINAL_CH)
    weights = 4 * 2 * (KSIZE * cin0 * HIDDEN + len(DILATIONS) * KSIZE * BOTTLENECK * HIDDEN
                       + N_BLOCKS * (HIDDEN + HIDDEN * BOTTLENECK + BOTTLENECK)
                       + CAT_CH * FINAL_CH + FINAL_CH)
    temps = 4 * L * (2 * HIDDEN + 2 * BOTTLENECK + 2 * FINAL_CH)
    return scratch + io + weights + temps


def tcnae_encoder_forward(x_ncl, params, pool):
    """x_ncl: (B, C_in, L) float32 (PyTorch NCL). Returns (B, 4, L // pool)."""
    B, cin0, L = x_ncl.shape
    L_out = L // pool
    slab_w = KSIZE * max(cin0, BOTTLENECK)

    x = jnp.transpose(x_ncl, (0, 2, 1))          # -> (B, L, C) channel-last
    blocks = params["blocks"]
    # Pack taps into the contraction dim:  w1p[j*cin + c, o] == torch_W1[o, c, j].
    # NOTE: real PyTorch Conv1d weights are (Cout, Cin, K); transpose(2, 1, 0) them to
    # (K, Cin, Cout) before this reshape (init_params below already produces that layout).
    w1_init = blocks[0]["w1"].reshape(KSIZE * cin0, HIDDEN)
    w1_rest = jnp.stack([blk["w1"].reshape(KSIZE * BOTTLENECK, HIDDEN) for blk in blocks[1:]])
    b1 = jnp.stack([blk["b1"].reshape(1, HIDDEN) for blk in blocks])
    w2 = jnp.stack([blk["w2"] for blk in blocks])
    b2 = jnp.stack([blk["b2"].reshape(1, BOTTLENECK) for blk in blocks])
    wf = params["final_w"]
    bf = params["final_b"].reshape(1, FINAL_CH)

    est = _estimate_vmem_bytes(L, L_out, cin0, slab_w)
    vmem_limit = None
    if est > (24 << 20):
        vmem_limit = int(min(est + (8 << 20), 64 << 20))

    kernel = functools.partial(_encoder_kernel, L=L, cin0=cin0, pool=pool)
    y = pl.pallas_call(
        kernel,
        out_shape=jax.ShapeDtypeStruct((B, L_out, FINAL_CH), jnp.float32),
        grid=(B,),
        in_specs=[
            pl.BlockSpec((1, L, cin0), lambda b: (b, 0, 0)),
            pl.BlockSpec((KSIZE * cin0, HIDDEN), lambda b: (0, 0)),
            pl.BlockSpec((len(DILATIONS), KSIZE * BOTTLENECK, HIDDEN), lambda b: (0, 0, 0)),
            pl.BlockSpec((N_BLOCKS, 1, HIDDEN), lambda b: (0, 0, 0)),
            pl.BlockSpec((N_BLOCKS, HIDDEN, BOTTLENECK), lambda b: (0, 0, 0)),
            pl.BlockSpec((N_BLOCKS, 1, BOTTLENECK), lambda b: (0, 0, 0)),
            pl.BlockSpec((CAT_CH, FINAL_CH), lambda b: (0, 0)),
            pl.BlockSpec((1, FINAL_CH), lambda b: (0, 0)),
        ],
        out_specs=pl.BlockSpec((1, L_out, FINAL_CH), lambda b: (b, 0, 0)),
        scratch_shapes=[
            pltpu.VMEM((L, slab_w), jnp.float32),       # packed-tap slab
            pltpu.VMEM((L, BOTTLENECK), jnp.float32),   # previous block output
            pltpu.VMEM((L, FINAL_CH), jnp.float32),     # pooling staging buffer
        ],
        compiler_params=pltpu.CompilerParams(
            dimension_semantics=("parallel",),
            vmem_limit_bytes=vmem_limit,
        ),
    )(x, w1_init, w1_rest, b1, w2, b2, wf, bf)
    # TODO(synk): for very long sequences (L >~ 32K) add an L-tile grid axis with a
    # 448-row halo (max dilation 64 * (KSIZE-1)) carried from the previous tile so the
    # resident block stays bounded on v7x's 64 MiB VMEM and DMA overlaps compute.
    # TODO(synk): on v6e/v7x, stacking several batch elements along M and casting the
    # slab/weights to bf16 (f32 accumulation) would raise MXU utilization further.
    return jnp.transpose(y, (0, 2, 1))               # back to NCL (B, 4, L_out)


# ----------------------------------------------------------------------------
# Deterministic parameter init (synthetic; shapes from the module __init__)
# ----------------------------------------------------------------------------
def init_params(key, in_channels):
    params = {"blocks": []}
    for i in range(N_BLOCKS):
        cin = in_channels if i == 0 else BOTTLENECK
        key, k1, k2, k3, k4 = jax.random.split(key, 5)
        params["blocks"].append(dict(
            w1=jax.random.normal(k1, (KSIZE, cin, HIDDEN), jnp.float32) * 0.1,
            b1=jax.random.normal(k2, (HIDDEN,), jnp.float32) * 0.1,
            w2=jax.random.normal(k3, (HIDDEN, BOTTLENECK), jnp.float32) * 0.1,
            b2=jax.random.normal(k4, (BOTTLENECK,), jnp.float32) * 0.1,
        ))
    key, kf, kb = jax.random.split(key, 3)
    params["final_w"] = jax.random.normal(kf, (CAT_CH, FINAL_CH), jnp.float32) * 0.1
    params["final_b"] = jax.random.normal(kb, (FINAL_CH,), jnp.float32) * 0.1
    return params


# ----------------------------------------------------------------------------
# Pure-JAX reference (NCL, lax.conv) for correctness cross-check
# ----------------------------------------------------------------------------
def _conv1d_ref(x_ncl, w_oik, b, dilation, padding):
    y = jax.lax.conv_general_dilated(
        x_ncl, w_oik, window_strides=(1,), padding=padding,
        rhs_dilation=(dilation,), dimension_numbers=("NCH", "OIH", "NCH"))
    return y + b[None, :, None]


def ref_forward(x_ncl, params, pool):
    dils = [1] + DILATIONS
    x = x_ncl
    inters = []
    for blk, d in zip(params["blocks"], dils):
        w_oik = jnp.transpose(blk["w1"], (2, 1, 0))          # (64, Cin, 8) torch layout
        tot = d * (KSIZE - 1)
        left = tot // 2
        x = _conv1d_ref(x, w_oik, blk["b1"], d, [(left, tot - left)])
        x = jnp.maximum(x, 0.0)
        w2_oik = jnp.transpose(blk["w2"], (1, 0))[:, :, None]  # (16, 64, 1)
        x = _conv1d_ref(x, w2_oik, blk["b2"], 1, [(0, 0)])
        inters.append(x)
    cat = jnp.concatenate(inters, axis=1)
    wf_oik = jnp.transpose(params["final_w"], (1, 0))[:, :, None]  # (4, 112, 1)
    y = _conv1d_ref(cat, wf_oik, params["final_b"], 1, [(0, 0)])
    B, C, L = y.shape
    L_out = L // pool
    return y[:, :, :L_out * pool].reshape(B, C, L_out, pool).mean(-1)


if __name__ == "__main__":
    B, C_in, L = 2, 4, 128
    avgpool_size = 4

    key = jax.random.PRNGKey(0)
    kx, kp = jax.random.split(key)
    x = jax.random.normal(kx, (B, C_in, L), jnp.float32)     # PyTorch NCL input
    params = init_params(kp, C_in)

    out = jax.block_until_ready(tcnae_encoder_forward(x, params, avgpool_size))
    ref = jax.block_until_ready(ref_forward(x, params, avgpool_size))

    assert out.shape == (B, FINAL_CH, L // avgpool_size), out.shape
    max_err = float(jnp.max(jnp.abs(out - ref)))
    assert max_err < 1e-3, f"max abs error vs reference: {max_err}"
    print("KERNEL_OK")
</pallas_src>

<mosaic_0001>
module attributes {stable_mosaic.version = 11 : i64} {
  func.func @_encoder_kernel(%arg0: i32, %arg1: memref<1x128x4xf32, #tpu.memory_space<vmem>>, %arg2: memref<32x64xf32, #tpu.memory_space<vmem>>, %arg3: memref<6x128x64xf32, #tpu.memory_space<vmem>>, %arg4: memref<7x1x64xf32, #tpu.memory_space<vmem>>, %arg5: memref<7x64x16xf32, #tpu.memory_space<vmem>>, %arg6: memref<7x1x16xf32, #tpu.memory_space<vmem>>, %arg7: memref<112x4xf32, #tpu.memory_space<vmem>>, %arg8: memref<1x4xf32, #tpu.memory_space<vmem>>, %arg9: memref<1x32x4xf32, #tpu.memory_space<vmem>>, %arg10: memref<128x128xf32, #tpu.memory_space<vmem>>, %arg11: memref<128x16xf32, #tpu.memory_space<vmem>>, %arg12: memref<128x4xf32, #tpu.memory_space<vmem>>) attributes {dimension_semantics = [#tpu.dimension_semantics<parallel>], iteration_bounds = array<i64: 2>, scalar_prefetch = 0 : i64, scratch_operands = 3 : i64, tpu.core_type = #tpu.core_type<tc>, window_params = [{transform_indices = @transform_0, window_bounds = array<i64: 1, 128, 4>}, {pipeline_mode = #tpu.pipeline_mode<synchronous>, transform_indices = @transform_1, window_bounds = array<i64: 32, 64>}, {pipeline_mode = #tpu.pipeline_mode<synchronous>, transform_indices = @transform_2, window_bounds = array<i64: 6, 128, 64>}, {pipeline_mode = #tpu.pipeline_mode<synchronous>, transform_indices = @transform_3, window_bounds = array<i64: 7, 1, 64>}, {pipeline_mode = #tpu.pipeline_mode<synchronous>, transform_indices = @transform_4, window_bounds = array<i64: 7, 64, 16>}, {pipeline_mode = #tpu.pipeline_mode<synchronous>, transform_indices = @transform_5, window_bounds = array<i64: 7, 1, 16>}, {pipeline_mode = #tpu.pipeline_mode<synchronous>, transform_indices = @transform_6, window_bounds = array<i64: 112, 4>}, {pipeline_mode = #tpu.pipeline_mode<synchronous>, transform_indices = @transform_7, window_bounds = array<i64: 1, 4>}, {transform_indices = @transform_8, window_bounds = array<i64: 1, 32, 4>}]} {
    %cst = arith.constant 0.000000e+00 : f32
    %0 = vector.broadcast %cst : f32 to vector<128x4xf32>
    %cst_0 = arith.constant 0.000000e+00 : f32
    %1 = vector.broadcast %cst_0 : f32 to vector<3x4xf32>
    %c0 = arith.constant 0 : index
    %c0_1 = arith.constant 0 : index
    %2 = vector.load %arg10[%c0, %c0_1] : memref<128x128xf32, #tpu.memory_space<vmem>>, vector<3x4xf32>
    tpu.vector_store %arg10[%c0, %c0_1], %1 {strides = array<i32>} : memref<128x128xf32, #tpu.memory_space<vmem>>, vector<3x4xf32>,
    %c0_2 = arith.constant 0 : index
    %c0_3 = arith.constant 0 : index
    %c0_4 = arith.constant 0 : index
    %3 = vector.load %arg1[%c0_2, %c0_3, %c0_4] : memref<1x128x4xf32, #tpu.memory_space<vmem>>, vector<1x125x4xf32>
    %4 = vector.shape_cast %3 : vector<1x125x4xf32> to vector<125x4xf32>
    %c3 = arith.constant 3 : index
    %c0_5 = arith.constant 0 : index
    %5 = vector.load %arg10[%c3, %c0_5] : memref<128x128xf32, #tpu.memory_space<vmem>>, vector<125x4xf32>
    tpu.vector_store %arg10[%c3, %c0_5], %4 {strides = array<i32>} : memref<128x128xf32, #tpu.memory_space<vmem>>, vector<125x4xf32>,
    %cst_6 = arith.constant 0.000000e+00 : f32
    %6 = vector.broadcast %cst_6 : f32 to vector<2x4xf32>
    %c0_7 = arith.constant 0 : index
    %c4 = arith.constant 4 : index
    %7 = vector.load %arg10[%c0_7, %c4] : memref<128x128xf32, #tpu.memory_space<vmem>>, vector<2x4xf32>
    tpu.vector_store %arg10[%c0_7, %c4], %6 {strides = array<i32>} : memref<128x128xf32, #tpu.memory_space<vmem>>, vector<2x4xf32>,
    %c0_8 = arith.constant 0 : index
    %c0_9 = arith.constant 0 : index
    %c0_10 = arith.constant 0 : index
    %8 = vector.load %arg1[%c0_8, %c0_9, %c0_10] : memref<1x128x4xf32, #tpu.memory_space<vmem>>, vector<1x126x4xf32>
    %9 = vector.shape_cast %8 : vector<1x126x4xf32> to vector<126x4xf32>
    %c2 = arith.constant 2 : index
    %c4_11 = arith.constant 4 : index
    %10 = vector.load %arg10[%c2, %c4_11] : memref<128x128xf32, #tpu.memory_space<vmem>>, vector<126x4xf32>
    tpu.vector_store %arg10[%c2, %c4_11], %9 {strides = array<i32>} : memref<128x128xf32, #tpu.memory_space<vmem>>, vector<126x4xf32>,
    %cst_12 = arith.constant 0.000000e+00 : f32
    %11 = vector.broadcast %cst_12 : f32 to vector<1x4xf32>
    %c0_13 = arith.constant 0 : index
    %c8 = arith.constant 8 : index
    %12 = vector.load %arg10[%c0_13, %c8] : memref<128x128xf32, #tpu.memory_space<vmem>>, vector<1x4xf32>
    tpu.vector_store %arg10[%c0_13, %c8], %11 {strides = array<i32>} : memref<128x128xf32, #tpu.memory_space<vmem>>, vector<1x4xf32>,
    %c0_14 = arith.constant 0 : index
    %c0_15 = arith.constant 0 : index
    %c0_16 = arith.constant 0 : index
    %13 = vector.load %arg1[%c0_14, %c0_15, %c0_16] : memref<1x128x4xf32, #tpu.memory_space<vmem>>, vector<1x127x4xf32>
    %14 = vector.shape_cast %13 : vector<1x127x4xf32> to vector<127x4xf32>
    %c1 = arith.constant 1 : index
    %c8_17 = arith.constant 8 : index
    %15 = vector.load %arg10[%c1, %c8_17] : memref<128x128xf32, #tpu.memory_space<vmem>>, vector<127x4xf32>
    tpu.vector_store %arg10[%c1, %c8_17], %14 {strides = array<i32>} : memref<128x128xf32, #tpu.memory_space<vmem>>, vector<127x4xf32>,
    %c0_18 = arith.constant 0 : index
    %c0_19 = arith.constant 0 : index
    %c0_20 = arith.constant 0 : index
    %16 = vector.load %arg1[%c0_18, %c0_19, %c0_20] : memref<1x128x4xf32, #tpu.memory_space<vmem>>, vector<1x128x4xf32>
    %17 = vector.shape_cast %16 : vector<1x128x4xf32> to vector<128x4xf32>
    %c0_21 = arith.constant 0 : index
    %c12 = arith.constant 12 : index
    %18 = vector.load %arg10[%c0_21, %c12] : memref<128x128xf32, #tpu.memory_space<vmem>>, vector<128x4xf32>
    tpu.vector_store %arg10[%c0_21, %c12], %17 {strides = array<i32>} : memref<128x128xf32, #tpu.memory_space<vmem>>, vector<128x4xf32>,
    %cst_22 = arith.constant 0.000000e+00 : f32
    %19 = vector.broadcast %cst_22 : f32 to vector<1x4xf32>
    %c127 = arith.constant 127 : index
    %c16 = arith.constant 16 : index
    %20 = vector.load %arg10[%c127, %c16] : memref<128x128xf32, #tpu.memory_space<vmem>>, vector<1x4xf32>
    tpu.vector_store %arg10[%c127, %c16], %19 {strides = array<i32>} : memref<128x128xf32, #tpu.memory_space<vmem>>, vector<1x4xf32>,
    %c0_23 = arith.constant 0 : index
    %c1_24 = arith.constant 1 : index
    %c0_25 = arith.constant 0 : index
    %21 = vector.load %arg1[%c0_23, %c1_24, %c0_25] : memref<1x128x4xf32, #tpu.memory_space<vmem>>, vector<1x127x4xf32>
    %22 = vector.shape_cast %21 : vector<1x127x4xf32> to vector<127x4xf32>
    %c0_26 = arith.constant 0 : index
    %c16_27 = arith.constant 16 : index
    %23 = vector.load %arg10[%c0_26, %c16_27] : memref<128x128xf32, #tpu.memory_space<vmem>>, vector<127x4xf32>
    tpu.vector_store %arg10[%c0_26, %c16_27], %22 {strides = array<i32>} : memref<128x128xf32, #tpu.memory_space<vmem>>, vector<127x4xf32>,
    %cst_28 = arith.constant 0.000000e+00 : f32
    %24 = vector.broadcast %cst_28 : f32 to vector<2x4xf32>
    %c126 = arith.constant 126 : index
    %c20 = arith.constant 20 : index
    %25 = vector.load %arg10[%c126, %c20] : memref<128x128xf32, #tpu.memory_space<vmem>>, vector<2x4xf32>
    tpu.vector_store %arg10[%c126, %c20], %24 {strides = array<i32>} : memref<128x128xf32, #tpu.memory_space<vmem>>, vector<2x4xf32>,
    %c0_29 = arith.constant 0 : index
    %c2_30 = arith.constant 2 : index
    %c0_31 = arith.constant 0 : index
    %26 = vector.load %arg1[%c0_29, %c2_30, %c0_31] : memref<1x128x4xf32, #tpu.memory_space<vmem>>, vector<1x126x4xf32>
    %27 = vector.shape_cast %26 : vector<1x126x4xf32> to vector<126x4xf32>
    %c0_32 = arith.constant 0 : index
    %c20_33 = arith.constant 20 : index
    %28 = vector.load %arg10[%c0_32, %c20_33] : memref<128x128xf32, #tpu.memory_space<vmem>>, vector<126x4xf32>
    tpu.vector_store %arg10[%c0_32, %c20_33], %27 {strides = array<i32>} : memref<128x128xf32, #tpu.memory_space<vmem>>, vector<126x4xf32>,
    %cst_34 = arith.constant 0.000000e+00 : f32
    %29 = vector.broadcast %cst_34 : f32 to vector<3x4xf32>
    %c125 = arith.constant 125 : index
    %c24 = arith.constant 24 : index
    %30 = vector.load %arg10[%c125, %c24] : memref<128x128xf32, #tpu.memory_space<vmem>>, vector<3x4xf32>
    tpu.vector_store %arg10[%c125, %c24], %29 {strides = array<i32>} : memref<128x128xf32, #tpu.memory_space<vmem>>, vector<3x4xf32>,
    %c0_35 = arith.constant 0 : index
    %c3_36 = arith.constant 3 : index
    %c0_37 = arith.constant 0 : index
    %31 = vector.load %arg1[%c0_35, %c3_36, %c0_37] : memref<1x128x4xf32, #tpu.memory_space<vmem>>, vector<1x125x4xf32>
    %32 = vector.shape_cast %31 : vector<1x125x4xf32> to vector<125x4xf32>
    %c0_38 = arith.constant 0 : index
    %c24_39 = arith.constant 24 : index
    %33 = vector.load %arg10[%c0_38, %c24_39] : memref<128x128xf32, #tpu.memory_space<vmem>>, vector<125x4xf32>
    tpu.vector_store %arg10[%c0_38, %c24_39], %32 {strides = array<i32>} : memref<128x128xf32, #tpu.memory_space<vmem>>, vector<125x4xf32>,
    %cst_40 = arith.constant 0.000000e+00 : f32
    %34 = vector.broadcast %cst_40 : f32 to vector<4x4xf32>
    %c124 = arith.constant 124 : index
    %c28 = arith.constant 28 : index
    %35 = vector.load %arg10[%c124, %c28] : memref<128x128xf32, #tpu.memory_space<vmem>>, vector<4x4xf32>
    tpu.vector_store %arg10[%c124, %c28], %34 {strides = array<i32>} : memref<128x128xf32, #tpu.memory_space<vmem>>, vector<4x4xf32>,
    %c0_41 = arith.constant 0 : index
    %c4_42 = arith.constant 4 : index
    %c0_43 = arith.constant 0 : index
    %36 = vector.load %arg1[%c0_41, %c4_42, %c0_43] : memref<1x128x4xf32, #tpu.memory_space<vmem>>, vector<1x124x4xf32>
    %37 = vector.shape_cast %36 : vector<1x124x4xf32> to vector<124x4xf32>
    %c0_44 = arith.constant 0 : index
    %c28_45 = arith.constant 28 : index
    %38 = vector.load %arg10[%c0_44, %c28_45] : memref<128x128xf32, #tpu.memory_space<vmem>>, vector<124x4xf32>
    tpu.vector_store %arg10[%c0_44, %c28_45], %37 {strides = array<i32>} : memref<128x128xf32, #tpu.memory_space<vmem>>, vector<124x4xf32>,
    %c0_46 = arith.constant 0 : index
    %c0_47 = arith.constant 0 : index
    %39 = vector.load %arg2[%c0_46, %c0_47] : memref<32x64xf32, #tpu.memory_space<vmem>>, vector<32x64xf32>
    %c0_48 = arith.constant 0 : index
    %c0_49 = arith.constant 0 : index
    %40 = vector.load %arg10[%c0_48, %c0_49] : memref<128x128xf32, #tpu.memory_space<vmem>>, vector<128x32xf32>
    %cst_50 = arith.constant dense<0.000000e+00> : vector<128x64xf32>
    %41 = tpu.matmul %40, %39, %cst_50 {dimension_numbers = #tpu.dot_dimension_numbers<[1], [0], [0], [1], [0, 0, 1, 1], [], []>} : vector<128x32xf32>, vector<32x64xf32>, vector<128x64xf32> -> vector<128x64xf32>
    %c0_51 = arith.constant 0 : index
    %c0_52 = arith.constant 0 : index
    %c0_53 = arith.constant 0 : index
    %42 = vector.load %arg4[%c0_51, %c0_52, %c0_53] : memref<7x1x64xf32, #tpu.memory_space<vmem>>, vector<1x1x64xf32>
    %43 = vector.shape_cast %42 : vector<1x1x64xf32> to vector<1x64xf32>
    %44 = vector.broadcast %43 : vector<1x64xf32> to vector<128x64xf32>
    %45 = arith.addf %41, %44 : vector<128x64xf32>
    %cst_54 = arith.constant 0.000000e+00 : f32
    %46 = vector.broadcast %cst_54 : f32 to vector<128x64xf32>
    %47 = arith.maximumf %45, %46 : vector<128x64xf32>
    %c0_55 = arith.constant 0 : index
    %c0_56 = arith.constant 0 : index
    %c0_57 = arith.constant 0 : index
    %48 = vector.load %arg5[%c0_55, %c0_56, %c0_57] : memref<7x64x16xf32, #tpu.memory_space<vmem>>, vector<1x64x16xf32>
    %49 = vector.shape_cast %48 : vector<1x64x16xf32> to vector<64x16xf32>
    %cst_58 = arith.constant dense<0.000000e+00> : vector<128x16xf32>
    %50 = tpu.matmul %47, %49, %cst_58 {dimension_numbers = #tpu.dot_dimension_numbers<[1], [0], [0], [1], [0, 0, 1, 1], [], []>} : vector<128x64xf32>, vector<64x16xf32>, vector<128x16xf32> -> vector<128x16xf32>
    %c0_59 = arith.constant 0 : index
    %c0_60 = arith.constant 0 : index
    %c0_61 = arith.constant 0 : index
    %51 = vector.load %arg6[%c0_59, %c0_60, %c0_61] : memref<7x1x16xf32, #tpu.memory_space<vmem>>, vector<1x1x16xf32>
    %52 = vector.shape_cast %51 : vector<1x1x16xf32> to vector<1x16xf32>
    %53 = vector.broadcast %52 : vector<1x16xf32> to vector<128x16xf32>
    %54 = arith.addf %50, %53 : vector<128x16xf32>
    %c0_62 = arith.constant 0 : index
    %c0_63 = arith.constant 0 : index
    %55 = vector.load %arg11[%c0_62, %c0_63] : memref<128x16xf32, #tpu.memory_space<vmem>>, vector<128x16xf32>
    tpu.vector_store %arg11[%c0_62, %c0_63], %54 {strides = array<i32>} : memref<128x16xf32, #tpu.memory_space<vmem>>, vector<128x16xf32>,
    %c0_64 = arith.constant 0 : index
    %c0_65 = arith.constant 0 : index
    %56 = vector.load %arg7[%c0_64, %c0_65] : memref<112x4xf32, #tpu.memory_space<vmem>>, vector<16x4xf32>
    %cst_66 = arith.constant dense<0.000000e+00> : vector<128x4xf32>
    %57 = tpu.matmul %54, %56, %cst_66 {dimension_numbers = #tpu.dot_dimension_numbers<[1], [0], [0], [1], [0, 0, 1, 1], [], []>} : vector<128x16xf32>, vector<16x4xf32>, vector<128x4xf32> -> vector<128x4xf32>
    %58 = arith.addf %0, %57 : vector<128x4xf32>
    %cst_67 = arith.constant 0.000000e+00 : f32
    %59 = vector.broadcast %cst_67 : f32 to vector<7x16xf32>
    %c0_68 = arith.constant 0 : index
    %c0_69 = arith.constant 0 : index
    %60 = vector.load %arg10[%c0_68, %c0_69] : memref<128x128xf32, #tpu.memory_space<vmem>>, vector<7x16xf32>
    tpu.vector_store %arg10[%c0_68, %c0_69], %59 {strides = array<i32>} : memref<128x128xf32, #tpu.memory_space<vmem>>, vector<7x16xf32>,
    %c0_70 = arith.constant 0 : index
    %c0_71 = arith.constant 0 : index
    %61 = vector.load %arg11[%c0_70, %c0_71] : memref<128x16xf32, #tpu.memory_space<vmem>>, vector<121x16xf32>
    %c7 = arith.constant 7 : index
    %c0_72 = arith.constant 0 : index
    %62 = vector.load %arg10[%c7, %c0_72] : memref<128x128xf32, #tpu.memory_space<vmem>>, vector<121x16xf32>
    tpu.vector_store %arg10[%c7, %c0_72], %61 {strides = array<i32>} : memref<128x128xf32, #tpu.memory_space<vmem>>, vector<121x16xf32>,
    %cst_73 = arith.constant 0.000000e+00 : f32
    %63 = vector.broadcast %cst_73 : f32 to vector<5x16xf32>
    %c0_74 = arith.constant 0 : index
    %c16_75 = arith.constant 16 : index
    %64 = vector.load %arg10[%c0_74, %c16_75] : memref<128x128xf32, #tpu.memory_space<vmem>>, vector<5x16xf32>
    tpu.vector_store %arg10[%c0_74, %c16_75], %63 {strides = array<i32>} : memref<128x128xf32, #tpu.memory_space<vmem>>, vector<5x16xf32>,
    %c0_76 = arith.constant 0 : index
    %c0_77 = arith.constant 0 : index
    %65 = vector.load %arg11[%c0_76, %c0_77] : memref<128x16xf32, #tpu.memory_space<vmem>>, vector<123x16xf32>
    %c5 = arith.constant 5 : index
    %c16_78 = arith.constant 16 : index
    %66 = vector.load %arg10[%c5, %c16_78] : memref<128x128xf32, #tpu.memory_space<vmem>>, vector<123x16xf32>
    tpu.vector_store %arg10[%c5, %c16_78], %65 {strides = array<i32>} : memref<128x128xf32, #tpu.memory_space<vmem>>, vector<123x16xf32>,
    %cst_79 = arith.constant 0.000000e+00 : f32
    %67 = vector.broadcast %cst_79 : f32 to vector<3x16xf32>
    %c0_80 = arith.constant 0 : index
    %c32 = arith.constant 32 : index
    %68 = vector.load %arg10[%c0_80, %c32] : memref<128x128xf32, #tpu.memory_space<vmem>>, vector<3x16xf32>
    tpu.vector_store %arg10[%c0_80, %c32], %67 {strides = array<i32>} : memref<128x128xf32, #tpu.memory_space<vmem>>, vector<3x16xf32>,
    %c0_81 = arith.constant 0 : index
    %c0_82 = arith.constant 0 : index
    %69 = vector.load %arg11[%c0_81, %c0_82] : memref<128x16xf32, #tpu.memory_space<vmem>>, vector<125x16xf32>
    %c3_83 = arith.constant 3 : index
    %c32_84 = arith.constant 32 : index
    %70 = vector.load %arg10[%c3_83, %c32_84] : memref<128x128xf32, #tpu.memory_space<vmem>>, vector<125x16xf32>
    tpu.vector_store %arg10[%c3_83, %c32_84], %69 {strides = array<i32>} : memref<128x128xf32, #tpu.memory_space<vmem>>, vector<125x16xf32>,
    %cst_85 = arith.constant 0.000000e+00 : f32
    %71 = vector.broadcast %cst_85 : f32 to vector<1x16xf32>
    %c0_86 = arith.constant 0 : index
    %c48 = arith.constant 48 : index
    %72 = vector.load %arg10[%c0_86, %c48] : memref<128x128xf32, #tpu.memory_space<vmem>>, vector<1x16xf32>
    tpu.vector_store %arg10[%c0_86, %c48], %71 {strides = array<i32>} : memref<128x128xf32, #tpu.memory_space<vmem>>, vector<1x16xf32>,
    %c0_87 = arith.constant 0 : index
    %c0_88 = arith.constant 0 : index
    %73 = vector.load %arg11[%c0_87, %c0_88] : memref<128x16xf32, #tpu.memory_space<vmem>>, vector<127x16xf32>
    %c1_89 = arith.constant 1 : index
    %c48_90 = arith.constant 48 : index
    %74 = vector.load %arg10[%c1_89, %c48_90] : memref<128x128xf32, #tpu.memory_space<vmem>>, vector<127x16xf32>
    tpu.vector_store %arg10[%c1_89, %c48_90], %73 {strides = array<i32>} : memref<128x128xf32, #tpu.memory_space<vmem>>, vector<127x16xf32>,
    %cst_91 = arith.constant 0.000000e+00 : f32
    %75 = vector.broadcast %cst_91 : f32 to vector<1x16xf32>
    %c127_92 = arith.constant 127 : index
    %c64 = arith.constant 64 : index
    %76 = vector.load %arg10[%c127_92, %c64] : memref<128x128xf32, #tpu.memory_space<vmem>>, vector<1x16xf32>
    tpu.vector_store %arg10[%c127_92, %c64], %75 {strides = array<i32>} : memref<128x128xf32, #tpu.memory_space<vmem>>, vector<1x16xf32>,
    %c1_93 = arith.constant 1 : index
    %c0_94 = arith.constant 0 : index
    %77 = vector.load %arg11[%c1_93, %c0_94] : memref<128x16xf32, #tpu.memory_space<vmem>>, vector<127x16xf32>
    %c0_95 = arith.constant 0 : index
    %c64_96 = arith.constant 64 : index
    %78 = vector.load %arg10[%c0_95, %c64_96] : memref<128x128xf32, #tpu.memory_space<vmem>>, vector<127x16xf32>
    tpu.vector_store %arg10[%c0_95, %c64_96], %77 {strides = array<i32>} : memref<128x128xf32, #tpu.memory_space<vmem>>, vector<127x16xf32>,
    %cst_97 = arith.constant 0.000000e+00 : f32
    %79 = vector.broadcast %cst_97 : f32 to vector<3x16xf32>
    %c125_98 = arith.constant 125 : index
    %c80 = arith.constant 80 : index
    %80 = vector.load %arg10[%c125_98, %c80] : memref<128x128xf32, #tpu.memory_space<vmem>>, vector<3x16xf32>
    tpu.vector_store %arg10[%c125_98, %c80], %79 {strides = array<i32>} : memref<128x128xf32, #tpu.memory_space<vmem>>, vector<3x16xf32>,
    %c3_99 = arith.constant 3 : index
    %c0_100 = arith.constant 0 : index
    %81 = vector.load %arg11[%c3_99, %c0_100] : memref<128x16xf32, #tpu.memory_space<vmem>>, vector<125x16xf32>
    %c0_101 = arith.constant 0 : index
    %c80_102 = arith.constant 80 : index
    %82 = vector.load %arg10[%c0_101, %c80_102] : memref<128x128xf32, #tpu.memory_space<vmem>>, vector<125x16xf32>
    tpu.vector_store %arg10[%c0_101, %c80_102], %81 {strides = array<i32>} : memref<128x128xf32, #tpu.memory_space<vmem>>, vector<125x16xf32>,
    %cst_103 = arith.constant 0.000000e+00 : f32
    %83 = vector.broadcast %cst_103 : f32 to vector<5x16xf32>
    %c123 = arith.constant 123 : index
    %c96 = arith.constant 96 : index
    %84 = vector.load %arg10[%c123, %c96] : memref<128x128xf32, #tpu.memory_space<vmem>>, vector<5x16xf32>
    tpu.vector_store %arg10[%c123, %c96], %83 {strides = array<i32>} : memref<128x128xf32, #tpu.memory_space<vmem>>, vector<5x16xf32>,
    %c5_104 = arith.constant 5 : index
    %c0_105 = arith.constant 0 : index
    %85 = vector.load %arg11[%c5_104, %c0_105] : memref<128x16xf32, #tpu.memory_space<vmem>>, vector<123x16xf32>
    %c0_106 = arith.constant 0 : index
    %c96_107 = arith.constant 96 : index
    %86 = vector.load %arg10[%c0_106, %c96_107] : memref<128x128xf32, #tpu.memory_space<vmem>>, vector<123x16xf32>
    tpu.vector_store %arg10[%c0_106, %c96_107], %85 {strides = array<i32>} : memref<128x128xf32, #tpu.memory_space<vmem>>, vector<123x16xf32>,
    %cst_108 = arith.constant 0.000000e+00 : f32
    %87 = vector.broadcast %cst_108 : f32 to vector<7x16xf32>
    %c121 = arith.constant 121 : index
    %c112 = arith.constant 112 : index
    %88 = vector.load %arg10[%c121, %c112] : memref<128x128xf32, #tpu.memory_space<vmem>>, vector<7x16xf32>
    tpu.vector_store %arg10[%c121, %c112], %87 {strides = array<i32>} : memref<128x128xf32, #tpu.memory_space<vmem>>, vector<7x16xf32>,
    %c7_109 = arith.constant 7 : index
    %c0_110 = arith.constant 0 : index
    %89 = vector.load %arg11[%c7_109, %c0_110] : memref<128x16xf32, #tpu.memory_space<vmem>>, vector<121x16xf32>
    %c0_111 = arith.constant 0 : index
    %c112_112 = arith.constant 112 : index
    %90 = vector.load %arg10[%c0_111, %c112_112] : memref<128x128xf32, #tpu.memory_space<vmem>>, vector<121x16xf32>
    tpu.vector_store %arg10[%c0_111, %c112_112], %89 {strides = array<i32>} : memref<128x128xf32, #tpu.memory_space<vmem>>, vector<121x16xf32>,
    %c0_113 = arith.constant 0 : index
    %c0_114 = arith.constant 0 : index
    %c0_115 = arith.constant 0 : index
    %91 = vector.load %arg3[%c0_113, %c0_114, %c0_115] : memref<6x128x64xf32, #tpu.memory_space<vmem>>, vector<1x128x64xf32>
    %92 = vector.shape_cast %91 : vector<1x128x64xf32> to vector<128x64xf32>
    %c0_116 = arith.constant 0 : index
    %c0_117 = arith.constant 0 : index
    %93 = vector.load %arg10[%c0_116, %c0_117] : memref<128x128xf32, #tpu.memory_space<vmem>>, vector<128x128xf32>
    %cst_118 = arith.constant dense<0.000000e+00> : vector<128x64xf32>
    %94 = tpu.matmul %93, %92, %cst_118 {dimension_numbers = #tpu.dot_dimension_numbers<[1], [0], [0], [1], [0, 0, 1, 1], [], []>} : vector<128x128xf32>, vector<128x64xf32>, vector<128x64xf32> -> vector<128x64xf32>
    %c1_119 = arith.constant 1 : index
    %c0_120 = arith.constant 0 : index
    %c0_121 = arith.constant 0 : index
    %95 = vector.load %arg4[%c1_119, %c0_120, %c0_121] : memref<7x1x64xf32, #tpu.memory_space<vmem>>, vector<1x1x64xf32>
    %96 = vector.shape_cast %95 : vector<1x1x64xf32> to vector<1x64xf32>
    %97 = vector.broadcast %96 : vector<1x64xf32> to vector<128x64xf32>
    %98 = arith.addf %94, %97 : vector<128x64xf32>
    %cst_122 = arith.constant 0.000000e+00 : f32
    %99 = vector.broadcast %cst_122 : f32 to vector<128x64xf32>
    %100 = arith.maximumf %98, %99 : vector<128x64xf32>
    %c1_123 = arith.constant 1 : index
    %c0_124 = arith.constant 0 : index
    %c0_125 = arith.constant 0 : index
    %101 = vector.load %arg5[%c1_123, %c0_124, %c0_125] : memref<7x64x16xf32, #tpu.memory_space<vmem>>, vector<1x64x16xf32>
    %102 = vector.shape_cast %101 : vector<1x64x16xf32> to vector<64x16xf32>
    %cst_126 = arith.constant dense<0.000000e+00> : vector<128x16xf32>
    %103 = tpu.matmul %100, %102, %cst_126 {dimension_numbers = #tpu.dot_dimension_numbers<[1], [0], [0], [1], [0, 0, 1, 1], [], []>} : vector<128x64xf32>, vector<64x16xf32>, vector<128x16xf32> -> vector<128x16xf32>
    %c1_127 = arith.constant 1 : index
    %c0_128 = arith.constant 0 : index
    %c0_129 = arith.constant 0 : index
    %104 = vector.load %arg6[%c1_127, %c0_128, %c0_129] : memref<7x1x16xf32, #tpu.memory_space<vmem>>, vector<1x1x16xf32>
    %105 = vector.shape_cast %104 : vector<1x1x16xf32> to vector<1x16xf32>
    %106 = vector.broadcast %105 : vector<1x16xf32> to vector<128x16xf32>
    %107 = arith.addf %103, %106 : vector<128x16xf32>
    %c0_130 = arith.constant 0 : index
    %c0_131 = arith.constant 0 : index
    %108 = vector.load %arg11[%c0_130, %c0_131] : memref<128x16xf32, #tpu.memory_space<vmem>>, vector<128x16xf32>
    tpu.vector_store %arg11[%c0_130, %c0_131], %107 {strides = array<i32>} : memref<128x16xf32, #tpu.memory_space<vmem>>, vector<128x16xf32>,
    %c16_132 = arith.constant 16 : index
    %c0_133 = arith.constant 0 : index
    %109 = vector.load %arg7[%c16_132, %c0_133] : memref<112x4xf32, #tpu.memory_space<vmem>>, vector<16x4xf32>
    %cst_134 = arith.constant dense<0.000000e+00> : vector<128x4xf32>
    %110 = tpu.matmul %107, %109, %cst_134 {dimension_numbers = #tpu.dot_dimension_numbers<[1], [0], [0], [1], [0, 0, 1, 1], [], []>} : vector<128x16xf32>, vector<16x4xf32>, vector<128x4xf32> -> vector<128x4xf32>
    %111 = arith.addf %58, %110 : vector<128x4xf32>
    %cst_135 = arith.constant 0.000000e+00 : f32
    %112 = vector.broadcast %cst_135 : f32 to vector<14x16xf32>
    %c0_136 = arith.constant 0 : index
    %c0_137 = arith.constant 0 : index
    %113 = vector.load %arg10[%c0_136, %c0_137] : memref<128x128xf32, #tpu.memory_space<vmem>>, vector<14x16xf32>
    tpu.vector_store %arg10[%c0_136, %c0_137], %112 {strides = array<i32>} : memref<128x128xf32, #tpu.memory_space<vmem>>, vector<14x16xf32>,
    %c0_138 = arith.constant 0 : index
    %c0_139 = arith.constant 0 : index
    %114 = vector.load %arg11[%c0_138, %c0_139] : memref<128x16xf32, #tpu.memory_space<vmem>>, vector<114x16xf32>
    %c14 = arith.constant 14 : index
    %c0_140 = arith.constant 0 : index
    %115 = vector.load %arg10[%c14, %c0_140] : memref<128x128xf32, #tpu.memory_space<vmem>>, vector<114x16xf32>
    tpu.vector_store %arg10[%c14, %c0_140], %114 {strides = array<i32>} : memref<128x128xf32, #tpu.memory_space<vmem>>, vector<114x16xf32>,
    %cst_141 = arith.constant 0.000000e+00 : f32
    %116 = vector.broadcast %cst_141 : f32 to vector<10x16xf32>
    %c0_142 = arith.constant 0 : index
    %c16_143 = arith.constant 16 : index
    %117 = vector.load %arg10[%c0_142, %c16_143] : memref<128x128xf32, #tpu.memory_space<vmem>>, vector<10x16xf32>
    tpu.vector_store %arg10[%c0_142, %c16_143], %116 {strides = array<i32>} : memref<128x128xf32, #tpu.memory_space<vmem>>, vector<10x16xf32>,
    %c0_144 = arith.constant 0 : index
    %c0_145 = arith.constant 0 : index
    %118 = vector.load %arg11[%c0_144, %c0_145] : memref<128x16xf32, #tpu.memory_space<vmem>>, vector<118x16xf32>
    %c10 = arith.constant 10 : index
    %c16_146 = arith.constant 16 : index
    %119 = vector.load %arg10[%c10, %c16_146] : memref<128x128xf32, #tpu.memory_space<vmem>>, vector<118x16xf32>
    tpu.vector_store %arg10[%c10, %c16_146], %118 {strides = array<i32>} : memref<128x128xf32, #tpu.memory_space<vmem>>, vector<118x16xf32>,
    %cst_147 = arith.constant 0.000000e+00 : f32
    %120 = vector.broadcast %cst_147 : f32 to vector<6x16xf32>
    %c0_148 = arith.constant 0 : index
    %c32_149 = arith.constant 32 : index
    %121 = vector.load %arg10[%c0_148, %c32_149] : memref<128x128xf32, #tpu.memory_space<vmem>>, vector<6x16xf32>
    tpu.vector_store %arg10[%c0_148, %c32_149], %120 {strides = array<i32>} : memref<128x128xf32, #tpu.memory_space<vmem>>, vector<6x16xf32>,
    %c0_150 = arith.constant 0 : index
    %c0_151 = arith.constant 0 : index
    %122 = vector.load %arg11[%c0_150, %c0_151] : memref<128x16xf32, #tpu.memory_space<vmem>>, vector<122x16xf32>
    %c6 = arith.constant 6 : index
    %c32_152 = arith.constant 32 : index
    %123 = vector.load %arg10[%c6, %c32_152] : memref<128x128xf32, #tpu.memory_space<vmem>>, vector<122x16xf32>
    tpu.vector_store %arg10[%c6, %c32_152], %122 {strides = array<i32>} : memref<128x128xf32, #tpu.memory_space<vmem>>, vector<122x16xf32>,
    %cst_153 = arith.constant 0.000000e+00 : f32
    %124 = vector.broadcast %cst_153 : f32 to vector<2x16xf32>
    %c0_154 = arith.constant 0 : index
    %c48_155 = arith.constant 48 : index
    %125 = vector.load %arg10[%c0_154, %c48_155] : memref<128x128xf32, #tpu.memory_space<vmem>>, vector<2x16xf32>
    tpu.vector_store %arg10[%c0_154, %c48_155], %124 {strides = array<i32>} : memref<128x128xf32, #tpu.memory_space<vmem>>, vector<2x16xf32>,
    %c0_156 = arith.constant 0 : index
    %c0_157 = arith.constant 0 : index
    %126 = vector.load %arg11[%c0_156, %c0_157] : memref<128x16xf32, #tpu.memory_space<vmem>>, vector<126x16xf32>
    %c2_158 = arith.constant 2 : index
    %c48_159 = arith.constant 48 : index
    %127 = vector.load %arg10[%c2_158, %c48_159] : memref<128x128xf32, #tpu.memory_space<vmem>>, vector<126x16xf32>
    tpu.vector_store %arg10[%c2_158, %c48_159], %126 {strides = array<i32>} : memref<128x128xf32, #tpu.memory_space<vmem>>, vector<126x16xf32>,
    %cst_160 = arith.constant 0.000000e+00 : f32
    %128 = vector.broadcast %cst_160 : f32 to vector<2x16xf32>
    %c126_161 = arith.constant 126 : index
    %c64_162 = arith.constant 64 : index
    %129 = vector.load %arg10[%c126_161, %c64_162] : memref<128x128xf32, #tpu.memory_space<vmem>>, vector<2x16xf32>
    tpu.vector_store %arg10[%c126_161, %c64_162], %128 {strides = array<i32>} : memref<128x128xf32, #tpu.memory_space<vmem>>, vector<2x16xf32>,
    %c2_163 = arith.constant 2 : index
    %c0_164 = arith.constant 0 : index
    %130 = vector.load %arg11[%c2_163, %c0_164] : memref<128x16xf32, #tpu.memory_space<vmem>>, vector<126x16xf32>
    %c0_165 = arith.constant 0 : index
    %c64_166 = arith.constant 64 : index
    %131 = vector.load %arg10[%c0_165, %c64_166] : memref<128x128xf32, #tpu.memory_space<vmem>>, vector<126x16xf32>
    tpu.vector_store %arg10[%c0_165, %c64_166], %130 {strides = array<i32>} : memref<128x128xf32, #tpu.memory_space<vmem>>, vector<126x16xf32>,
    %cst_167 = arith.constant 0.000000e+00 : f32
    %132 = vector.broadcast %cst_167 : f32 to vector<6x16xf32>
    %c122 = arith.constant 122 : index
    %c80_168 = arith.constant 80 : index
    %133 = vector.load %arg10[%c122, %c80_168] : memref<128x128xf32, #tpu.memory_space<vmem>>, vector<6x16xf32>
    tpu.vector_store %arg10[%c122, %c80_168], %132 {strides = array<i32>} : memref<128x128xf32, #tpu.memory_space<vmem>>, vector<6x16xf32>,
    %c6_169 = arith.constant 6 : index
    %c0_170 = arith.constant 0 : index
    %134 = vector.load %arg11[%c6_169, %c0_170] : memref<128x16xf32, #tpu.memory_space<vmem>>, vector<122x16xf32>
    %c0_171 = arith.constant 0 : index
    %c80_172 = arith.constant 80 : index
    %135 = vector.load %arg10[%c0_171, %c80_172] : memref<128x128xf32, #tpu.memory_space<vmem>>, vector<122x16xf32>
    tpu.vector_store %arg10[%c0_171, %c80_172], %134 {strides = array<i32>} : memref<128x128xf32, #tpu.memory_space<vmem>>, vector<122x16xf32>,
    %cst_173 = arith.constant 0.000000e+00 : f32
    %136 = vector.broadcast %cst_173 : f32 to vector<10x16xf32>
    %c118 = arith.constant 118 : index
    %c96_174 = arith.constant 96 : index
    %137 = vector.load %arg10[%c118, %c96_174] : memref<128x128xf32, #tpu.memory_space<vmem>>, vector<10x16xf32>
    tpu.vector_store %arg10[%c118, %c96_174], %136 {strides = array<i32>} : memref<128x128xf32, #tpu.memory_space<vmem>>, vector<10x16xf32>,
    %c10_175 = arith.constant 10 : index
    %c0_176 = arith.constant 0 : index
    %138 = vector.load %arg11[%c10_175, %c0_176] : memref<128x16xf32, #tpu.memory_space<vmem>>, vector<118x16xf32>
    %c0_177 = arith.constant 0 : index
    %c96_178 = arith.constant 96 : index
    %139 = vector.load %arg10[%c0_177, %c96_178] : memref<128x128xf32, #tpu.memory_space<vmem>>, vector<118x16xf32>
    tpu.vector_store %arg10[%c0_177, %c96_178], %138 {strides = array<i32>} : memref<128x128xf32, #tpu.memory_space<vmem>>, vector<118x16xf32>,
    %cst_179 = arith.constant 0.000000e+00 : f32
    %140 = vector.broadcast %cst_179 : f32 to vector<14x16xf32>
    %c114 = arith.constant 114 : index
    %c112_180 = arith.constant 112 : index
    %141 = vector.load %arg10[%c114, %c112_180] : memref<128x128xf32, #tpu.memory_space<vmem>>, vector<14x16xf32>
    tpu.vector_store %arg10[%c114, %c112_180], %140 {strides = array<i32>} : memref<128x128xf32, #tpu.memory_space<vmem>>, vector<14x16xf32>,
    %c14_181 = arith.constant 14 : index
    %c0_182 = arith.constant 0 : index
    %142 = vector.load %arg11[%c14_181, %c0_182] : memref<128x16xf32, #tpu.memory_space<vmem>>, vector<114x16xf32>
    %c0_183 = arith.constant 0 : index
    %c112_184 = arith.constant 112 : index
    %143 = vector.load %arg10[%c0_183, %c112_184] : memref<128x128xf32, #tpu.memory_space<vmem>>, vector<114x16xf32>
    tpu.vector_store %arg10[%c0_183, %c112_184], %142 {strides = array<i32>} : memref<128x128xf32, #tpu.memory_space<vmem>>, vector<114x16xf32>,
    %c1_185 = arith.constant 1 : index
    %c0_186 = arith.constant 0 : index
    %c0_187 = arith.constant 0 : index
    %144 = vector.load %arg3[%c1_185, %c0_186, %c0_187] : memref<6x128x64xf32, #tpu.memory_space<vmem>>, vector<1x128x64xf32>
    %145 = vector.shape_cast %144 : vector<1x128x64xf32> to vector<128x64xf32>
    %c0_188 = arith.constant 0 : index
    %c0_189 = arith.constant 0 : index
    %146 = vector.load %arg10[%c0_188, %c0_189] : memref<128x128xf32, #tpu.memory_space<vmem>>, vector<128x128xf32>
    %cst_190 = arith.constant dense<0.000000e+00> : vector<128x64xf32>
    %147 = tpu.matmul %146, %145, %cst_190 {dimension_numbers = #tpu.dot_dimension_numbers<[1], [0], [0], [1], [0, 0, 1, 1], [], []>} : vector<128x128xf32>, vector<128x64xf32>, vector<128x64xf32> -> vector<128x64xf32>
    %c2_191 = arith.constant 2 : index
    %c0_192 = arith.constant 0 : index
    %c0_193 = arith.constant 0 : index
    %148 = vector.load %arg4[%c2_191, %c0_192, %c0_193] : memref<7x1x64xf32, #tpu.memory_space<vmem>>, vector<1x1x64xf32>
    %149 = vector.shape_cast %148 : vector<1x1x64xf32> to vector<1x64xf32>
    %150 = vector.broadcast %149 : vector<1x64xf32> to vector<128x64xf32>
    %151 = arith.addf %147, %150 : vector<128x64xf32>
    %cst_194 = arith.constant 0.000000e+00 : f32
    %152 = vector.broadcast %cst_194 : f32 to vector<128x64xf32>
    %153 = arith.maximumf %151, %152 : vector<128x64xf32>
    %c2_195 = arith.constant 2 : index
    %c0_196 = arith.constant 0 : index
    %c0_197 = arith.constant 0 : index
    %154 = vector.load %arg5[%c2_195, %c0_196, %c0_197] : memref<7x64x16xf32, #tpu.memory_space<vmem>>, vector<1x64x16xf32>
    %155 = vector.shape_cast %154 : vector<1x64x16xf32> to vector<64x16xf32>
    %cst_198 = arith.constant dense<0.000000e+00> : vector<128x16xf32>
    %156 = tpu.matmul %153, %155, %cst_198 {dimension_numbers = #tpu.dot_dimension_numbers<[1], [0], [0], [1], [0, 0, 1, 1], [], []>} : vector<128x64xf32>, vector<64x16xf32>, vector<128x16xf32> -> vector<128x16xf32>
    %c2_199 = arith.constant 2 : index
    %c0_200 = arith.constant 0 : index
    %c0_201 = arith.constant 0 : index
    %157 = vector.load %arg6[%c2_199, %c0_200, %c0_201] : memref<7x1x16xf32, #tpu.memory_space<vmem>>, vector<1x1x16xf32>
    %158 = vector.shape_cast %157 : vector<1x1x16xf32> to vector<1x16xf32>
    %159 = vector.broadcast %158 : vector<1x16xf32> to vector<128x16xf32>
    %160 = arith.addf %156, %159 : vector<128x16xf32>
    %c0_202 = arith.constant 0 : index
    %c0_203 = arith.constant 0 : index
    %161 = vector.load %arg11[%c0_202, %c0_203] : memref<128x16xf32, #tpu.memory_space<vmem>>, vector<128x16xf32>
    tpu.vector_store %arg11[%c0_202, %c0_203], %160 {strides = array<i32>} : memref<128x16xf32, #tpu.memory_space<vmem>>, vector<128x16xf32>,
    %c32_204 = arith.constant 32 : index
    %c0_205 = arith.constant 0 : index
    %162 = vector.load %arg7[%c32_204, %c0_205] : memref<112x4xf32, #tpu.memory_space<vmem>>, vector<16x4xf32>
    %cst_206 = arith.constant dense<0.000000e+00> : vector<128x4xf32>
    %163 = tpu.matmul %160, %162, %cst_206 {dimension_numbers = #tpu.dot_dimension_numbers<[1], [0], [0], [1], [0, 0, 1, 1], [], []>} : vector<128x16xf32>, vector<16x4xf32>, vector<128x4xf32> -> vector<128x4xf32>
    %164 = arith.addf %111, %163 : vector<128x4xf32>
    %cst_207 = arith.constant 0.000000e+00 : f32
    %165 = vector.broadcast %cst_207 : f32 to vector<28x16xf32>
    %c0_208 = arith.constant 0 : index
    %c0_209 = arith.constant 0 : index
    %166 = vector.load %arg10[%c0_208, %c0_209] : memref<128x128xf32, #tpu.memory_space<vmem>>, vector<28x16xf32>
    tpu.vector_store %arg10[%c0_208, %c0_209], %165 {strides = array<i32>} : memref<128x128xf32, #tpu.memory_space<vmem>>, vector<28x16xf32>,
    %c0_210 = arith.constant 0 : index
    %c0_211 = arith.constant 0 : index
    %167 = vector.load %arg11[%c0_210, %c0_211] : memref<128x16xf32, #tpu.memory_space<vmem>>, vector<100x16xf32>
    %c28_212 = arith.constant 28 : index
    %c0_213 = arith.constant 0 : index
    %168 = vector.load %arg10[%c28_212, %c0_213] : memref<128x128xf32, #tpu.memory_space<vmem>>, vector<100x16xf32>
    tpu.vector_store %arg10[%c28_212, %c0_213], %167 {strides = array<i32>} : memref<128x128xf32, #tpu.memory_space<vmem>>, vector<100x16xf32>,
    %cst_214 = arith.constant 0.000000e+00 : f32
    %169 = vector.broadcast %cst_214 : f32 to vector<20x16xf32>
    %c0_215 = arith.constant 0 : index
    %c16_216 = arith.constant 16 : index
    %170 = vector.load %arg10[%c0_215, %c16_216] : memref<128x128xf32, #tpu.memory_space<vmem>>, vector<20x16xf32>
    tpu.vector_store %arg10[%c0_215, %c16_216], %169 {strides = array<i32>} : memref<128x128xf32, #tpu.memory_space<vmem>>, vector<20x16xf32>,
    %c0_217 = arith.constant 0 : index
    %c0_218 = arith.constant 0 : index
    %171 = vector.load %arg11[%c0_217, %c0_218] : memref<128x16xf32, #tpu.memory_space<vmem>>, vector<108x16xf32>
    %c20_219 = arith.constant 20 : index
    %c16_220 = arith.constant 16 : index
    %172 = vector.load %arg10[%c20_219, %c16_220] : memref<128x128xf32, #tpu.memory_space<vmem>>, vector<108x16xf32>
    tpu.vector_store %arg10[%c20_219, %c16_220], %171 {strides = array<i32>} : memref<128x128xf32, #tpu.memory_space<vmem>>, vector<108x16xf32>,
    %cst_221 = arith.constant 0.000000e+00 : f32
    %173 = vector.broadcast %cst_221 : f32 to vector<12x16xf32>
    %c0_222 = arith.constant 0 : index
    %c32_223 = arith.constant 32 : index
    %174 = vector.load %arg10[%c0_222, %c32_223] : memref<128x128xf32, #tpu.memory_space<vmem>>, vector<12x16xf32>
    tpu.vector_store %arg10[%c0_222, %c32_223], %173 {strides = array<i32>} : memref<128x128xf32, #tpu.memory_space<vmem>>, vector<12x16xf32>,
    %c0_224 = arith.constant 0 : index
    %c0_225 = arith.constant 0 : index
    %175 = vector.load %arg11[%c0_224, %c0_225] : memref<128x16xf32, #tpu.memory_space<vmem>>, vector<116x16xf32>
    %c12_226 = arith.constant 12 : index
    %c32_227 = arith.constant 32 : index
    %176 = vector.load %arg10[%c12_226, %c32_227] : memref<128x128xf32, #tpu.memory_space<vmem>>, vector<116x16xf32>
    tpu.vector_store %arg10[%c12_226, %c32_227], %175 {strides = array<i32>} : memref<128x128xf32, #tpu.memory_space<vmem>>, vector<116x16xf32>,
    %cst_228 = arith.constant 0.000000e+00 : f32
    %177 = vector.broadcast %cst_228 : f32 to vector<4x16xf32>
    %c0_229 = arith.constant 0 : index
    %c48_230 = arith.constant 48 : index
    %178 = vector.load %arg10[%c0_229, %c48_230] : memref<128x128xf32, #tpu.memory_space<vmem>>, vector<4x16xf32>
    tpu.vector_store %arg10[%c0_229, %c48_230], %177 {strides = array<i32>} : memref<128x128xf32, #tpu.memory_space<vmem>>, vector<4x16xf32>,
    %c0_231 = arith.constant 0 : index
    %c0_232 = arith.constant 0 : index
    %179 = vector.load %arg11[%c0_231, %c0_232] : memref<128x16xf32, #tpu.memory_space<vmem>>, vector<124x16xf32>
    %c4_233 = arith.constant 4 : index
    %c48_234 = arith.constant 48 : index
    %180 = vector.load %arg10[%c4_233, %c48_234] : memref<128x128xf32, #tpu.memory_space<vmem>>, vector<124x16xf32>
    tpu.vector_store %arg10[%c4_233, %c48_234], %179 {strides = array<i32>} : memref<128x128xf32, #tpu.memory_space<vmem>>, vector<124x16xf32>,
    %cst_235 = arith.constant 0.000000e+00 : f32
    %181 = vector.broadcast %cst_235 : f32 to vector<4x16xf32>
    %c124_236 = arith.constant 124 : index
    %c64_237 = arith.constant 64 : index
    %182 = vector.load %arg10[%c124_236, %c64_237] : memref<128x128xf32, #tpu.memory_space<vmem>>, vector<4x16xf32>
    tpu.vector_store %arg10[%c124_236, %c64_237], %181 {strides = array<i32>} : memref<128x128xf32, #tpu.memory_space<vmem>>, vector<4x16xf32>,
    %c4_238 = arith.constant 4 : index
    %c0_239 = arith.constant 0 : index
    %183 = vector.load %arg11[%c4_238, %c0_239] : memref<128x16xf32, #tpu.memory_space<vmem>>, vector<124x16xf32>
    %c0_240 = arith.constant 0 : index
    %c64_241 = arith.constant 64 : index
    %184 = vector.load %arg10[%c0_240, %c64_241] : memref<128x128xf32, #tpu.memory_space<vmem>>, vector<124x16xf32>
    tpu.vector_store %arg10[%c0_240, %c64_241], %183 {strides = array<i32>} : memref<128x128xf32, #tpu.memory_space<vmem>>, vector<124x16xf32>,
    %cst_242 = arith.constant 0.000000e+00 : f32
    %185 = vector.broadcast %cst_242 : f32 to vector<12x16xf32>
    %c116 = arith.constant 116 : index
    %c80_243 = arith.constant 80 : index
    %186 = vector.load %arg10[%c116, %c80_243] : memref<128x128xf32, #tpu.memory_space<vmem>>, vector<12x16xf32>
    tpu.vector_store %arg10[%c116, %c80_243], %185 {strides = array<i32>} : memref<128x128xf32, #tpu.memory_space<vmem>>, vector<12x16xf32>,
    %c12_244 = arith.constant 12 : index
    %c0_245 = arith.constant 0 : index
    %187 = vector.load %arg11[%c12_244, %c0_245] : memref<128x16xf32, #tpu.memory_space<vmem>>, vector<116x16xf32>
    %c0_246 = arith.constant 0 : index
    %c80_247 = arith.constant 80 : index
    %188 = vector.load %arg10[%c0_246, %c80_247] : memref<128x128xf32, #tpu.memory_space<vmem>>, vector<116x16xf32>
    tpu.vector_store %arg10[%c0_246, %c80_247], %187 {strides = array<i32>} : memref<128x128xf32, #tpu.memory_space<vmem>>, vector<116x16xf32>,
    %cst_248 = arith.constant 0.000000e+00 : f32
    %189 = vector.broadcast %cst_248 : f32 to vector<20x16xf32>
    %c108 = arith.constant 108 : index
    %c96_249 = arith.constant 96 : index
    %190 = vector.load %arg10[%c108, %c96_249] : memref<128x128xf32, #tpu.memory_space<vmem>>, vector<20x16xf32>
    tpu.vector_store %arg10[%c108, %c96_249], %189 {strides = array<i32>} : memref<128x128xf32, #tpu.memory_space<vmem>>, vector<20x16xf32>,
    %c20_250 = arith.constant 20 : index
    %c0_251 = arith.constant 0 : index
    %191 = vector.load %arg11[%c20_250, %c0_251] : memref<128x16xf32, #tpu.memory_space<vmem>>, vector<108x16xf32>
    %c0_252 = arith.constant 0 : index
    %c96_253 = arith.constant 96 : index
    %192 = vector.load %arg10[%c0_252, %c96_253] : memref<128x128xf32, #tpu.memory_space<vmem>>, vector<108x16xf32>
    tpu.vector_store %arg10[%c0_252, %c96_253], %191 {strides = array<i32>} : memref<128x128xf32, #tpu.memory_space<vmem>>, vector<108x16xf32>,
    %cst_254 = arith.constant 0.000000e+00 : f32
    %193 = vector.broadcast %cst_254 : f32 to vector<28x16xf32>
    %c100 = arith.constant 100 : index
    %c112_255 = arith.constant 112 : index
    %194 = vector.load %arg10[%c100, %c112_255] : memref<128x128xf32, #tpu.memory_space<vmem>>, vector<28x16xf32>
    tpu.vector_store %arg10[%c100, %c112_255], %193 {strides = array<i32>} : memref<128x128xf32, #tpu.memory_space<vmem>>, vector<28x16xf32>,
    %c28_256 = arith.constant 28 : index
    %c0_257 = arith.constant 0 : index
    %195 = vector.load %arg11[%c28_256, %c0_257] : memref<128x16xf32, #tpu.memory_space<vmem>>, vector<100x16xf32>
    %c0_258 = arith.constant 0 : index
    %c112_259 = arith.constant 112 : index
    %196 = vector.load %arg10[%c0_258, %c112_259] : memref<128x128xf32, #tpu.memory_space<vmem>>, vector<100x16xf32>
    tpu.vector_store %arg10[%c0_258, %c112_259], %195 {strides = array<i32>} : memref<128x128xf32, #tpu.memory_space<vmem>>, vector<100x16xf32>,
    %c2_260 = arith.constant 2 : index
    %c0_261 = arith.constant 0 : index
    %c0_262 = arith.constant 0 : index
    %197 = vector.load %arg3[%c2_260, %c0_261, %c0_262] : memref<6x128x64xf32, #tpu.memory_space<vmem>>, vector<1x128x64xf32>
    %198 = vector.shape_cast %197 : vector<1x128x64xf32> to vector<128x64xf32>
    %c0_263 = arith.constant 0 : index
    %c0_264 = arith.constant 0 : index
    %199 = vector.load %arg10[%c0_263, %c0_264] : memref<128x128xf32, #tpu.memory_space<vmem>>, vector<128x128xf32>
    %cst_265 = arith.constant dense<0.000000e+00> : vector<128x64xf32>
    %200 = tpu.matmul %199, %198, %cst_265 {dimension_numbers = #tpu.dot_dimension_numbers<[1], [0], [0], [1], [0, 0, 1, 1], [], []>} : vector<128x128xf32>, vector<128x64xf32>, vector<128x64xf32> -> vector<128x64xf32>
    %c3_266 = arith.constant 3 : index
    %c0_267 = arith.constant 0 : index
    %c0_268 = arith.constant 0 : index
    %201 = vector.load %arg4[%c3_266, %c0_267, %c0_268] : memref<7x1x64xf32, #tpu.memory_space<vmem>>, vector<1x1x64xf32>
    %202 = vector.shape_cast %201 : vector<1x1x64xf32> to vector<1x64xf32>
    %203 = vector.broadcast %202 : vector<1x64xf32> to vector<128x64xf32>
    %204 = arith.addf %200, %203 : vector<128x64xf32>
    %cst_269 = arith.constant 0.000000e+00 : f32
    %205 = vector.broadcast %cst_269 : f32 to vector<128x64xf32>
    %206 = arith.maximumf %204, %205 : vector<128x64xf32>
    %c3_270 = arith.constant 3 : index
    %c0_271 = arith.constant 0 : index
    %c0_272 = arith.constant 0 : index
    %207 = vector.load %arg5[%c3_270, %c0_271, %c0_272] : memref<7x64x16xf32, #tpu.memory_space<vmem>>, vector<1x64x16xf32>
    %208 = vector.shape_cast %207 : vector<1x64x16xf32> to vector<64x16xf32>
    %cst_273 = arith.constant dense<0.000000e+00> : vector<128x16xf32>
    %209 = tpu.matmul %206, %208, %cst_273 {dimension_numbers = #tpu.dot_dimension_numbers<[1], [0], [0], [1], [0, 0, 1, 1], [], []>} : vector<128x64xf32>, vector<64x16xf32>, vector<128x16xf32> -> vector<128x16xf32>
    %c3_274 = arith.constant 3 : index
    %c0_275 = arith.constant 0 : index
    %c0_276 = arith.constant 0 : index
    %210 = vector.load %arg6[%c3_274, %c0_275, %c0_276] : memref<7x1x16xf32, #tpu.memory_space<vmem>>, vector<1x1x16xf32>
    %211 = vector.shape_cast %210 : vector<1x1x16xf32> to vector<1x16xf32>
    %212 = vector.broadcast %211 : vector<1x16xf32> to vector<128x16xf32>
    %213 = arith.addf %209, %212 : vector<128x16xf32>
    %c0_277 = arith.constant 0 : index
    %c0_278 = arith.constant 0 : index
    %214 = vector.load %arg11[%c0_277, %c0_278] : memref<128x16xf32, #tpu.memory_space<vmem>>, vector<128x16xf32>
    tpu.vector_store %arg11[%c0_277, %c0_278], %213 {strides = array<i32>} : memref<128x16xf32, #tpu.memory_space<vmem>>, vector<128x16xf32>,
    %c48_279 = arith.constant 48 : index
    %c0_280 = arith.constant 0 : index
    %215 = vector.load %arg7[%c48_279, %c0_280] : memref<112x4xf32, #tpu.memory_space<vmem>>, vector<16x4xf32>
    %cst_281 = arith.constant dense<0.000000e+00> : vector<128x4xf32>
    %216 = tpu.matmul %213, %215, %cst_281 {dimension_numbers = #tpu.dot_dimension_numbers<[1], [0], [0], [1], [0, 0, 1, 1], [], []>} : vector<128x16xf32>, vector<16x4xf32>, vector<128x4xf32> -> vector<128x4xf32>
    %217 = arith.addf %164, %216 : vector<128x4xf32>
    %cst_282 = arith.constant 0.000000e+00 : f32
    %218 = vector.broadcast %cst_282 : f32 to vector<56x16xf32>
    %c0_283 = arith.constant 0 : index
    %c0_284 = arith.constant 0 : index
    %219 = vector.load %arg10[%c0_283, %c0_284] : memref<128x128xf32, #tpu.memory_space<vmem>>, vector<56x16xf32>
    tpu.vector_store %arg10[%c0_283, %c0_284], %218 {strides = array<i32>} : memref<128x128xf32, #tpu.memory_space<vmem>>, vector<56x16xf32>,
    %c0_285 = arith.constant 0 : index
    %c0_286 = arith.constant 0 : index
    %220 = vector.load %arg11[%c0_285, %c0_286] : memref<128x16xf32, #tpu.memory_space<vmem>>, vector<72x16xf32>
    %c56 = arith.constant 56 : index
    %c0_287 = arith.constant 0 : index
    %221 = vector.load %arg10[%c56, %c0_287] : memref<128x128xf32, #tpu.memory_space<vmem>>, vector<72x16xf32>
    tpu.vector_store %arg10[%c56, %c0_287], %220 {strides = array<i32>} : memref<128x128xf32, #tpu.memory_space<vmem>>, vector<72x16xf32>,
    %cst_288 = arith.constant 0.000000e+00 : f32
    %222 = vector.broadcast %cst_288 : f32 to vector<40x16xf32>
    %c0_289 = arith.constant 0 : index
    %c16_290 = arith.constant 16 : index
    %223 = vector.load %arg10[%c0_289, %c16_290] : memref<128x128xf32, #tpu.memory_space<vmem>>, vector<40x16xf32>
    tpu.vector_store %arg10[%c0_289, %c16_290], %222 {strides = array<i32>} : memref<128x128xf32, #tpu.memory_space<vmem>>, vector<40x16xf32>,
    %c0_291 = arith.constant 0 : index
    %c0_292 = arith.constant 0 : index
    %224 = vector.load %arg11[%c0_291, %c0_292] : memref<128x16xf32, #tpu.memory_space<vmem>>, vector<88x16xf32>
    %c40 = arith.constant 40 : index
    %c16_293 = arith.constant 16 : index
    %225 = vector.load %arg10[%c40, %c16_293] : memref<128x128xf32, #tpu.memory_space<vmem>>, vector<88x16xf32>
    tpu.vector_store %arg10[%c40, %c16_293], %224 {strides = array<i32>} : memref<128x128xf32, #tpu.memory_space<vmem>>, vector<88x16xf32>,
    %cst_294 = arith.constant 0.000000e+00 : f32
    %226 = vector.broadcast %cst_294 : f32 to vector<24x16xf32>
    %c0_295 = arith.constant 0 : index
    %c32_296 = arith.constant 32 : index
    %227 = vector.load %arg10[%c0_295, %c32_296] : memref<128x128xf32, #tpu.memory_space<vmem>>, vector<24x16xf32>
    tpu.vector_store %arg10[%c0_295, %c32_296], %226 {strides = array<i32>} : memref<128x128xf32, #tpu.memory_space<vmem>>, vector<24x16xf32>,
    %c0_297 = arith.constant 0 : index
    %c0_298 = arith.constant 0 : index
    %228 = vector.load %arg11[%c0_297, %c0_298] : memref<128x16xf32, #tpu.memory_space<vmem>>, vector<104x16xf32>
    %c24_299 = arith.constant 24 : index
    %c32_300 = arith.constant 32 : index
    %229 = vector.load %arg10[%c24_299, %c32_300] : memref<128x128xf32, #tpu.memory_space<vmem>>, vector<104x16xf32>
    tpu.vector_store %arg10[%c24_299, %c32_300], %228 {strides = array<i32>} : memref<128x128xf32, #tpu.memory_space<vmem>>, vector<104x16xf32>,
    %cst_301 = arith.constant 0.000000e+00 : f32
    %230 = vector.broadcast %cst_301 : f32 to vector<8x16xf32>
    %c0_302 = arith.constant 0 : index
    %c48_303 = arith.constant 48 : index
    %231 = vector.load %arg10[%c0_302, %c48_303] : memref<128x128xf32, #tpu.memory_space<vmem>>, vector<8x16xf32>
    tpu.vector_store %arg10[%c0_302, %c48_303], %230 {strides = array<i32>} : memref<128x128xf32, #tpu.memory_space<vmem>>, vector<8x16xf32>,
    %c0_304 = arith.constant 0 : index
    %c0_305 = arith.constant 0 : index
    %232 = vector.load %arg11[%c0_304, %c0_305] : memref<128x16xf32, #tpu.memory_space<vmem>>, vector<120x16xf32>
    %c8_306 = arith.constant 8 : index
    %c48_307 = arith.constant 48 : index
    %233 = vector.load %arg10[%c8_306, %c48_307] : memref<128x128xf32, #tpu.memory_space<vmem>>, vector<120x16xf32>
    tpu.vector_store %arg10[%c8_306, %c48_307], %232 {strides = array<i32>} : memref<128x128xf32, #tpu.memory_space<vmem>>, vector<120x16xf32>,
    %cst_308 = arith.constant 0.000000e+00 : f32
    %234 = vector.broadcast %cst_308 : f32 to vector<8x16xf32>
    %c120 = arith.constant 120 : index
    %c64_309 = arith.constant 64 : index
    %235 = vector.load %arg10[%c120, %c64_309] : memref<128x128xf32, #tpu.memory_space<vmem>>, vector<8x16xf32>
    tpu.vector_store %arg10[%c120, %c64_309], %234 {strides = array<i32>} : memref<128x128xf32, #tpu.memory_space<vmem>>, vector<8x16xf32>,
    %c8_310 = arith.constant 8 : index
    %c0_311 = arith.constant 0 : index
    %236 = vector.load %arg11[%c8_310, %c0_311] : memref<128x16xf32, #tpu.memory_space<vmem>>, vector<120x16xf32>
    %c0_312 = arith.constant 0 : index
    %c64_313 = arith.constant 64 : index
    %237 = vector.load %arg10[%c0_312, %c64_313] : memref<128x128xf32, #tpu.memory_space<vmem>>, vector<120x16xf32>
    tpu.vector_store %arg10[%c0_312, %c64_313], %236 {strides = array<i32>} : memref<128x128xf32, #tpu.memory_space<vmem>>, vector<120x16xf32>,
    %cst_314 = arith.constant 0.000000e+00 : f32
    %238 = vector.broadcast %cst_314 : f32 to vector<24x16xf32>
    %c104 = arith.constant 104 : index
    %c80_315 = arith.constant 80 : index
    %239 = vector.load %arg10[%c104, %c80_315] : memref<128x128xf32, #tpu.memory_space<vmem>>, vector<24x16xf32>
    tpu.vector_store %arg10[%c104, %c80_315], %238 {strides = array<i32>} : memref<128x128xf32, #tpu.memory_space<vmem>>, vector<24x16xf32>,
    %c24_316 = arith.constant 24 : index
    %c0_317 = arith.constant 0 : index
    %240 = vector.load %arg11[%c24_316, %c0_317] : memref<128x16xf32, #tpu.memory_space<vmem>>, vector<104x16xf32>
    %c0_318 = arith.constant 0 : index
    %c80_319 = arith.constant 80 : index
    %241 = vector.load %arg10[%c0_318, %c80_319] : memref<128x128xf32, #tpu.memory_space<vmem>>, vector<104x16xf32>
    tpu.vector_store %arg10[%c0_318, %c80_319], %240 {strides = array<i32>} : memref<128x128xf32, #tpu.memory_space<vmem>>, vector<104x16xf32>,
    %cst_320 = arith.constant 0.000000e+00 : f32
    %242 = vector.broadcast %cst_320 : f32 to vector<40x16xf32>
    %c88 = arith.constant 88 : index
    %c96_321 = arith.constant 96 : index
    %243 = vector.load %arg10[%c88, %c96_321] : memref<128x128xf32, #tpu.memory_space<vmem>>, vector<40x16xf32>
    tpu.vector_store %arg10[%c88, %c96_321], %242 {strides = array<i32>} : memref<128x128xf32, #tpu.memory_space<vmem>>, vector<40x16xf32>,
    %c40_322 = arith.constant 40 : index
    %c0_323 = arith.constant 0 : index
    %244 = vector.load %arg11[%c40_322, %c0_323] : memref<128x16xf32, #tpu.memory_space<vmem>>, vector<88x16xf32>
    %c0_324 = arith.constant 0 : index
    %c96_325 = arith.constant 96 : index
    %245 = vector.load %arg10[%c0_324, %c96_325] : memref<128x128xf32, #tpu.memory_space<vmem>>, vector<88x16xf32>
    tpu.vector_store %arg10[%c0_324, %c96_325], %244 {strides = array<i32>} : memref<128x128xf32, #tpu.memory_space<vmem>>, vector<88x16xf32>,
    %cst_326 = arith.constant 0.000000e+00 : f32
    %246 = vector.broadcast %cst_326 : f32 to vector<56x16xf32>
    %c72 = arith.constant 72 : index
    %c112_327 = arith.constant 112 : index
    %247 = vector.load %arg10[%c72, %c112_327] : memref<128x128xf32, #tpu.memory_space<vmem>>, vector<56x16xf32>
    tpu.vector_store %arg10[%c72, %c112_327], %246 {strides = array<i32>} : memref<128x128xf32, #tpu.memory_space<vmem>>, vector<56x16xf32>,
    %c56_328 = arith.constant 56 : index
    %c0_329 = arith.constant 0 : index
    %248 = vector.load %arg11[%c56_328, %c0_329] : memref<128x16xf32, #tpu.memory_space<vmem>>, vector<72x16xf32>
    %c0_330 = arith.constant 0 : index
    %c112_331 = arith.constant 112 : index
    %249 = vector.load %arg10[%c0_330, %c112_331] : memref<128x128xf32, #tpu.memory_space<vmem>>, vector<72x16xf32>
    tpu.vector_store %arg10[%c0_330, %c112_331], %248 {strides = array<i32>} : memref<128x128xf32, #tpu.memory_space<vmem>>, vector<72x16xf32>,
    %c3_332 = arith.constant 3 : index
    %c0_333 = arith.constant 0 : index
    %c0_334 = arith.constant 0 : index
    %250 = vector.load %arg3[%c3_332, %c0_333, %c0_334] : memref<6x128x64xf32, #tpu.memory_space<vmem>>, vector<1x128x64xf32>
    %251 = vector.shape_cast %250 : vector<1x128x64xf32> to vector<128x64xf32>
    %c0_335 = arith.constant 0 : index
    %c0_336 = arith.constant 0 : index
    %252 = vector.load %arg10[%c0_335, %c0_336] : memref<128x128xf32, #tpu.memory_space<vmem>>, vector<128x128xf32>
    %cst_337 = arith.constant dense<0.000000e+00> : vector<128x64xf32>
    %253 = tpu.matmul %252, %251, %cst_337 {dimension_numbers = #tpu.dot_dimension_numbers<[1], [0], [0], [1], [0, 0, 1, 1], [], []>} : vector<128x128xf32>, vector<128x64xf32>, vector<128x64xf32> -> vector<128x64xf32>
    %c4_338 = arith.constant 4 : index
    %c0_339 = arith.constant 0 : index
    %c0_340 = arith.constant 0 : index
    %254 = vector.load %arg4[%c4_338, %c0_339, %c0_340] : memref<7x1x64xf32, #tpu.memory_space<vmem>>, vector<1x1x64xf32>
    %255 = vector.shape_cast %254 : vector<1x1x64xf32> to vector<1x64xf32>
    %256 = vector.broadcast %255 : vector<1x64xf32> to vector<128x64xf32>
    %257 = arith.addf %253, %256 : vector<128x64xf32>
    %cst_341 = arith.constant 0.000000e+00 : f32
    %258 = vector.broadcast %cst_341 : f32 to vector<128x64xf32>
    %259 = arith.maximumf %257, %258 : vector<128x64xf32>
    %c4_342 = arith.constant 4 : index
    %c0_343 = arith.constant 0 : index
    %c0_344 = arith.constant 0 : index
    %260 = vector.load %arg5[%c4_342, %c0_343, %c0_344] : memref<7x64x16xf32, #tpu.memory_space<vmem>>, vector<1x64x16xf32>
    %261 = vector.shape_cast %260 : vector<1x64x16xf32> to vector<64x16xf32>
    %cst_345 = arith.constant dense<0.000000e+00> : vector<128x16xf32>
    %262 = tpu.matmul %259, %261, %cst_345 {dimension_numbers = #tpu.dot_dimension_numbers<[1], [0], [0], [1], [0, 0, 1, 1], [], []>} : vector<128x64xf32>, vector<64x16xf32>, vector<128x16xf32> -> vector<128x16xf32>
    %c4_346 = arith.constant 4 : index
    %c0_347 = arith.constant 0 : index
    %c0_348 = arith.constant 0 : index
    %263 = vector.load %arg6[%c4_346, %c0_347, %c0_348] : memref<7x1x16xf32, #tpu.memory_space<vmem>>, vector<1x1x16xf32>
    %264 = vector.shape_cast %263 : vector<1x1x16xf32> to vector<1x16xf32>
    %265 = vector.broadcast %264 : vector<1x16xf32> to vector<128x16xf32>
    %266 = arith.addf %262, %265 : vector<128x16xf32>
    %c0_349 = arith.constant 0 : index
    %c0_350 = arith.constant 0 : index
    %267 = vector.load %arg11[%c0_349, %c0_350] : memref<128x16xf32, #tpu.memory_space<vmem>>, vector<128x16xf32>
    tpu.vector_store %arg11[%c0_349, %c0_350], %266 {strides = array<i32>} : memref<128x16xf32, #tpu.memory_space<vmem>>, vector<128x16xf32>,
    %c64_351 = arith.constant 64 : index
    %c0_352 = arith.constant 0 : index
    %268 = vector.load %arg7[%c64_351, %c0_352] : memref<112x4xf32, #tpu.memory_space<vmem>>, vector<16x4xf32>
    %cst_353 = arith.constant dense<0.000000e+00> : vector<128x4xf32>
    %269 = tpu.matmul %266, %268, %cst_353 {dimension_numbers = #tpu.dot_dimension_numbers<[1], [0], [0], [1], [0, 0, 1, 1], [], []>} : vector<128x16xf32>, vector<16x4xf32>, vector<128x4xf32> -> vector<128x4xf32>
    %270 = arith.addf %217, %269 : vector<128x4xf32>
    %cst_354 = arith.constant 0.000000e+00 : f32
    %271 = vector.broadcast %cst_354 : f32 to vector<112x16xf32>
    %c0_355 = arith.constant 0 : index
    %c0_356 = arith.constant 0 : index
    %272 = vector.load %arg10[%c0_355, %c0_356] : memref<128x128xf32, #tpu.memory_space<vmem>>, vector<112x16xf32>
    tpu.vector_store %arg10[%c0_355, %c0_356], %271 {strides = array<i32>} : memref<128x128xf32, #tpu.memory_space<vmem>>, vector<112x16xf32>,
    %c0_357 = arith.constant 0 : index
    %c0_358 = arith.constant 0 : index
    %273 = vector.load %arg11[%c0_357, %c0_358] : memref<128x16xf32, #tpu.memory_space<vmem>>, vector<16x16xf32>
    %c112_359 = arith.constant 112 : index
    %c0_360 = arith.constant 0 : index
    %274 = vector.load %arg10[%c112_359, %c0_360] : memref<128x128xf32, #tpu.memory_space<vmem>>, vector<16x16xf32>
    tpu.vector_store %arg10[%c112_359, %c0_360], %273 {strides = array<i32>} : memref<128x128xf32, #tpu.memory_space<vmem>>, vector<16x16xf32>,
    %cst_361 = arith.constant 0.000000e+00 : f32
    %275 = vector.broadcast %cst_361 : f32 to vector<80x16xf32>
    %c0_362 = arith.constant 0 : index
    %c16_363 = arith.constant 16 : index
    %276 = vector.load %arg10[%c0_362, %c16_363] : memref<128x128xf32, #tpu.memory_space<vmem>>, vector<80x16xf32>
    tpu.vector_store %arg10[%c0_362, %c16_363], %275 {strides = array<i32>} : memref<128x128xf32, #tpu.memory_space<vmem>>, vector<80x16xf32>,
    %c0_364 = arith.constant 0 : index
    %c0_365 = arith.constant 0 : index
    %277 = vector.load %arg11[%c0_364, %c0_365] : memref<128x16xf32, #tpu.memory_space<vmem>>, vector<48x16xf32>
    %c80_366 = arith.constant 80 : index
    %c16_367 = arith.constant 16 : index
    %278 = vector.load %arg10[%c80_366, %c16_367] : memref<128x128xf32, #tpu.memory_space<vmem>>, vector<48x16xf32>
    tpu.vector_store %arg10[%c80_366, %c16_367], %277 {strides = array<i32>} : memref<128x128xf32, #tpu.memory_space<vmem>>, vector<48x16xf32>,
    %cst_368 = arith.constant 0.000000e+00 : f32
    %279 = vector.broadcast %cst_368 : f32 to vector<48x16xf32>
    %c0_369 = arith.constant 0 : index
    %c32_370 = arith.constant 32 : index
    %280 = vector.load %arg10[%c0_369, %c32_370] : memref<128x128xf32, #tpu.memory_space<vmem>>, vector<48x16xf32>
    tpu.vector_store %arg10[%c0_369, %c32_370], %279 {strides = array<i32>} : memref<128x128xf32, #tpu.memory_space<vmem>>, vector<48x16xf32>,
    %c0_371 = arith.constant 0 : index
    %c0_372 = arith.constant 0 : index
    %281 = vector.load %arg11[%c0_371, %c0_372] : memref<128x16xf32, #tpu.memory_space<vmem>>, vector<80x16xf32>
    %c48_373 = arith.constant 48 : index
    %c32_374 = arith.constant 32 : index
    %282 = vector.load %arg10[%c48_373, %c32_374] : memref<128x128xf32, #tpu.memory_space<vmem>>, vector<80x16xf32>
    tpu.vector_store %arg10[%c48_373, %c32_374], %281 {strides = array<i32>} : memref<128x128xf32, #tpu.memory_space<vmem>>, vector<80x16xf32>,
    %cst_375 = arith.constant 0.000000e+00 : f32
    %283 = vector.broadcast %cst_375 : f32 to vector<16x16xf32>
    %c0_376 = arith.constant 0 : index
    %c48_377 = arith.constant 48 : index
    %284 = vector.load %arg10[%c0_376, %c48_377] : memref<128x128xf32, #tpu.memory_space<vmem>>, vector<16x16xf32>
    tpu.vector_store %arg10[%c0_376, %c48_377], %283 {strides = array<i32>} : memref<128x128xf32, #tpu.memory_space<vmem>>, vector<16x16xf32>,
    %c0_378 = arith.constant 0 : index
    %c0_379 = arith.constant 0 : index
    %285 = vector.load %arg11[%c0_378, %c0_379] : memref<128x16xf32, #tpu.memory_space<vmem>>, vector<112x16xf32>
    %c16_380 = arith.constant 16 : index
    %c48_381 = arith.constant 48 : index
    %286 = vector.load %arg10[%c16_380, %c48_381] : memref<128x128xf32, #tpu.memory_space<vmem>>, vector<112x16xf32>
    tpu.vector_store %arg10[%c16_380, %c48_381], %285 {strides = array<i32>} : memref<128x128xf32, #tpu.memory_space<vmem>>, vector<112x16xf32>,
    %cst_382 = arith.constant 0.000000e+00 : f32
    %287 = vector.broadcast %cst_382 : f32 to vector<16x16xf32>
    %c112_383 = arith.constant 112 : index
    %c64_384 = arith.constant 64 : index
    %288 = vector.load %arg10[%c112_383, %c64_384] : memref<128x128xf32, #tpu.memory_space<vmem>>, vector<16x16xf32>
    tpu.vector_store %arg10[%c112_383, %c64_384], %287 {strides = array<i32>} : memref<128x128xf32, #tpu.memory_space<vmem>>, vector<16x16xf32>,
    %c16_385 = arith.constant 16 : index
    %c0_386 = arith.constant 0 : index
    %289 = vector.load %arg11[%c16_385, %c0_386] : memref<128x16xf32, #tpu.memory_space<vmem>>, vector<112x16xf32>
    %c0_387 = arith.constant 0 : index
    %c64_388 = arith.constant 64 : index
    %290 = vector.load %arg10[%c0_387, %c64_388] : memref<128x128xf32, #tpu.memory_space<vmem>>, vector<112x16xf32>
    tpu.vector_store %arg10[%c0_387, %c64_388], %289 {strides = array<i32>} : memref<128x128xf32, #tpu.memory_space<vmem>>, vector<112x16xf32>,
    %cst_389 = arith.constant 0.000000e+00 : f32
    %291 = vector.broadcast %cst_389 : f32 to vector<48x16xf32>
    %c80_390 = arith.constant 80 : index
    %c80_391 = arith.constant 80 : index
    %292 = vector.load %arg10[%c80_390, %c80_391] : memref<128x128xf32, #tpu.memory_space<vmem>>, vector<48x16xf32>
    tpu.vector_store %arg10[%c80_390, %c80_391], %291 {strides = array<i32>} : memref<128x128xf32, #tpu.memory_space<vmem>>, vector<48x16xf32>,
    %c48_392 = arith.constant 48 : index
    %c0_393 = arith.constant 0 : index
    %293 = vector.load %arg11[%c48_392, %c0_393] : memref<128x16xf32, #tpu.memory_space<vmem>>, vector<80x16xf32>
    %c0_394 = arith.constant 0 : index
    %c80_395 = arith.constant 80 : index
    %294 = vector.load %arg10[%c0_394, %c80_395] : memref<128x128xf32, #tpu.memory_space<vmem>>, vector<80x16xf32>
    tpu.vector_store %arg10[%c0_394, %c80_395], %293 {strides = array<i32>} : memref<128x128xf32, #tpu.memory_space<vmem>>, vector<80x16xf32>,
    %cst_396 = arith.constant 0.000000e+00 : f32
    %295 = vector.broadcast %cst_396 : f32 to vector<80x16xf32>
    %c48_397 = arith.constant 48 : index
    %c96_398 = arith.constant 96 : index
    %296 = vector.load %arg10[%c48_397, %c96_398] : memref<128x128xf32, #tpu.memory_space<vmem>>, vector<80x16xf32>
    tpu.vector_store %arg10[%c48_397, %c96_398], %295 {strides = array<i32>} : memref<128x128xf32, #tpu.memory_space<vmem>>, vector<80x16xf32>,
    %c80_399 = arith.constant 80 : index
    %c0_400 = arith.constant 0 : index
    %297 = vector.load %arg11[%c80_399, %c0_400] : memref<128x16xf32, #tpu.memory_space<vmem>>, vector<48x16xf32>
    %c0_401 = arith.constant 0 : index
    %c96_402 = arith.constant 96 : index
    %298 = vector.load %arg10[%c0_401, %c96_402] : memref<128x128xf32, #tpu.memory_space<vmem>>, vector<48x16xf32>
    tpu.vector_store %arg10[%c0_401, %c96_402], %297 {strides = array<i32>} : memref<128x128xf32, #tpu.memory_space<vmem>>, vector<48x16xf32>,
    %cst_403 = arith.constant 0.000000e+00 : f32
    %299 = vector.broadcast %cst_403 : f32 to vector<112x16xf32>
    %c16_404 = arith.constant 16 : index
    %c112_405 = arith.constant 112 : index
    %300 = vector.load %arg10[%c16_404, %c112_405] : memref<128x128xf32, #tpu.memory_space<vmem>>, vector<112x16xf32>
    tpu.vector_store %arg10[%c16_404, %c112_405], %299 {strides = array<i32>} : memref<128x128xf32, #tpu.memory_space<vmem>>, vector<112x16xf32>,
    %c112_406 = arith.constant 112 : index
    %c0_407 = arith.constant 0 : index
    %301 = vector.load %arg11[%c112_406, %c0_407] : memref<128x16xf32, #tpu.memory_space<vmem>>, vector<16x16xf32>
    %c0_408 = arith.constant 0 : index
    %c112_409 = arith.constant 112 : index
    %302 = vector.load %arg10[%c0_408, %c112_409] : memref<128x128xf32, #tpu.memory_space<vmem>>, vector<16x16xf32>
    tpu.vector_store %arg10[%c0_408, %c112_409], %301 {strides = array<i32>} : memref<128x128xf32, #tpu.memory_space<vmem>>, vector<16x16xf32>,
    %c4_410 = arith.constant 4 : index
    %c0_411 = arith.constant 0 : index
    %c0_412 = arith.constant 0 : index
    %303 = vector.load %arg3[%c4_410, %c0_411, %c0_412] : memref<6x128x64xf32, #tpu.memory_space<vmem>>, vector<1x128x64xf32>
    %304 = vector.shape_cast %303 : vector<1x128x64xf32> to vector<128x64xf32>
    %c0_413 = arith.constant 0 : index
    %c0_414 = arith.constant 0 : index
    %305 = vector.load %arg10[%c0_413, %c0_414] : memref<128x128xf32, #tpu.memory_space<vmem>>, vector<128x128xf32>
    %cst_415 = arith.constant dense<0.000000e+00> : vector<128x64xf32>
    %306 = tpu.matmul %305, %304, %cst_415 {dimension_numbers = #tpu.dot_dimension_numbers<[1], [0], [0], [1], [0, 0, 1, 1], [], []>} : vector<128x128xf32>, vector<128x64xf32>, vector<128x64xf32> -> vector<128x64xf32>
    %c5_416 = arith.constant 5 : index
    %c0_417 = arith.constant 0 : index
    %c0_418 = arith.constant 0 : index
    %307 = vector.load %arg4[%c5_416, %c0_417, %c0_418] : memref<7x1x64xf32, #tpu.memory_space<vmem>>, vector<1x1x64xf32>
    %308 = vector.shape_cast %307 : vector<1x1x64xf32> to vector<1x64xf32>
    %309 = vector.broadcast %308 : vector<1x64xf32> to vector<128x64xf32>
    %310 = arith.addf %306, %309 : vector<128x64xf32>
    %cst_419 = arith.constant 0.000000e+00 : f32
    %311 = vector.broadcast %cst_419 : f32 to vector<128x64xf32>
    %312 = arith.maximumf %310, %311 : vector<128x64xf32>
    %c5_420 = arith.constant 5 : index
    %c0_421 = arith.constant 0 : index
    %c0_422 = arith.constant 0 : index
    %313 = vector.load %arg5[%c5_420, %c0_421, %c0_422] : memref<7x64x16xf32, #tpu.memory_space<vmem>>, vector<1x64x16xf32>
    %314 = vector.shape_cast %313 : vector<1x64x16xf32> to vector<64x16xf32>
    %cst_423 = arith.constant dense<0.000000e+00> : vector<128x16xf32>
    %315 = tpu.matmul %312, %314, %cst_423 {dimension_numbers = #tpu.dot_dimension_numbers<[1], [0], [0], [1], [0, 0, 1, 1], [], []>} : vector<128x64xf32>, vector<64x16xf32>, vector<128x16xf32> -> vector<128x16xf32>
    %c5_424 = arith.constant 5 : index
    %c0_425 = arith.constant 0 : index
    %c0_426 = arith.constant 0 : index
    %316 = vector.load %arg6[%c5_424, %c0_425, %c0_426] : memref<7x1x16xf32, #tpu.memory_space<vmem>>, vector<1x1x16xf32>
    %317 = vector.shape_cast %316 : vector<1x1x16xf32> to vector<1x16xf32>
    %318 = vector.broadcast %317 : vector<1x16xf32> to vector<128x16xf32>
    %319 = arith.addf %315, %318 : vector<128x16xf32>
    %c0_427 = arith.constant 0 : index
    %c0_428 = arith.constant 0 : index
    %320 = vector.load %arg11[%c0_427, %c0_428] : memref<128x16xf32, #tpu.memory_space<vmem>>, vector<128x16xf32>
    tpu.vector_store %arg11[%c0_427, %c0_428], %319 {strides = array<i32>} : memref<128x16xf32, #tpu.memory_space<vmem>>, vector<128x16xf32>,
    %c80_429 = arith.constant 80 : index
    %c0_430 = arith.constant 0 : index
    %321 = vector.load %arg7[%c80_429, %c0_430] : memref<112x4xf32, #tpu.memory_space<vmem>>, vector<16x4xf32>
    %cst_431 = arith.constant dense<0.000000e+00> : vector<128x4xf32>
    %322 = tpu.matmul %319, %321, %cst_431 {dimension_numbers = #tpu.dot_dimension_numbers<[1], [0], [0], [1], [0, 0, 1, 1], [], []>} : vector<128x16xf32>, vector<16x4xf32>, vector<128x4xf32> -> vector<128x4xf32>
    %323 = arith.addf %270, %322 : vector<128x4xf32>
    %cst_432 = arith.constant 0.000000e+00 : f32
    %324 = vector.broadcast %cst_432 : f32 to vector<128x16xf32>
    %c0_433 = arith.constant 0 : index
    %c0_434 = arith.constant 0 : index
    %325 = vector.load %arg10[%c0_433, %c0_434] : memref<128x128xf32, #tpu.memory_space<vmem>>, vector<128x16xf32>
    tpu.vector_store %arg10[%c0_433, %c0_434], %324 {strides = array<i32>} : memref<128x128xf32, #tpu.memory_space<vmem>>, vector<128x16xf32>,
    %cst_435 = arith.constant 0.000000e+00 : f32
    %326 = vector.broadcast %cst_435 : f32 to vector<128x16xf32>
    %c0_436 = arith.constant 0 : index
    %c16_437 = arith.constant 16 : index
    %327 = vector.load %arg10[%c0_436, %c16_437] : memref<128x128xf32, #tpu.memory_space<vmem>>, vector<128x16xf32>
    tpu.vector_store %arg10[%c0_436, %c16_437], %326 {strides = array<i32>} : memref<128x128xf32, #tpu.memory_space<vmem>>, vector<128x16xf32>,
    %cst_438 = arith.constant 0.000000e+00 : f32
    %328 = vector.broadcast %cst_438 : f32 to vector<96x16xf32>
    %c0_439 = arith.constant 0 : index
    %c32_440 = arith.constant 32 : index
    %329 = vector.load %arg10[%c0_439, %c32_440] : memref<128x128xf32, #tpu.memory_space<vmem>>, vector<96x16xf32>
    tpu.vector_store %arg10[%c0_439, %c32_440], %328 {strides = array<i32>} : memref<128x128xf32, #tpu.memory_space<vmem>>, vector<96x16xf32>,
    %c0_441 = arith.constant 0 : index
    %c0_442 = arith.constant 0 : index
    %330 = vector.load %arg11[%c0_441, %c0_442] : memref<128x16xf32, #tpu.memory_space<vmem>>, vector<32x16xf32>
    %c96_443 = arith.constant 96 : index
    %c32_444 = arith.constant 32 : index
    %331 = vector.load %arg10[%c96_443, %c32_444] : memref<128x128xf32, #tpu.memory_space<vmem>>, vector<32x16xf32>
    tpu.vector_store %arg10[%c96_443, %c32_444], %330 {strides = array<i32>} : memref<128x128xf32, #tpu.memory_space<vmem>>, vector<32x16xf32>,
    %cst_445 = arith.constant 0.000000e+00 : f32
    %332 = vector.broadcast %cst_445 : f32 to vector<32x16xf32>
    %c0_446 = arith.constant 0 : index
    %c48_447 = arith.constant 48 : index
    %333 = vector.load %arg10[%c0_446, %c48_447] : memref<128x128xf32, #tpu.memory_space<vmem>>, vector<32x16xf32>
    tpu.vector_store %arg10[%c0_446, %c48_447], %332 {strides = array<i32>} : memref<128x128xf32, #tpu.memory_space<vmem>>, vector<32x16xf32>,
    %c0_448 = arith.constant 0 : index
    %c0_449 = arith.constant 0 : index
    %334 = vector.load %arg11[%c0_448, %c0_449] : memref<128x16xf32, #tpu.memory_space<vmem>>, vector<96x16xf32>
    %c32_450 = arith.constant 32 : index
    %c48_451 = arith.constant 48 : index
    %335 = vector.load %arg10[%c32_450, %c48_451] : memref<128x128xf32, #tpu.memory_space<vmem>>, vector<96x16xf32>
    tpu.vector_store %arg10[%c32_450, %c48_451], %334 {strides = array<i32>} : memref<128x128xf32, #tpu.memory_space<vmem>>, vector<96x16xf32>,
    %cst_452 = arith.constant 0.000000e+00 : f32
    %336 = vector.broadcast %cst_452 : f32 to vector<32x16xf32>
    %c96_453 = arith.constant 96 : index
    %c64_454 = arith.constant 64 : index
    %337 = vector.load %arg10[%c96_453, %c64_454] : memref<128x128xf32, #tpu.memory_space<vmem>>, vector<32x16xf32>
    tpu.vector_store %arg10[%c96_453, %c64_454], %336 {strides = array<i32>} : memref<128x128xf32, #tpu.memory_space<vmem>>, vector<32x16xf32>,
    %c32_455 = arith.constant 32 : index
    %c0_456 = arith.constant 0 : index
    %338 = vector.load %arg11[%c32_455, %c0_456] : memref<128x16xf32, #tpu.memory_space<vmem>>, vector<96x16xf32>
    %c0_457 = arith.constant 0 : index
    %c64_458 = arith.constant 64 : index
    %339 = vector.load %arg10[%c0_457, %c64_458] : memref<128x128xf32, #tpu.memory_space<vmem>>, vector<96x16xf32>
    tpu.vector_store %arg10[%c0_457, %c64_458], %338 {strides = array<i32>} : memref<128x128xf32, #tpu.memory_space<vmem>>, vector<96x16xf32>,
    %cst_459 = arith.constant 0.000000e+00 : f32
    %340 = vector.broadcast %cst_459 : f32 to vector<96x16xf32>
    %c32_460 = arith.constant 32 : index
    %c80_461 = arith.constant 80 : index
    %341 = vector.load %arg10[%c32_460, %c80_461] : memref<128x128xf32, #tpu.memory_space<vmem>>, vector<96x16xf32>
    tpu.vector_store %arg10[%c32_460, %c80_461], %340 {strides = array<i32>} : memref<128x128xf32, #tpu.memory_space<vmem>>, vector<96x16xf32>,
    %c96_462 = arith.constant 96 : index
    %c0_463 = arith.constant 0 : index
    %342 = vector.load %arg11[%c96_462, %c0_463] : memref<128x16xf32, #tpu.memory_space<vmem>>, vector<32x16xf32>
    %c0_464 = arith.constant 0 : index
    %c80_465 = arith.constant 80 : index
    %343 = vector.load %arg10[%c0_464, %c80_465] : memref<128x128xf32, #tpu.memory_space<vmem>>, vector<32x16xf32>
    tpu.vector_store %arg10[%c0_464, %c80_465], %342 {strides = array<i32>} : memref<128x128xf32, #tpu.memory_space<vmem>>, vector<32x16xf32>,
    %cst_466 = arith.constant 0.000000e+00 : f32
    %344 = vector.broadcast %cst_466 : f32 to vector<128x16xf32>
    %c0_467 = arith.constant 0 : index
    %c96_468 = arith.constant 96 : index
    %345 = vector.load %arg10[%c0_467, %c96_468] : memref<128x128xf32, #tpu.memory_space<vmem>>, vector<128x16xf32>
    tpu.vector_store %arg10[%c0_467, %c96_468], %344 {strides = array<i32>} : memref<128x128xf32, #tpu.memory_space<vmem>>, vector<128x16xf32>,
    %cst_469 = arith.constant 0.000000e+00 : f32
    %346 = vector.broadcast %cst_469 : f32 to vector<128x16xf32>
    %c0_470 = arith.constant 0 : index
    %c112_471 = arith.constant 112 : index
    %347 = vector.load %arg10[%c0_470, %c112_471] : memref<128x128xf32, #tpu.memory_space<vmem>>, vector<128x16xf32>
    tpu.vector_store %arg10[%c0_470, %c112_471], %346 {strides = array<i32>} : memref<128x128xf32, #tpu.memory_space<vmem>>, vector<128x16xf32>,
    %c5_472 = arith.constant 5 : index
    %c0_473 = arith.constant 0 : index
    %c0_474 = arith.constant 0 : index
    %348 = vector.load %arg3[%c5_472, %c0_473, %c0_474] : memref<6x128x64xf32, #tpu.memory_space<vmem>>, vector<1x128x64xf32>
    %349 = vector.shape_cast %348 : vector<1x128x64xf32> to vector<128x64xf32>
    %c0_475 = arith.constant 0 : index
    %c0_476 = arith.constant 0 : index
    %350 = vector.load %arg10[%c0_475, %c0_476] : memref<128x128xf32, #tpu.memory_space<vmem>>, vector<128x128xf32>
    %cst_477 = arith.constant dense<0.000000e+00> : vector<128x64xf32>
    %351 = tpu.matmul %350, %349, %cst_477 {dimension_numbers = #tpu.dot_dimension_numbers<[1], [0], [0], [1], [0, 0, 1, 1], [], []>} : vector<128x128xf32>, vector<128x64xf32>, vector<128x64xf32> -> vector<128x64xf32>
    %c6_478 = arith.constant 6 : index
    %c0_479 = arith.constant 0 : index
    %c0_480 = arith.constant 0 : index
    %352 = vector.load %arg4[%c6_478, %c0_479, %c0_480] : memref<7x1x64xf32, #tpu.memory_space<vmem>>, vector<1x1x64xf32>
    %353 = vector.shape_cast %352 : vector<1x1x64xf32> to vector<1x64xf32>
    %354 = vector.broadcast %353 : vector<1x64xf32> to vector<128x64xf32>
    %355 = arith.addf %351, %354 : vector<128x64xf32>
    %cst_481 = arith.constant 0.000000e+00 : f32
    %356 = vector.broadcast %cst_481 : f32 to vector<128x64xf32>
    %357 = arith.maximumf %355, %356 : vector<128x64xf32>
    %c6_482 = arith.constant 6 : index
    %c0_483 = arith.constant 0 : index
    %c0_484 = arith.constant 0 : index
    %358 = vector.load %arg5[%c6_482, %c0_483, %c0_484] : memref<7x64x16xf32, #tpu.memory_space<vmem>>, vector<1x64x16xf32>
    %359 = vector.shape_cast %358 : vector<1x64x16xf32> to vector<64x16xf32>
    %cst_485 = arith.constant dense<0.000000e+00> : vector<128x16xf32>
    %360 = tpu.matmul %357, %359, %cst_485 {dimension_numbers = #tpu.dot_dimension_numbers<[1], [0], [0], [1], [0, 0, 1, 1], [], []>} : vector<128x64xf32>, vector<64x16xf32>, vector<128x16xf32> -> vector<128x16xf32>
    %c6_486 = arith.constant 6 : index
    %c0_487 = arith.constant 0 : index
    %c0_488 = arith.constant 0 : index
    %361 = vector.load %arg6[%c6_486, %c0_487, %c0_488] : memref<7x1x16xf32, #tpu.memory_space<vmem>>, vector<1x1x16xf32>
    %362 = vector.shape_cast %361 : vector<1x1x16xf32> to vector<1x16xf32>
    %363 = vector.broadcast %362 : vector<1x16xf32> to vector<128x16xf32>
    %364 = arith.addf %360, %363 : vector<128x16xf32>
    %c96_489 = arith.constant 96 : index
    %c0_490 = arith.constant 0 : index
    %365 = vector.load %arg7[%c96_489, %c0_490] : memref<112x4xf32, #tpu.memory_space<vmem>>, vector<16x4xf32>
    %cst_491 = arith.constant dense<0.000000e+00> : vector<128x4xf32>
    %366 = tpu.matmul %364, %365, %cst_491 {dimension_numbers = #tpu.dot_dimension_numbers<[1], [0], [0], [1], [0, 0, 1, 1], [], []>} : vector<128x16xf32>, vector<16x4xf32>, vector<128x4xf32> -> vector<128x4xf32>
    %367 = arith.addf %323, %366 : vector<128x4xf32>
    %c0_492 = arith.constant 0 : index
    %c0_493 = arith.constant 0 : index
    %368 = vector.load %arg12[%c0_492, %c0_493] : memref<128x4xf32, #tpu.memory_space<vmem>>, vector<128x4xf32>
    tpu.vector_store %arg12[%c0_492, %c0_493], %367 {strides = array<i32>} : memref<128x4xf32, #tpu.memory_space<vmem>>, vector<128x4xf32>,
    %c0_494 = arith.constant 0 : index
    %c0_495 = arith.constant 0 : index
    %369 = tpu.strided_load %arg12[%c0_494, %c0_495] {strides = array<i32: 4, 1>} : memref<128x4xf32, #tpu.memory_space<vmem>>, vector<32x4xf32>
    %c1_496 = arith.constant 1 : index
    %c0_497 = arith.constant 0 : index
    %370 = tpu.strided_load %arg12[%c1_496, %c0_497] {strides = array<i32: 4, 1>} : memref<128x4xf32, #tpu.memory_space<vmem>>, vector<32x4xf32>
    %371 = arith.addf %369, %370 : vector<32x4xf32>
    %c2_498 = arith.constant 2 : index
    %c0_499 = arith.constant 0 : index
    %372 = tpu.strided_load %arg12[%c2_498, %c0_499] {strides = array<i32: 4, 1>} : memref<128x4xf32, #tpu.memory_space<vmem>>, vector<32x4xf32>
    %373 = arith.addf %371, %372 : vector<32x4xf32>
    %c3_500 = arith.constant 3 : index
    %c0_501 = arith.constant 0 : index
    %374 = tpu.strided_load %arg12[%c3_500, %c0_501] {strides = array<i32: 4, 1>} : memref<128x4xf32, #tpu.memory_space<vmem>>, vector<32x4xf32>
    %375 = arith.addf %373, %374 : vector<32x4xf32>
    %cst_502 = arith.constant 2.500000e-01 : f32
    %376 = vector.broadcast %cst_502 : f32 to vector<32x4xf32>
    %377 = arith.mulf %375, %376 : vector<32x4xf32>
    %c0_503 = arith.constant 0 : index
    %c0_504 = arith.constant 0 : index
    %378 = vector.load %arg8[%c0_503, %c0_504] : memref<1x4xf32, #tpu.memory_space<vmem>>, vector<1x4xf32>
    %379 = vector.broadcast %378 : vector<1x4xf32> to vector<32x4xf32>
    %380 = arith.addf %377, %379 : vector<32x4xf32>
    %c0_505 = arith.constant 0 : index
    %c0_506 = arith.constant 0 : index
    %c0_507 = arith.constant 0 : index
    %381 = vector.load %arg9[%c0_505, %c0_506, %c0_507] : memref<1x32x4xf32, #tpu.memory_space<vmem>>, vector<1x32x4xf32>
    %382 = vector.shape_cast %381 : vector<1x32x4xf32> to vector<32x4xf32>
    %383 = vector.shape_cast %380 : vector<32x4xf32> to vector<1x32x4xf32>
    tpu.vector_store %arg9[%c0_505, %c0_506, %c0_507], %383 {strides = array<i32>} : memref<1x32x4xf32, #tpu.memory_space<vmem>>, vector<1x32x4xf32>,
    return
  }
  func.func @transform_0(%arg0: i32) -> (i32, i32, i32) {
    %c0_i32 = arith.constant 0 : i32
    %c0_i32_0 = arith.constant 0 : i32
    %c0_i32_1 = arith.constant 0 : i32
    return %arg0, %c0_i32, %c0_i32_0 : i32, i32, i32
  }
  func.func @transform_1(%arg0: i32) -> (i32, i32) {
    %c0_i32 = arith.constant 0 : i32
    %c0_i32_0 = arith.constant 0 : i32
    %c0_i32_1 = arith.constant 0 : i32
    return %c0_i32, %c0_i32_0 : i32, i32
  }
  func.func @transform_2(%arg0: i32) -> (i32, i32, i32) {
    %c0_i32 = arith.constant 0 : i32
    %c0_i32_0 = arith.constant 0 : i32
    %c0_i32_1 = arith.constant 0 : i32
    %c0_i32_2 = arith.constant 0 : i32
    return %c0_i32, %c0_i32_0, %c0_i32_1 : i32, i32, i32
  }
  func.func @transform_3(%arg0: i32) -> (i32, i32, i32) {
    %c0_i32 = arith.constant 0 : i32
    %c0_i32_0 = arith.constant 0 : i32
    %c0_i32_1 = arith.constant 0 : i32
    %c0_i32_2 = arith.constant 0 : i32
    return %c0_i32, %c0_i32_0, %c0_i32_1 : i32, i32, i32
  }
  func.func @transform_4(%arg0: i32) -> (i32, i32, i32) {
    %c0_i32 = arith.constant 0 : i32
    %c0_i32_0 = arith.constant 0 : i32
    %c0_i32_1 = arith.constant 0 : i32
    %c0_i32_2 = arith.constant 0 : i32
    return %c0_i32, %c0_i32_0, %c0_i32_1 : i32, i32, i32
  }
  func.func @transform_5(%arg0: i32) -> (i32, i32, i32) {
    %c0_i32 = arith.constant 0 : i32
    %c0_i32_0 = arith.constant 0 : i32
    %c0_i32_1 = arith.constant 0 : i32
    %c0_i32_2 = arith.constant 0 : i32
    return %c0_i32, %c0_i32_0, %c0_i32_1 : i32, i32, i32
  }
  func.func @transform_6(%arg0: i32) -> (i32, i32) {
    %c0_i32 = arith.constant 0 : i32
    %c0_i32_0 = arith.constant 0 : i32
    %c0_i32_1 = arith.constant 0 : i32
    return %c0_i32, %c0_i32_0 : i32, i32
  }
  func.func @transform_7(%arg0: i32) -> (i32, i32) {
    %c0_i32 = arith.constant 0 : i32
    %c0_i32_0 = arith.constant 0 : i32
    %c0_i32_1 = arith.constant 0 : i32
    return %c0_i32, %c0_i32_0 : i32, i32
  }
  func.func @transform_8(%arg0: i32) -> (i32, i32, i32) {
    %c0_i32 = arith.constant 0 : i32
    %c0_i32_0 = arith.constant 0 : i32
    %c0_i32_1 = arith.constant 0 : i32
    return %arg0, %c0_i32, %c0_i32_0 : i32, i32, i32
  }
}

</mosaic_0001>

<llo_original>
// kernel: tpu_custom_call.1
$region0: #{tpu_custom_call.1}
  #allocation0 [shape = 'u32[]', space=smem, size = 0x4, offset = 0x4, fixed_abs, tag = 'smem constant byte address 0x4 - core index']
  #allocation1 [shape = 'u32[144,128]{1,0:T(1,128)}', space=vmem, size = 0x12000, scoped, tag = 'internal scratch']
  #allocation2 [shape = 'f32[128,128]{1,0:T(8,128)}', space=vmem, size = 0x10000, scoped, tag = 'scratch operand']
  #allocation3 [shape = 'f32[128,16]{1,0:T(8,128)}', space=vmem, size = 0x10000, scoped, tag = 'scratch operand']
  #allocation4 [shape = 'f32[128,4]{1,0:T(8,128)}', space=vmem, size = 0x10000, scoped, tag = 'scratch operand']
  %s0 = inlined_call_operand.vmem [shape: f32[2,128,4], index: 0, kind: input, shape index: {}]
  %s1 = inlined_call_operand.vmem [shape: f32[32,64], index: 1, kind: input, shape index: {}]
  %s2 = inlined_call_operand.vmem [shape: f32[6,128,64], index: 2, kind: input, shape index: {}]
  %s3 = inlined_call_operand.vmem [shape: f32[7,1,64], index: 3, kind: input, shape index: {}]
  %s4 = inlined_call_operand.vmem [shape: f32[7,64,16], index: 4, kind: input, shape index: {}]
  %s5 = inlined_call_operand.vmem [shape: f32[7,1,16], index: 5, kind: input, shape index: {}]
  %s6 = inlined_call_operand.vmem [shape: f32[112,4], index: 6, kind: input, shape index: {}]
  %s7 = inlined_call_operand.vmem [shape: f32[1,4], index: 7, kind: input, shape index: {}]
  %s8 = inlined_call_operand.vmem [shape: f32[2,32,4], index: 8, kind: output, shape index: {}]
  %s9 = sld [smem:[#allocation0]]
  $region65: #{tpu_custom_call.1} parent=0
    _
  %s11 = ssub.s32 1, %s9
  %s12 = scalar_select 0, %s11, %s9
  loop: start=0, step=1, limit=4
  $region2: #{tpu_custom_call.1} parent=0 // loop_pre_header
    _
  $region3: #{tpu_custom_call.1} parent=0 // loop_header
    %s14 = sphi 0, %s18
    %p15 = scmp.ge.s32.totalorder %s14, 4
    %s24 = sphi 0, %s26
    %s27 = sphi 0, %s24
    %s28 = sphi 0, %s27
    %s44 = sphi 0, %s28
    %s48 = sphi 0, %s48
    %s50 = sphi 0, %s48
    %s51 = sphi 0, %s50
    %s65 = sphi 0, %s51
    %s69 = sphi 0, %s69
    %s71 = sphi 0, %s69
    %s72 = sphi 0, %s71
    %s86 = sphi 0, %s72
    %s90 = sphi 0, %s90
    %s92 = sphi 0, %s90
    %s93 = sphi 0, %s92
    %s107 = sphi 0, %s93
    %s111 = sphi 0, %s111
    %s113 = sphi 0, %s111
    %s114 = sphi 0, %s113
    %s128 = sphi 0, %s114
    %s132 = sphi 0, %s132
    %s134 = sphi 0, %s132
    %s135 = sphi 0, %s134
    %s149 = sphi 0, %s135
    %s153 = sphi 0, %s153
    %s155 = sphi 0, %s153
    %s156 = sphi 0, %s155
    %s170 = sphi 0, %s156
    %s174 = sphi 0, %s174
    %s176 = sphi 0, %s174
    %s177 = sphi 0, %s176
    %s191 = sphi 0, %s177
    %s197 = sphi 0, %s199
    %s200 = sphi 0, %s197
    %s201 = sphi 0, %s200
    %s217 = sphi 0, %s201
  $region4: #{tpu_custom_call.1} parent=0 // loop_header_branch
    %17 = sbr.rel (%p15) target = $region8
  $region5: #{tpu_custom_call.1} parent=0 // loop_body
    %s19 = ssub.s32 %s14, 1
    %s20 = ssub.s32 %s14, 2
    %s21 = sadd.s32 %s14, 1
    %s22 = ssub.s32 %s14, %s21
    %p23 = scmp.eq.s32.totalorder %s22, 0
    %s25 = sadd.s32 %s24, 1
    %s26 = scalar_select %p23, %s24, %s25
    %p29 = pneg %p23
    %p30 = scmp.eq.s32.totalorder %s14, 1
    %p31 = por %p29, %p30
    %p32 = scmp.ne.s32.totalorder %s24, %s27
    %p33 = scmp.eq.s32.totalorder %s14, 0
    %p34 = por %p32, %p33
    %p35 = scmp.ne.s32.totalorder %s24, %s27
    %p36 = scmp.eq.s32.totalorder %s19, 1
    %p37 = por %p35, %p36
    %p38 = scmp.ne.s32.totalorder %s27, %s28
    %p39 = scmp.eq.s32.totalorder %s19, 0
    %p40 = por %p38, %p39
    %p41 = scmp.ne.s32.totalorder %s27, %s28
    %p42 = scmp.eq.s32.totalorder %s20, 1
    %p43 = por %p41, %p42
    %p45 = scmp.ne.s32.totalorder %s28, %s44
    %p46 = scmp.eq.s32.totalorder %s20, 0
    %p47 = por %p45, %p46
    %s49 = sadd.s32 %s48, 1
    %p52 = scmp.eq.s32.totalorder %s14, 1
    %p53 = scmp.ne.s32.totalorder %s48, %s50
    %p54 = scmp.eq.s32.totalorder %s14, 0
    %p55 = por %p53, %p54
    %p56 = scmp.ne.s32.totalorder %s48, %s50
    %p57 = scmp.eq.s32.totalorder %s19, 1
    %p58 = por %p56, %p57
    %p59 = scmp.ne.s32.totalorder %s50, %s51
    %p60 = scmp.eq.s32.totalorder %s19, 0
    %p61 = por %p59, %p60
    %p62 = scmp.ne.s32.totalorder %s50, %s51
    %p63 = scmp.eq.s32.totalorder %s20, 1
    %p64 = por %p62, %p63
    %p66 = scmp.ne.s32.totalorder %s51, %s65
    %p67 = scmp.eq.s32.totalorder %s20, 0
    %p68 = por %p66, %p67
    %s70 = sadd.s32 %s69, 1
    %p73 = scmp.eq.s32.totalorder %s14, 1
    %p74 = scmp.ne.s32.totalorder %s69, %s71
    %p75 = scmp.eq.s32.totalorder %s14, 0
    %p76 = por %p74, %p75
    %p77 = scmp.ne.s32.totalorder %s69, %s71
    %p78 = scmp.eq.s32.totalorder %s19, 1
    %p79 = por %p77, %p78
    %p80 = scmp.ne.s32.totalorder %s71, %s72
    %p81 = scmp.eq.s32.totalorder %s19, 0
    %p82 = por %p80, %p81
    %p83 = scmp.ne.s32.totalorder %s71, %s72
    %p84 = scmp.eq.s32.totalorder %s20, 1
    %p85 = por %p83, %p84
    %p87 = scmp.ne.s32.totalorder %s72, %s86
    %p88 = scmp.eq.s32.totalorder %s20, 0
    %p89 = por %p87, %p88
    %s91 = sadd.s32 %s90, 1
    %p94 = scmp.eq.s32.totalorder %s14, 1
    %p95 = scmp.ne.s32.totalorder %s90, %s92
    %p96 = scmp.eq.s32.totalorder %s14, 0
    %p97 = por %p95, %p96
    %p98 = scmp.ne.s32.totalorder %s90, %s92
    %p99 = scmp.eq.s32.totalorder %s19, 1
    %p100 = por %p98, %p99
    %p101 = scmp.ne.s32.totalorder %s92, %s93
    %p102 = scmp.eq.s32.totalorder %s19, 0
    %p103 = por %p101, %p102
    %p104 = scmp.ne.s32.totalorder %s92, %s93
    %p105 = scmp.eq.s32.totalorder %s20, 1
    %p106 = por %p104, %p105
    %p108 = scmp.ne.s32.totalorder %s93, %s107
    %p109 = scmp.eq.s32.totalorder %s20, 0
    %p110 = por %p108, %p109
    %s112 = sadd.s32 %s111, 1
    %p115 = scmp.eq.s32.totalorder %s14, 1
    %p116 = scmp.ne.s32.totalorder %s111, %s113
    %p117 = scmp.eq.s32.totalorder %s14, 0
    %p118 = por %p116, %p117
    %p119 = scmp.ne.s32.totalorder %s111, %s113
    %p120 = scmp.eq.s32.totalorder %s19, 1
    %p121 = por %p119, %p120
    %p122 = scmp.ne.s32.totalorder %s113, %s114
    %p123 = scmp.eq.s32.totalorder %s19, 0
    %p124 = por %p122, %p123
    %p125 = scmp.ne.s32.totalorder %s113, %s114
    %p126 = scmp.eq.s32.totalorder %s20, 1
    %p127 = por %p125, %p126
    %p129 = scmp.ne.s32.totalorder %s114, %s128
    %p130 = scmp.eq.s32.totalorder %s20, 0
    %p131 = por %p129, %p130
    %s133 = sadd.s32 %s132, 1
    %p136 = scmp.eq.s32.totalorder %s14, 1
    %p137 = scmp.ne.s32.totalorder %s132, %s134
    %p138 = scmp.eq.s32.totalorder %s14, 0
    %p139 = por %p137, %p138
    %p140 = scmp.ne.s32.totalorder %s132, %s134
    %p141 = scmp.eq.s32.totalorder %s19, 1
    %p142 = por %p140, %p141
    %p143 = scmp.ne.s32.totalorder %s134, %s135
    %p144 = scmp.eq.s32.totalorder %s19, 0
    %p145 = por %p143, %p144
    %p146 = scmp.ne.s32.totalorder %s134, %s135
    %p147 = scmp.eq.s32.totalorder %s20, 1
    %p148 = por %p146, %p147
    %p150 = scmp.ne.s32.totalorder %s135, %s149
    %p151 = scmp.eq.s32.totalorder %s20, 0
    %p152 = por %p150, %p151
    %s154 = sadd.s32 %s153, 1
    %p157 = scmp.eq.s32.totalorder %s14, 1
    %p158 = scmp.ne.s32.totalorder %s153, %s155
    %p159 = scmp.eq.s32.totalorder %s14, 0
    %p160 = por %p158, %p159
    %p161 = scmp.ne.s32.totalorder %s153, %s155
    %p162 = scmp.eq.s32.totalorder %s19, 1
    %p163 = por %p161, %p162
    %p164 = scmp.ne.s32.totalorder %s155, %s156
    %p165 = scmp.eq.s32.totalorder %s19, 0
    %p166 = por %p164, %p165
    %p167 = scmp.ne.s32.totalorder %s155, %s156
    %p168 = scmp.eq.s32.totalorder %s20, 1
    %p169 = por %p167, %p168
    %p171 = scmp.ne.s32.totalorder %s156, %s170
    %p172 = scmp.eq.s32.totalorder %s20, 0
    %p173 = por %p171, %p172
    %s175 = sadd.s32 %s174, 1
    %p178 = scmp.eq.s32.totalorder %s14, 1
    %p179 = scmp.ne.s32.totalorder %s174, %s176
    %p180 = scmp.eq.s32.totalorder %s14, 0
    %p181 = por %p179, %p180
    %p182 = scmp.ne.s32.totalorder %s174, %s176
    %p183 = scmp.eq.s32.totalorder %s19, 1
    %p184 = por %p182, %p183
    %p185 = scmp.ne.s32.totalorder %s176, %s177
    %p186 = scmp.eq.s32.totalorder %s19, 0
    %p187 = por %p185, %p186
    %p188 = scmp.ne.s32.totalorder %s176, %s177
    %p189 = scmp.eq.s32.totalorder %s20, 1
    %p190 = por %p188, %p189
    %p192 = scmp.ne.s32.totalorder %s177, %s191
    %p193 = scmp.eq.s32.totalorder %s20, 0
    %p194 = por %p192, %p193
    %s195 = ssub.s32 %s14, %s21
    %p196 = scmp.eq.s32.totalorder %s195, 0
    %s198 = sadd.s32 %s197, 1
    %s199 = scalar_select %p196, %s197, %s198
    %p202 = pneg %p196
    %p203 = scmp.eq.s32.totalorder %s14, 1
    %p204 = por %p202, %p203
    %p205 = scmp.ne.s32.totalorder %s197, %s200
    %p206 = scmp.eq.s32.totalorder %s14, 0
    %p207 = por %p205, %p206
    %p208 = scmp.ne.s32.totalorder %s197, %s200
    %p209 = scmp.eq.s32.totalorder %s19, 1
    %p210 = por %p208, %p209
    %p211 = scmp.ne.s32.totalorder %s200, %s201
    %p212 = scmp.eq.s32.totalorder %s19, 0
    %p213 = por %p211, %p212
    %p214 = scmp.ne.s32.totalorder %s200, %s201
    %p215 = scmp.eq.s32.totalorder %s20, 1
    %p216 = por %p214, %p215
    %p218 = scmp.ne.s32.totalorder %s201, %s217
    %p219 = scmp.eq.s32.totalorder %s20, 0
    %p220 = por %p218, %p219
    %p221 = scmp.le.s32.totalorder 1, %s14
    %p222 = scmp.lt.s32.totalorder %s14, 3
    %p223 = pnand %p221, %p222
    %p224 = pneg %p223
    // Predicated region
    $region9: #{tpu_custom_call.1} parent=5 // pred_check
      _
    $region10: #{tpu_custom_call.1} parent=5 // pred_check_branch
      %226 = sbr.rel (%p223) target = $region12
    $region11: #{tpu_custom_call.1} parent=5 // pred_region
      %s227 = ssub.s32 %s14, 1
      // Predicated region
      $region13: #{tpu_custom_call.1} parent=11 // pred_check
        %p228 = pneg %p61
      $region14: #{tpu_custom_call.1} parent=11 // pred_check_branch
        %230 = sbr.rel (%p228) target = $region16
      $region15: #{tpu_custom_call.1} parent=11 // pred_region
        _
      $region16: #{tpu_custom_call.1} parent=11 // pred_fallthru
        _
      // Predicated region
      $region17: #{tpu_custom_call.1} parent=11 // pred_check
        %p231 = pneg %p82
      $region18: #{tpu_custom_call.1} parent=11 // pred_check_branch
        %233 = sbr.rel (%p231) target = $region20
      $region19: #{tpu_custom_call.1} parent=11 // pred_region
        _
      $region20: #{tpu_custom_call.1} parent=11 // pred_fallthru
        _
      // Predicated region
      $region21: #{tpu_custom_call.1} parent=11 // pred_check
        %p234 = pneg %p103
      $region22: #{tpu_custom_call.1} parent=11 // pred_check_branch
        %236 = sbr.rel (%p234) target = $region24
      $region23: #{tpu_custom_call.1} parent=11 // pred_region
        _
      $region24: #{tpu_custom_call.1} parent=11 // pred_fallthru
        _
      // Predicated region
      $region25: #{tpu_custom_call.1} parent=11 // pred_check
        %p237 = pneg %p124
      $region26: #{tpu_custom_call.1} parent=11 // pred_check_branch
        %239 = sbr.rel (%p237) target = $region28
      $region27: #{tpu_custom_call.1} parent=11 // pred_region
        _
      $region28: #{tpu_custom_call.1} parent=11 // pred_fallthru
        _
      // Predicated region
      $region29: #{tpu_custom_call.1} parent=11 // pred_check
        %p240 = pneg %p145
      $region30: #{tpu_custom_call.1} parent=11 // pred_check_branch
        %242 = sbr.rel (%p240) target = $region32
      $region31: #{tpu_custom_call.1} parent=11 // pred_region
        _
      $region32: #{tpu_custom_call.1} parent=11 // pred_fallthru
        _
      // Predicated region
      $region33: #{tpu_custom_call.1} parent=11 // pred_check
        %p243 = pneg %p166
      $region34: #{tpu_custom_call.1} parent=11 // pred_check_branch
        %245 = sbr.rel (%p243) target = $region36
      $region35: #{tpu_custom_call.1} parent=11 // pred_region
        _
      $region36: #{tpu_custom_call.1} parent=11 // pred_fallthru
        _
      // Predicated region
      $region37: #{tpu_custom_call.1} parent=11 // pred_check
        %p246 = pneg %p187
      $region38: #{tpu_custom_call.1} parent=11 // pred_check_branch
        %248 = sbr.rel (%p246) target = $region40
      $region39: #{tpu_custom_call.1} parent=11 // pred_region
        _
      $region40: #{tpu_custom_call.1} parent=11 // pred_fallthru
        _
    $region12: #{tpu_custom_call.1} parent=5 // pred_fallthru
      _
    %p249 = scmp.lt.s32.totalorder %s14, 2
    // Predicated region
    $region41: #{tpu_custom_call.1} parent=5 // pred_check
      %p250 = pneg %p249
    $region42: #{tpu_custom_call.1} parent=5 // pred_check_branch
      %252 = sbr.rel (%p250) target = $region44
    $region43: #{tpu_custom_call.1} parent=5 // pred_region
      // Predicated region
      $region45: #{tpu_custom_call.1} parent=43 // pred_check
        %p253 = pneg %p34
      $region46: #{tpu_custom_call.1} parent=43 // pred_check_branch
        %255 = sbr.rel (%p253) target = $region48
      $region47: #{tpu_custom_call.1} parent=43 // pred_region
        %p256 = scmp.lt.s32.totalorder %s14, 1
        %s257 = scalar_select %p256, %s14, 1
        %s258 = smul.addr %s257, 16
        %s259 = smul.addr %s258, 8
        %s260 = scalar_lea.vmem %s0, %s259
      $region48: #{tpu_custom_call.1} parent=43 // pred_fallthru
        _
    $region44: #{tpu_custom_call.1} parent=5 // pred_fallthru
      _
    %p261 = scmp.le.s32.totalorder 1, %s14
    %p262 = scmp.lt.s32.totalorder %s14, 3
    %p263 = pnand %p261, %p262
    %p264 = pneg %p263
    // Predicated region
    $region49: #{tpu_custom_call.1} parent=5 // pred_check
      _
    $region50: #{tpu_custom_call.1} parent=5 // pred_check_branch
      %266 = sbr.rel (%p263) target = $region52
    $region51: #{tpu_custom_call.1} parent=5 // pred_region
      %s267 = ssub.s32 %s14, 1
      %p268 = scmp.lt.s32.totalorder %s19, 1
      %s269 = scalar_select %p268, %s19, 1
      %s270 = smul.addr %s269, 16
      %s271 = smul.addr %s270, 8
      %s272 = scalar_lea.vmem %s0, %s271
      %p273 = pneg %p40
      %p274 = pneg %p37
      %p275 = pneg %p61
      %p276 = pneg %p58
      %p277 = pneg %p82
      %p278 = pneg %p79
      %p279 = pneg %p103
      %p280 = pneg %p100
      %p281 = pneg %p124
      %p282 = pneg %p121
      %p283 = pneg %p145
      %p284 = pneg %p142
      %p285 = pneg %p166
      %p286 = pneg %p163
      %p287 = pneg %p187
      %p288 = pneg %p184
      %p289 = pneg %p213
      %p290 = pneg %p210
      %p291 = scmp.lt.s32.totalorder %s19, 1
      %s292 = scalar_select %p291, %s19, 1
      %s293 = smul.addr %s292, 4
      %s294 = smul.addr %s293, 8
      %s295 = scalar_lea.vmem %s8, %s294
      %p296 = scmp.lt.s32.totalorder %s19, 1
      %s297 = scalar_select %p296, %s19, 1
      %s298 = smul.addr %s297, 16
      %s299 = smul.addr %s298, 8
      %s300 = scalar_lea.vmem %s0, %s299
      %p301 = scmp.lt.s32.totalorder %s19, 1
      %s302 = scalar_select %p301, %s19, 1
      %s303 = smul.addr %s302, 4
      %s304 = smul.addr %s303, 8
      %s305 = scalar_lea.vmem %s8, %s304
      %vm306 = vcmask 26624
      %307 = vst.msk [vmem:[#allocation2] sm:$0x7] %vm306, 0.0
      %v308 = vld [vmem:[%s300] sm:$0xff]
      %v309 = vld [vmem:[%s300 + $0x8] sm:$0xff]
      %v310 = vld [vmem:[%s300 + $0x10] sm:$0xff]
      %v311 = vld [vmem:[%s300 + $0x18] sm:$0xff]
      %v312 = vld [vmem:[%s300 + $0x20] sm:$0xff]
      %v313 = vld [vmem:[%s300 + $0x28] sm:$0xff]
      %v314 = vld [vmem:[%s300 + $0x30] sm:$0xff]
      %v315 = vld [vmem:[%s300 + $0x38] sm:$0xff]
      %v316 = vld [vmem:[%s300 + $0x40] sm:$0xff]
      %v317 = vld [vmem:[%s300 + $0x48] sm:$0xff]
      %v318 = vld [vmem:[%s300 + $0x50] sm:$0xff]
      %v319 = vld [vmem:[%s300 + $0x58] sm:$0xff]
      %v320 = vld [vmem:[%s300 + $0x60] sm:$0xff]
      %v321 = vld [vmem:[%s300 + $0x68] sm:$0xff]
      %v322 = vld [vmem:[%s300 + $0x70] sm:$0xff]
      %v323 = vld [vmem:[%s300 + $0x78] sm:$0x1f]
      %vm324 = vcmask 31744
      %325 = vst.msk [vmem:[#allocation2 + $0x3] sm:$0xff] %vm324, %v308
      %326 = vst.msk [vmem:[#allocation2 + $0xb] sm:$0xff] %vm324, %v309
      %327 = vst.msk [vmem:[#allocation2 + $0x13] sm:$0xff] %vm324, %v310
      %328 = vst.msk [vmem:[#allocation2 + $0x1b] sm:$0xff] %vm324, %v311
      %329 = vst.msk [vmem:[#allocation2 + $0x23] sm:$0xff] %vm324, %v312
      %330 = vst.msk [vmem:[#allocation2 + $0x2b] sm:$0xff] %vm324, %v313
      %331 = vst.msk [vmem:[#allocation2 + $0x33] sm:$0xff] %vm324, %v314
      %332 = vst.msk [vmem:[#allocation2 + $0x3b] sm:$0xff] %vm324, %v315
      %333 = vst.msk [vmem:[#allocation2 + $0x43] sm:$0xff] %vm324, %v316
      %334 = vst.msk [vmem:[#allocation2 + $0x4b] sm:$0xff] %vm324, %v317
      %335 = vst.msk [vmem:[#allocation2 + $0x53] sm:$0xff] %vm324, %v318
      %336 = vst.msk [vmem:[#allocation2 + $0x5b] sm:$0xff] %vm324, %v319
      %337 = vst.msk [vmem:[#allocation2 + $0x63] sm:$0xff] %vm324, %v320
      %338 = vst.msk [vmem:[#allocation2 + $0x6b] sm:$0xff] %vm324, %v321
      %339 = vst.msk [vmem:[#allocation2 + $0x73] sm:$0xff] %vm324, %v322
      %vm340 = vcmask 28672
      %341 = vst.msk [vmem:[#allocation2 + $0x7b] sm:$0x1f] %vm340, %v323
      %vm342 = vcmask 58400
      %343 = vst.msk [vmem:[#allocation2] sm:$0x3] %vm342, 0.0
      %v344 = vld [vmem:[%s300] sm:$0xff]
      %v345 = vld [vmem:[%s300 + $0x8] sm:$0xff]
      %v346 = vld [vmem:[%s300 + $0x10] sm:$0xff]
      %v347 = vld [vmem:[%s300 + $0x18] sm:$0xff]
      %v348 = vld [vmem:[%s300 + $0x20] sm:$0xff]
      %v349 = vld [vmem:[%s300 + $0x28] sm:$0xff]
      %v350 = vld [vmem:[%s300 + $0x30] sm:$0xff]
      %v351 = vld [vmem:[%s300 + $0x38] sm:$0xff]
      %v352 = vld [vmem:[%s300 + $0x40] sm:$0xff]
      %v353 = vld [vmem:[%s300 + $0x48] sm:$0xff]
      %v354 = vld [vmem:[%s300 + $0x50] sm:$0xff]
      %v355 = vld [vmem:[%s300 + $0x58] sm:$0xff]
      %v356 = vld [vmem:[%s300 + $0x60] sm:$0xff]
      %v357 = vld [vmem:[%s300 + $0x68] sm:$0xff]
      %v358 = vld [vmem:[%s300 + $0x70] sm:$0xff]
      %v359 = vld [vmem:[%s300 + $0x78] sm:$0x3f]
      %376 = vrot.lane.b32.xlu0 %v344, 4
      %v377 = vpop.permute.xlu0 %376
      %378 = vrot.lane.b32.xlu0 %v345, 4
      %v379 = vpop.permute.xlu0 %378
      %380 = vrot.lane.b32.xlu0 %v346, 4
      %v381 = vpop.permute.xlu0 %380
      %382 = vrot.lane.b32.xlu0 %v347, 4
      %v383 = vpop.permute.xlu0 %382
      %384 = vrot.lane.b32.xlu0 %v348, 4
      %v385 = vpop.permute.xlu0 %384
      %386 = vrot.lane.b32.xlu0 %v349, 4
      %v387 = vpop.permute.xlu0 %386
      %388 = vrot.lane.b32.xlu0 %v350, 4
      %v389 = vpop.permute.xlu0 %388
      %390 = vrot.lane.b32.xlu0 %v351, 4
      %v391 = vpop.permute.xlu0 %390
      %392 = vrot.lane.b32.xlu0 %v352, 4
      %v393 = vpop.permute.xlu0 %392
      %394 = vrot.lane.b32.xlu0 %v353, 4
      %v395 = vpop.permute.xlu0 %394
      %396 = vrot.lane.b32.xlu0 %v354, 4
      %v397 = vpop.permute.xlu0 %396
      %398 = vrot.lane.b32.xlu0 %v355, 4
      %v399 = vpop.permute.xlu0 %398
      %400 = vrot.lane.b32.xlu0 %v356, 4
      %v401 = vpop.permute.xlu0 %400
      %402 = vrot.lane.b32.xlu0 %v357, 4
      %v403 = vpop.permute.xlu0 %402
      %404 = vrot.lane.b32.xlu0 %v358, 4
      %v405 = vpop.permute.xlu0 %404
      %406 = vrot.lane.b32.xlu0 %v359, 4
      %v407 = vpop.permute.xlu0 %406
      %vm424 = vcmask 64544
      %425 = vst.msk [vmem:[#allocation2 + $0x2] sm:$0xff] %vm424, %v377
      %426 = vst.msk [vmem:[#allocation2 + $0xa] sm:$0xff] %vm424, %v379
      %427 = vst.msk [vmem:[#allocation2 + $0x12] sm:$0xff] %vm424, %v381
      %428 = vst.msk [vmem:[#allocation2 + $0x1a] sm:$0xff] %vm424, %v383
      %429 = vst.msk [vmem:[#allocation2 + $0x22] sm:$0xff] %vm424, %v385
      %430 = vst.msk [vmem:[#allocation2 + $0x2a] sm:$0xff] %vm424, %v387
      %431 = vst.msk [vmem:[#allocation2 + $0x32] sm:$0xff] %vm424, %v389
      %432 = vst.msk [vmem:[#allocation2 + $0x3a] sm:$0xff] %vm424, %v391
      %433 = vst.msk [vmem:[#allocation2 + $0x42] sm:$0xff] %vm424, %v393
      %434 = vst.msk [vmem:[#allocation2 + $0x4a] sm:$0xff] %vm424, %v395
      %435 = vst.msk [vmem:[#allocation2 + $0x52] sm:$0xff] %vm424, %v397
      %436 = vst.msk [vmem:[#allocation2 + $0x5a] sm:$0xff] %vm424, %v399
      %437 = vst.msk [vmem:[#allocation2 + $0x62] sm:$0xff] %vm424, %v401
      %438 = vst.msk [vmem:[#allocation2 + $0x6a] sm:$0xff] %vm424, %v403
      %439 = vst.msk [vmem:[#allocation2 + $0x72] sm:$0xff] %vm424, %v405
      %vm440 = vcmask 62496
      %441 = vst.msk [vmem:[#allocation2 + $0x7a] sm:$0x3f] %vm440, %v407
      %vm442 = vcmask 90176
      %443 = vst.msk [vmem:[#allocation2] sm:$0x1] %vm442, 0.0
      %v444 = vld [vmem:[%s300] sm:$0xff]
      %v445 = vld [vmem:[%s300 + $0x8] sm:$0xff]
      %v446 = vld [vmem:[%s300 + $0x10] sm:$0xff]
      %v447 = vld [vmem:[%s300 + $0x18] sm:$0xff]
      %v448 = vld [vmem:[%s300 + $0x20] sm:$0xff]
      %v449 = vld [vmem:[%s300 + $0x28] sm:$0xff]
      %v450 = vld [vmem:[%s300 + $0x30] sm:$0xff]
      %v451 = vld [vmem:[%s300 + $0x38] sm:$0xff]
      %v452 = vld [vmem:[%s300 + $0x40] sm:$0xff]
      %v453 = vld [vmem:[%s300 + $0x48] sm:$0xff]
      %v454 = vld [vmem:[%s300 + $0x50] sm:$0xff]
      %v455 = vld [vmem:[%s300 + $0x58] sm:$0xff]
      %v456 = vld [vmem:[%s300 + $0x60] sm:$0xff]
      %v457 = vld [vmem:[%s300 + $0x68] sm:$0xff]
      %v458 = vld [vmem:[%s300 + $0x70] sm:$0xff]
      %v459 = vld [vmem:[%s300 + $0x78] sm:$0x7f]
      %476 = vrot.lane.b32.xlu0 %v444, 8
      %v477 = vpop.permute.xlu0 %476
      %478 = vrot.lane.b32.xlu0 %v445, 8
      %v479 = vpop.permute.xlu0 %478
      %480 = vrot.lane.b32.xlu0 %v446, 8
      %v481 = vpop.permute.xlu0 %480
      %482 = vrot.lane.b32.xlu0 %v447, 8
      %v483 = vpop.permute.xlu0 %482
      %484 = vrot.lane.b32.xlu0 %v448, 8
      %v485 = vpop.permute.xlu0 %484
      %486 = vrot.lane.b32.xlu0 %v449, 8
      %v487 = vpop.permute.xlu0 %486
      %488 = vrot.lane.b32.xlu0 %v450, 8
      %v489 = vpop.permute.xlu0 %488
      %490 = vrot.lane.b32.xlu0 %v451, 8
      %v491 = vpop.permute.xlu0 %490
      %492 = vrot.lane.b32.xlu0 %v452, 8
      %v493 = vpop.permute.xlu0 %492
      %494 = vrot.lane.b32.xlu0 %v453, 8
      %v495 = vpop.permute.xlu0 %494
      %496 = vrot.lane.b32.xlu0 %v454, 8
      %v497 = vpop.permute.xlu0 %496
      %498 = vrot.lane.b32.xlu0 %v455, 8
      %v499 = vpop.permute.xlu0 %498
      %500 = vrot.lane.b32.xlu0 %v456, 8
      %v501 = vpop.permute.xlu0 %500
      %502 = vrot.lane.b32.xlu0 %v457, 8
      %v503 = vpop.permute.xlu0 %502
      %504 = vrot.lane.b32.xlu0 %v458, 8
      %v505 = vpop.permute.xlu0 %504
      %506 = vrot.lane.b32.xlu0 %v459, 8
      %v507 = vpop.permute.xlu0 %506
      %vm524 = vcmask 97344
      %525 = vst.msk [vmem:[#allocation2 + $0x1] sm:$0xff] %vm524, %v477
      %526 = vst.msk [vmem:[#allocation2 + $0x9] sm:$0xff] %vm524, %v479
      %527 = vst.msk [vmem:[#allocation2 + $0x11] sm:$0xff] %vm524, %v481
      %528 = vst.msk [vmem:[#allocation2 + $0x19] sm:$0xff] %vm524, %v483
      %529 = vst.msk [vmem:[#allocation2 + $0x21] sm:$0xff] %vm524, %v485
      %530 = vst.msk [vmem:[#allocation2 + $0x29] sm:$0xff] %vm524, %v487
      %531 = vst.msk [vmem:[#allocation2 + $0x31] sm:$0xff] %vm524, %v489
      %532 = vst.msk [vmem:[#allocation2 + $0x39] sm:$0xff] %vm524, %v491
      %533 = vst.msk [vmem:[#allocation2 + $0x41] sm:$0xff] %vm524, %v493
      %534 = vst.msk [vmem:[#allocation2 + $0x49] sm:$0xff] %vm524, %v495
      %535 = vst.msk [vmem:[#allocation2 + $0x51] sm:$0xff] %vm524, %v497
      %536 = vst.msk [vmem:[#allocation2 + $0x59] sm:$0xff] %vm524, %v499
      %537 = vst.msk [vmem:[#allocation2 + $0x61] sm:$0xff] %vm524, %v501
      %538 = vst.msk [vmem:[#allocation2 + $0x69] sm:$0xff] %vm524, %v503
      %539 = vst.msk [vmem:[#allocation2 + $0x71] sm:$0xff] %vm524, %v505
      %vm540 = vcmask 96320
      %541 = vst.msk [vmem:[#allocation2 + $0x79] sm:$0x7f] %vm540, %v507
      %v542 = vld [vmem:[%s300] sm:$0xff]
      %v543 = vld [vmem:[%s300 + $0x8] sm:$0xff]
      %v544 = vld [vmem:[%s300 + $0x10] sm:$0xff]
      %v545 = vld [vmem:[%s300 + $0x18] sm:$0xff]
      %v546 = vld [vmem:[%s300 + $0x20] sm:$0xff]
      %v547 = vld [vmem:[%s300 + $0x28] sm:$0xff]
      %v548 = vld [vmem:[%s300 + $0x30] sm:$0xff]
      %v549 = vld [vmem:[%s300 + $0x38] sm:$0xff]
      %v550 = vld [vmem:[%s300 + $0x40] sm:$0xff]
      %v551 = vld [vmem:[%s300 + $0x48] sm:$0xff]
      %v552 = vld [vmem:[%s300 + $0x50] sm:$0xff]
      %v553 = vld [vmem:[%s300 + $0x58] sm:$0xff]
      %v554 = vld [vmem:[%s300 + $0x60] sm:$0xff]
      %v555 = vld [vmem:[%s300 + $0x68] sm:$0xff]
      %v556 = vld [vmem:[%s300 + $0x70] sm:$0xff]
      %v557 = vld [vmem:[%s300 + $0x78] sm:$0xff]
      %574 = vrot.lane.b32.xlu0 %v542, 12
      %v575 = vpop.permute.xlu0 %574
      %576 = vrot.lane.b32.xlu0 %v543, 12
      %v577 = vpop.permute.xlu0 %576
      %578 = vrot.lane.b32.xlu0 %v544, 12
      %v579 = vpop.permute.xlu0 %578
      %580 = vrot.lane.b32.xlu0 %v545, 12
      %v581 = vpop.permute.xlu0 %580
      %582 = vrot.lane.b32.xlu0 %v546, 12
      %v583 = vpop.permute.xlu0 %582
      %584 = vrot.lane.b32.xlu0 %v547, 12
      %v585 = vpop.permute.xlu0 %584
      %586 = vrot.lane.b32.xlu0 %v548, 12
      %v587 = vpop.permute.xlu0 %586
      %588 = vrot.lane.b32.xlu0 %v549, 12
      %v589 = vpop.permute.xlu0 %588
      %590 = vrot.lane.b32.xlu0 %v550, 12
      %v591 = vpop.permute.xlu0 %590
      %592 = vrot.lane.b32.xlu0 %v551, 12
      %v593 = vpop.permute.xlu0 %592
      %594 = vrot.lane.b32.xlu0 %v552, 12
      %v595 = vpop.permute.xlu0 %594
      %596 = vrot.lane.b32.xlu0 %v553, 12
      %v597 = vpop.permute.xlu0 %596
      %598 = vrot.lane.b32.xlu0 %v554, 12
      %v599 = vpop.permute.xlu0 %598
      %600 = vrot.lane.b32.xlu0 %v555, 12
      %v601 = vpop.permute.xlu0 %600
      %602 = vrot.lane.b32.xlu0 %v556, 12
      %v603 = vpop.permute.xlu0 %602
      %604 = vrot.lane.b32.xlu0 %v557, 12
      %v605 = vpop.permute.xlu0 %604
      %vm622 = vcmask 130144
      %623 = vst.msk [vmem:[#allocation2] sm:$0xff] %vm622, %v575
      %624 = vst.msk [vmem:[#allocation2 + $0x8] sm:$0xff] %vm622, %v577
      %625 = vst.msk [vmem:[#allocation2 + $0x10] sm:$0xff] %vm622, %v579
      %626 = vst.msk [vmem:[#allocation2 + $0x18] sm:$0xff] %vm622, %v581
      %627 = vst.msk [vmem:[#allocation2 + $0x20] sm:$0xff] %vm622, %v583
      %628 = vst.msk [vmem:[#allocation2 + $0x28] sm:$0xff] %vm622, %v585
      %629 = vst.msk [vmem:[#allocation2 + $0x30] sm:$0xff] %vm622, %v587
      %630 = vst.msk [vmem:[#allocation2 + $0x38] sm:$0xff] %vm622, %v589
      %631 = vst.msk [vmem:[#allocation2 + $0x40] sm:$0xff] %vm622, %v591
      %632 = vst.msk [vmem:[#allocation2 + $0x48] sm:$0xff] %vm622, %v593
      %633 = vst.msk [vmem:[#allocation2 + $0x50] sm:$0xff] %vm622, %v595
      %634 = vst.msk [vmem:[#allocation2 + $0x58] sm:$0xff] %vm622, %v597
      %635 = vst.msk [vmem:[#allocation2 + $0x60] sm:$0xff] %vm622, %v599
      %636 = vst.msk [vmem:[#allocation2 + $0x68] sm:$0xff] %vm622, %v601
      %637 = vst.msk [vmem:[#allocation2 + $0x70] sm:$0xff] %vm622, %v603
      %638 = vst.msk [vmem:[#allocation2 + $0x78] sm:$0xff] %vm622, %v605
      %vm639 = vcmask 155776
      %640 = vst.msk [vmem:[#allocation2 + $0x7f] sm:$0x1] %vm639, 0.0
      %v641 = vld [vmem:[%s300 + $0x1] sm:$0xff]
      %v642 = vld [vmem:[%s300 + $0x9] sm:$0xff]
      %v643 = vld [vmem:[%s300 + $0x11] sm:$0xff]
      %v644 = vld [vmem:[%s300 + $0x19] sm:$0xff]
      %v645 = vld [vmem:[%s300 + $0x21] sm:$0xff]
      %v646 = vld [vmem:[%s300 + $0x29] sm:$0xff]
      %v647 = vld [vmem:[%s300 + $0x31] sm:$0xff]
      %v648 = vld [vmem:[%s300 + $0x39] sm:$0xff]
      %v649 = vld [vmem:[%s300 + $0x41] sm:$0xff]
      %v650 = vld [vmem:[%s300 + $0x49] sm:$0xff]
      %v651 = vld [vmem:[%s300 + $0x51] sm:$0xff]
      %v652 = vld [vmem:[%s300 + $0x59] sm:$0xff]
      %v653 = vld [vmem:[%s300 + $0x61] sm:$0xff]
      %v654 = vld [vmem:[%s300 + $0x69] sm:$0xff]
      %v655 = vld [vmem:[%s300 + $0x71] sm:$0xff]
      %v656 = vld [vmem:[%s300 + $0x79] sm:$0x7f]
      %673 = vrot.lane.b32.xlu0 %v641, 16
      %v674 = vpop.permute.xlu0 %673
      %675 = vrot.lane.b32.xlu0 %v642, 16
      %v676 = vpop.permute.xlu0 %675
      %677 = vrot.lane.b32.xlu0 %v643, 16
      %v678 = vpop.permute.xlu0 %677
      %679 = vrot.lane.b32.xlu0 %v644, 16
      %v680 = vpop.permute.xlu0 %679
      %681 = vrot.lane.b32.xlu0 %v645, 16
      %v682 = vpop.permute.xlu0 %681
      %683 = vrot.lane.b32.xlu0 %v646, 16
      %v684 = vpop.permute.xlu0 %683
      %685 = vrot.lane.b32.xlu0 %v647, 16
      %v686 = vpop.permute.xlu0 %685
      %687 = vrot.lane.b32.xlu0 %v648, 16
      %v688 = vpop.permute.xlu0 %687
      %689 = vrot.lane.b32.xlu0 %v649, 16
      %v690 = vpop.permute.xlu0 %689
      %691 = vrot.lane.b32.xlu0 %v650, 16
      %v692 = vpop.permute.xlu0 %691
      %693 = vrot.lane.b32.xlu0 %v651, 16
      %v694 = vpop.permute.xlu0 %693
      %695 = vrot.lane.b32.xlu0 %v652, 16
      %v696 = vpop.permute.xlu0 %695
      %697 = vrot.lane.b32.xlu0 %v653, 16
      %v698 = vpop.permute.xlu0 %697
      %699 = vrot.lane.b32.xlu0 %v654, 16
      %v700 = vpop.permute.xlu0 %699
      %701 = vrot.lane.b32.xlu0 %v655, 16
      %v702 = vpop.permute.xlu0 %701
      %703 = vrot.lane.b32.xlu0 %v656, 16
      %v704 = vpop.permute.xlu0 %703
      %vm721 = vcmask 162944
      %722 = vst.msk [vmem:[#allocation2] sm:$0xff] %vm721, %v674
      %723 = vst.msk [vmem:[#allocation2 + $0x8] sm:$0xff] %vm721, %v676
      %724 = vst.msk [vmem:[#allocation2 + $0x10] sm:$0xff] %vm721, %v678
      %725 = vst.msk [vmem:[#allocation2 + $0x18] sm:$0xff] %vm721, %v680
      %726 = vst.msk [vmem:[#allocation2 + $0x20] sm:$0xff] %vm721, %v682
      %727 = vst.msk [vmem:[#allocation2 + $0x28] sm:$0xff] %vm721, %v684
      %728 = vst.msk [vmem:[#allocation2 + $0x30] sm:$0xff] %vm721, %v686
      %729 = vst.msk [vmem:[#allocation2 + $0x38] sm:$0xff] %vm721, %v688
      %730 = vst.msk [vmem:[#allocation2 + $0x40] sm:$0xff] %vm721, %v690
      %731 = vst.msk [vmem:[#allocation2 + $0x48] sm:$0xff] %vm721, %v692
      %732 = vst.msk [vmem:[#allocation2 + $0x50] sm:$0xff] %vm721, %v694
      %733 = vst.msk [vmem:[#allocation2 + $0x58] sm:$0xff] %vm721, %v696
      %734 = vst.msk [vmem:[#allocation2 + $0x60] sm:$0xff] %vm721, %v698
      %735 = vst.msk [vmem:[#allocation2 + $0x68] sm:$0xff] %vm721, %v700
      %736 = vst.msk [vmem:[#allocation2 + $0x70] sm:$0xff] %vm721, %v702
      %vm737 = vcmask 161920
      %738 = vst.msk [vmem:[#allocation2 + $0x78] sm:$0x7f] %vm737, %v704
      %vm739 = vcmask 189600
      %740 = vst.msk [vmem:[#allocation2 + $0x7e] sm:$0x3] %vm739, 0.0
      %v741 = vld [vmem:[%s300 + $0x2] sm:$0xff]
      %v742 = vld [vmem:[%s300 + $0xa] sm:$0xff]
      %v743 = vld [vmem:[%s300 + $0x12] sm:$0xff]
      %v744 = vld [vmem:[%s300 + $0x1a] sm:$0xff]
      %v745 = vld [vmem:[%s300 + $0x22] sm:$0xff]
      %v746 = vld [vmem:[%s300 + $0x2a] sm:$0xff]
      %v747 = vld [vmem:[%s300 + $0x32] sm:$0xff]
      %v748 = vld [vmem:[%s300 + $0x3a] sm:$0xff]
      %v749 = vld [vmem:[%s300 + $0x42] sm:$0xff]
      %v750 = vld [vmem:[%s300 + $0x4a] sm:$0xff]
      %v751 = vld [vmem:[%s300 + $0x52] sm:$0xff]
      %v752 = vld [vmem:[%s300 + $0x5a] sm:$0xff]
      %v753 = vld [vmem:[%s300 + $0x62] sm:$0xff]
      %v754 = vld [vmem:[%s300 + $0x6a] sm:$0xff]
      %v755 = vld [vmem:[%s300 + $0x72] sm:$0xff]
      %v756 = vld [vmem:[%s300 + $0x7a] sm:$0x3f]
      %773 = vrot.lane.b32.xlu0 %v741, 20
      %v774 = vpop.permute.xlu0 %773
      %775 = vrot.lane.b32.xlu0 %v742, 20
      %v776 = vpop.permute.xlu0 %775
      %777 = vrot.lane.b32.xlu0 %v743, 20
      %v778 = vpop.permute.xlu0 %777
      %779 = vrot.lane.b32.xlu0 %v744, 20
      %v780 = vpop.permute.xlu0 %779
      %781 = vrot.lane.b32.xlu0 %v745, 20
      %v782 = vpop.permute.xlu0 %781
      %783 = vrot.lane.b32.xlu0 %v746, 20
      %v784 = vpop.permute.xlu0 %783
      %785 = vrot.lane.b32.xlu0 %v747, 20
      %v786 = vpop.permute.xlu0 %785
      %787 = vrot.lane.b32.xlu0 %v748, 20
      %v788 = vpop.permute.xlu0 %787
      %789 = vrot.lane.b32.xlu0 %v749, 20
      %v790 = vpop.permute.xlu0 %789
      %791 = vrot.lane.b32.xlu0 %v750, 20
      %v792 = vpop.permute.xlu0 %791
      %793 = vrot.lane.b32.xlu0 %v751, 20
      %v794 = vpop.permute.xlu0 %793
      %795 = vrot.lane.b32.xlu0 %v752, 20
      %v796 = vpop.permute.xlu0 %795
      %797 = vrot.lane.b32.xlu0 %v753, 20
      %v798 = vpop.permute.xlu0 %797
      %799 = vrot.lane.b32.xlu0 %v754, 20
      %v800 = vpop.permute.xlu0 %799
      %801 = vrot.lane.b32.xlu0 %v755, 20
      %v802 = vpop.permute.xlu0 %801
      %803 = vrot.lane.b32.xlu0 %v756, 20
      %v804 = vpop.permute.xlu0 %803
      %vm821 = vcmask 195744
      %822 = vst.msk [vmem:[#allocation2] sm:$0xff] %vm821, %v774
      %823 = vst.msk [vmem:[#allocation2 + $0x8] sm:$0xff] %vm821, %v776
      %824 = vst.msk [vmem:[#allocation2 + $0x10] sm:$0xff] %vm821, %v778
      %825 = vst.msk [vmem:[#allocation2 + $0x18] sm:$0xff] %vm821, %v780
      %826 = vst.msk [vmem:[#allocation2 + $0x20] sm:$0xff] %vm821, %v782
      %827 = vst.msk [vmem:[#allocation2 + $0x28] sm:$0xff] %vm821, %v784
      %828 = vst.msk [vmem:[#allocation2 + $0x30] sm:$0xff] %vm821, %v786
      %829 = vst.msk [vmem:[#allocation2 + $0x38] sm:$0xff] %vm821, %v788
      %830 = vst.msk [vmem:[#allocation2 + $0x40] sm:$0xff] %vm821, %v790
      %831 = vst.msk [vmem:[#allocation2 + $0x48] sm:$0xff] %vm821, %v792
      %832 = vst.msk [vmem:[#allocation2 + $0x50] sm:$0xff] %vm821, %v794
      %833 = vst.msk [vmem:[#allocation2 + $0x58] sm:$0xff] %vm821, %v796
      %834 = vst.msk [vmem:[#allocation2 + $0x60] sm:$0xff] %vm821, %v798
      %835 = vst.msk [vmem:[#allocation2 + $0x68] sm:$0xff] %vm821, %v800
      %836 = vst.msk [vmem:[#allocation2 + $0x70] sm:$0xff] %vm821, %v802
      %vm837 = vcmask 193696
      %838 = vst.msk [vmem:[#allocation2 + $0x78] sm:$0x3f] %vm837, %v804
      %vm839 = vcmask 223424
      %840 = vst.msk [vmem:[#allocation2 + $0x7d] sm:$0x7] %vm839, 0.0
      %v841 = vld [vmem:[%s300 + $0x3] sm:$0xff]
      %v842 = vld [vmem:[%s300 + $0xb] sm:$0xff]
      %v843 = vld [vmem:[%s300 + $0x13] sm:$0xff]
      %v844 = vld [vmem:[%s300 + $0x1b] sm:$0xff]
      %v845 = vld [vmem:[%s300 + $0x23] sm:$0xff]
      %v846 = vld [vmem:[%s300 + $0x2b] sm:$0xff]
      %v847 = vld [vmem:[%s300 + $0x33] sm:$0xff]
      %v848 = vld [vmem:[%s300 + $0x3b] sm:$0xff]
      %v849 = vld [vmem:[%s300 + $0x43] sm:$0xff]
      %v850 = vld [vmem:[%s300 + $0x4b] sm:$0xff]
      %v851 = vld [vmem:[%s300 + $0x53] sm:$0xff]
      %v852 = vld [vmem:[%s300 + $0x5b] sm:$0xff]
      %v853 = vld [vmem:[%s300 + $0x63] sm:$0xff]
      %v854 = vld [vmem:[%s300 + $0x6b] sm:$0xff]
      %v855 = vld [vmem:[%s300 + $0x73] sm:$0xff]
      %v856 = vld [vmem:[%s300 + $0x7b] sm:$0x1f]
      %873 = vrot.lane.b32.xlu0 %v841, 24
      %v874 = vpop.permute.xlu0 %873
      %875 = vrot.lane.b32.xlu0 %v842, 24
      %v876 = vpop.permute.xlu0 %875
      %877 = vrot.lane.b32.xlu0 %v843, 24
      %v878 = vpop.permute.xlu0 %877
      %879 = vrot.lane.b32.xlu0 %v844, 24
      %v880 = vpop.permute.xlu0 %879
      %881 = vrot.lane.b32.xlu0 %v845, 24
      %v882 = vpop.permute.xlu0 %881
      %883 = vrot.lane.b32.xlu0 %v846, 24
      %v884 = vpop.permute.xlu0 %883
      %885 = vrot.lane.b32.xlu0 %v847, 24
      %v886 = vpop.permute.xlu0 %885
      %887 = vrot.lane.b32.xlu0 %v848, 24
      %v888 = vpop.permute.xlu0 %887
      %889 = vrot.lane.b32.xlu0 %v849, 24
      %v890 = vpop.permute.xlu0 %889
      %891 = vrot.lane.b32.xlu0 %v850, 24
      %v892 = vpop.permute.xlu0 %891
      %893 = vrot.lane.b32.xlu0 %v851, 24
      %v894 = vpop.permute.xlu0 %893
      %895 = vrot.lane.b32.xlu0 %v852, 24
      %v896 = vpop.permute.xlu0 %895
      %897 = vrot.lane.b32.xlu0 %v853, 24
      %v898 = vpop.permute.xlu0 %897
      %899 = vrot.lane.b32.xlu0 %v854, 24
      %v900 = vpop.permute.xlu0 %899
      %901 = vrot.lane.b32.xlu0 %v855, 24
      %v902 = vpop.permute.xlu0 %901
      %903 = vrot.lane.b32.xlu0 %v856, 24
      %v904 = vpop.permute.xlu0 %903
      %vm921 = vcmask 228544
      %922 = vst.msk [vmem:[#allocation2] sm:$0xff] %vm921, %v874
      %923 = vst.msk [vmem:[#allocation2 + $0x8] sm:$0xff] %vm921, %v876
      %924 = vst.msk [vmem:[#allocation2 + $0x10] sm:$0xff] %vm921, %v878
      %925 = vst.msk [vmem:[#allocation2 + $0x18] sm:$0xff] %vm921, %v880
      %926 = vst.msk [vmem:[#allocation2 + $0x20] sm:$0xff] %vm921, %v882
      %927 = vst.msk [vmem:[#allocation2 + $0x28] sm:$0xff] %vm921, %v884
      %928 = vst.msk [vmem:[#allocation2 + $0x30] sm:$0xff] %vm921, %v886
      %929 = vst.msk [vmem:[#allocation2 + $0x38] sm:$0xff] %vm921, %v888
      %930 = vst.msk [vmem:[#allocation2 + $0x40] sm:$0xff] %vm921, %v890
      %931 = vst.msk [vmem:[#allocation2 + $0x48] sm:$0xff] %vm921, %v892
      %932 = vst.msk [vmem:[#allocation2 + $0x50] sm:$0xff] %vm921, %v894
      %933 = vst.msk [vmem:[#allocation2 + $0x58] sm:$0xff] %vm921, %v896
      %934 = vst.msk [vmem:[#allocation2 + $0x60] sm:$0xff] %vm921, %v898
      %935 = vst.msk [vmem:[#allocation2 + $0x68] sm:$0xff] %vm921, %v900
      %936 = vst.msk [vmem:[#allocation2 + $0x70] sm:$0xff] %vm921, %v902
      %vm937 = vcmask 225472
      %938 = vst.msk [vmem:[#allocation2 + $0x78] sm:$0x1f] %vm937, %v904
      %vm939 = vcmask 257248
      %940 = vst.msk [vmem:[#allocation2 + $0x7c] sm:$0xf] %vm939, 0.0
      %v941 = vld [vmem:[%s300 + $0x4] sm:$0xff]
      %v942 = vld [vmem:[%s300 + $0xc] sm:$0xff]
      %v943 = vld [vmem:[%s300 + $0x14] sm:$0xff]
      %v944 = vld [vmem:[%s300 + $0x1c] sm:$0xff]
      %v945 = vld [vmem:[%s300 + $0x24] sm:$0xff]
      %v946 = vld [vmem:[%s300 + $0x2c] sm:$0xff]
      %v947 = vld [vmem:[%s300 + $0x34] sm:$0xff]
      %v948 = vld [vmem:[%s300 + $0x3c] sm:$0xff]
      %v949 = vld [vmem:[%s300 + $0x44] sm:$0xff]
      %v950 = vld [vmem:[%s300 + $0x4c] sm:$0xff]
      %v951 = vld [vmem:[%s300 + $0x54] sm:$0xff]
      %v952 = vld [vmem:[%s300 + $0x5c] sm:$0xff]
      %v953 = vld [vmem:[%s300 + $0x64] sm:$0xff]
      %v954 = vld [vmem:[%s300 + $0x6c] sm:$0xff]
      %v955 = vld [vmem:[%s300 + $0x74] sm:$0xff]
      %v956 = vld [vmem:[%s300 + $0x7c] sm:$0xf]
      %973 = vrot.lane.b32.xlu0 %v941, 28
      %v974 = vpop.permute.xlu0 %973
      %975 = vrot.lane.b32.xlu0 %v942, 28
      %v976 = vpop.permute.xlu0 %975
      %977 = vrot.lane.b32.xlu0 %v943, 28
      %v978 = vpop.permute.xlu0 %977
      %979 = vrot.lane.b32.xlu0 %v944, 28
      %v980 = vpop.permute.xlu0 %979
      %981 = vrot.lane.b32.xlu0 %v945, 28
      %v982 = vpop.permute.xlu0 %981
      %983 = vrot.lane.b32.xlu0 %v946, 28
      %v984 = vpop.permute.xlu0 %983
      %985 = vrot.lane.b32.xlu0 %v947, 28
      %v986 = vpop.permute.xlu0 %985
      %987 = vrot.lane.b32.xlu0 %v948, 28
      %v988 = vpop.permute.xlu0 %987
      %989 = vrot.lane.b32.xlu0 %v949, 28
      %v990 = vpop.permute.xlu0 %989
      %991 = vrot.lane.b32.xlu0 %v950, 28
      %v992 = vpop.permute.xlu0 %991
      %993 = vrot.lane.b32.xlu0 %v951, 28
      %v994 = vpop.permute.xlu0 %993
      %995 = vrot.lane.b32.xlu0 %v952, 28
      %v996 = vpop.permute.xlu0 %995
      %997 = vrot.lane.b32.xlu0 %v953, 28
      %v998 = vpop.permute.xlu0 %997
      %999 = vrot.lane.b32.xlu0 %v954, 28
      %v1000 = vpop.permute.xlu0 %999
      %1001 = vrot.lane.b32.xlu0 %v955, 28
      %v1002 = vpop.permute.xlu0 %1001
      %1003 = vrot.lane.b32.xlu0 %v956, 28
      %v1004 = vpop.permute.xlu0 %1003
      %vm1021 = vcmask 261344
      %1022 = vst.msk [vmem:[#allocation2] sm:$0xff] %vm1021, %v974
      %1023 = vst.msk [vmem:[#allocation2 + $0x8] sm:$0xff] %vm1021, %v976
      %1024 = vst.msk [vmem:[#allocation2 + $0x10] sm:$0xff] %vm1021, %v978
      %1025 = vst.msk [vmem:[#allocation2 + $0x18] sm:$0xff] %vm1021, %v980
      %1026 = vst.msk [vmem:[#allocation2 + $0x20] sm:$0xff] %vm1021, %v982
      %1027 = vst.msk [vmem:[#allocation2 + $0x28] sm:$0xff] %vm1021, %v984
      %1028 = vst.msk [vmem:[#allocation2 + $0x30] sm:$0xff] %vm1021, %v986
      %1029 = vst.msk [vmem:[#allocation2 + $0x38] sm:$0xff] %vm1021, %v988
      %1030 = vst.msk [vmem:[#allocation2 + $0x40] sm:$0xff] %vm1021, %v990
      %1031 = vst.msk [vmem:[#allocation2 + $0x48] sm:$0xff] %vm1021, %v992
      %1032 = vst.msk [vmem:[#allocation2 + $0x50] sm:$0xff] %vm1021, %v994
      %1033 = vst.msk [vmem:[#allocation2 + $0x58] sm:$0xff] %vm1021, %v996
      %1034 = vst.msk [vmem:[#allocation2 + $0x60] sm:$0xff] %vm1021, %v998
      %1035 = vst.msk [vmem:[#allocation2 + $0x68] sm:$0xff] %vm1021, %v1000
      %1036 = vst.msk [vmem:[#allocation2 + $0x70] sm:$0xff] %vm1021, %v1002
      %1037 = vst.msk [vmem:[#allocation2 + $0x78] sm:$0xf] %vm939, %v1004
      %v1038 = vld [vmem:[%s1] sm:$0xff]
      %v1039 = vld [vmem:[%s1 + $0x8] sm:$0xff]
      %v1040 = vld [vmem:[%s1 + $0x10] sm:$0xff]
      %v1041 = vld [vmem:[%s1 + $0x18] sm:$0xff]
      %v1042 = vld [vmem:[#allocation2] sm:$0xff]
      %v1043 = vld [vmem:[#allocation2 + $0x8] sm:$0xff]
      %v1044 = vld [vmem:[#allocation2 + $0x10] sm:$0xff]
      %v1045 = vld [vmem:[#allocation2 + $0x18] sm:$0xff]
      %v1046 = vld [vmem:[#allocation2 + $0x20] sm:$0xff]
      %v1047 = vld [vmem:[#allocation2 + $0x28] sm:$0xff]
      %v1048 = vld [vmem:[#allocation2 + $0x30] sm:$0xff]
      %v1049 = vld [vmem:[#allocation2 + $0x38] sm:$0xff]
      %v1050 = vld [vmem:[#allocation2 + $0x40] sm:$0xff]
      %v1051 = vld [vmem:[#allocation2 + $0x48] sm:$0xff]
      %v1052 = vld [vmem:[#allocation2 + $0x50] sm:$0xff]
      %v1053 = vld [vmem:[#allocation2 + $0x58] sm:$0xff]
      %v1054 = vld [vmem:[#allocation2 + $0x60] sm:$0xff]
      %v1055 = vld [vmem:[#allocation2 + $0x68] sm:$0xff]
      %v1056 = vld [vmem:[#allocation2 + $0x70] sm:$0xff]
      %v1057 = vld [vmem:[#allocation2 + $0x78] sm:$0xff]
      %v1058 = vld [vmem:[%s3] sm:$0x1]
      %v1060 = vlaneseq
      %v1061 = vshrl.u32 %v1060, 7
      %v1062 = vsub.s32 0, %v1061
      %v1063 = vrot.slane %v1058, %v1062
      %vm1065 = vcmask 261120
      %v1067 = vsel %vm1065, %v1042, 0
      %v1070 = vsel %vm1065, %v1043, 0
      %v1073 = vsel %vm1065, %v1044, 0
      %v1076 = vsel %vm1065, %v1045, 0
      %v1079 = vsel %vm1065, %v1046, 0
      %v1082 = vsel %vm1065, %v1047, 0
      %v1085 = vsel %vm1065, %v1048, 0
      %v1088 = vsel %vm1065, %v1049, 0
      %v1091 = vsel %vm1065, %v1050, 0
      %v1094 = vsel %vm1065, %v1051, 0
      %v1097 = vsel %vm1065, %v1052, 0
      %v1100 = vsel %vm1065, %v1053, 0
      %v1103 = vsel %vm1065, %v1054, 0
      %v1106 = vsel %vm1065, %v1055, 0
      %v1109 = vsel %vm1065, %v1056, 0
      %v1112 = vsel %vm1065, %v1057, 0
      %1114 = vmatprep.subr.mxu0 0.0
      %1115 = vmatpush1.msra.mxu0 %v1038
      %1116 = vmatprep.subr.mxu0 0.0
      %1117 = vmatpush1.msra.mxu0 %v1039
      %1118 = vmatprep.subr.mxu0 0.0
      %1119 = vmatpush1.msra.mxu0 %v1040
      %1120 = vmatprep.subr.mxu0 0.0
      %1121 = vmatpush1.msra.mxu0 %v1041
      %1122 = vmatprep.subr.mxu0 0.0
      %1123 = vmatpush1.msra.mxu0 0.0
      %1124 = vmatprep.subr.mxu0 0.0
      %1125 = vmatpush1.msra.mxu0 0.0
      %1126 = vmatprep.subr.mxu0 0.0
      %1127 = vmatpush1.msra.mxu0 0.0
      %1128 = vmatprep.subr.mxu0 0.0
      %1129 = vmatpush1.msra.mxu0 0.0
      %1130 = vmatprep.subr.mxu0 0.0
      %1131 = vmatpush1.msra.mxu0 0.0
      %1132 = vmatprep.subr.mxu0 0.0
      %1133 = vmatpush1.msra.mxu0 0.0
      %1134 = vmatprep.subr.mxu0 0.0
      %1135 = vmatpush1.msra.mxu0 0.0
      %1136 = vmatprep.subr.mxu0 0.0
      %1137 = vmatpush1.msra.mxu0 0.0
      %1138 = vmatprep.subr.mxu0 0.0
      %1139 = vmatpush1.msra.mxu0 0.0
      %1140 = vmatprep.subr.mxu0 0.0
      %1141 = vmatpush1.msra.mxu0 0.0
      %1142 = vmatprep.subr.mxu0 0.0
      %1143 = vmatpush1.msra.mxu0 0.0
      %1144 = vmatprep.subr.mxu0 0.0
      %1145 = vmatpush1.msra.mxu0 0.0
      %1146 = vmatprep.subr.mxu0 0.0
      %1147 = vmatpush1.msra.mxu0 0.0
      %1148 = vmatprep.subr.mxu0 0.0
      %1149 = vmatpush1.msra.mxu0 0.0
      %1150 = vmatprep.subr.mxu0 0.0
      %1151 = vmatpush1.msra.mxu0 0.0
      %1152 = vmatprep.subr.mxu0 0.0
      %1153 = vmatpush1.msra.mxu0 0.0
      %1154 = vmatprep.subr.mxu0 0.0
      %1155 = vmatpush1.msra.mxu0 0.0
      %1156 = vmatprep.subr.mxu0 0.0
      %1157 = vmatpush1.msra.mxu0 0.0
      %1158 = vmatprep.subr.mxu0 0.0
      %1159 = vmatpush1.msra.mxu0 0.0
      %1160 = vmatprep.subr.mxu0 0.0
      %1161 = vmatpush1.msra.mxu0 0.0
      %1162 = vmatprep.subr.mxu0 0.0
      %1163 = vmatpush1.msra.mxu0 0.0
      %1164 = vmatprep.subr.mxu0 0.0
      %1165 = vmatpush1.msra.mxu0 0.0
      %1166 = vmatprep.subr.mxu0 0.0
      %1167 = vmatpush1.msra.mxu0 0.0
      %1168 = vmatprep.subr.mxu0 0.0
      %1169 = vmatpush1.msra.mxu0 0.0
      %1170 = vmatprep.subr.mxu0 0.0
      %1171 = vmatpush1.msra.mxu0 0.0
      %1172 = vmatprep.subr.mxu0 0.0
      %1173 = vmatpush1.msra.mxu0 0.0
      %1174 = vmatprep.subr.mxu0 0.0
      %1175 = vmatpush1.msra.mxu0 0.0
      %1176 = vmatprep.subr.mxu0 0.0
      %1177 = vmatpush1.msra.mxu0 0.0
      %1178 = vmatprep.mubr.f32.mxu0 0.0
      %1179 = vmatmul.mubr.f32.gmra.mrb[0].mxu0 %v1067
      %v1180 = vpop.f32.mrb[0].mxu0
      %v1181 = vadd.f32 %v1063, %v1180
      %v1182 = vpop.f32.mrb[0].mxu0
      %1183 = vmatprep.mubr.f32.mxu0 0.0
      %1184 = vmatmul.mubr.f32.gmra.mrb[0].mxu0 %v1070
      %v1185 = vpop.f32.mrb[0].mxu0
      %v1186 = vadd.f32 %v1063, %v1185
      %v1187 = vpop.f32.mrb[0].mxu0
      %1188 = vmatprep.mubr.f32.mxu0 0.0
      %1189 = vmatmul.mubr.f32.gmra.mrb[0].mxu0 %v1073
      %v1190 = vpop.f32.mrb[0].mxu0
      %v1191 = vadd.f32 %v1063, %v1190
      %v1192 = vpop.f32.mrb[0].mxu0
      %1193 = vmatprep.mubr.f32.mxu0 0.0
      %1194 = vmatmul.mubr.f32.gmra.mrb[0].mxu0 %v1076
      %v1195 = vpop.f32.mrb[0].mxu0
      %v1196 = vadd.f32 %v1063, %v1195
      %v1197 = vpop.f32.mrb[0].mxu0
      %1198 = vmatprep.mubr.f32.mxu0 0.0
      %1199 = vmatmul.mubr.f32.gmra.mrb[0].mxu0 %v1079
      %v1200 = vpop.f32.mrb[0].mxu0
      %v1201 = vadd.f32 %v1063, %v1200
      %v1202 = vpop.f32.mrb[0].mxu0
      %1203 = vmatprep.mubr.f32.mxu0 0.0
      %1204 = vmatmul.mubr.f32.gmra.mrb[0].mxu0 %v1082
      %v1205 = vpop.f32.mrb[0].mxu0
      %v1206 = vadd.f32 %v1063, %v1205
      %v1207 = vpop.f32.mrb[0].mxu0
      %1208 = vmatprep.mubr.f32.mxu0 0.0
      %1209 = vmatmul.mubr.f32.gmra.mrb[0].mxu0 %v1085
      %v1210 = vpop.f32.mrb[0].mxu0
      %v1211 = vadd.f32 %v1063, %v1210
      %v1212 = vpop.f32.mrb[0].mxu0
      %1213 = vmatprep.mubr.f32.mxu0 0.0
      %1214 = vmatmul.mubr.f32.gmra.mrb[0].mxu0 %v1088
      %v1215 = vpop.f32.mrb[0].mxu0
      %v1216 = vadd.f32 %v1063, %v1215
      %v1217 = vpop.f32.mrb[0].mxu0
      %1218 = vmatprep.mubr.f32.mxu0 0.0
      %1219 = vmatmul.mubr.f32.gmra.mrb[0].mxu0 %v1091
      %v1220 = vpop.f32.mrb[0].mxu0
      %v1221 = vadd.f32 %v1063, %v1220
      %v1222 = vpop.f32.mrb[0].mxu0
      %1223 = vmatprep.mubr.f32.mxu0 0.0
      %1224 = vmatmul.mubr.f32.gmra.mrb[0].mxu0 %v1094
      %v1225 = vpop.f32.mrb[0].mxu0
      %v1226 = vadd.f32 %v1063, %v1225
      %v1227 = vpop.f32.mrb[0].mxu0
      %1228 = vmatprep.mubr.f32.mxu0 0.0
      %1229 = vmatmul.mubr.f32.gmra.mrb[0].mxu0 %v1097
      %v1230 = vpop.f32.mrb[0].mxu0
      %v1231 = vadd.f32 %v1063, %v1230
      %v1232 = vpop.f32.mrb[0].mxu0
      %1233 = vmatprep.mubr.f32.mxu0 0.0
      %1234 = vmatmul.mubr.f32.gmra.mrb[0].mxu0 %v1100
      %v1235 = vpop.f32.mrb[0].mxu0
      %v1236 = vadd.f32 %v1063, %v1235
      %v1237 = vpop.f32.mrb[0].mxu0
      %1238 = vmatprep.mubr.f32.mxu0 0.0
      %1239 = vmatmul.mubr.f32.gmra.mrb[0].mxu0 %v1103
      %v1240 = vpop.f32.mrb[0].mxu0
      %v1241 = vadd.f32 %v1063, %v1240
      %v1242 = vpop.f32.mrb[0].mxu0
      %1243 = vmatprep.mubr.f32.mxu0 0.0
      %1244 = vmatmul.mubr.f32.gmra.mrb[0].mxu0 %v1106
      %v1245 = vpop.f32.mrb[0].mxu0
      %v1246 = vadd.f32 %v1063, %v1245
      %v1247 = vpop.f32.mrb[0].mxu0
      %1248 = vmatprep.mubr.f32.mxu0 0.0
      %1249 = vmatmul.mubr.f32.gmra.mrb[0].mxu0 %v1109
      %v1250 = vpop.f32.mrb[0].mxu0
      %v1251 = vadd.f32 %v1063, %v1250
      %v1252 = vpop.f32.mrb[0].mxu0
      %1253 = vmatprep.mubr.f32.mxu0 0.0
      %1254 = vmatmul.mubr.f32.gmra.mrb[0].mxu0 %v1112
      %v1255 = vpop.f32.mrb[0].mxu0
      %v1256 = vadd.f32 %v1063, %v1255
      %v1257 = vpop.f32.mrb[0].mxu0
      %1258 = vdwg.mxu0
      %v1259 = vmax.f32 %v1181, 0.0
      %v1260 = vmax.f32 %v1186, 0.0
      %v1261 = vmax.f32 %v1191, 0.0
      %v1262 = vmax.f32 %v1196, 0.0
      %v1263 = vmax.f32 %v1201, 0.0
      %v1264 = vmax.f32 %v1206, 0.0
      %v1265 = vmax.f32 %v1211, 0.0
      %v1266 = vmax.f32 %v1216, 0.0
      %v1267 = vmax.f32 %v1221, 0.0
      %v1268 = vmax.f32 %v1226, 0.0
      %v1269 = vmax.f32 %v1231, 0.0
      %v1270 = vmax.f32 %v1236, 0.0
      %v1271 = vmax.f32 %v1241, 0.0
      %v1272 = vmax.f32 %v1246, 0.0
      %v1273 = vmax.f32 %v1251, 0.0
      %v1274 = vmax.f32 %v1256, 0.0
      %v1275 = vld [vmem:[%s4] sm:$0xff]
      %v1276 = vld [vmem:[%s4 + $0x8] sm:$0xff]
      %v1277 = vld [vmem:[%s4 + $0x10] sm:$0xff]
      %v1278 = vld [vmem:[%s4 + $0x18] sm:$0xff]
      %v1279 = vld [vmem:[%s4 + $0x20] sm:$0xff]
      %v1280 = vld [vmem:[%s4 + $0x28] sm:$0xff]
      %v1281 = vld [vmem:[%s4 + $0x30] sm:$0xff]
      %v1282 = vld [vmem:[%s4 + $0x38] sm:$0xff]
      %v1283 = vld [vmem:[%s5] sm:$0x1]
      %v1285 = vlaneseq
      %v1286 = vshrl.u32 %v1285, 7
      %v1287 = vsub.s32 0, %v1286
      %v1288 = vrot.slane %v1283, %v1287
      %vm1290 = vcmask 523264
      %v1292 = vsel %vm1290, %v1259, 0
      %v1295 = vsel %vm1290, %v1260, 0
      %v1298 = vsel %vm1290, %v1261, 0
      %v1301 = vsel %vm1290, %v1262, 0
      %v1304 = vsel %vm1290, %v1263, 0
      %v1307 = vsel %vm1290, %v1264, 0
      %v1310 = vsel %vm1290, %v1265, 0
      %v1313 = vsel %vm1290, %v1266, 0
      %v1316 = vsel %vm1290, %v1267, 0
      %v1319 = vsel %vm1290, %v1268, 0
      %v1322 = vsel %vm1290, %v1269, 0
      %v1325 = vsel %vm1290, %v1270, 0
      %v1328 = vsel %vm1290, %v1271, 0
      %v1331 = vsel %vm1290, %v1272, 0
      %v1334 = vsel %vm1290, %v1273, 0
      %v1337 = vsel %vm1290, %v1274, 0
      %1339 = vmatprep.subr.mxu0 0.0
      %1340 = vmatpush1.msra.mxu0 %v1275
      %1341 = vmatprep.subr.mxu0 0.0
      %1342 = vmatpush1.msra.mxu0 %v1276
      %1343 = vmatprep.subr.mxu0 0.0
      %1344 = vmatpush1.msra.mxu0 %v1277
      %1345 = vmatprep.subr.mxu0 0.0
      %1346 = vmatpush1.msra.mxu0 %v1278
      %1347 = vmatprep.subr.mxu0 0.0
      %1348 = vmatpush1.msra.mxu0 %v1279
      %1349 = vmatprep.subr.mxu0 0.0
      %1350 = vmatpush1.msra.mxu0 %v1280
      %1351 = vmatprep.subr.mxu0 0.0
      %1352 = vmatpush1.msra.mxu0 %v1281
      %1353 = vmatprep.subr.mxu0 0.0
      %1354 = vmatpush1.msra.mxu0 %v1282
      %1355 = vmatprep.subr.mxu0 0.0
      %1356 = vmatpush1.msra.mxu0 0.0
      %1357 = vmatprep.subr.mxu0 0.0
      %1358 = vmatpush1.msra.mxu0 0.0
      %1359 = vmatprep.subr.mxu0 0.0
      %1360 = vmatpush1.msra.mxu0 0.0
      %1361 = vmatprep.subr.mxu0 0.0
      %1362 = vmatpush1.msra.mxu0 0.0
      %1363 = vmatprep.subr.mxu0 0.0
      %1364 = vmatpush1.msra.mxu0 0.0
      %1365 = vmatprep.subr.mxu0 0.0
      %1366 = vmatpush1.msra.mxu0 0.0
      %1367 = vmatprep.subr.mxu0 0.0
      %1368 = vmatpush1.msra.mxu0 0.0
      %1369 = vmatprep.subr.mxu0 0.0
      %1370 = vmatpush1.msra.mxu0 0.0
      %1371 = vmatprep.subr.mxu0 0.0
      %1372 = vmatpush1.msra.mxu0 0.0
      %1373 = vmatprep.subr.mxu0 0.0
      %1374 = vmatpush1.msra.mxu0 0.0
      %1375 = vmatprep.subr.mxu0 0.0
      %1376 = vmatpush1.msra.mxu0 0.0
      %1377 = vmatprep.subr.mxu0 0.0
      %1378 = vmatpush1.msra.mxu0 0.0
      %1379 = vmatprep.subr.mxu0 0.0
      %1380 = vmatpush1.msra.mxu0 0.0
      %1381 = vmatprep.subr.mxu0 0.0
      %1382 = vmatpush1.msra.mxu0 0.0
      %1383 = vmatprep.subr.mxu0 0.0
      %1384 = vmatpush1.msra.mxu0 0.0
      %1385 = vmatprep.subr.mxu0 0.0
      %1386 = vmatpush1.msra.mxu0 0.0
      %1387 = vmatprep.subr.mxu0 0.0
      %1388 = vmatpush1.msra.mxu0 0.0
      %1389 = vmatprep.subr.mxu0 0.0
      %1390 = vmatpush1.msra.mxu0 0.0
      %1391 = vmatprep.subr.mxu0 0.0
      %1392 = vmatpush1.msra.mxu0 0.0
      %1393 = vmatprep.subr.mxu0 0.0
      %1394 = vmatpush1.msra.mxu0 0.0
      %1395 = vmatprep.subr.mxu0 0.0
      %1396 = vmatpush1.msra.mxu0 0.0
      %1397 = vmatprep.subr.mxu0 0.0
      %1398 = vmatpush1.msra.mxu0 0.0
      %1399 = vmatprep.subr.mxu0 0.0
      %1400 = vmatpush1.msra.mxu0 0.0
      %1401 = vmatprep.subr.mxu0 0.0
      %1402 = vmatpush1.msra.mxu0 0.0
      %1403 = vmatprep.mubr.f32.mxu0 0.0
      %1404 = vmatmul.mubr.f32.gmra.mrb[0].mxu0 %v1292
      %v1405 = vpop.f32.mrb[0].mxu0
      %v1406 = vadd.f32 %v1288, %v1405
      %v1407 = vpop.f32.mrb[0].mxu0
      %1408 = vmatprep.mubr.f32.mxu0 0.0
      %1409 = vmatmul.mubr.f32.gmra.mrb[0].mxu0 %v1295
      %v1410 = vpop.f32.mrb[0].mxu0
      %v1411 = vadd.f32 %v1288, %v1410
      %v1412 = vpop.f32.mrb[0].mxu0
      %1413 = vmatprep.mubr.f32.mxu0 0.0
      %1414 = vmatmul.mubr.f32.gmra.mrb[0].mxu0 %v1298
      %v1415 = vpop.f32.mrb[0].mxu0
      %v1416 = vadd.f32 %v1288, %v1415
      %v1417 = vpop.f32.mrb[0].mxu0
      %1418 = vmatprep.mubr.f32.mxu0 0.0
      %1419 = vmatmul.mubr.f32.gmra.mrb[0].mxu0 %v1301
      %v1420 = vpop.f32.mrb[0].mxu0
      %v1421 = vadd.f32 %v1288, %v1420
      %v1422 = vpop.f32.mrb[0].mxu0
      %1423 = vmatprep.mubr.f32.mxu0 0.0
      %1424 = vmatmul.mubr.f32.gmra.mrb[0].mxu0 %v1304
      %v1425 = vpop.f32.mrb[0].mxu0
      %v1426 = vadd.f32 %v1288, %v1425
      %v1427 = vpop.f32.mrb[0].mxu0
      %1428 = vmatprep.mubr.f32.mxu0 0.0
      %1429 = vmatmul.mubr.f32.gmra.mrb[0].mxu0 %v1307
      %v1430 = vpop.f32.mrb[0].mxu0
      %v1431 = vadd.f32 %v1288, %v1430
      %v1432 = vpop.f32.mrb[0].mxu0
      %1433 = vmatprep.mubr.f32.mxu0 0.0
      %1434 = vmatmul.mubr.f32.gmra.mrb[0].mxu0 %v1310
      %v1435 = vpop.f32.mrb[0].mxu0
      %v1436 = vadd.f32 %v1288, %v1435
      %v1437 = vpop.f32.mrb[0].mxu0
      %1438 = vmatprep.mubr.f32.mxu0 0.0
      %1439 = vmatmul.mubr.f32.gmra.mrb[0].mxu0 %v1313
      %v1440 = vpop.f32.mrb[0].mxu0
      %v1441 = vadd.f32 %v1288, %v1440
      %v1442 = vpop.f32.mrb[0].mxu0
      %1443 = vmatprep.mubr.f32.mxu0 0.0
      %1444 = vmatmul.mubr.f32.gmra.mrb[0].mxu0 %v1316
      %v1445 = vpop.f32.mrb[0].mxu0
      %v1446 = vadd.f32 %v1288, %v1445
      %v1447 = vpop.f32.mrb[0].mxu0
      %1448 = vmatprep.mubr.f32.mxu0 0.0
      %1449 = vmatmul.mubr.f32.gmra.mrb[0].mxu0 %v1319
      %v1450 = vpop.f32.mrb[0].mxu0
      %v1451 = vadd.f32 %v1288, %v1450
      %v1452 = vpop.f32.mrb[0].mxu0
      %1453 = vmatprep.mubr.f32.mxu0 0.0
      %1454 = vmatmul.mubr.f32.gmra.mrb[0].mxu0 %v1322
      %v1455 = vpop.f32.mrb[0].mxu0
      %v1456 = vadd.f32 %v1288, %v1455
      %v1457 = vpop.f32.mrb[0].mxu0
      %1458 = vmatprep.mubr.f32.mxu0 0.0
      %1459 = vmatmul.mubr.f32.gmra.mrb[0].mxu0 %v1325
      %v1460 = vpop.f32.mrb[0].mxu0
      %v1461 = vadd.f32 %v1288, %v1460
      %v1462 = vpop.f32.mrb[0].mxu0
      %1463 = vmatprep.mubr.f32.mxu0 0.0
      %1464 = vmatmul.mubr.f32.gmra.mrb[0].mxu0 %v1328
      %v1465 = vpop.f32.mrb[0].mxu0
      %v1466 = vadd.f32 %v1288, %v1465
      %v1467 = vpop.f32.mrb[0].mxu0
      %1468 = vmatprep.mubr.f32.mxu0 0.0
      %1469 = vmatmul.mubr.f32.gmra.mrb[0].mxu0 %v1331
      %v1470 = vpop.f32.mrb[0].mxu0
      %v1471 = vadd.f32 %v1288, %v1470
      %v1472 = vpop.f32.mrb[0].mxu0
      %1473 = vmatprep.mubr.f32.mxu0 0.0
      %1474 = vmatmul.mubr.f32.gmra.mrb[0].mxu0 %v1334
      %v1475 = vpop.f32.mrb[0].mxu0
      %v1476 = vadd.f32 %v1288, %v1475
      %v1477 = vpop.f32.mrb[0].mxu0
      %1478 = vmatprep.mubr.f32.mxu0 0.0
      %1479 = vmatmul.mubr.f32.gmra.mrb[0].mxu0 %v1337
      %v1480 = vpop.f32.mrb[0].mxu0
      %v1481 = vadd.f32 %v1288, %v1480
      %v1482 = vpop.f32.mrb[0].mxu0
      %1483 = vdwg.mxu0
      %vm1484 = vcmask 130048
      %1485 = vst.msk [vmem:[#allocation3] sm:$0xff] %vm1484, %v1406
      %1486 = vst.msk [vmem:[#allocation3 + $0x8] sm:$0xff] %vm1484, %v1411
      %1487 = vst.msk [vmem:[#allocation3 + $0x10] sm:$0xff] %vm1484, %v1416
      %1488 = vst.msk [vmem:[#allocation3 + $0x18] sm:$0xff] %vm1484, %v1421
      %1489 = vst.msk [vmem:[#allocation3 + $0x20] sm:$0xff] %vm1484, %v1426
      %1490 = vst.msk [vmem:[#allocation3 + $0x28] sm:$0xff] %vm1484, %v1431
      %1491 = vst.msk [vmem:[#allocation3 + $0x30] sm:$0xff] %vm1484, %v1436
      %1492 = vst.msk [vmem:[#allocation3 + $0x38] sm:$0xff] %vm1484, %v1441
      %1493 = vst.msk [vmem:[#allocation3 + $0x40] sm:$0xff] %vm1484, %v1446
      %1494 = vst.msk [vmem:[#allocation3 + $0x48] sm:$0xff] %vm1484, %v1451
      %1495 = vst.msk [vmem:[#allocation3 + $0x50] sm:$0xff] %vm1484, %v1456
      %1496 = vst.msk [vmem:[#allocation3 + $0x58] sm:$0xff] %vm1484, %v1461
      %1497 = vst.msk [vmem:[#allocation3 + $0x60] sm:$0xff] %vm1484, %v1466
      %1498 = vst.msk [vmem:[#allocation3 + $0x68] sm:$0xff] %vm1484, %v1471
      %1499 = vst.msk [vmem:[#allocation3 + $0x70] sm:$0xff] %vm1484, %v1476
      %1500 = vst.msk [vmem:[#allocation3 + $0x78] sm:$0xff] %vm1484, %v1481
      %v1501 = vld [vmem:[%s6] sm:$0xff]
      %v1502 = vld [vmem:[%s6 + $0x8] sm:$0xff]
      %vm1503 = vcmask 129024
      %1504 = vst.msk [vmem:[#allocation2] sm:$0x7f] %vm1503, 0.0
      %v1505 = vld [vmem:[#allocation3] sm:$0xff]
      %v1506 = vld [vmem:[#allocation3 + $0x8] sm:$0xff]
      %v1507 = vld [vmem:[#allocation3 + $0x10] sm:$0xff]
      %v1508 = vld [vmem:[#allocation3 + $0x18] sm:$0xff]
      %v1509 = vld [vmem:[#allocation3 + $0x20] sm:$0xff]
      %v1510 = vld [vmem:[#allocation3 + $0x28] sm:$0xff]
      %v1511 = vld [vmem:[#allocation3 + $0x30] sm:$0xff]
      %v1512 = vld [vmem:[#allocation3 + $0x38] sm:$0xff]
      %v1513 = vld [vmem:[#allocation3 + $0x40] sm:$0xff]
      %v1514 = vld [vmem:[#allocation3 + $0x48] sm:$0xff]
      %v1515 = vld [vmem:[#allocation3 + $0x50] sm:$0xff]
      %v1516 = vld [vmem:[#allocation3 + $0x58] sm:$0xff]
      %v1517 = vld [vmem:[#allocation3 + $0x60] sm:$0xff]
      %v1518 = vld [vmem:[#allocation3 + $0x68] sm:$0xff]
      %v1519 = vld [vmem:[#allocation3 + $0x70] sm:$0xff]
      %v1520 = vld [vmem:[#allocation3 + $0x78] sm:$0x1]
      %1521 = vst.msk [vmem:[#allocation2 + $0x7] sm:$0xff] %vm1484, %v1505
      %1522 = vst.msk [vmem:[#allocation2 + $0xf] sm:$0xff] %vm1484, %v1506
      %1523 = vst.msk [vmem:[#allocation2 + $0x17] sm:$0xff] %vm1484, %v1507
      %1524 = vst.msk [vmem:[#allocation2 + $0x1f] sm:$0xff] %vm1484, %v1508
      %1525 = vst.msk [vmem:[#allocation2 + $0x27] sm:$0xff] %vm1484, %v1509
      %1526 = vst.msk [vmem:[#allocation2 + $0x2f] sm:$0xff] %vm1484, %v1510
      %1527 = vst.msk [vmem:[#allocation2 + $0x37] sm:$0xff] %vm1484, %v1511
      %1528 = vst.msk [vmem:[#allocation2 + $0x3f] sm:$0xff] %vm1484, %v1512
      %1529 = vst.msk [vmem:[#allocation2 + $0x47] sm:$0xff] %vm1484, %v1513
      %1530 = vst.msk [vmem:[#allocation2 + $0x4f] sm:$0xff] %vm1484, %v1514
      %1531 = vst.msk [vmem:[#allocation2 + $0x57] sm:$0xff] %vm1484, %v1515
      %1532 = vst.msk [vmem:[#allocation2 + $0x5f] sm:$0xff] %vm1484, %v1516
      %1533 = vst.msk [vmem:[#allocation2 + $0x67] sm:$0xff] %vm1484, %v1517
      %1534 = vst.msk [vmem:[#allocation2 + $0x6f] sm:$0xff] %vm1484, %v1518
      %1535 = vst.msk [vmem:[#allocation2 + $0x77] sm:$0xff] %vm1484, %v1519
      %vm1536 = vcmask 122880
      %1537 = vst.msk [vmem:[#allocation2 + $0x7f] sm:$0x1] %vm1536, %v1520
      %vm1538 = vcmask 258176
      %1539 = vst.msk [vmem:[#allocation2] sm:$0x1f] %vm1538, 0.0
      %v1540 = vld [vmem:[#allocation3] sm:$0xff]
      %v1541 = vld [vmem:[#allocation3 + $0x8] sm:$0xff]
      %v1542 = vld [vmem:[#allocation3 + $0x10] sm:$0xff]
      %v1543 = vld [vmem:[#allocation3 + $0x18] sm:$0xff]
      %v1544 = vld [vmem:[#allocation3 + $0x20] sm:$0xff]
      %v1545 = vld [vmem:[#allocation3 + $0x28] sm:$0xff]
      %v1546 = vld [vmem:[#allocation3 + $0x30] sm:$0xff]
      %v1547 = vld [vmem:[#allocation3 + $0x38] sm:$0xff]
      %v1548 = vld [vmem:[#allocation3 + $0x40] sm:$0xff]
      %v1549 = vld [vmem:[#allocation3 + $0x48] sm:$0xff]
      %v1550 = vld [vmem:[#allocation3 + $0x50] sm:$0xff]
      %v1551 = vld [vmem:[#allocation3 + $0x58] sm:$0xff]
      %v1552 = vld [vmem:[#allocation3 + $0x60] sm:$0xff]
      %v1553 = vld [vmem:[#allocation3 + $0x68] sm:$0xff]
      %v1554 = vld [vmem:[#allocation3 + $0x70] sm:$0xff]
      %v1555 = vld [vmem:[#allocation3 + $0x78] sm:$0x7]
      %1572 = vrot.lane.b32.xlu0 %v1540, 16
      %v1573 = vpop.permute.xlu0 %1572
      %1574 = vrot.lane.b32.xlu0 %v1541, 16
      %v1575 = vpop.permute.xlu0 %1574
      %1576 = vrot.lane.b32.xlu0 %v1542, 16
      %v1577 = vpop.permute.xlu0 %1576
      %1578 = vrot.lane.b32.xlu0 %v1543, 16
      %v1579 = vpop.permute.xlu0 %1578
      %1580 = vrot.lane.b32.xlu0 %v1544, 16
      %v1581 = vpop.permute.xlu0 %1580
      %1582 = vrot.lane.b32.xlu0 %v1545, 16
      %v1583 = vpop.permute.xlu0 %1582
      %1584 = vrot.lane.b32.xlu0 %v1546, 16
      %v1585 = vpop.permute.xlu0 %1584
      %1586 = vrot.lane.b32.xlu0 %v1547, 16
      %v1587 = vpop.permute.xlu0 %1586
      %1588 = vrot.lane.b32.xlu0 %v1548, 16
      %v1589 = vpop.permute.xlu0 %1588
      %1590 = vrot.lane.b32.xlu0 %v1549, 16
      %v1591 = vpop.permute.xlu0 %1590
      %1592 = vrot.lane.b32.xlu0 %v1550, 16
      %v1593 = vpop.permute.xlu0 %1592
      %1594 = vrot.lane.b32.xlu0 %v1551, 16
      %v1595 = vpop.permute.xlu0 %1594
      %1596 = vrot.lane.b32.xlu0 %v1552, 16
      %v1597 = vpop.permute.xlu0 %1596
      %1598 = vrot.lane.b32.xlu0 %v1553, 16
      %v1599 = vpop.permute.xlu0 %1598
      %1600 = vrot.lane.b32.xlu0 %v1554, 16
      %v1601 = vpop.permute.xlu0 %1600
      %1602 = vrot.lane.b32.xlu0 %v1555, 16
      %v1603 = vpop.permute.xlu0 %1602
      %vm1620 = vcmask 261248
      %1621 = vst.msk [vmem:[#allocation2 + $0x5] sm:$0xff] %vm1620, %v1573
      %1622 = vst.msk [vmem:[#allocation2 + $0xd] sm:$0xff] %vm1620, %v1575
      %1623 = vst.msk [vmem:[#allocation2 + $0x15] sm:$0xff] %vm1620, %v1577
      %1624 = vst.msk [vmem:[#allocation2 + $0x1d] sm:$0xff] %vm1620, %v1579
      %1625 = vst.msk [vmem:[#allocation2 + $0x25] sm:$0xff] %vm1620, %v1581
      %1626 = vst.msk [vmem:[#allocation2 + $0x2d] sm:$0xff] %vm1620, %v1583
      %1627 = vst.msk [vmem:[#allocation2 + $0x35] sm:$0xff] %vm1620, %v1585
      %1628 = vst.msk [vmem:[#allocation2 + $0x3d] sm:$0xff] %vm1620, %v1587
      %1629 = vst.msk [vmem:[#allocation2 + $0x45] sm:$0xff] %vm1620, %v1589
      %1630 = vst.msk [vmem:[#allocation2 + $0x4d] sm:$0xff] %vm1620, %v1591
      %1631 = vst.msk [vmem:[#allocation2 + $0x55] sm:$0xff] %vm1620, %v1593
      %1632 = vst.msk [vmem:[#allocation2 + $0x5d] sm:$0xff] %vm1620, %v1595
      %1633 = vst.msk [vmem:[#allocation2 + $0x65] sm:$0xff] %vm1620, %v1597
      %1634 = vst.msk [vmem:[#allocation2 + $0x6d] sm:$0xff] %vm1620, %v1599
      %1635 = vst.msk [vmem:[#allocation2 + $0x75] sm:$0xff] %vm1620, %v1601
      %vm1636 = vcmask 256128
      %1637 = vst.msk [vmem:[#allocation2 + $0x7d] sm:$0x7] %vm1636, %v1603
      %vm1638 = vcmask 387328
      %1639 = vst.msk [vmem:[#allocation2] sm:$0x7] %vm1638, 0.0
      %v1640 = vld [vmem:[#allocation3] sm:$0xff]
      %v1641 = vld [vmem:[#allocation3 + $0x8] sm:$0xff]
      %v1642 = vld [vmem:[#allocation3 + $0x10] sm:$0xff]
      %v1643 = vld [vmem:[#allocation3 + $0x18] sm:$0xff]
      %v1644 = vld [vmem:[#allocation3 + $0x20] sm:$0xff]
      %v1645 = vld [vmem:[#allocation3 + $0x28] sm:$0xff]
      %v1646 = vld [vmem:[#allocation3 + $0x30] sm:$0xff]
      %v1647 = vld [vmem:[#allocation3 + $0x38] sm:$0xff]
      %v1648 = vld [vmem:[#allocation3 + $0x40] sm:$0xff]
      %v1649 = vld [vmem:[#allocation3 + $0x48] sm:$0xff]
      %v1650 = vld [vmem:[#allocation3 + $0x50] sm:$0xff]
      %v1651 = vld [vmem:[#allocation3 + $0x58] sm:$0xff]
      %v1652 = vld [vmem:[#allocation3 + $0x60] sm:$0xff]
      %v1653 = vld [vmem:[#allocation3 + $0x68] sm:$0xff]
      %v1654 = vld [vmem:[#allocation3 + $0x70] sm:$0xff]
      %v1655 = vld [vmem:[#allocation3 + $0x78] sm:$0x1f]
      %1672 = vrot.lane.b32.xlu0 %v1640, 32
      %v1673 = vpop.permute.xlu0 %1672
      %1674 = vrot.lane.b32.xlu0 %v1641, 32
      %v1675 = vpop.permute.xlu0 %1674
      %1676 = vrot.lane.b32.xlu0 %v1642, 32
      %v1677 = vpop.permute.xlu0 %1676
      %1678 = vrot.lane.b32.xlu0 %v1643, 32
      %v1679 = vpop.permute.xlu0 %1678
      %1680 = vrot.lane.b32.xlu0 %v1644, 32
      %v1681 = vpop.permute.xlu0 %1680
      %1682 = vrot.lane.b32.xlu0 %v1645, 32
      %v1683 = vpop.permute.xlu0 %1682
      %1684 = vrot.lane.b32.xlu0 %v1646, 32
      %v1685 = vpop.permute.xlu0 %1684
      %1686 = vrot.lane.b32.xlu0 %v1647, 32
      %v1687 = vpop.permute.xlu0 %1686
      %1688 = vrot.lane.b32.xlu0 %v1648, 32
      %v1689 = vpop.permute.xlu0 %1688
      %1690 = vrot.lane.b32.xlu0 %v1649, 32
      %v1691 = vpop.permute.xlu0 %1690
      %1692 = vrot.lane.b32.xlu0 %v1650, 32
      %v1693 = vpop.permute.xlu0 %1692
      %1694 = vrot.lane.b32.xlu0 %v1651, 32
      %v1695 = vpop.permute.xlu0 %1694
      %1696 = vrot.lane.b32.xlu0 %v1652, 32
      %v1697 = vpop.permute.xlu0 %1696
      %1698 = vrot.lane.b32.xlu0 %v1653, 32
      %v1699 = vpop.permute.xlu0 %1698
      %1700 = vrot.lane.b32.xlu0 %v1654, 32
      %v1701 = vpop.permute.xlu0 %1700
      %1702 = vrot.lane.b32.xlu0 %v1655, 32
      %v1703 = vpop.permute.xlu0 %1702
      %vm1720 = vcmask 392448
      %1721 = vst.msk [vmem:[#allocation2 + $0x3] sm:$0xff] %vm1720, %v1673
      %1722 = vst.msk [vmem:[#allocation2 + $0xb] sm:$0xff] %vm1720, %v1675
      %1723 = vst.msk [vmem:[#allocation2 + $0x13] sm:$0xff] %vm1720, %v1677
      %1724 = vst.msk [vmem:[#allocation2 + $0x1b] sm:$0xff] %vm1720, %v1679
      %1725 = vst.msk [vmem:[#allocation2 + $0x23] sm:$0xff] %vm1720, %v1681
      %1726 = vst.msk [vmem:[#allocation2 + $0x2b] sm:$0xff] %vm1720, %v1683
      %1727 = vst.msk [vmem:[#allocation2 + $0x33] sm:$0xff] %vm1720, %v1685
      %1728 = vst.msk [vmem:[#allocation2 + $0x3b] sm:$0xff] %vm1720, %v1687
      %1729 = vst.msk [vmem:[#allocation2 + $0x43] sm:$0xff] %vm1720, %v1689
      %1730 = vst.msk [vmem:[#allocation2 + $0x4b] sm:$0xff] %vm1720, %v1691
      %1731 = vst.msk [vmem:[#allocation2 + $0x53] sm:$0xff] %vm1720, %v1693
      %1732 = vst.msk [vmem:[#allocation2 + $0x5b] sm:$0xff] %vm1720, %v1695
      %1733 = vst.msk [vmem:[#allocation2 + $0x63] sm:$0xff] %vm1720, %v1697
      %1734 = vst.msk [vmem:[#allocation2 + $0x6b] sm:$0xff] %vm1720, %v1699
      %1735 = vst.msk [vmem:[#allocation2 + $0x73] sm:$0xff] %vm1720, %v1701
      %vm1736 = vcmask 389376
      %1737 = vst.msk [vmem:[#allocation2 + $0x7b] sm:$0x1f] %vm1736, %v1703
      %vm1738 = vcmask 516480
      %1739 = vst.msk [vmem:[#allocation2] sm:$0x1] %vm1738, 0.0
      %v1740 = vld [vmem:[#allocation3] sm:$0xff]
      %v1741 = vld [vmem:[#allocation3 + $0x8] sm:$0xff]
      %v1742 = vld [vmem:[#allocation3 + $0x10] sm:$0xff]
      %v1743 = vld [vmem:[#allocation3 + $0x18] sm:$0xff]
      %v1744 = vld [vmem:[#allocation3 + $0x20] sm:$0xff]
      %v1745 = vld [vmem:[#allocation3 + $0x28] sm:$0xff]
      %v1746 = vld [vmem:[#allocation3 + $0x30] sm:$0xff]
      %v1747 = vld [vmem:[#allocation3 + $0x38] sm:$0xff]
      %v1748 = vld [vmem:[#allocation3 + $0x40] sm:$0xff]
      %v1749 = vld [vmem:[#allocation3 + $0x48] sm:$0xff]
      %v1750 = vld [vmem:[#allocation3 + $0x50] sm:$0xff]
      %v1751 = vld [vmem:[#allocation3 + $0x58] sm:$0xff]
      %v1752 = vld [vmem:[#allocation3 + $0x60] sm:$0xff]
      %v1753 = vld [vmem:[#allocation3 + $0x68] sm:$0xff]
      %v1754 = vld [vmem:[#allocation3 + $0x70] sm:$0xff]
      %v1755 = vld [vmem:[#allocation3 + $0x78] sm:$0x7f]
      %1772 = vrot.lane.b32.xlu0 %v1740, 48
      %v1773 = vpop.permute.xlu0 %1772
      %1774 = vrot.lane.b32.xlu0 %v1741, 48
      %v1775 = vpop.permute.xlu0 %1774
      %1776 = vrot.lane.b32.xlu0 %v1742, 48
      %v1777 = vpop.permute.xlu0 %1776
      %1778 = vrot.lane.b32.xlu0 %v1743, 48
      %v1779 = vpop.permute.xlu0 %1778
      %1780 = vrot.lane.b32.xlu0 %v1744, 48
      %v1781 = vpop.permute.xlu0 %1780
      %1782 = vrot.lane.b32.xlu0 %v1745, 48
      %v1783 = vpop.permute.xlu0 %1782
      %1784 = vrot.lane.b32.xlu0 %v1746, 48
      %v1785 = vpop.permute.xlu0 %1784
      %1786 = vrot.lane.b32.xlu0 %v1747, 48
      %v1787 = vpop.permute.xlu0 %1786
      %1788 = vrot.lane.b32.xlu0 %v1748, 48
      %v1789 = vpop.permute.xlu0 %1788
      %1790 = vrot.lane.b32.xlu0 %v1749, 48
      %v1791 = vpop.permute.xlu0 %1790
      %1792 = vrot.lane.b32.xlu0 %v1750, 48
      %v1793 = vpop.permute.xlu0 %1792
      %1794 = vrot.lane.b32.xlu0 %v1751, 48
      %v1795 = vpop.permute.xlu0 %1794
      %1796 = vrot.lane.b32.xlu0 %v1752, 48
      %v1797 = vpop.permute.xlu0 %1796
      %1798 = vrot.lane.b32.xlu0 %v1753, 48
      %v1799 = vpop.permute.xlu0 %1798
      %1800 = vrot.lane.b32.xlu0 %v1754, 48
      %v1801 = vpop.permute.xlu0 %1800
      %1802 = vrot.lane.b32.xlu0 %v1755, 48
      %v1803 = vpop.permute.xlu0 %1802
      %vm1820 = vcmask 523648
      %1821 = vst.msk [vmem:[#allocation2 + $0x1] sm:$0xff] %vm1820, %v1773
      %1822 = vst.msk [vmem:[#allocation2 + $0x9] sm:$0xff] %vm1820, %v1775
      %1823 = vst.msk [vmem:[#allocation2 + $0x11] sm:$0xff] %vm1820, %v1777
      %1824 = vst.msk [vmem:[#allocation2 + $0x19] sm:$0xff] %vm1820, %v1779
      %1825 = vst.msk [vmem:[#allocation2 + $0x21] sm:$0xff] %vm1820, %v1781
      %1826 = vst.msk [vmem:[#allocation2 + $0x29] sm:$0xff] %vm1820, %v1783
      %1827 = vst.msk [vmem:[#allocation2 + $0x31] sm:$0xff] %vm1820, %v1785
      %1828 = vst.msk [vmem:[#allocation2 + $0x39] sm:$0xff] %vm1820, %v1787
      %1829 = vst.msk [vmem:[#allocation2 + $0x41] sm:$0xff] %vm1820, %v1789
      %1830 = vst.msk [vmem:[#allocation2 + $0x49] sm:$0xff] %vm1820, %v1791
      %1831 = vst.msk [vmem:[#allocation2 + $0x51] sm:$0xff] %vm1820, %v1793
      %1832 = vst.msk [vmem:[#allocation2 + $0x59] sm:$0xff] %vm1820, %v1795
      %1833 = vst.msk [vmem:[#allocation2 + $0x61] sm:$0xff] %vm1820, %v1797
      %1834 = vst.msk [vmem:[#allocation2 + $0x69] sm:$0xff] %vm1820, %v1799
      %1835 = vst.msk [vmem:[#allocation2 + $0x71] sm:$0xff] %vm1820, %v1801
      %vm1836 = vcmask 522624
      %1837 = vst.msk [vmem:[#allocation2 + $0x79] sm:$0x7f] %vm1836, %v1803
      %vm1838 = vcmask 647680
      %1839 = vst.msk [vmem:[#allocation2 + $0x7f] sm:$0x1] %vm1838, 0.0
      %v1840 = vld [vmem:[#allocation3 + $0x1] sm:$0xff]
      %v1841 = vld [vmem:[#allocation3 + $0x9] sm:$0xff]
      %v1842 = vld [vmem:[#allocation3 + $0x11] sm:$0xff]
      %v1843 = vld [vmem:[#allocation3 + $0x19] sm:$0xff]
      %v1844 = vld [vmem:[#allocation3 + $0x21] sm:$0xff]
      %v1845 = vld [vmem:[#allocation3 + $0x29] sm:$0xff]
      %v1846 = vld [vmem:[#allocation3 + $0x31] sm:$0xff]
      %v1847 = vld [vmem:[#allocation3 + $0x39] sm:$0xff]
      %v1848 = vld [vmem:[#allocation3 + $0x41] sm:$0xff]
      %v1849 = vld [vmem:[#allocation3 + $0x49] sm:$0xff]
      %v1850 = vld [vmem:[#allocation3 + $0x51] sm:$0xff]
      %v1851 = vld [vmem:[#allocation3 + $0x59] sm:$0xff]
      %v1852 = vld [vmem:[#allocation3 + $0x61] sm:$0xff]
      %v1853 = vld [vmem:[#allocation3 + $0x69] sm:$0xff]
      %v1854 = vld [vmem:[#allocation3 + $0x71] sm:$0xff]
      %v1855 = vld [vmem:[#allocation3 + $0x79] sm:$0x7f]
      %1872 = vrot.lane.b32.xlu0 %v1840, 64
      %v1873 = vpop.permute.xlu0 %1872
      %1874 = vrot.lane.b32.xlu0 %v1841, 64
      %v1875 = vpop.permute.xlu0 %1874
      %1876 = vrot.lane.b32.xlu0 %v1842, 64
      %v1877 = vpop.permute.xlu0 %1876
      %1878 = vrot.lane.b32.xlu0 %v1843, 64
      %v1879 = vpop.permute.xlu0 %1878
      %1880 = vrot.lane.b32.xlu0 %v1844, 64
      %v1881 = vpop.permute.xlu0 %1880
      %1882 = vrot.lane.b32.xlu0 %v1845, 64
      %v1883 = vpop.permute.xlu0 %1882
      %1884 = vrot.lane.b32.xlu0 %v1846, 64
      %v1885 = vpop.permute.xlu0 %1884
      %1886 = vrot.lane.b32.xlu0 %v1847, 64
      %v1887 = vpop.permute.xlu0 %1886
      %1888 = vrot.lane.b32.xlu0 %v1848, 64
      %v1889 = vpop.permute.xlu0 %1888
      %1890 = vrot.lane.b32.xlu0 %v1849, 64
      %v1891 = vpop.permute.xlu0 %1890
      %1892 = vrot.lane.b32.xlu0 %v1850, 64
      %v1893 = vpop.permute.xlu0 %1892
      %1894 = vrot.lane.b32.xlu0 %v1851, 64
      %v1895 = vpop.permute.xlu0 %1894
      %1896 = vrot.lane.b32.xlu0 %v1852, 64
      %v1897 = vpop.permute.xlu0 %1896
      %1898 = vrot.lane.b32.xlu0 %v1853, 64
      %v1899 = vpop.permute.xlu0 %1898
      %1900 = vrot.lane.b32.xlu0 %v1854, 64
      %v1901 = vpop.permute.xlu0 %1900
      %1902 = vrot.lane.b32.xlu0 %v1855, 64
      %v1903 = vpop.permute.xlu0 %1902
      %vm1920 = vcmask 654848
      %1921 = vst.msk [vmem:[#allocation2] sm:$0xff] %vm1920, %v1873
      %1922 = vst.msk [vmem:[#allocation2 + $0x8] sm:$0xff] %vm1920, %v1875
      %1923 = vst.msk [vmem:[#allocation2 + $0x10] sm:$0xff] %vm1920, %v1877
      %1924 = vst.msk [vmem:[#allocation2 + $0x18] sm:$0xff] %vm1920, %v1879
      %1925 = vst.msk [vmem:[#allocation2 + $0x20] sm:$0xff] %vm1920, %v1881
      %1926 = vst.msk [vmem:[#allocation2 + $0x28] sm:$0xff] %vm1920, %v1883
      %1927 = vst.msk [vmem:[#allocation2 + $0x30] sm:$0xff] %vm1920, %v1885
      %1928 = vst.msk [vmem:[#allocation2 + $0x38] sm:$0xff] %vm1920, %v1887
      %1929 = vst.msk [vmem:[#allocation2 + $0x40] sm:$0xff] %vm1920, %v1889
      %1930 = vst.msk [vmem:[#allocation2 + $0x48] sm:$0xff] %vm1920, %v1891
      %1931 = vst.msk [vmem:[#allocation2 + $0x50] sm:$0xff] %vm1920, %v1893
      %1932 = vst.msk [vmem:[#allocation2 + $0x58] sm:$0xff] %vm1920, %v1895
      %1933 = vst.msk [vmem:[#allocation2 + $0x60] sm:$0xff] %vm1920, %v1897
      %1934 = vst.msk [vmem:[#allocation2 + $0x68] sm:$0xff] %vm1920, %v1899
      %1935 = vst.msk [vmem:[#allocation2 + $0x70] sm:$0xff] %vm1920, %v1901
      %vm1936 = vcmask 653824
      %1937 = vst.msk [vmem:[#allocation2 + $0x78] sm:$0x7f] %vm1936, %v1903
      %vm1938 = vcmask 780928
      %1939 = vst.msk [vmem:[#allocation2 + $0x7d] sm:$0x7] %vm1938, 0.0
      %v1940 = vld [vmem:[#allocation3 + $0x3] sm:$0xff]
      %v1941 = vld [vmem:[#allocation3 + $0xb] sm:$0xff]
      %v1942 = vld [vmem:[#allocation3 + $0x13] sm:$0xff]
      %v1943 = vld [vmem:[#allocation3 + $0x1b] sm:$0xff]
      %v1944 = vld [vmem:[#allocation3 + $0x23] sm:$0xff]
      %v1945 = vld [vmem:[#allocation3 + $0x2b] sm:$0xff]
      %v1946 = vld [vmem:[#allocation3 + $0x33] sm:$0xff]
      %v1947 = vld [vmem:[#allocation3 + $0x3b] sm:$0xff]
      %v1948 = vld [vmem:[#allocation3 + $0x43] sm:$0xff]
      %v1949 = vld [vmem:[#allocation3 + $0x4b] sm:$0xff]
      %v1950 = vld [vmem:[#allocation3 + $0x53] sm:$0xff]
      %v1951 = vld [vmem:[#allocation3 + $0x5b] sm:$0xff]
      %v1952 = vld [vmem:[#allocation3 + $0x63] sm:$0xff]
      %v1953 = vld [vmem:[#allocation3 + $0x6b] sm:$0xff]
      %v1954 = vld [vmem:[#allocation3 + $0x73] sm:$0xff]
      %v1955 = vld [vmem:[#allocation3 + $0x7b] sm:$0x1f]
      %1972 = vrot.lane.b32.xlu0 %v1940, 80
      %v1973 = vpop.permute.xlu0 %1972
      %1974 = vrot.lane.b32.xlu0 %v1941, 80
      %v1975 = vpop.permute.xlu0 %1974
      %1976 = vrot.lane.b32.xlu0 %v1942, 80
      %v1977 = vpop.permute.xlu0 %1976
      %1978 = vrot.lane.b32.xlu0 %v1943, 80
      %v1979 = vpop.permute.xlu0 %1978
      %1980 = vrot.lane.b32.xlu0 %v1944, 80
      %v1981 = vpop.permute.xlu0 %1980
      %1982 = vrot.lane.b32.xlu0 %v1945, 80
      %v1983 = vpop.permute.xlu0 %1982
      %1984 = vrot.lane.b32.xlu0 %v1946, 80
      %v1985 = vpop.permute.xlu0 %1984
      %1986 = vrot.lane.b32.xlu0 %v1947, 80
      %v1987 = vpop.permute.xlu0 %1986
      %1988 = vrot.lane.b32.xlu0 %v1948, 80
      %v1989 = vpop.permute.xlu0 %1988
      %1990 = vrot.lane.b32.xlu0 %v1949, 80
      %v1991 = vpop.permute.xlu0 %1990
      %1992 = vrot.lane.b32.xlu0 %v1950, 80
      %v1993 = vpop.permute.xlu0 %1992
      %1994 = vrot.lane.b32.xlu0 %v1951, 80
      %v1995 = vpop.permute.xlu0 %1994
      %1996 = vrot.lane.b32.xlu0 %v1952, 80
      %v1997 = vpop.permute.xlu0 %1996
      %1998 = vrot.lane.b32.xlu0 %v1953, 80
      %v1999 = vpop.permute.xlu0 %1998
      %2000 = vrot.lane.b32.xlu0 %v1954, 80
      %v2001 = vpop.permute.xlu0 %2000
      %2002 = vrot.lane.b32.xlu0 %v1955, 80
      %v2003 = vpop.permute.xlu0 %2002
      %vm2020 = vcmask 786048
      %2021 = vst.msk [vmem:[#allocation2] sm:$0xff] %vm2020, %v1973
      %2022 = vst.msk [vmem:[#allocation2 + $0x8] sm:$0xff] %vm2020, %v1975
      %2023 = vst.msk [vmem:[#allocation2 + $0x10] sm:$0xff] %vm2020, %v1977
      %2024 = vst.msk [vmem:[#allocation2 + $0x18] sm:$0xff] %vm2020, %v1979
      %2025 = vst.msk [vmem:[#allocation2 + $0x20] sm:$0xff] %vm2020, %v1981
      %2026 = vst.msk [vmem:[#allocation2 + $0x28] sm:$0xff] %vm2020, %v1983
      %2027 = vst.msk [vmem:[#allocation2 + $0x30] sm:$0xff] %vm2020, %v1985
      %2028 = vst.msk [vmem:[#allocation2 + $0x38] sm:$0xff] %vm2020, %v1987
      %2029 = vst.msk [vmem:[#allocation2 + $0x40] sm:$0xff] %vm2020, %v1989
      %2030 = vst.msk [vmem:[#allocation2 + $0x48] sm:$0xff] %vm2020, %v1991
      %2031 = vst.msk [vmem:[#allocation2 + $0x50] sm:$0xff] %vm2020, %v1993
      %2032 = vst.msk [vmem:[#allocation2 + $0x58] sm:$0xff] %vm2020, %v1995
      %2033 = vst.msk [vmem:[#allocation2 + $0x60] sm:$0xff] %vm2020, %v1997
      %2034 = vst.msk [vmem:[#allocation2 + $0x68] sm:$0xff] %vm2020, %v1999
      %2035 = vst.msk [vmem:[#allocation2 + $0x70] sm:$0xff] %vm2020, %v2001
      %vm2036 = vcmask 782976
      %2037 = vst.msk [vmem:[#allocation2 + $0x78] sm:$0x1f] %vm2036, %v2003
      %vm2038 = vcmask 914176
      %2039 = vst.msk [vmem:[#allocation2 + $0x7b] sm:$0x1f] %vm2038, 0.0
      %v2040 = vld [vmem:[#allocation3 + $0x5] sm:$0xff]
      %v2041 = vld [vmem:[#allocation3 + $0xd] sm:$0xff]
      %v2042 = vld [vmem:[#allocation3 + $0x15] sm:$0xff]
      %v2043 = vld [vmem:[#allocation3 + $0x1d] sm:$0xff]
      %v2044 = vld [vmem:[#allocation3 + $0x25] sm:$0xff]
      %v2045 = vld [vmem:[#allocation3 + $0x2d] sm:$0xff]
      %v2046 = vld [vmem:[#allocation3 + $0x35] sm:$0xff]
      %v2047 = vld [vmem:[#allocation3 + $0x3d] sm:$0xff]
      %v2048 = vld [vmem:[#allocation3 + $0x45] sm:$0xff]
      %v2049 = vld [vmem:[#allocation3 + $0x4d] sm:$0xff]
      %v2050 = vld [vmem:[#allocation3 + $0x55] sm:$0xff]
      %v2051 = vld [vmem:[#allocation3 + $0x5d] sm:$0xff]
      %v2052 = vld [vmem:[#allocation3 + $0x65] sm:$0xff]
      %v2053 = vld [vmem:[#allocation3 + $0x6d] sm:$0xff]
      %v2054 = vld [vmem:[#allocation3 + $0x75] sm:$0xff]
      %v2055 = vld [vmem:[#allocation3 + $0x7d] sm:$0x7]
      %2072 = vrot.lane.b32.xlu0 %v2040, 96
      %v2073 = vpop.permute.xlu0 %2072
      %2074 = vrot.lane.b32.xlu0 %v2041, 96
      %v2075 = vpop.permute.xlu0 %2074
      %2076 = vrot.lane.b32.xlu0 %v2042, 96
      %v2077 = vpop.permute.xlu0 %2076
      %2078 = vrot.lane.b32.xlu0 %v2043, 96
      %v2079 = vpop.permute.xlu0 %2078
      %2080 = vrot.lane.b32.xlu0 %v2044, 96
      %v2081 = vpop.permute.xlu0 %2080
      %2082 = vrot.lane.b32.xlu0 %v2045, 96
      %v2083 = vpop.permute.xlu0 %2082
      %2084 = vrot.lane.b32.xlu0 %v2046, 96
      %v2085 = vpop.permute.xlu0 %2084
      %2086 = vrot.lane.b32.xlu0 %v2047, 96
      %v2087 = vpop.permute.xlu0 %2086
      %2088 = vrot.lane.b32.xlu0 %v2048, 96
      %v2089 = vpop.permute.xlu0 %2088
      %2090 = vrot.lane.b32.xlu0 %v2049, 96
      %v2091 = vpop.permute.xlu0 %2090
      %2092 = vrot.lane.b32.xlu0 %v2050, 96
      %v2093 = vpop.permute.xlu0 %2092
      %2094 = vrot.lane.b32.xlu0 %v2051, 96
      %v2095 = vpop.permute.xlu0 %2094
      %2096 = vrot.lane.b32.xlu0 %v2052, 96
      %v2097 = vpop.permute.xlu0 %2096
      %2098 = vrot.lane.b32.xlu0 %v2053, 96
      %v2099 = vpop.permute.xlu0 %2098
      %2100 = vrot.lane.b32.xlu0 %v2054, 96
      %v2101 = vpop.permute.xlu0 %2100
      %2102 = vrot.lane.b32.xlu0 %v2055, 96
      %v2103 = vpop.permute.xlu0 %2102
      %vm2120 = vcmask 917248
      %2121 = vst.msk [vmem:[#allocation2] sm:$0xff] %vm2120, %v2073
      %2122 = vst.msk [vmem:[#allocation2 + $0x8] sm:$0xff] %vm2120, %v2075
      %2123 = vst.msk [vmem:[#allocation2 + $0x10] sm:$0xff] %vm2120, %v2077
      %2124 = vst.msk [vmem:[#allocation2 + $0x18] sm:$0xff] %vm2120, %v2079
      %2125 = vst.msk [vmem:[#allocation2 + $0x20] sm:$0xff] %vm2120, %v2081
      %2126 = vst.msk [vmem:[#allocation2 + $0x28] sm:$0xff] %vm2120, %v2083
      %2127 = vst.msk [vmem:[#allocation2 + $0x30] sm:$0xff] %vm2120, %v2085
      %2128 = vst.msk [vmem:[#allocation2 + $0x38] sm:$0xff] %vm2120, %v2087
      %2129 = vst.msk [vmem:[#allocation2 + $0x40] sm:$0xff] %vm2120, %v2089
      %2130 = vst.msk [vmem:[#allocation2 + $0x48] sm:$0xff] %vm2120, %v2091
      %2131 = vst.msk [vmem:[#allocation2 + $0x50] sm:$0xff] %vm2120, %v2093
      %2132 = vst.msk [vmem:[#allocation2 + $0x58] sm:$0xff] %vm2120, %v2095
      %2133 = vst.msk [vmem:[#allocation2 + $0x60] sm:$0xff] %vm2120, %v2097
      %2134 = vst.msk [vmem:[#allocation2 + $0x68] sm:$0xff] %vm2120, %v2099
      %2135 = vst.msk [vmem:[#allocation2 + $0x70] sm:$0xff] %vm2120, %v2101
      %vm2136 = vcmask 912128
      %2137 = vst.msk [vmem:[#allocation2 + $0x78] sm:$0x7] %vm2136, %v2103
      %vm2138 = vcmask 1047424
      %2139 = vst.msk [vmem:[#allocation2 + $0x79] sm:$0x7f] %vm2138, 0.0
      %v2140 = vld [vmem:[#allocation3 + $0x7] sm:$0xff]
      %v2141 = vld [vmem:[#allocation3 + $0xf] sm:$0xff]
      %v2142 = vld [vmem:[#allocation3 + $0x17] sm:$0xff]
      %v2143 = vld [vmem:[#allocation3 + $0x1f] sm:$0xff]
      %v2144 = vld [vmem:[#allocation3 + $0x27] sm:$0xff]
      %v2145 = vld [vmem:[#allocation3 + $0x2f] sm:$0xff]
      %v2146 = vld [vmem:[#allocation3 + $0x37] sm:$0xff]
      %v2147 = vld [vmem:[#allocation3 + $0x3f] sm:$0xff]
      %v2148 = vld [vmem:[#allocation3 + $0x47] sm:$0xff]
      %v2149 = vld [vmem:[#allocation3 + $0x4f] sm:$0xff]
      %v2150 = vld [vmem:[#allocation3 + $0x57] sm:$0xff]
      %v2151 = vld [vmem:[#allocation3 + $0x5f] sm:$0xff]
      %v2152 = vld [vmem:[#allocation3 + $0x67] sm:$0xff]
      %v2153 = vld [vmem:[#allocation3 + $0x6f] sm:$0xff]
      %v2154 = vld [vmem:[#allocation3 + $0x77] sm:$0xff]
      %v2155 = vld [vmem:[#allocation3 + $0x7f] sm:$0x1]
      %2172 = vrot.lane.b32.xlu0 %v2140, 112
      %v2173 = vpop.permute.xlu0 %2172
      %2174 = vrot.lane.b32.xlu0 %v2141, 112
      %v2175 = vpop.permute.xlu0 %2174
      %2176 = vrot.lane.b32.xlu0 %v2142, 112
      %v2177 = vpop.permute.xlu0 %2176
      %2178 = vrot.lane.b32.xlu0 %v2143, 112
      %v2179 = vpop.permute.xlu0 %2178
      %2180 = vrot.lane.b32.xlu0 %v2144, 112
      %v2181 = vpop.permute.xlu0 %2180
      %2182 = vrot.lane.b32.xlu0 %v2145, 112
      %v2183 = vpop.permute.xlu0 %2182
      %2184 = vrot.lane.b32.xlu0 %v2146, 112
      %v2185 = vpop.permute.xlu0 %2184
      %2186 = vrot.lane.b32.xlu0 %v2147, 112
      %v2187 = vpop.permute.xlu0 %2186
      %2188 = vrot.lane.b32.xlu0 %v2148, 112
      %v2189 = vpop.permute.xlu0 %2188
      %2190 = vrot.lane.b32.xlu0 %v2149, 112
      %v2191 = vpop.permute.xlu0 %2190
      %2192 = vrot.lane.b32.xlu0 %v2150, 112
      %v2193 = vpop.permute.xlu0 %2192
      %2194 = vrot.lane.b32.xlu0 %v2151, 112
      %v2195 = vpop.permute.xlu0 %2194
      %2196 = vrot.lane.b32.xlu0 %v2152, 112
      %v2197 = vpop.permute.xlu0 %2196
      %2198 = vrot.lane.b32.xlu0 %v2153, 112
      %v2199 = vpop.permute.xlu0 %2198
      %2200 = vrot.lane.b32.xlu0 %v2154, 112
      %v2201 = vpop.permute.xlu0 %2200
      %2202 = vrot.lane.b32.xlu0 %v2155, 112
      %v2203 = vpop.permute.xlu0 %2202
      %vm2220 = vcmask 1048448
      %2221 = vst.msk [vmem:[#allocation2] sm:$0xff] %vm2220, %v2173
      %2222 = vst.msk [vmem:[#allocation2 + $0x8] sm:$0xff] %vm2220, %v2175
      %2223 = vst.msk [vmem:[#allocation2 + $0x10] sm:$0xff] %vm2220, %v2177
      %2224 = vst.msk [vmem:[#allocation2 + $0x18] sm:$0xff] %vm2220, %v2179
      %2225 = vst.msk [vmem:[#allocation2 + $0x20] sm:$0xff] %vm2220, %v2181
      %2226 = vst.msk [vmem:[#allocation2 + $0x28] sm:$0xff] %vm2220, %v2183
      %2227 = vst.msk [vmem:[#allocation2 + $0x30] sm:$0xff] %vm2220, %v2185
      %2228 = vst.msk [vmem:[#allocation2 + $0x38] sm:$0xff] %vm2220, %v2187
      %2229 = vst.msk [vmem:[#allocation2 + $0x40] sm:$0xff] %vm2220, %v2189
      %2230 = vst.msk [vmem:[#allocation2 + $0x48] sm:$0xff] %vm2220, %v2191
      %2231 = vst.msk [vmem:[#allocation2 + $0x50] sm:$0xff] %vm2220, %v2193
      %2232 = vst.msk [vmem:[#allocation2 + $0x58] sm:$0xff] %vm2220, %v2195
      %2233 = vst.msk [vmem:[#allocation2 + $0x60] sm:$0xff] %vm2220, %v2197
      %2234 = vst.msk [vmem:[#allocation2 + $0x68] sm:$0xff] %vm2220, %v2199
      %2235 = vst.msk [vmem:[#allocation2 + $0x70] sm:$0xff] %vm2220, %v2201
      %vm2236 = vcmask 1041280
      %2237 = vst.msk [vmem:[#allocation2 + $0x78] sm:$0x1] %vm2236, %v2203
      %v2238 = vld [vmem:[%s2] sm:$0xff]
      %v2239 = vld [vmem:[%s2 + $0x8] sm:$0xff]
      %v2240 = vld [vmem:[%s2 + $0x10] sm:$0xff]
      %v2241 = vld [vmem:[%s2 + $0x18] sm:$0xff]
      %v2242 = vld [vmem:[%s2 + $0x20] sm:$0xff]
      %v2243 = vld [vmem:[%s2 + $0x28] sm:$0xff]
      %v2244 = vld [vmem:[%s2 + $0x30] sm:$0xff]
      %v2245 = vld [vmem:[%s2 + $0x38] sm:$0xff]
      %v2246 = vld [vmem:[%s2 + $0x40] sm:$0xff]
      %v2247 = vld [vmem:[%s2 + $0x48] sm:$0xff]
      %v2248 = vld [vmem:[%s2 + $0x50] sm:$0xff]
      %v2249 = vld [vmem:[%s2 + $0x58] sm:$0xff]
      %v2250 = vld [vmem:[%s2 + $0x60] sm:$0xff]
      %v2251 = vld [vmem:[%s2 + $0x68] sm:$0xff]
      %v2252 = vld [vmem:[%s2 + $0x70] sm:$0xff]
      %v2253 = vld [vmem:[%s2 + $0x78] sm:$0xff]
      %v2254 = vld [vmem:[#allocation2] sm:$0xff]
      %v2255 = vld [vmem:[#allocation2 + $0x8] sm:$0xff]
      %v2256 = vld [vmem:[#allocation2 + $0x10] sm:$0xff]
      %v2257 = vld [vmem:[#allocation2 + $0x18] sm:$0xff]
      %v2258 = vld [vmem:[#allocation2 + $0x20] sm:$0xff]
      %v2259 = vld [vmem:[#allocation2 + $0x28] sm:$0xff]
      %v2260 = vld [vmem:[#allocation2 + $0x30] sm:$0xff]
      %v2261 = vld [vmem:[#allocation2 + $0x38] sm:$0xff]
      %v2262 = vld [vmem:[#allocation2 + $0x40] sm:$0xff]
      %v2263 = vld [vmem:[#allocation2 + $0x48] sm:$0xff]
      %v2264 = vld [vmem:[#allocation2 + $0x50] sm:$0xff]
      %v2265 = vld [vmem:[#allocation2 + $0x58] sm:$0xff]
      %v2266 = vld [vmem:[#allocation2 + $0x60] sm:$0xff]
      %v2267 = vld [vmem:[#allocation2 + $0x68] sm:$0xff]
      %v2268 = vld [vmem:[#allocation2 + $0x70] sm:$0xff]
      %v2269 = vld [vmem:[#allocation2 + $0x78] sm:$0xff]
      %s2270 = scalar_lea.vmem %s3, 1
      %v2271 = vld [vmem:[%s2270] sm:$0x1]
      %v2273 = vlaneseq
      %v2274 = vshrl.u32 %v2273, 7
      %v2275 = vsub.s32 0, %v2274
      %v2276 = vrot.slane %v2271, %v2275
      %2278 = vmatprep.subr.mxu0 0.0
      %2279 = vmatpush1.msra.mxu0 %v2238
      %2280 = vmatprep.subr.mxu0 0.0
      %2281 = vmatpush1.msra.mxu0 %v2239
      %2282 = vmatprep.subr.mxu0 0.0
      %2283 = vmatpush1.msra.mxu0 %v2240
      %2284 = vmatprep.subr.mxu0 0.0
      %2285 = vmatpush1.msra.mxu0 %v2241
      %2286 = vmatprep.subr.mxu0 0.0
      %2287 = vmatpush1.msra.mxu0 %v2242
      %2288 = vmatprep.subr.mxu0 0.0
      %2289 = vmatpush1.msra.mxu0 %v2243
      %2290 = vmatprep.subr.mxu0 0.0
      %2291 = vmatpush1.msra.mxu0 %v2244
      %2292 = vmatprep.subr.mxu0 0.0
      %2293 = vmatpush1.msra.mxu0 %v2245
      %2294 = vmatprep.subr.mxu0 0.0
      %2295 = vmatpush1.msra.mxu0 %v2246
      %2296 = vmatprep.subr.mxu0 0.0
      %2297 = vmatpush1.msra.mxu0 %v2247
      %2298 = vmatprep.subr.mxu0 0.0
      %2299 = vmatpush1.msra.mxu0 %v2248
      %2300 = vmatprep.subr.mxu0 0.0
      %2301 = vmatpush1.msra.mxu0 %v2249
      %2302 = vmatprep.subr.mxu0 0.0
      %2303 = vmatpush1.msra.mxu0 %v2250
      %2304 = vmatprep.subr.mxu0 0.0
      %2305 = vmatpush1.msra.mxu0 %v2251
      %2306 = vmatprep.subr.mxu0 0.0
      %2307 = vmatpush1.msra.mxu0 %v2252
      %2308 = vmatprep.subr.mxu0 0.0
      %2309 = vmatpush1.msra.mxu0 %v2253
      %2310 = vmatprep.subr.mxu0 0.0
      %2311 = vmatpush1.msra.mxu0 0.0
      %2312 = vmatprep.subr.mxu0 0.0
      %2313 = vmatpush1.msra.mxu0 0.0
      %2314 = vmatprep.subr.mxu0 0.0
      %2315 = vmatpush1.msra.mxu0 0.0
      %2316 = vmatprep.subr.mxu0 0.0
      %2317 = vmatpush1.msra.mxu0 0.0
      %2318 = vmatprep.subr.mxu0 0.0
      %2319 = vmatpush1.msra.mxu0 0.0
      %2320 = vmatprep.subr.mxu0 0.0
      %2321 = vmatpush1.msra.mxu0 0.0
      %2322 = vmatprep.subr.mxu0 0.0
      %2323 = vmatpush1.msra.mxu0 0.0
      %2324 = vmatprep.subr.mxu0 0.0
      %2325 = vmatpush1.msra.mxu0 0.0
      %2326 = vmatprep.subr.mxu0 0.0
      %2327 = vmatpush1.msra.mxu0 0.0
      %2328 = vmatprep.subr.mxu0 0.0
      %2329 = vmatpush1.msra.mxu0 0.0
      %2330 = vmatprep.subr.mxu0 0.0
      %2331 = vmatpush1.msra.mxu0 0.0
      %2332 = vmatprep.subr.mxu0 0.0
      %2333 = vmatpush1.msra.mxu0 0.0
      %2334 = vmatprep.subr.mxu0 0.0
      %2335 = vmatpush1.msra.mxu0 0.0
      %2336 = vmatprep.subr.mxu0 0.0
      %2337 = vmatpush1.msra.mxu0 0.0
      %2338 = vmatprep.subr.mxu0 0.0
      %2339 = vmatpush1.msra.mxu0 0.0
      %2340 = vmatprep.subr.mxu0 0.0
      %2341 = vmatpush1.msra.mxu0 0.0
      %2342 = vmatprep.mubr.f32.mxu0 0.0
      %2343 = vmatmul.mubr.f32.gmra.mrb[0].mxu0 %v2254
      %v2344 = vpop.f32.mrb[0].mxu0
      %v2345 = vadd.f32 %v2276, %v2344
      %v2346 = vpop.f32.mrb[0].mxu0
      %2347 = vmatprep.mubr.f32.mxu0 0.0
      %2348 = vmatmul.mubr.f32.gmra.mrb[0].mxu0 %v2255
      %v2349 = vpop.f32.mrb[0].mxu0
      %v2350 = vadd.f32 %v2276, %v2349
      %v2351 = vpop.f32.mrb[0].mxu0
      %2352 = vmatprep.mubr.f32.mxu0 0.0
      %2353 = vmatmul.mubr.f32.gmra.mrb[0].mxu0 %v2256
      %v2354 = vpop.f32.mrb[0].mxu0
      %v2355 = vadd.f32 %v2276, %v2354
      %v2356 = vpop.f32.mrb[0].mxu0
      %2357 = vmatprep.mubr.f32.mxu0 0.0
      %2358 = vmatmul.mubr.f32.gmra.mrb[0].mxu0 %v2257
      %v2359 = vpop.f32.mrb[0].mxu0
      %v2360 = vadd.f32 %v2276, %v2359
      %v2361 = vpop.f32.mrb[0].mxu0
      %2362 = vmatprep.mubr.f32.mxu0 0.0
      %2363 = vmatmul.mubr.f32.gmra.mrb[0].mxu0 %v2258
      %v2364 = vpop.f32.mrb[0].mxu0
      %v2365 = vadd.f32 %v2276, %v2364
      %v2366 = vpop.f32.mrb[0].mxu0
      %2367 = vmatprep.mubr.f32.mxu0 0.0
      %2368 = vmatmul.mubr.f32.gmra.mrb[0].mxu0 %v2259
      %v2369 = vpop.f32.mrb[0].mxu0
      %v2370 = vadd.f32 %v2276, %v2369
      %v2371 = vpop.f32.mrb[0].mxu0
      %2372 = vmatprep.mubr.f32.mxu0 0.0
      %2373 = vmatmul.mubr.f32.gmra.mrb[0].mxu0 %v2260
      %v2374 = vpop.f32.mrb[0].mxu0
      %v2375 = vadd.f32 %v2276, %v2374
      %v2376 = vpop.f32.mrb[0].mxu0
      %2377 = vmatprep.mubr.f32.mxu0 0.0
      %2378 = vmatmul.mubr.f32.gmra.mrb[0].mxu0 %v2261
      %v2379 = vpop.f32.mrb[0].mxu0
      %v2380 = vadd.f32 %v2276, %v2379
      %v2381 = vpop.f32.mrb[0].mxu0
      %2382 = vmatprep.mubr.f32.mxu0 0.0
      %2383 = vmatmul.mubr.f32.gmra.mrb[0].mxu0 %v2262
      %v2384 = vpop.f32.mrb[0].mxu0
      %v2385 = vadd.f32 %v2276, %v2384
      %v2386 = vpop.f32.mrb[0].mxu0
      %2387 = vmatprep.mubr.f32.mxu0 0.0
      %2388 = vmatmul.mubr.f32.gmra.mrb[0].mxu0 %v2263
      %v2389 = vpop.f32.mrb[0].mxu0
      %v2390 = vadd.f32 %v2276, %v2389
      %v2391 = vpop.f32.mrb[0].mxu0
      %2392 = vmatprep.mubr.f32.mxu0 0.0
      %2393 = vmatmul.mubr.f32.gmra.mrb[0].mxu0 %v2264
      %v2394 = vpop.f32.mrb[0].mxu0
      %v2395 = vadd.f32 %v2276, %v2394
      %v2396 = vpop.f32.mrb[0].mxu0
      %2397 = vmatprep.mubr.f32.mxu0 0.0
      %2398 = vmatmul.mubr.f32.gmra.mrb[0].mxu0 %v2265
      %v2399 = vpop.f32.mrb[0].mxu0
      %v2400 = vadd.f32 %v2276, %v2399
      %v2401 = vpop.f32.mrb[0].mxu0
      %2402 = vmatprep.mubr.f32.mxu0 0.0
      %2403 = vmatmul.mubr.f32.gmra.mrb[0].mxu0 %v2266
      %v2404 = vpop.f32.mrb[0].mxu0
      %v2405 = vadd.f32 %v2276, %v2404
      %v2406 = vpop.f32.mrb[0].mxu0
      %2407 = vmatprep.mubr.f32.mxu0 0.0
      %2408 = vmatmul.mubr.f32.gmra.mrb[0].mxu0 %v2267
      %v2409 = vpop.f32.mrb[0].mxu0
      %v2410 = vadd.f32 %v2276, %v2409
      %v2411 = vpop.f32.mrb[0].mxu0
      %2412 = vmatprep.mubr.f32.mxu0 0.0
      %2413 = vmatmul.mubr.f32.gmra.mrb[0].mxu0 %v2268
      %v2414 = vpop.f32.mrb[0].mxu0
      %v2415 = vadd.f32 %v2276, %v2414
      %v2416 = vpop.f32.mrb[0].mxu0
      %2417 = vmatprep.mubr.f32.mxu0 0.0
      %2418 = vmatmul.mubr.f32.gmra.mrb[0].mxu0 %v2269
      %v2419 = vpop.f32.mrb[0].mxu0
      %v2420 = vadd.f32 %v2276, %v2419
      %v2421 = vpop.f32.mrb[0].mxu0
      %2422 = vdwg.mxu0
      %v2423 = vmax.f32 %v2345, 0.0
      %v2424 = vmax.f32 %v2350, 0.0
      %v2425 = vmax.f32 %v2355, 0.0
      %v2426 = vmax.f32 %v2360, 0.0
      %v2427 = vmax.f32 %v2365, 0.0
      %v2428 = vmax.f32 %v2370, 0.0
      %v2429 = vmax.f32 %v2375, 0.0
      %v2430 = vmax.f32 %v2380, 0.0
      %v2431 = vmax.f32 %v2385, 0.0
      %v2432 = vmax.f32 %v2390, 0.0
      %v2433 = vmax.f32 %v2395, 0.0
      %v2434 = vmax.f32 %v2400, 0.0
      %v2435 = vmax.f32 %v2405, 0.0
      %v2436 = vmax.f32 %v2410, 0.0
      %v2437 = vmax.f32 %v2415, 0.0
      %v2438 = vmax.f32 %v2420, 0.0
      %s2439 = scalar_lea.vmem %s4, 64
      %v2440 = vld [vmem:[%s2439] sm:$0xff]
      %v2441 = vld [vmem:[%s2439 + $0x8] sm:$0xff]
      %v2442 = vld [vmem:[%s2439 + $0x10] sm:$0xff]
      %v2443 = vld [vmem:[%s2439 + $0x18] sm:$0xff]
      %v2444 = vld [vmem:[%s2439 + $0x20] sm:$0xff]
      %v2445 = vld [vmem:[%s2439 + $0x28] sm:$0xff]
      %v2446 = vld [vmem:[%s2439 + $0x30] sm:$0xff]
      %v2447 = vld [vmem:[%s2439 + $0x38] sm:$0xff]
      %s2448 = scalar_lea.vmem %s5, 1
      %v2449 = vld [vmem:[%s2448] sm:$0x1]
      %v2451 = vlaneseq
      %v2452 = vshrl.u32 %v2451, 7
      %v2453 = vsub.s32 0, %v2452
      %v2454 = vrot.slane %v2449, %v2453
      %v2457 = vsel %vm1290, %v2423, 0
      %v2460 = vsel %vm1290, %v2424, 0
      %v2463 = vsel %vm1290, %v2425, 0
      %v2466 = vsel %vm1290, %v2426, 0
      %v2469 = vsel %vm1290, %v2427, 0
      %v2472 = vsel %vm1290, %v2428, 0
      %v2475 = vsel %vm1290, %v2429, 0
      %v2478 = vsel %vm1290, %v2430, 0
      %v2481 = vsel %vm1290, %v2431, 0
      %v2484 = vsel %vm1290, %v2432, 0
      %v2487 = vsel %vm1290, %v2433, 0
      %v2490 = vsel %vm1290, %v2434, 0
      %v2493 = vsel %vm1290, %v2435, 0
      %v2496 = vsel %vm1290, %v2436, 0
      %v2499 = vsel %vm1290, %v2437, 0
      %v2502 = vsel %vm1290, %v2438, 0
      %2504 = vmatprep.subr.mxu0 0.0
      %2505 = vmatpush1.msra.mxu0 %v2440
      %2506 = vmatprep.subr.mxu0 0.0
      %2507 = vmatpush1.msra.mxu0 %v2441
      %2508 = vmatprep.subr.mxu0 0.0
      %2509 = vmatpush1.msra.mxu0 %v2442
      %2510 = vmatprep.subr.mxu0 0.0
      %2511 = vmatpush1.msra.mxu0 %v2443
      %2512 = vmatprep.subr.mxu0 0.0
      %2513 = vmatpush1.msra.mxu0 %v2444
      %2514 = vmatprep.subr.mxu0 0.0
      %2515 = vmatpush1.msra.mxu0 %v2445
      %2516 = vmatprep.subr.mxu0 0.0
      %2517 = vmatpush1.msra.mxu0 %v2446
      %2518 = vmatprep.subr.mxu0 0.0
      %2519 = vmatpush1.msra.mxu0 %v2447
      %2520 = vmatprep.subr.mxu0 0.0
      %2521 = vmatpush1.msra.mxu0 0.0
      %2522 = vmatprep.subr.mxu0 0.0
      %2523 = vmatpush1.msra.mxu0 0.0
      %2524 = vmatprep.subr.mxu0 0.0
      %2525 = vmatpush1.msra.mxu0 0.0
      %2526 = vmatprep.subr.mxu0 0.0
      %2527 = vmatpush1.msra.mxu0 0.0
      %2528 = vmatprep.subr.mxu0 0.0
      %2529 = vmatpush1.msra.mxu0 0.0
      %2530 = vmatprep.subr.mxu0 0.0
      %2531 = vmatpush1.msra.mxu0 0.0
      %2532 = vmatprep.subr.mxu0 0.0
      %2533 = vmatpush1.msra.mxu0 0.0
      %2534 = vmatprep.subr.mxu0 0.0
      %2535 = vmatpush1.msra.mxu0 0.0
      %2536 = vmatprep.subr.mxu0 0.0
      %2537 = vmatpush1.msra.mxu0 0.0
      %2538 = vmatprep.subr.mxu0 0.0
      %2539 = vmatpush1.msra.mxu0 0.0
      %2540 = vmatprep.subr.mxu0 0.0
      %2541 = vmatpush1.msra.mxu0 0.0
      %2542 = vmatprep.subr.mxu0 0.0
      %2543 = vmatpush1.msra.mxu0 0.0
      %2544 = vmatprep.subr.mxu0 0.0
      %2545 = vmatpush1.msra.mxu0 0.0
      %2546 = vmatprep.subr.mxu0 0.0
      %2547 = vmatpush1.msra.mxu0 0.0
      %2548 = vmatprep.subr.mxu0 0.0
      %2549 = vmatpush1.msra.mxu0 0.0
      %2550 = vmatprep.subr.mxu0 0.0
      %2551 = vmatpush1.msra.mxu0 0.0
      %2552 = vmatprep.subr.mxu0 0.0
      %2553 = vmatpush1.msra.mxu0 0.0
      %2554 = vmatprep.subr.mxu0 0.0
      %2555 = vmatpush1.msra.mxu0 0.0
      %2556 = vmatprep.subr.mxu0 0.0
      %2557 = vmatpush1.msra.mxu0 0.0
      %2558 = vmatprep.subr.mxu0 0.0
      %2559 = vmatpush1.msra.mxu0 0.0
      %2560 = vmatprep.subr.mxu0 0.0
      %2561 = vmatpush1.msra.mxu0 0.0
      %2562 = vmatprep.subr.mxu0 0.0
      %2563 = vmatpush1.msra.mxu0 0.0
      %2564 = vmatprep.subr.mxu0 0.0
      %2565 = vmatpush1.msra.mxu0 0.0
      %2566 = vmatprep.subr.mxu0 0.0
      %2567 = vmatpush1.msra.mxu0 0.0
      %2568 = vmatprep.mubr.f32.mxu0 0.0
      %2569 = vmatmul.mubr.f32.gmra.mrb[0].mxu0 %v2457
      %v2570 = vpop.f32.mrb[0].mxu0
      %v2571 = vadd.f32 %v2454, %v2570
      %v2572 = vpop.f32.mrb[0].mxu0
      %2573 = vmatprep.mubr.f32.mxu0 0.0
      %2574 = vmatmul.mubr.f32.gmra.mrb[0].mxu0 %v2460
      %v2575 = vpop.f32.mrb[0].mxu0
      %v2576 = vadd.f32 %v2454, %v2575
      %v2577 = vpop.f32.mrb[0].mxu0
      %2578 = vmatprep.mubr.f32.mxu0 0.0
      %2579 = vmatmul.mubr.f32.gmra.mrb[0].mxu0 %v2463
      %v2580 = vpop.f32.mrb[0].mxu0
      %v2581 = vadd.f32 %v2454, %v2580
      %v2582 = vpop.f32.mrb[0].mxu0
      %2583 = vmatprep.mubr.f32.mxu0 0.0
      %2584 = vmatmul.mubr.f32.gmra.mrb[0].mxu0 %v2466
      %v2585 = vpop.f32.mrb[0].mxu0
      %v2586 = vadd.f32 %v2454, %v2585
      %v2587 = vpop.f32.mrb[0].mxu0
      %2588 = vmatprep.mubr.f32.mxu0 0.0
      %2589 = vmatmul.mubr.f32.gmra.mrb[0].mxu0 %v2469
      %v2590 = vpop.f32.mrb[0].mxu0
      %v2591 = vadd.f32 %v2454, %v2590
      %v2592 = vpop.f32.mrb[0].mxu0
      %2593 = vmatprep.mubr.f32.mxu0 0.0
      %2594 = vmatmul.mubr.f32.gmra.mrb[0].mxu0 %v2472
      %v2595 = vpop.f32.mrb[0].mxu0
      %v2596 = vadd.f32 %v2454, %v2595
      %v2597 = vpop.f32.mrb[0].mxu0
      %2598 = vmatprep.mubr.f32.mxu0 0.0
      %2599 = vmatmul.mubr.f32.gmra.mrb[0].mxu0 %v2475
      %v2600 = vpop.f32.mrb[0].mxu0
      %v2601 = vadd.f32 %v2454, %v2600
      %v2602 = vpop.f32.mrb[0].mxu0
      %2603 = vmatprep.mubr.f32.mxu0 0.0
      %2604 = vmatmul.mubr.f32.gmra.mrb[0].mxu0 %v2478
      %v2605 = vpop.f32.mrb[0].mxu0
      %v2606 = vadd.f32 %v2454, %v2605
      %v2607 = vpop.f32.mrb[0].mxu0
      %2608 = vmatprep.mubr.f32.mxu0 0.0
      %2609 = vmatmul.mubr.f32.gmra.mrb[0].mxu0 %v2481
      %v2610 = vpop.f32.mrb[0].mxu0
      %v2611 = vadd.f32 %v2454, %v2610
      %v2612 = vpop.f32.mrb[0].mxu0
      %2613 = vmatprep.mubr.f32.mxu0 0.0
      %2614 = vmatmul.mubr.f32.gmra.mrb[0].mxu0 %v2484
      %v2615 = vpop.f32.mrb[0].mxu0
      %v2616 = vadd.f32 %v2454, %v2615
      %v2617 = vpop.f32.mrb[0].mxu0
      %2618 = vmatprep.mubr.f32.mxu0 0.0
      %2619 = vmatmul.mubr.f32.gmra.mrb[0].mxu0 %v2487
      %v2620 = vpop.f32.mrb[0].mxu0
      %v2621 = vadd.f32 %v2454, %v2620
      %v2622 = vpop.f32.mrb[0].mxu0
      %2623 = vmatprep.mubr.f32.mxu0 0.0
      %2624 = vmatmul.mubr.f32.gmra.mrb[0].mxu0 %v2490
      %v2625 = vpop.f32.mrb[0].mxu0
      %v2626 = vadd.f32 %v2454, %v2625
      %v2627 = vpop.f32.mrb[0].mxu0
      %2628 = vmatprep.mubr.f32.mxu0 0.0
      %2629 = vmatmul.mubr.f32.gmra.mrb[0].mxu0 %v2493
      %v2630 = vpop.f32.mrb[0].mxu0
      %v2631 = vadd.f32 %v2454, %v2630
      %v2632 = vpop.f32.mrb[0].mxu0
      %2633 = vmatprep.mubr.f32.mxu0 0.0
      %2634 = vmatmul.mubr.f32.gmra.mrb[0].mxu0 %v2496
      %v2635 = vpop.f32.mrb[0].mxu0
      %v2636 = vadd.f32 %v2454, %v2635
      %v2637 = vpop.f32.mrb[0].mxu0
      %2638 = vmatprep.mubr.f32.mxu0 0.0
      %2639 = vmatmul.mubr.f32.gmra.mrb[0].mxu0 %v2499
      %v2640 = vpop.f32.mrb[0].mxu0
      %v2641 = vadd.f32 %v2454, %v2640
      %v2642 = vpop.f32.mrb[0].mxu0
      %2643 = vmatprep.mubr.f32.mxu0 0.0
      %2644 = vmatmul.mubr.f32.gmra.mrb[0].mxu0 %v2502
      %v2645 = vpop.f32.mrb[0].mxu0
      %v2646 = vadd.f32 %v2454, %v2645
      %v2647 = vpop.f32.mrb[0].mxu0
      %2648 = vdwg.mxu0
      %2649 = vst.msk [vmem:[#allocation3] sm:$0xff] %vm1484, %v2571
      %2650 = vst.msk [vmem:[#allocation3 + $0x8] sm:$0xff] %vm1484, %v2576
      %2651 = vst.msk [vmem:[#allocation3 + $0x10] sm:$0xff] %vm1484, %v2581
      %2652 = vst.msk [vmem:[#allocation3 + $0x18] sm:$0xff] %vm1484, %v2586
      %2653 = vst.msk [vmem:[#allocation3 + $0x20] sm:$0xff] %vm1484, %v2591
      %2654 = vst.msk [vmem:[#allocation3 + $0x28] sm:$0xff] %vm1484, %v2596
      %2655 = vst.msk [vmem:[#allocation3 + $0x30] sm:$0xff] %vm1484, %v2601
      %2656 = vst.msk [vmem:[#allocation3 + $0x38] sm:$0xff] %vm1484, %v2606
      %2657 = vst.msk [vmem:[#allocation3 + $0x40] sm:$0xff] %vm1484, %v2611
      %2658 = vst.msk [vmem:[#allocation3 + $0x48] sm:$0xff] %vm1484, %v2616
      %2659 = vst.msk [vmem:[#allocation3 + $0x50] sm:$0xff] %vm1484, %v2621
      %2660 = vst.msk [vmem:[#allocation3 + $0x58] sm:$0xff] %vm1484, %v2626
      %2661 = vst.msk [vmem:[#allocation3 + $0x60] sm:$0xff] %vm1484, %v2631
      %2662 = vst.msk [vmem:[#allocation3 + $0x68] sm:$0xff] %vm1484, %v2636
      %2663 = vst.msk [vmem:[#allocation3 + $0x70] sm:$0xff] %vm1484, %v2641
      %2664 = vst.msk [vmem:[#allocation3 + $0x78] sm:$0xff] %vm1484, %v2646
      %v2665 = vld [vmem:[%s6 + $0x10] sm:$0xff]
      %v2666 = vld [vmem:[%s6 + $0x18] sm:$0xff]
      %v2668 = vsel %vm1484, %v2571, 0
      %v2671 = vsel %vm1484, %v2576, 0
      %v2674 = vsel %vm1484, %v2581, 0
      %v2677 = vsel %vm1484, %v2586, 0
      %v2680 = vsel %vm1484, %v2591, 0
      %v2683 = vsel %vm1484, %v2596, 0
      %v2686 = vsel %vm1484, %v2601, 0
      %v2689 = vsel %vm1484, %v2606, 0
      %v2692 = vsel %vm1484, %v2611, 0
      %v2695 = vsel %vm1484, %v2616, 0
      %v2698 = vsel %vm1484, %v2621, 0
      %v2701 = vsel %vm1484, %v2626, 0
      %v2704 = vsel %vm1484, %v2631, 0
      %v2707 = vsel %vm1484, %v2636, 0
      %v2710 = vsel %vm1484, %v2641, 0
      %v2713 = vsel %vm1484, %v2646, 0
      %2715 = vmatprep.subr.mxu0 0.0
      %2716 = vmatpush1.msra.mxu0 %v2665
      %2717 = vmatprep.subr.mxu0 0.0
      %2718 = vmatpush1.msra.mxu0 %v2666
      %2719 = vmatprep.subr.mxu0 0.0
      %2720 = vmatpush1.msra.mxu0 0.0
      %2721 = vmatprep.subr.mxu0 0.0
      %2722 = vmatpush1.msra.mxu0 0.0
      %2723 = vmatprep.subr.mxu0 0.0
      %2724 = vmatpush1.msra.mxu0 0.0
      %2725 = vmatprep.subr.mxu0 0.0
      %2726 = vmatpush1.msra.mxu0 0.0
      %2727 = vmatprep.subr.mxu0 0.0
      %2728 = vmatpush1.msra.mxu0 0.0
      %2729 = vmatprep.subr.mxu0 0.0
      %2730 = vmatpush1.msra.mxu0 0.0
      %2731 = vmatprep.subr.mxu0 0.0
      %2732 = vmatpush1.msra.mxu0 0.0
      %2733 = vmatprep.subr.mxu0 0.0
      %2734 = vmatpush1.msra.mxu0 0.0
      %2735 = vmatprep.subr.mxu0 0.0
      %2736 = vmatpush1.msra.mxu0 0.0
      %2737 = vmatprep.subr.mxu0 0.0
      %2738 = vmatpush1.msra.mxu0 0.0
      %2739 = vmatprep.subr.mxu0 0.0
      %2740 = vmatpush1.msra.mxu0 0.0
      %2741 = vmatprep.subr.mxu0 0.0
      %2742 = vmatpush1.msra.mxu0 0.0
      %2743 = vmatprep.subr.mxu0 0.0
      %2744 = vmatpush1.msra.mxu0 0.0
      %2745 = vmatprep.subr.mxu0 0.0
      %2746 = vmatpush1.msra.mxu0 0.0
      %2747 = vmatprep.subr.mxu0 0.0
      %2748 = vmatpush1.msra.mxu0 0.0
      %2749 = vmatprep.subr.mxu0 0.0
      %2750 = vmatpush1.msra.mxu0 0.0
      %2751 = vmatprep.subr.mxu0 0.0
      %2752 = vmatpush1.msra.mxu0 0.0
      %2753 = vmatprep.subr.mxu0 0.0
      %2754 = vmatpush1.msra.mxu0 0.0
      %2755 = vmatprep.subr.mxu0 0.0
      %2756 = vmatpush1.msra.mxu0 0.0
      %2757 = vmatprep.subr.mxu0 0.0
      %2758 = vmatpush1.msra.mxu0 0.0
      %2759 = vmatprep.subr.mxu0 0.0
      %2760 = vmatpush1.msra.mxu0 0.0
      %2761 = vmatprep.subr.mxu0 0.0
      %2762 = vmatpush1.msra.mxu0 0.0
      %2763 = vmatprep.subr.mxu0 0.0
      %2764 = vmatpush1.msra.mxu0 0.0
      %2765 = vmatprep.subr.mxu0 0.0
      %2766 = vmatpush1.msra.mxu0 0.0
      %2767 = vmatprep.subr.mxu0 0.0
      %2768 = vmatpush1.msra.mxu0 0.0
      %2769 = vmatprep.subr.mxu0 0.0
      %2770 = vmatpush1.msra.mxu0 0.0
      %2771 = vmatprep.subr.mxu0 0.0
      %2772 = vmatpush1.msra.mxu0 0.0
      %2773 = vmatprep.subr.mxu0 0.0
      %2774 = vmatpush1.msra.mxu0 0.0
      %2775 = vmatprep.subr.mxu0 0.0
      %2776 = vmatpush1.msra.mxu0 0.0
      %2777 = vmatprep.subr.mxu0 0.0
      %2778 = vmatpush1.msra.mxu0 0.0
      %2779 = vmatprep.mubr.f32.mxu0 0.0
      %2780 = vmatmul.mubr.f32.gmra.mrb[0].mxu0 %v2668
      %v2781 = vpop.f32.mrb[0].mxu0
      %v2782 = vadd.f32 0.0, %v2781
      %v2783 = vpop.f32.mrb[0].mxu0
      %2784 = vmatprep.mubr.f32.mxu0 0.0
      %2785 = vmatmul.mubr.f32.gmra.mrb[0].mxu0 %v2671
      %v2786 = vpop.f32.mrb[0].mxu0
      %v2787 = vadd.f32 0.0, %v2786
      %v2788 = vpop.f32.mrb[0].mxu0
      %2789 = vmatprep.mubr.f32.mxu0 0.0
      %2790 = vmatmul.mubr.f32.gmra.mrb[0].mxu0 %v2674
      %v2791 = vpop.f32.mrb[0].mxu0
      %v2792 = vadd.f32 0.0, %v2791
      %v2793 = vpop.f32.mrb[0].mxu0
      %2794 = vmatprep.mubr.f32.mxu0 0.0
      %2795 = vmatmul.mubr.f32.gmra.mrb[0].mxu0 %v2677
      %v2796 = vpop.f32.mrb[0].mxu0
      %v2797 = vadd.f32 0.0, %v2796
      %v2798 = vpop.f32.mrb[0].mxu0
      %2799 = vmatprep.mubr.f32.mxu0 0.0
      %2800 = vmatmul.mubr.f32.gmra.mrb[0].mxu0 %v2680
      %v2801 = vpop.f32.mrb[0].mxu0
      %v2802 = vadd.f32 0.0, %v2801
      %v2803 = vpop.f32.mrb[0].mxu0
      %2804 = vmatprep.mubr.f32.mxu0 0.0
      %2805 = vmatmul.mubr.f32.gmra.mrb[0].mxu0 %v2683
      %v2806 = vpop.f32.mrb[0].mxu0
      %v2807 = vadd.f32 0.0, %v2806
      %v2808 = vpop.f32.mrb[0].mxu0
      %2809 = vmatprep.mubr.f32.mxu0 0.0
      %2810 = vmatmul.mubr.f32.gmra.mrb[0].mxu0 %v2686
      %v2811 = vpop.f32.mrb[0].mxu0
      %v2812 = vadd.f32 0.0, %v2811
      %v2813 = vpop.f32.mrb[0].mxu0
      %2814 = vmatprep.mubr.f32.mxu0 0.0
      %2815 = vmatmul.mubr.f32.gmra.mrb[0].mxu0 %v2689
      %v2816 = vpop.f32.mrb[0].mxu0
      %v2817 = vadd.f32 0.0, %v2816
      %v2818 = vpop.f32.mrb[0].mxu0
      %2819 = vmatprep.mubr.f32.mxu0 0.0
      %2820 = vmatmul.mubr.f32.gmra.mrb[0].mxu0 %v2692
      %v2821 = vpop.f32.mrb[0].mxu0
      %v2822 = vadd.f32 0.0, %v2821
      %v2823 = vpop.f32.mrb[0].mxu0
      %2824 = vmatprep.mubr.f32.mxu0 0.0
      %2825 = vmatmul.mubr.f32.gmra.mrb[0].mxu0 %v2695
      %v2826 = vpop.f32.mrb[0].mxu0
      %v2827 = vadd.f32 0.0, %v2826
      %v2828 = vpop.f32.mrb[0].mxu0
      %2829 = vmatprep.mubr.f32.mxu0 0.0
      %2830 = vmatmul.mubr.f32.gmra.mrb[0].mxu0 %v2698
      %v2831 = vpop.f32.mrb[0].mxu0
      %v2832 = vadd.f32 0.0, %v2831
      %v2833 = vpop.f32.mrb[0].mxu0
      %2834 = vmatprep.mubr.f32.mxu0 0.0
      %2835 = vmatmul.mubr.f32.gmra.mrb[0].mxu0 %v2701
      %v2836 = vpop.f32.mrb[0].mxu0
      %v2837 = vadd.f32 0.0, %v2836
      %v2838 = vpop.f32.mrb[0].mxu0
      %2839 = vmatprep.mubr.f32.mxu0 0.0
      %2840 = vmatmul.mubr.f32.gmra.mrb[0].mxu0 %v2704
      %v2841 = vpop.f32.mrb[0].mxu0
      %v2842 = vadd.f32 0.0, %v2841
      %v2843 = vpop.f32.mrb[0].mxu0
      %2844 = vmatprep.mubr.f32.mxu0 0.0
      %2845 = vmatmul.mubr.f32.gmra.mrb[0].mxu0 %v2707
      %v2846 = vpop.f32.mrb[0].mxu0
      %v2847 = vadd.f32 0.0, %v2846
      %v2848 = vpop.f32.mrb[0].mxu0
      %2849 = vmatprep.mubr.f32.mxu0 0.0
      %2850 = vmatmul.mubr.f32.gmra.mrb[0].mxu0 %v2710
      %v2851 = vpop.f32.mrb[0].mxu0
      %v2852 = vadd.f32 0.0, %v2851
      %v2853 = vpop.f32.mrb[0].mxu0
      %2854 = vmatprep.mubr.f32.mxu0 0.0
      %2855 = vmatmul.mubr.f32.gmra.mrb[0].mxu0 %v2713
      %v2856 = vpop.f32.mrb[0].mxu0
      %v2857 = vadd.f32 0.0, %v2856
      %v2858 = vpop.f32.mrb[0].mxu0
      %2859 = vdwg.mxu0
      %v2861 = vsel %vm1484, %v1406, 0
      %v2864 = vsel %vm1484, %v1411, 0
      %v2867 = vsel %vm1484, %v1416, 0
      %v2870 = vsel %vm1484, %v1421, 0
      %v2873 = vsel %vm1484, %v1426, 0
      %v2876 = vsel %vm1484, %v1431, 0
      %v2879 = vsel %vm1484, %v1436, 0
      %v2882 = vsel %vm1484, %v1441, 0
      %v2885 = vsel %vm1484, %v1446, 0
      %v2888 = vsel %vm1484, %v1451, 0
      %v2891 = vsel %vm1484, %v1456, 0
      %v2894 = vsel %vm1484, %v1461, 0
      %v2897 = vsel %vm1484, %v1466, 0
      %v2900 = vsel %vm1484, %v1471, 0
      %v2903 = vsel %vm1484, %v1476, 0
      %v2906 = vsel %vm1484, %v1481, 0
      %2908 = vmatprep.subr.mxu0 0.0
      %2909 = vmatpush1.msra.mxu0 %v1501
      %2910 = vmatprep.subr.mxu0 0.0
      %2911 = vmatpush1.msra.mxu0 %v1502
      %2912 = vmatprep.subr.mxu0 0.0
      %2913 = vmatpush1.msra.mxu0 0.0
      %2914 = vmatprep.subr.mxu0 0.0
      %2915 = vmatpush1.msra.mxu0 0.0
      %2916 = vmatprep.subr.mxu0 0.0
      %2917 = vmatpush1.msra.mxu0 0.0
      %2918 = vmatprep.subr.mxu0 0.0
      %2919 = vmatpush1.msra.mxu0 0.0
      %2920 = vmatprep.subr.mxu0 0.0
      %2921 = vmatpush1.msra.mxu0 0.0
      %2922 = vmatprep.subr.mxu0 0.0
      %2923 = vmatpush1.msra.mxu0 0.0
      %2924 = vmatprep.subr.mxu0 0.0
      %2925 = vmatpush1.msra.mxu0 0.0
      %2926 = vmatprep.subr.mxu0 0.0
      %2927 = vmatpush1.msra.mxu0 0.0
      %2928 = vmatprep.subr.mxu0 0.0
      %2929 = vmatpush1.msra.mxu0 0.0
      %2930 = vmatprep.subr.mxu0 0.0
      %2931 = vmatpush1.msra.mxu0 0.0
      %2932 = vmatprep.subr.mxu0 0.0
      %2933 = vmatpush1.msra.mxu0 0.0
      %2934 = vmatprep.subr.mxu0 0.0
      %2935 = vmatpush1.msra.mxu0 0.0
      %2936 = vmatprep.subr.mxu0 0.0
      %2937 = vmatpush1.msra.mxu0 0.0
      %2938 = vmatprep.subr.mxu0 0.0
      %2939 = vmatpush1.msra.mxu0 0.0
      %2940 = vmatprep.subr.mxu0 0.0
      %2941 = vmatpush1.msra.mxu0 0.0
      %2942 = vmatprep.subr.mxu0 0.0
      %2943 = vmatpush1.msra.mxu0 0.0
      %2944 = vmatprep.subr.mxu0 0.0
      %2945 = vmatpush1.msra.mxu0 0.0
      %2946 = vmatprep.subr.mxu0 0.0
      %2947 = vmatpush1.msra.mxu0 0.0
      %2948 = vmatprep.subr.mxu0 0.0
      %2949 = vmatpush1.msra.mxu0 0.0
      %2950 = vmatprep.subr.mxu0 0.0
      %2951 = vmatpush1.msra.mxu0 0.0
      %2952 = vmatprep.subr.mxu0 0.0
      %2953 = vmatpush1.msra.mxu0 0.0
      %2954 = vmatprep.subr.mxu0 0.0
      %2955 = vmatpush1.msra.mxu0 0.0
      %2956 = vmatprep.subr.mxu0 0.0
      %2957 = vmatpush1.msra.mxu0 0.0
      %2958 = vmatprep.subr.mxu0 0.0
      %2959 = vmatpush1.msra.mxu0 0.0
      %2960 = vmatprep.subr.mxu0 0.0
      %2961 = vmatpush1.msra.mxu0 0.0
      %2962 = vmatprep.subr.mxu0 0.0
      %2963 = vmatpush1.msra.mxu0 0.0
      %2964 = vmatprep.subr.mxu0 0.0
      %2965 = vmatpush1.msra.mxu0 0.0
      %2966 = vmatprep.subr.mxu0 0.0
      %2967 = vmatpush1.msra.mxu0 0.0
      %2968 = vmatprep.subr.mxu0 0.0
      %2969 = vmatpush1.msra.mxu0 0.0
      %2970 = vmatprep.subr.mxu0 0.0
      %2971 = vmatpush1.msra.mxu0 0.0
      %2972 = vmatprep.mubr.f32.mxu0 0.0
      %2973 = vmatmul.mubr.f32.gmra.mrb[0].mxu0 %v2861
      %v2974 = vpop.f32.mrb[0].mxu0
      %v2975 = vadd.f32 %v2782, %v2974
      %v2976 = vpop.f32.mrb[0].mxu0
      %2977 = vmatprep.mubr.f32.mxu0 0.0
      %2978 = vmatmul.mubr.f32.gmra.mrb[0].mxu0 %v2864
      %v2979 = vpop.f32.mrb[0].mxu0
      %v2980 = vadd.f32 %v2787, %v2979
      %v2981 = vpop.f32.mrb[0].mxu0
      %2982 = vmatprep.mubr.f32.mxu0 0.0
      %2983 = vmatmul.mubr.f32.gmra.mrb[0].mxu0 %v2867
      %v2984 = vpop.f32.mrb[0].mxu0
      %v2985 = vadd.f32 %v2792, %v2984
      %v2986 = vpop.f32.mrb[0].mxu0
      %2987 = vmatprep.mubr.f32.mxu0 0.0
      %2988 = vmatmul.mubr.f32.gmra.mrb[0].mxu0 %v2870
      %v2989 = vpop.f32.mrb[0].mxu0
      %v2990 = vadd.f32 %v2797, %v2989
      %v2991 = vpop.f32.mrb[0].mxu0
      %2992 = vmatprep.mubr.f32.mxu0 0.0
      %2993 = vmatmul.mubr.f32.gmra.mrb[0].mxu0 %v2873
      %v2994 = vpop.f32.mrb[0].mxu0
      %v2995 = vadd.f32 %v2802, %v2994
      %v2996 = vpop.f32.mrb[0].mxu0
      %2997 = vmatprep.mubr.f32.mxu0 0.0
      %2998 = vmatmul.mubr.f32.gmra.mrb[0].mxu0 %v2876
      %v2999 = vpop.f32.mrb[0].mxu0
      %v3000 = vadd.f32 %v2807, %v2999
      %v3001 = vpop.f32.mrb[0].mxu0
      %3002 = vmatprep.mubr.f32.mxu0 0.0
      %3003 = vmatmul.mubr.f32.gmra.mrb[0].mxu0 %v2879
      %v3004 = vpop.f32.mrb[0].mxu0
      %v3005 = vadd.f32 %v2812, %v3004
      %v3006 = vpop.f32.mrb[0].mxu0
      %3007 = vmatprep.mubr.f32.mxu0 0.0
      %3008 = vmatmul.mubr.f32.gmra.mrb[0].mxu0 %v2882
      %v3009 = vpop.f32.mrb[0].mxu0
      %v3010 = vadd.f32 %v2817, %v3009
      %v3011 = vpop.f32.mrb[0].mxu0
      %3012 = vmatprep.mubr.f32.mxu0 0.0
      %3013 = vmatmul.mubr.f32.gmra.mrb[0].mxu0 %v2885
      %v3014 = vpop.f32.mrb[0].mxu0
      %v3015 = vadd.f32 %v2822, %v3014
      %v3016 = vpop.f32.mrb[0].mxu0
      %3017 = vmatprep.mubr.f32.mxu0 0.0
      %3018 = vmatmul.mubr.f32.gmra.mrb[0].mxu0 %v2888
      %v3019 = vpop.f32.mrb[0].mxu0
      %v3020 = vadd.f32 %v2827, %v3019
      %v3021 = vpop.f32.mrb[0].mxu0
      %3022 = vmatprep.mubr.f32.mxu0 0.0
      %3023 = vmatmul.mubr.f32.gmra.mrb[0].mxu0 %v2891
      %v3024 = vpop.f32.mrb[0].mxu0
      %v3025 = vadd.f32 %v2832, %v3024
      %v3026 = vpop.f32.mrb[0].mxu0
      %3027 = vmatprep.mubr.f32.mxu0 0.0
      %3028 = vmatmul.mubr.f32.gmra.mrb[0].mxu0 %v2894
      %v3029 = vpop.f32.mrb[0].mxu0
      %v3030 = vadd.f32 %v2837, %v3029
      %v3031 = vpop.f32.mrb[0].mxu0
      %3032 = vmatprep.mubr.f32.mxu0 0.0
      %3033 = vmatmul.mubr.f32.gmra.mrb[0].mxu0 %v2897
      %v3034 = vpop.f32.mrb[0].mxu0
      %v3035 = vadd.f32 %v2842, %v3034
      %v3036 = vpop.f32.mrb[0].mxu0
      %3037 = vmatprep.mubr.f32.mxu0 0.0
      %3038 = vmatmul.mubr.f32.gmra.mrb[0].mxu0 %v2900
      %v3039 = vpop.f32.mrb[0].mxu0
      %v3040 = vadd.f32 %v2847, %v3039
      %v3041 = vpop.f32.mrb[0].mxu0
      %3042 = vmatprep.mubr.f32.mxu0 0.0
      %3043 = vmatmul.mubr.f32.gmra.mrb[0].mxu0 %v2903
      %v3044 = vpop.f32.mrb[0].mxu0
      %v3045 = vadd.f32 %v2852, %v3044
      %v3046 = vpop.f32.mrb[0].mxu0
      %3047 = vmatprep.mubr.f32.mxu0 0.0
      %3048 = vmatmul.mubr.f32.gmra.mrb[0].mxu0 %v2906
      %v3049 = vpop.f32.mrb[0].mxu0
      %v3050 = vadd.f32 %v2857, %v3049
      %v3051 = vpop.f32.mrb[0].mxu0
      %3052 = vdwg.mxu0
      %3053 = vst.msk [vmem:[#allocation2] sm:$0xff] %vm1484, 0.0
      %vm3054 = vcmask 128000
      %3055 = vst.msk [vmem:[#allocation2 + $0x8] sm:$0x3f] %vm3054, 0.0
      %v3056 = vld [vmem:[#allocation3] sm:$0xff]
      %v3057 = vld [vmem:[#allocation3 + $0x8] sm:$0xff]
      %v3058 = vld [vmem:[#allocation3 + $0x10] sm:$0xff]
      %v3059 = vld [vmem:[#allocation3 + $0x18] sm:$0xff]
      %v3060 = vld [vmem:[#allocation3 + $0x20] sm:$0xff]
      %v3061 = vld [vmem:[#allocation3 + $0x28] sm:$0xff]
      %v3062 = vld [vmem:[#allocation3 + $0x30] sm:$0xff]
      %v3063 = vld [vmem:[#allocation3 + $0x38] sm:$0xff]
      %v3064 = vld [vmem:[#allocation3 + $0x40] sm:$0xff]
      %v3065 = vld [vmem:[#allocation3 + $0x48] sm:$0xff]
      %v3066 = vld [vmem:[#allocation3 + $0x50] sm:$0xff]
      %v3067 = vld [vmem:[#allocation3 + $0x58] sm:$0xff]
      %v3068 = vld [vmem:[#allocation3 + $0x60] sm:$0xff]
      %v3069 = vld [vmem:[#allocation3 + $0x68] sm:$0xff]
      %v3070 = vld [vmem:[#allocation3 + $0x70] sm:$0x3]
      %3071 = vst.msk [vmem:[#allocation2 + $0xe] sm:$0xff] %vm1484, %v3056
      %3072 = vst.msk [vmem:[#allocation2 + $0x16] sm:$0xff] %vm1484, %v3057
      %3073 = vst.msk [vmem:[#allocation2 + $0x1e] sm:$0xff] %vm1484, %v3058
      %3074 = vst.msk [vmem:[#allocation2 + $0x26] sm:$0xff] %vm1484, %v3059
      %3075 = vst.msk [vmem:[#allocation2 + $0x2e] sm:$0xff] %vm1484, %v3060
      %3076 = vst.msk [vmem:[#allocation2 + $0x36] sm:$0xff] %vm1484, %v3061
      %3077 = vst.msk [vmem:[#allocation2 + $0x3e] sm:$0xff] %vm1484, %v3062
      %3078 = vst.msk [vmem:[#allocation2 + $0x46] sm:$0xff] %vm1484, %v3063
      %3079 = vst.msk [vmem:[#allocation2 + $0x4e] sm:$0xff] %vm1484, %v3064
      %3080 = vst.msk [vmem:[#allocation2 + $0x56] sm:$0xff] %vm1484, %v3065
      %3081 = vst.msk [vmem:[#allocation2 + $0x5e] sm:$0xff] %vm1484, %v3066
      %3082 = vst.msk [vmem:[#allocation2 + $0x66] sm:$0xff] %vm1484, %v3067
      %3083 = vst.msk [vmem:[#allocation2 + $0x6e] sm:$0xff] %vm1484, %v3068
      %3084 = vst.msk [vmem:[#allocation2 + $0x76] sm:$0xff] %vm1484, %v3069
      %vm3085 = vcmask 123904
      %3086 = vst.msk [vmem:[#allocation2 + $0x7e] sm:$0x3] %vm3085, %v3070
      %3087 = vst.msk [vmem:[#allocation2] sm:$0xff] %vm1620, 0.0
      %vm3088 = vcmask 255104
      %3089 = vst.msk [vmem:[#allocation2 + $0x8] sm:$0x3] %vm3088, 0.0
      %v3090 = vld [vmem:[#allocation3] sm:$0xff]
      %v3091 = vld [vmem:[#allocation3 + $0x8] sm:$0xff]
      %v3092 = vld [vmem:[#allocation3 + $0x10] sm:$0xff]
      %v3093 = vld [vmem:[#allocation3 + $0x18] sm:$0xff]
      %v3094 = vld [vmem:[#allocation3 + $0x20] sm:$0xff]
      %v3095 = vld [vmem:[#allocation3 + $0x28] sm:$0xff]
      %v3096 = vld [vmem:[#allocation3 + $0x30] sm:$0xff]
      %v3097 = vld [vmem:[#allocation3 + $0x38] sm:$0xff]
      %v3098 = vld [vmem:[#allocation3 + $0x40] sm:$0xff]
      %v3099 = vld [vmem:[#allocation3 + $0x48] sm:$0xff]
      %v3100 = vld [vmem:[#allocation3 + $0x50] sm:$0xff]
      %v3101 = vld [vmem:[#allocation3 + $0x58] sm:$0xff]
      %v3102 = vld [vmem:[#allocation3 + $0x60] sm:$0xff]
      %v3103 = vld [vmem:[#allocation3 + $0x68] sm:$0xff]
      %v3104 = vld [vmem:[#allocation3 + $0x70] sm:$0x3f]
      %3120 = vrot.lane.b32.xlu0 %v3090, 16
      %v3121 = vpop.permute.xlu0 %3120
      %3122 = vrot.lane.b32.xlu0 %v3091, 16
      %v3123 = vpop.permute.xlu0 %3122
      %3124 = vrot.lane.b32.xlu0 %v3092, 16
      %v3125 = vpop.permute.xlu0 %3124
      %3126 = vrot.lane.b32.xlu0 %v3093, 16
      %v3127 = vpop.permute.xlu0 %3126
      %3128 = vrot.lane.b32.xlu0 %v3094, 16
      %v3129 = vpop.permute.xlu0 %3128
      %3130 = vrot.lane.b32.xlu0 %v3095, 16
      %v3131 = vpop.permute.xlu0 %3130
      %3132 = vrot.lane.b32.xlu0 %v3096, 16
      %v3133 = vpop.permute.xlu0 %3132
      %3134 = vrot.lane.b32.xlu0 %v3097, 16
      %v3135 = vpop.permute.xlu0 %3134
      %3136 = vrot.lane.b32.xlu0 %v3098, 16
      %v3137 = vpop.permute.xlu0 %3136
      %3138 = vrot.lane.b32.xlu0 %v3099, 16
      %v3139 = vpop.permute.xlu0 %3138
      %3140 = vrot.lane.b32.xlu0 %v3100, 16
      %v3141 = vpop.permute.xlu0 %3140
      %3142 = vrot.lane.b32.xlu0 %v3101, 16
      %v3143 = vpop.permute.xlu0 %3142
      %3144 = vrot.lane.b32.xlu0 %v3102, 16
      %v3145 = vpop.permute.xlu0 %3144
      %3146 = vrot.lane.b32.xlu0 %v3103, 16
      %v3147 = vpop.permute.xlu0 %3146
      %3148 = vrot.lane.b32.xlu0 %v3104, 16
      %v3149 = vpop.permute.xlu0 %3148
      %3165 = vst.msk [vmem:[#allocation2 + $0xa] sm:$0xff] %vm1620, %v3121
      %3166 = vst.msk [vmem:[#allocation2 + $0x12] sm:$0xff] %vm1620, %v3123
      %3167 = vst.msk [vmem:[#allocation2 + $0x1a] sm:$0xff] %vm1620, %v3125
      %3168 = vst.msk [vmem:[#allocation2 + $0x22] sm:$0xff] %vm1620, %v3127
      %3169 = vst.msk [vmem:[#allocation2 + $0x2a] sm:$0xff] %vm1620, %v3129
      %3170 = vst.msk [vmem:[#allocation2 + $0x32] sm:$0xff] %vm1620, %v3131
      %3171 = vst.msk [vmem:[#allocation2 + $0x3a] sm:$0xff] %vm1620, %v3133
      %3172 = vst.msk [vmem:[#allocation2 + $0x42] sm:$0xff] %vm1620, %v3135
      %3173 = vst.msk [vmem:[#allocation2 + $0x4a] sm:$0xff] %vm1620, %v3137
      %3174 = vst.msk [vmem:[#allocation2 + $0x52] sm:$0xff] %vm1620, %v3139
      %3175 = vst.msk [vmem:[#allocation2 + $0x5a] sm:$0xff] %vm1620, %v3141
      %3176 = vst.msk [vmem:[#allocation2 + $0x62] sm:$0xff] %vm1620, %v3143
      %3177 = vst.msk [vmem:[#allocation2 + $0x6a] sm:$0xff] %vm1620, %v3145
      %3178 = vst.msk [vmem:[#allocation2 + $0x72] sm:$0xff] %vm1620, %v3147
      %vm3179 = vcmask 259200
      %3180 = vst.msk [vmem:[#allocation2 + $0x7a] sm:$0x3f] %vm3179, %v3149
      %vm3181 = vcmask 390400
      %3182 = vst.msk [vmem:[#allocation2] sm:$0x3f] %vm3181, 0.0
      %v3183 = vld [vmem:[#allocation3] sm:$0xff]
      %v3184 = vld [vmem:[#allocation3 + $0x8] sm:$0xff]
      %v3185 = vld [vmem:[#allocation3 + $0x10] sm:$0xff]
      %v3186 = vld [vmem:[#allocation3 + $0x18] sm:$0xff]
      %v3187 = vld [vmem:[#allocation3 + $0x20] sm:$0xff]
      %v3188 = vld [vmem:[#allocation3 + $0x28] sm:$0xff]
      %v3189 = vld [vmem:[#allocation3 + $0x30] sm:$0xff]
      %v3190 = vld [vmem:[#allocation3 + $0x38] sm:$0xff]
      %v3191 = vld [vmem:[#allocation3 + $0x40] sm:$0xff]
      %v3192 = vld [vmem:[#allocation3 + $0x48] sm:$0xff]
      %v3193 = vld [vmem:[#allocation3 + $0x50] sm:$0xff]
      %v3194 = vld [vmem:[#allocation3 + $0x58] sm:$0xff]
      %v3195 = vld [vmem:[#allocation3 + $0x60] sm:$0xff]
      %v3196 = vld [vmem:[#allocation3 + $0x68] sm:$0xff]
      %v3197 = vld [vmem:[#allocation3 + $0x70] sm:$0xff]
      %v3198 = vld [vmem:[#allocation3 + $0x78] sm:$0x3]
      %3215 = vrot.lane.b32.xlu0 %v3183, 32
      %v3216 = vpop.permute.xlu0 %3215
      %3217 = vrot.lane.b32.xlu0 %v3184, 32
      %v3218 = vpop.permute.xlu0 %3217
      %3219 = vrot.lane.b32.xlu0 %v3185, 32
      %v3220 = vpop.permute.xlu0 %3219
      %3221 = vrot.lane.b32.xlu0 %v3186, 32
      %v3222 = vpop.permute.xlu0 %3221
      %3223 = vrot.lane.b32.xlu0 %v3187, 32
      %v3224 = vpop.permute.xlu0 %3223
      %3225 = vrot.lane.b32.xlu0 %v3188, 32
      %v3226 = vpop.permute.xlu0 %3225
      %3227 = vrot.lane.b32.xlu0 %v3189, 32
      %v3228 = vpop.permute.xlu0 %3227
      %3229 = vrot.lane.b32.xlu0 %v3190, 32
      %v3230 = vpop.permute.xlu0 %3229
      %3231 = vrot.lane.b32.xlu0 %v3191, 32
      %v3232 = vpop.permute.xlu0 %3231
      %3233 = vrot.lane.b32.xlu0 %v3192, 32
      %v3234 = vpop.permute.xlu0 %3233
      %3235 = vrot.lane.b32.xlu0 %v3193, 32
      %v3236 = vpop.permute.xlu0 %3235
      %3237 = vrot.lane.b32.xlu0 %v3194, 32
      %v3238 = vpop.permute.xlu0 %3237
      %3239 = vrot.lane.b32.xlu0 %v3195, 32
      %v3240 = vpop.permute.xlu0 %3239
      %3241 = vrot.lane.b32.xlu0 %v3196, 32
      %v3242 = vpop.permute.xlu0 %3241
      %3243 = vrot.lane.b32.xlu0 %v3197, 32
      %v3244 = vpop.permute.xlu0 %3243
      %3245 = vrot.lane.b32.xlu0 %v3198, 32
      %v3246 = vpop.permute.xlu0 %3245
      %3263 = vst.msk [vmem:[#allocation2 + $0x6] sm:$0xff] %vm1720, %v3216
      %3264 = vst.msk [vmem:[#allocation2 + $0xe] sm:$0xff] %vm1720, %v3218
      %3265 = vst.msk [vmem:[#allocation2 + $0x16] sm:$0xff] %vm1720, %v3220
      %3266 = vst.msk [vmem:[#allocation2 + $0x1e] sm:$0xff] %vm1720, %v3222
      %3267 = vst.msk [vmem:[#allocation2 + $0x26] sm:$0xff] %vm1720, %v3224
      %3268 = vst.msk [vmem:[#allocation2 + $0x2e] sm:$0xff] %vm1720, %v3226
      %3269 = vst.msk [vmem:[#allocation2 + $0x36] sm:$0xff] %vm1720, %v3228
      %3270 = vst.msk [vmem:[#allocation2 + $0x3e] sm:$0xff] %vm1720, %v3230
      %3271 = vst.msk [vmem:[#allocation2 + $0x46] sm:$0xff] %vm1720, %v3232
      %3272 = vst.msk [vmem:[#allocation2 + $0x4e] sm:$0xff] %vm1720, %v3234
      %3273 = vst.msk [vmem:[#allocation2 + $0x56] sm:$0xff] %vm1720, %v3236
      %3274 = vst.msk [vmem:[#allocation2 + $0x5e] sm:$0xff] %vm1720, %v3238
      %3275 = vst.msk [vmem:[#allocation2 + $0x66] sm:$0xff] %vm1720, %v3240
      %3276 = vst.msk [vmem:[#allocation2 + $0x6e] sm:$0xff] %vm1720, %v3242
      %3277 = vst.msk [vmem:[#allocation2 + $0x76] sm:$0xff] %vm1720, %v3244
      %vm3278 = vcmask 386304
      %3279 = vst.msk [vmem:[#allocation2 + $0x7e] sm:$0x3] %vm3278, %v3246
      %vm3280 = vcmask 517504
      %3281 = vst.msk [vmem:[#allocation2] sm:$0x3] %vm3280, 0.0
      %v3282 = vld [vmem:[#allocation3] sm:$0xff]
      %v3283 = vld [vmem:[#allocation3 + $0x8] sm:$0xff]
      %v3284 = vld [vmem:[#allocation3 + $0x10] sm:$0xff]
      %v3285 = vld [vmem:[#allocation3 + $0x18] sm:$0xff]
      %v3286 = vld [vmem:[#allocation3 + $0x20] sm:$0xff]
      %v3287 = vld [vmem:[#allocation3 + $0x28] sm:$0xff]
      %v3288 = vld [vmem:[#allocation3 + $0x30] sm:$0xff]
      %v3289 = vld [vmem:[#allocation3 + $0x38] sm:$0xff]
      %v3290 = vld [vmem:[#allocation3 + $0x40] sm:$0xff]
      %v3291 = vld [vmem:[#allocation3 + $0x48] sm:$0xff]
      %v3292 = vld [vmem:[#allocation3 + $0x50] sm:$0xff]
      %v3293 = vld [vmem:[#allocation3 + $0x58] sm:$0xff]
      %v3294 = vld [vmem:[#allocation3 + $0x60] sm:$0xff]
      %v3295 = vld [vmem:[#allocation3 + $0x68] sm:$0xff]
      %v3296 = vld [vmem:[#allocation3 + $0x70] sm:$0xff]
      %v3297 = vld [vmem:[#allocation3 + $0x78] sm:$0x3f]
      %3314 = vrot.lane.b32.xlu0 %v3282, 48
      %v3315 = vpop.permute.xlu0 %3314
      %3316 = vrot.lane.b32.xlu0 %v3283, 48
      %v3317 = vpop.permute.xlu0 %3316
      %3318 = vrot.lane.b32.xlu0 %v3284, 48
      %v3319 = vpop.permute.xlu0 %3318
      %3320 = vrot.lane.b32.xlu0 %v3285, 48
      %v3321 = vpop.permute.xlu0 %3320
      %3322 = vrot.lane.b32.xlu0 %v3286, 48
      %v3323 = vpop.permute.xlu0 %3322
      %3324 = vrot.lane.b32.xlu0 %v3287, 48
      %v3325 = vpop.permute.xlu0 %3324
      %3326 = vrot.lane.b32.xlu0 %v3288, 48
      %v3327 = vpop.permute.xlu0 %3326
      %3328 = vrot.lane.b32.xlu0 %v3289, 48
      %v3329 = vpop.permute.xlu0 %3328
      %3330 = vrot.lane.b32.xlu0 %v3290, 48
      %v3331 = vpop.permute.xlu0 %3330
      %3332 = vrot.lane.b32.xlu0 %v3291, 48
      %v3333 = vpop.permute.xlu0 %3332
      %3334 = vrot.lane.b32.xlu0 %v3292, 48
      %v3335 = vpop.permute.xlu0 %3334
      %3336 = vrot.lane.b32.xlu0 %v3293, 48
      %v3337 = vpop.permute.xlu0 %3336
      %3338 = vrot.lane.b32.xlu0 %v3294, 48
      %v3339 = vpop.permute.xlu0 %3338
      %3340 = vrot.lane.b32.xlu0 %v3295, 48
      %v3341 = vpop.permute.xlu0 %3340
      %3342 = vrot.lane.b32.xlu0 %v3296, 48
      %v3343 = vpop.permute.xlu0 %3342
      %3344 = vrot.lane.b32.xlu0 %v3297, 48
      %v3345 = vpop.permute.xlu0 %3344
      %3362 = vst.msk [vmem:[#allocation2 + $0x2] sm:$0xff] %vm1820, %v3315
      %3363 = vst.msk [vmem:[#allocation2 + $0xa] sm:$0xff] %vm1820, %v3317
      %3364 = vst.msk [vmem:[#allocation2 + $0x12] sm:$0xff] %vm1820, %v3319
      %3365 = vst.msk [vmem:[#allocation2 + $0x1a] sm:$0xff] %vm1820, %v3321
      %3366 = vst.msk [vmem:[#allocation2 + $0x22] sm:$0xff] %vm1820, %v3323
      %3367 = vst.msk [vmem:[#allocation2 + $0x2a] sm:$0xff] %vm1820, %v3325
      %3368 = vst.msk [vmem:[#allocation2 + $0x32] sm:$0xff] %vm1820, %v3327
      %3369 = vst.msk [vmem:[#allocation2 + $0x3a] sm:$0xff] %vm1820, %v3329
      %3370 = vst.msk [vmem:[#allocation2 + $0x42] sm:$0xff] %vm1820, %v3331
      %3371 = vst.msk [vmem:[#allocation2 + $0x4a] sm:$0xff] %vm1820, %v3333
      %3372 = vst.msk [vmem:[#allocation2 + $0x52] sm:$0xff] %vm1820, %v3335
      %3373 = vst.msk [vmem:[#allocation2 + $0x5a] sm:$0xff] %vm1820, %v3337
      %3374 = vst.msk [vmem:[#allocation2 + $0x62] sm:$0xff] %vm1820, %v3339
      %3375 = vst.msk [vmem:[#allocation2 + $0x6a] sm:$0xff] %vm1820, %v3341
      %3376 = vst.msk [vmem:[#allocation2 + $0x72] sm:$0xff] %vm1820, %v3343
      %vm3377 = vcmask 521600
      %3378 = vst.msk [vmem:[#allocation2 + $0x7a] sm:$0x3f] %vm3377, %v3345
      %vm3379 = vcmask 648704
      %3380 = vst.msk [vmem:[#allocation2 + $0x7e] sm:$0x3] %vm3379, 0.0
      %v3381 = vld [vmem:[#allocation3 + $0x2] sm:$0xff]
      %v3382 = vld [vmem:[#allocation3 + $0xa] sm:$0xff]
      %v3383 = vld [vmem:[#allocation3 + $0x12] sm:$0xff]
      %v3384 = vld [vmem:[#allocation3 + $0x1a] sm:$0xff]
      %v3385 = vld [vmem:[#allocation3 + $0x22] sm:$0xff]
      %v3386 = vld [vmem:[#allocation3 + $0x2a] sm:$0xff]
      %v3387 = vld [vmem:[#allocation3 + $0x32] sm:$0xff]
      %v3388 = vld [vmem:[#allocation3 + $0x3a] sm:$0xff]
      %v3389 = vld [vmem:[#allocation3 + $0x42] sm:$0xff]
      %v3390 = vld [vmem:[#allocation3 + $0x4a] sm:$0xff]
      %v3391 = vld [vmem:[#allocation3 + $0x52] sm:$0xff]
      %v3392 = vld [vmem:[#allocation3 + $0x5a] sm:$0xff]
      %v3393 = vld [vmem:[#allocation3 + $0x62] sm:$0xff]
      %v3394 = vld [vmem:[#allocation3 + $0x6a] sm:$0xff]
      %v3395 = vld [vmem:[#allocation3 + $0x72] sm:$0xff]
      %v3396 = vld [vmem:[#allocation3 + $0x7a] sm:$0x3f]
      %3413 = vrot.lane.b32.xlu0 %v3381, 64
      %v3414 = vpop.permute.xlu0 %3413
      %3415 = vrot.lane.b32.xlu0 %v3382, 64
      %v3416 = vpop.permute.xlu0 %3415
      %3417 = vrot.lane.b32.xlu0 %v3383, 64
      %v3418 = vpop.permute.xlu0 %3417
      %3419 = vrot.lane.b32.xlu0 %v3384, 64
      %v3420 = vpop.permute.xlu0 %3419
      %3421 = vrot.lane.b32.xlu0 %v3385, 64
      %v3422 = vpop.permute.xlu0 %3421
      %3423 = vrot.lane.b32.xlu0 %v3386, 64
      %v3424 = vpop.permute.xlu0 %3423
      %3425 = vrot.lane.b32.xlu0 %v3387, 64
      %v3426 = vpop.permute.xlu0 %3425
      %3427 = vrot.lane.b32.xlu0 %v3388, 64
      %v3428 = vpop.permute.xlu0 %3427
      %3429 = vrot.lane.b32.xlu0 %v3389, 64
      %v3430 = vpop.permute.xlu0 %3429
      %3431 = vrot.lane.b32.xlu0 %v3390, 64
      %v3432 = vpop.permute.xlu0 %3431
      %3433 = vrot.lane.b32.xlu0 %v3391, 64
      %v3434 = vpop.permute.xlu0 %3433
      %3435 = vrot.lane.b32.xlu0 %v3392, 64
      %v3436 = vpop.permute.xlu0 %3435
      %3437 = vrot.lane.b32.xlu0 %v3393, 64
      %v3438 = vpop.permute.xlu0 %3437
      %3439 = vrot.lane.b32.xlu0 %v3394, 64
      %v3440 = vpop.permute.xlu0 %3439
      %3441 = vrot.lane.b32.xlu0 %v3395, 64
      %v3442 = vpop.permute.xlu0 %3441
      %3443 = vrot.lane.b32.xlu0 %v3396, 64
      %v3444 = vpop.permute.xlu0 %3443
      %3461 = vst.msk [vmem:[#allocation2] sm:$0xff] %vm1920, %v3414
      %3462 = vst.msk [vmem:[#allocation2 + $0x8] sm:$0xff] %vm1920, %v3416
      %3463 = vst.msk [vmem:[#allocation2 + $0x10] sm:$0xff] %vm1920, %v3418
      %3464 = vst.msk [vmem:[#allocation2 + $0x18] sm:$0xff] %vm1920, %v3420
      %3465 = vst.msk [vmem:[#allocation2 + $0x20] sm:$0xff] %vm1920, %v3422
      %3466 = vst.msk [vmem:[#allocation2 + $0x28] sm:$0xff] %vm1920, %v3424
      %3467 = vst.msk [vmem:[#allocation2 + $0x30] sm:$0xff] %vm1920, %v3426
      %3468 = vst.msk [vmem:[#allocation2 + $0x38] sm:$0xff] %vm1920, %v3428
      %3469 = vst.msk [vmem:[#allocation2 + $0x40] sm:$0xff] %vm1920, %v3430
      %3470 = vst.msk [vmem:[#allocation2 + $0x48] sm:$0xff] %vm1920, %v3432
      %3471 = vst.msk [vmem:[#allocation2 + $0x50] sm:$0xff] %vm1920, %v3434
      %3472 = vst.msk [vmem:[#allocation2 + $0x58] sm:$0xff] %vm1920, %v3436
      %3473 = vst.msk [vmem:[#allocation2 + $0x60] sm:$0xff] %vm1920, %v3438
      %3474 = vst.msk [vmem:[#allocation2 + $0x68] sm:$0xff] %vm1920, %v3440
      %3475 = vst.msk [vmem:[#allocation2 + $0x70] sm:$0xff] %vm1920, %v3442
      %vm3476 = vcmask 652800
      %3477 = vst.msk [vmem:[#allocation2 + $0x78] sm:$0x3f] %vm3476, %v3444
      %vm3478 = vcmask 784000
      %3479 = vst.msk [vmem:[#allocation2 + $0x7a] sm:$0x3f] %vm3478, 0.0
      %v3480 = vld [vmem:[#allocation3 + $0x6] sm:$0xff]
      %v3481 = vld [vmem:[#allocation3 + $0xe] sm:$0xff]
      %v3482 = vld [vmem:[#allocation3 + $0x16] sm:$0xff]
      %v3483 = vld [vmem:[#allocation3 + $0x1e] sm:$0xff]
      %v3484 = vld [vmem:[#allocation3 + $0x26] sm:$0xff]
      %v3485 = vld [vmem:[#allocation3 + $0x2e] sm:$0xff]
      %v3486 = vld [vmem:[#allocation3 + $0x36] sm:$0xff]
      %v3487 = vld [vmem:[#allocation3 + $0x3e] sm:$0xff]
      %v3488 = vld [vmem:[#allocation3 + $0x46] sm:$0xff]
      %v3489 = vld [vmem:[#allocation3 + $0x4e] sm:$0xff]
      %v3490 = vld [vmem:[#allocation3 + $0x56] sm:$0xff]
      %v3491 = vld [vmem:[#allocation3 + $0x5e] sm:$0xff]
      %v3492 = vld [vmem:[#allocation3 + $0x66] sm:$0xff]
      %v3493 = vld [vmem:[#allocation3 + $0x6e] sm:$0xff]
      %v3494 = vld [vmem:[#allocation3 + $0x76] sm:$0xff]
      %v3495 = vld [vmem:[#allocation3 + $0x7e] sm:$0x3]
      %3512 = vrot.lane.b32.xlu0 %v3480, 80
      %v3513 = vpop.permute.xlu0 %3512
      %3514 = vrot.lane.b32.xlu0 %v3481, 80
      %v3515 = vpop.permute.xlu0 %3514
      %3516 = vrot.lane.b32.xlu0 %v3482, 80
      %v3517 = vpop.permute.xlu0 %3516
      %3518 = vrot.lane.b32.xlu0 %v3483, 80
      %v3519 = vpop.permute.xlu0 %3518
      %3520 = vrot.lane.b32.xlu0 %v3484, 80
      %v3521 = vpop.permute.xlu0 %3520
      %3522 = vrot.lane.b32.xlu0 %v3485, 80
      %v3523 = vpop.permute.xlu0 %3522
      %3524 = vrot.lane.b32.xlu0 %v3486, 80
      %v3525 = vpop.permute.xlu0 %3524
      %3526 = vrot.lane.b32.xlu0 %v3487, 80
      %v3527 = vpop.permute.xlu0 %3526
      %3528 = vrot.lane.b32.xlu0 %v3488, 80
      %v3529 = vpop.permute.xlu0 %3528
      %3530 = vrot.lane.b32.xlu0 %v3489, 80
      %v3531 = vpop.permute.xlu0 %3530
      %3532 = vrot.lane.b32.xlu0 %v3490, 80
      %v3533 = vpop.permute.xlu0 %3532
      %3534 = vrot.lane.b32.xlu0 %v3491, 80
      %v3535 = vpop.permute.xlu0 %3534
      %3536 = vrot.lane.b32.xlu0 %v3492, 80
      %v3537 = vpop.permute.xlu0 %3536
      %3538 = vrot.lane.b32.xlu0 %v3493, 80
      %v3539 = vpop.permute.xlu0 %3538
      %3540 = vrot.lane.b32.xlu0 %v3494, 80
      %v3541 = vpop.permute.xlu0 %3540
      %3542 = vrot.lane.b32.xlu0 %v3495, 80
      %v3543 = vpop.permute.xlu0 %3542
      %3560 = vst.msk [vmem:[#allocation2] sm:$0xff] %vm2020, %v3513
      %3561 = vst.msk [vmem:[#allocation2 + $0x8] sm:$0xff] %vm2020, %v3515
      %3562 = vst.msk [vmem:[#allocation2 + $0x10] sm:$0xff] %vm2020, %v3517
      %3563 = vst.msk [vmem:[#allocation2 + $0x18] sm:$0xff] %vm2020, %v3519
      %3564 = vst.msk [vmem:[#allocation2 + $0x20] sm:$0xff] %vm2020, %v3521
      %3565 = vst.msk [vmem:[#allocation2 + $0x28] sm:$0xff] %vm2020, %v3523
      %3566 = vst.msk [vmem:[#allocation2 + $0x30] sm:$0xff] %vm2020, %v3525
      %3567 = vst.msk [vmem:[#allocation2 + $0x38] sm:$0xff] %vm2020, %v3527
      %3568 = vst.msk [vmem:[#allocation2 + $0x40] sm:$0xff] %vm2020, %v3529
      %3569 = vst.msk [vmem:[#allocation2 + $0x48] sm:$0xff] %vm2020, %v3531
      %3570 = vst.msk [vmem:[#allocation2 + $0x50] sm:$0xff] %vm2020, %v3533
      %3571 = vst.msk [vmem:[#allocation2 + $0x58] sm:$0xff] %vm2020, %v3535
      %3572 = vst.msk [vmem:[#allocation2 + $0x60] sm:$0xff] %vm2020, %v3537
      %3573 = vst.msk [vmem:[#allocation2 + $0x68] sm:$0xff] %vm2020, %v3539
      %3574 = vst.msk [vmem:[#allocation2 + $0x70] sm:$0xff] %vm2020, %v3541
      %vm3575 = vcmask 779904
      %3576 = vst.msk [vmem:[#allocation2 + $0x78] sm:$0x3] %vm3575, %v3543
      %3577 = vst.msk [vmem:[#allocation2 + $0x76] sm:$0xff] %vm2120, 0.0
      %vm3578 = vcmask 911104
      %3579 = vst.msk [vmem:[#allocation2 + $0x7e] sm:$0x3] %vm3578, 0.0
      %v3580 = vld [vmem:[#allocation3 + $0xa] sm:$0xff]
      %v3581 = vld [vmem:[#allocation3 + $0x12] sm:$0xff]
      %v3582 = vld [vmem:[#allocation3 + $0x1a] sm:$0xff]
      %v3583 = vld [vmem:[#allocation3 + $0x22] sm:$0xff]
      %v3584 = vld [vmem:[#allocation3 + $0x2a] sm:$0xff]
      %v3585 = vld [vmem:[#allocation3 + $0x32] sm:$0xff]
      %v3586 = vld [vmem:[#allocation3 + $0x3a] sm:$0xff]
      %v3587 = vld [vmem:[#allocation3 + $0x42] sm:$0xff]
      %v3588 = vld [vmem:[#allocation3 + $0x4a] sm:$0xff]
      %v3589 = vld [vmem:[#allocation3 + $0x52] sm:$0xff]
      %v3590 = vld [vmem:[#allocation3 + $0x5a] sm:$0xff]
      %v3591 = vld [vmem:[#allocation3 + $0x62] sm:$0xff]
      %v3592 = vld [vmem:[#allocation3 + $0x6a] sm:$0xff]
      %v3593 = vld [vmem:[#allocation3 + $0x72] sm:$0xff]
      %v3594 = vld [vmem:[#allocation3 + $0x7a] sm:$0x3f]
      %3610 = vrot.lane.b32.xlu0 %v3580, 96
      %v3611 = vpop.permute.xlu0 %3610
      %3612 = vrot.lane.b32.xlu0 %v3581, 96
      %v3613 = vpop.permute.xlu0 %3612
      %3614 = vrot.lane.b32.xlu0 %v3582, 96
      %v3615 = vpop.permute.xlu0 %3614
      %3616 = vrot.lane.b32.xlu0 %v3583, 96
      %v3617 = vpop.permute.xlu0 %3616
      %3618 = vrot.lane.b32.xlu0 %v3584, 96
      %v3619 = vpop.permute.xlu0 %3618
      %3620 = vrot.lane.b32.xlu0 %v3585, 96
      %v3621 = vpop.permute.xlu0 %3620
      %3622 = vrot.lane.b32.xlu0 %v3586, 96
      %v3623 = vpop.permute.xlu0 %3622
      %3624 = vrot.lane.b32.xlu0 %v3587, 96
      %v3625 = vpop.permute.xlu0 %3624
      %3626 = vrot.lane.b32.xlu0 %v3588, 96
      %v3627 = vpop.permute.xlu0 %3626
      %3628 = vrot.lane.b32.xlu0 %v3589, 96
      %v3629 = vpop.permute.xlu0 %3628
      %3630 = vrot.lane.b32.xlu0 %v3590, 96
      %v3631 = vpop.permute.xlu0 %3630
      %3632 = vrot.lane.b32.xlu0 %v3591, 96
      %v3633 = vpop.permute.xlu0 %3632
      %3634 = vrot.lane.b32.xlu0 %v3592, 96
      %v3635 = vpop.permute.xlu0 %3634
      %3636 = vrot.lane.b32.xlu0 %v3593, 96
      %v3637 = vpop.permute.xlu0 %3636
      %3638 = vrot.lane.b32.xlu0 %v3594, 96
      %v3639 = vpop.permute.xlu0 %3638
      %3655 = vst.msk [vmem:[#allocation2] sm:$0xff] %vm2120, %v3611
      %3656 = vst.msk [vmem:[#allocation2 + $0x8] sm:$0xff] %vm2120, %v3613
      %3657 = vst.msk [vmem:[#allocation2 + $0x10] sm:$0xff] %vm2120, %v3615
      %3658 = vst.msk [vmem:[#allocation2 + $0x18] sm:$0xff] %vm2120, %v3617
      %3659 = vst.msk [vmem:[#allocation2 + $0x20] sm:$0xff] %vm2120, %v3619
      %3660 = vst.msk [vmem:[#allocation2 + $0x28] sm:$0xff] %vm2120, %v3621
      %3661 = vst.msk [vmem:[#allocation2 + $0x30] sm:$0xff] %vm2120, %v3623
      %3662 = vst.msk [vmem:[#allocation2 + $0x38] sm:$0xff] %vm2120, %v3625
      %3663 = vst.msk [vmem:[#allocation2 + $0x40] sm:$0xff] %vm2120, %v3627
      %3664 = vst.msk [vmem:[#allocation2 + $0x48] sm:$0xff] %vm2120, %v3629
      %3665 = vst.msk [vmem:[#allocation2 + $0x50] sm:$0xff] %vm2120, %v3631
      %3666 = vst.msk [vmem:[#allocation2 + $0x58] sm:$0xff] %vm2120, %v3633
      %3667 = vst.msk [vmem:[#allocation2 + $0x60] sm:$0xff] %vm2120, %v3635
      %3668 = vst.msk [vmem:[#allocation2 + $0x68] sm:$0xff] %vm2120, %v3637
      %vm3669 = vcmask 915200
      %3670 = vst.msk [vmem:[#allocation2 + $0x70] sm:$0x3f] %vm3669, %v3639
      %3671 = vst.msk [vmem:[#allocation2 + $0x72] sm:$0xff] %vm2220, 0.0
      %vm3672 = vcmask 1046400
      %3673 = vst.msk [vmem:[#allocation2 + $0x7a] sm:$0x3f] %vm3672, 0.0
      %v3674 = vld [vmem:[#allocation3 + $0xe] sm:$0xff]
      %v3675 = vld [vmem:[#allocation3 + $0x16] sm:$0xff]
      %v3676 = vld [vmem:[#allocation3 + $0x1e] sm:$0xff]
      %v3677 = vld [vmem:[#allocation3 + $0x26] sm:$0xff]
      %v3678 = vld [vmem:[#allocation3 + $0x2e] sm:$0xff]
      %v3679 = vld [vmem:[#allocation3 + $0x36] sm:$0xff]
      %v3680 = vld [vmem:[#allocation3 + $0x3e] sm:$0xff]
      %v3681 = vld [vmem:[#allocation3 + $0x46] sm:$0xff]
      %v3682 = vld [vmem:[#allocation3 + $0x4e] sm:$0xff]
      %v3683 = vld [vmem:[#allocation3 + $0x56] sm:$0xff]
      %v3684 = vld [vmem:[#allocation3 + $0x5e] sm:$0xff]
      %v3685 = vld [vmem:[#allocation3 + $0x66] sm:$0xff]
      %v3686 = vld [vmem:[#allocation3 + $0x6e] sm:$0xff]
      %v3687 = vld [vmem:[#allocation3 + $0x76] sm:$0xff]
      %v3688 = vld [vmem:[#allocation3 + $0x7e] sm:$0x3]
      %3704 = vrot.lane.b32.xlu0 %v3674, 112
      %v3705 = vpop.permute.xlu0 %3704
      %3706 = vrot.lane.b32.xlu0 %v3675, 112
      %v3707 = vpop.permute.xlu0 %3706
      %3708 = vrot.lane.b32.xlu0 %v3676, 112
      %v3709 = vpop.permute.xlu0 %3708
      %3710 = vrot.lane.b32.xlu0 %v3677, 112
      %v3711 = vpop.permute.xlu0 %3710
      %3712 = vrot.lane.b32.xlu0 %v3678, 112
      %v3713 = vpop.permute.xlu0 %3712
      %3714 = vrot.lane.b32.xlu0 %v3679, 112
      %v3715 = vpop.permute.xlu0 %3714
      %3716 = vrot.lane.b32.xlu0 %v3680, 112
      %v3717 = vpop.permute.xlu0 %3716
      %3718 = vrot.lane.b32.xlu0 %v3681, 112
      %v3719 = vpop.permute.xlu0 %3718
      %3720 = vrot.lane.b32.xlu0 %v3682, 112
      %v3721 = vpop.permute.xlu0 %3720
      %3722 = vrot.lane.b32.xlu0 %v3683, 112
      %v3723 = vpop.permute.xlu0 %3722
      %3724 = vrot.lane.b32.xlu0 %v3684, 112
      %v3725 = vpop.permute.xlu0 %3724
      %3726 = vrot.lane.b32.xlu0 %v3685, 112
      %v3727 = vpop.permute.xlu0 %3726
      %3728 = vrot.lane.b32.xlu0 %v3686, 112
      %v3729 = vpop.permute.xlu0 %3728
      %3730 = vrot.lane.b32.xlu0 %v3687, 112
      %v3731 = vpop.permute.xlu0 %3730
      %3732 = vrot.lane.b32.xlu0 %v3688, 112
      %v3733 = vpop.permute.xlu0 %3732
      %3749 = vst.msk [vmem:[#allocation2] sm:$0xff] %vm2220, %v3705
      %3750 = vst.msk [vmem:[#allocation2 + $0x8] sm:$0xff] %vm2220, %v3707
      %3751 = vst.msk [vmem:[#allocation2 + $0x10] sm:$0xff] %vm2220, %v3709
      %3752 = vst.msk [vmem:[#allocation2 + $0x18] sm:$0xff] %vm2220, %v3711
      %3753 = vst.msk [vmem:[#allocation2 + $0x20] sm:$0xff] %vm2220, %v3713
      %3754 = vst.msk [vmem:[#allocation2 + $0x28] sm:$0xff] %vm2220, %v3715
      %3755 = vst.msk [vmem:[#allocation2 + $0x30] sm:$0xff] %vm2220, %v3717
      %3756 = vst.msk [vmem:[#allocation2 + $0x38] sm:$0xff] %vm2220, %v3719
      %3757 = vst.msk [vmem:[#allocation2 + $0x40] sm:$0xff] %vm2220, %v3721
      %3758 = vst.msk [vmem:[#allocation2 + $0x48] sm:$0xff] %vm2220, %v3723
      %3759 = vst.msk [vmem:[#allocation2 + $0x50] sm:$0xff] %vm2220, %v3725
      %3760 = vst.msk [vmem:[#allocation2 + $0x58] sm:$0xff] %vm2220, %v3727
      %3761 = vst.msk [vmem:[#allocation2 + $0x60] sm:$0xff] %vm2220, %v3729
      %3762 = vst.msk [vmem:[#allocation2 + $0x68] sm:$0xff] %vm2220, %v3731
      %vm3763 = vcmask 1042304
      %3764 = vst.msk [vmem:[#allocation2 + $0x70] sm:$0x3] %vm3763, %v3733
      %s3765 = scalar_lea.vmem %s2, 128
      %v3766 = vld [vmem:[%s3765] sm:$0xff]
      %v3767 = vld [vmem:[%s3765 + $0x8] sm:$0xff]
      %v3768 = vld [vmem:[%s3765 + $0x10] sm:$0xff]
      %v3769 = vld [vmem:[%s3765 + $0x18] sm:$0xff]
      %v3770 = vld [vmem:[%s3765 + $0x20] sm:$0xff]
      %v3771 = vld [vmem:[%s3765 + $0x28] sm:$0xff]
      %v3772 = vld [vmem:[%s3765 + $0x30] sm:$0xff]
      %v3773 = vld [vmem:[%s3765 + $0x38] sm:$0xff]
      %v3774 = vld [vmem:[%s3765 + $0x40] sm:$0xff]
      %v3775 = vld [vmem:[%s3765 + $0x48] sm:$0xff]
      %v3776 = vld [vmem:[%s3765 + $0x50] sm:$0xff]
      %v3777 = vld [vmem:[%s3765 + $0x58] sm:$0xff]
      %v3778 = vld [vmem:[%s3765 + $0x60] sm:$0xff]
      %v3779 = vld [vmem:[%s3765 + $0x68] sm:$0xff]
      %v3780 = vld [vmem:[%s3765 + $0x70] sm:$0xff]
      %v3781 = vld [vmem:[%s3765 + $0x78] sm:$0xff]
      %v3782 = vld [vmem:[#allocation2] sm:$0xff]
      %v3783 = vld [vmem:[#allocation2 + $0x8] sm:$0xff]
      %v3784 = vld [vmem:[#allocation2 + $0x10] sm:$0xff]
      %v3785 = vld [vmem:[#allocation2 + $0x18] sm:$0xff]
      %v3786 = vld [vmem:[#allocation2 + $0x20] sm:$0xff]
      %v3787 = vld [vmem:[#allocation2 + $0x28] sm:$0xff]
      %v3788 = vld [vmem:[#allocation2 + $0x30] sm:$0xff]
      %v3789 = vld [vmem:[#allocation2 + $0x38] sm:$0xff]
      %v3790 = vld [vmem:[#allocation2 + $0x40] sm:$0xff]
      %v3791 = vld [vmem:[#allocation2 + $0x48] sm:$0xff]
      %v3792 = vld [vmem:[#allocation2 + $0x50] sm:$0xff]
      %v3793 = vld [vmem:[#allocation2 + $0x58] sm:$0xff]
      %v3794 = vld [vmem:[#allocation2 + $0x60] sm:$0xff]
      %v3795 = vld [vmem:[#allocation2 + $0x68] sm:$0xff]
      %v3796 = vld [vmem:[#allocation2 + $0x70] sm:$0xff]
      %v3797 = vld [vmem:[#allocation2 + $0x78] sm:$0xff]
      %s3798 = scalar_lea.vmem %s3, 2
      %v3799 = vld [vmem:[%s3798] sm:$0x1]
      %v3801 = vlaneseq
      %v3802 = vshrl.u32 %v3801, 7
      %v3803 = vsub.s32 0, %v3802
      %v3804 = vrot.slane %v3799, %v3803
      %3806 = vmatprep.subr.mxu0 0.0
      %3807 = vmatpush1.msra.mxu0 %v3766
      %3808 = vmatprep.subr.mxu0 0.0
      %3809 = vmatpush1.msra.mxu0 %v3767
      %3810 = vmatprep.subr.mxu0 0.0
      %3811 = vmatpush1.msra.mxu0 %v3768
      %3812 = vmatprep.subr.mxu0 0.0
      %3813 = vmatpush1.msra.mxu0 %v3769
      %3814 = vmatprep.subr.mxu0 0.0
      %3815 = vmatpush1.msra.mxu0 %v3770
      %3816 = vmatprep.subr.mxu0 0.0
      %3817 = vmatpush1.msra.mxu0 %v3771
      %3818 = vmatprep.subr.mxu0 0.0
      %3819 = vmatpush1.msra.mxu0 %v3772
      %3820 = vmatprep.subr.mxu0 0.0
      %3821 = vmatpush1.msra.mxu0 %v3773
      %3822 = vmatprep.subr.mxu0 0.0
      %3823 = vmatpush1.msra.mxu0 %v3774
      %3824 = vmatprep.subr.mxu0 0.0
      %3825 = vmatpush1.msra.mxu0 %v3775
      %3826 = vmatprep.subr.mxu0 0.0
      %3827 = vmatpush1.msra.mxu0 %v3776
      %3828 = vmatprep.subr.mxu0 0.0
      %3829 = vmatpush1.msra.mxu0 %v3777
      %3830 = vmatprep.subr.mxu0 0.0
      %3831 = vmatpush1.msra.mxu0 %v3778
      %3832 = vmatprep.subr.mxu0 0.0
      %3833 = vmatpush1.msra.mxu0 %v3779
      %3834 = vmatprep.subr.mxu0 0.0
      %3835 = vmatpush1.msra.mxu0 %v3780
      %3836 = vmatprep.subr.mxu0 0.0
      %3837 = vmatpush1.msra.mxu0 %v3781
      %3838 = vmatprep.subr.mxu0 0.0
      %3839 = vmatpush1.msra.mxu0 0.0
      %3840 = vmatprep.subr.mxu0 0.0
      %3841 = vmatpush1.msra.mxu0 0.0
      %3842 = vmatprep.subr.mxu0 0.0
      %3843 = vmatpush1.msra.mxu0 0.0
      %3844 = vmatprep.subr.mxu0 0.0
      %3845 = vmatpush1.msra.mxu0 0.0
      %3846 = vmatprep.subr.mxu0 0.0
      %3847 = vmatpush1.msra.mxu0 0.0
      %3848 = vmatprep.subr.mxu0 0.0
      %3849 = vmatpush1.msra.mxu0 0.0
      %3850 = vmatprep.subr.mxu0 0.0
      %3851 = vmatpush1.msra.mxu0 0.0
      %3852 = vmatprep.subr.mxu0 0.0
      %3853 = vmatpush1.msra.mxu0 0.0
      %3854 = vmatprep.subr.mxu0 0.0
      %3855 = vmatpush1.msra.mxu0 0.0
      %3856 = vmatprep.subr.mxu0 0.0
      %3857 = vmatpush1.msra.mxu0 0.0
      %3858 = vmatprep.subr.mxu0 0.0
      %3859 = vmatpush1.msra.mxu0 0.0
      %3860 = vmatprep.subr.mxu0 0.0
      %3861 = vmatpush1.msra.mxu0 0.0
      %3862 = vmatprep.subr.mxu0 0.0
      %3863 = vmatpush1.msra.mxu0 0.0
      %3864 = vmatprep.subr.mxu0 0.0
      %3865 = vmatpush1.msra.mxu0 0.0
      %3866 = vmatprep.subr.mxu0 0.0
      %3867 = vmatpush1.msra.mxu0 0.0
      %3868 = vmatprep.subr.mxu0 0.0
      %3869 = vmatpush1.msra.mxu0 0.0
      %3870 = vmatprep.mubr.f32.mxu0 0.0
      %3871 = vmatmul.mubr.f32.gmra.mrb[0].mxu0 %v3782
      %v3872 = vpop.f32.mrb[0].mxu0
      %v3873 = vadd.f32 %v3804, %v3872
      %v3874 = vpop.f32.mrb[0].mxu0
      %3875 = vmatprep.mubr.f32.mxu0 0.0
      %3876 = vmatmul.mubr.f32.gmra.mrb[0].mxu0 %v3783
      %v3877 = vpop.f32.mrb[0].mxu0
      %v3878 = vadd.f32 %v3804, %v3877
      %v3879 = vpop.f32.mrb[0].mxu0
      %3880 = vmatprep.mubr.f32.mxu0 0.0
      %3881 = vmatmul.mubr.f32.gmra.mrb[0].mxu0 %v3784
      %v3882 = vpop.f32.mrb[0].mxu0
      %v3883 = vadd.f32 %v3804, %v3882
      %v3884 = vpop.f32.mrb[0].mxu0
      %3885 = vmatprep.mubr.f32.mxu0 0.0
      %3886 = vmatmul.mubr.f32.gmra.mrb[0].mxu0 %v3785
      %v3887 = vpop.f32.mrb[0].mxu0
      %v3888 = vadd.f32 %v3804, %v3887
      %v3889 = vpop.f32.mrb[0].mxu0
      %3890 = vmatprep.mubr.f32.mxu0 0.0
      %3891 = vmatmul.mubr.f32.gmra.mrb[0].mxu0 %v3786
      %v3892 = vpop.f32.mrb[0].mxu0
      %v3893 = vadd.f32 %v3804, %v3892
      %v3894 = vpop.f32.mrb[0].mxu0
      %3895 = vmatprep.mubr.f32.mxu0 0.0
      %3896 = vmatmul.mubr.f32.gmra.mrb[0].mxu0 %v3787
      %v3897 = vpop.f32.mrb[0].mxu0
      %v3898 = vadd.f32 %v3804, %v3897
      %v3899 = vpop.f32.mrb[0].mxu0
      %3900 = vmatprep.mubr.f32.mxu0 0.0
      %3901 = vmatmul.mubr.f32.gmra.mrb[0].mxu0 %v3788
      %v3902 = vpop.f32.mrb[0].mxu0
      %v3903 = vadd.f32 %v3804, %v3902
      %v3904 = vpop.f32.mrb[0].mxu0
      %3905 = vmatprep.mubr.f32.mxu0 0.0
      %3906 = vmatmul.mubr.f32.gmra.mrb[0].mxu0 %v3789
      %v3907 = vpop.f32.mrb[0].mxu0
      %v3908 = vadd.f32 %v3804, %v3907
      %v3909 = vpop.f32.mrb[0].mxu0
      %3910 = vmatprep.mubr.f32.mxu0 0.0
      %3911 = vmatmul.mubr.f32.gmra.mrb[0].mxu0 %v3790
      %v3912 = vpop.f32.mrb[0].mxu0
      %v3913 = vadd.f32 %v3804, %v3912
      %v3914 = vpop.f32.mrb[0].mxu0
      %3915 = vmatprep.mubr.f32.mxu0 0.0
      %3916 = vmatmul.mubr.f32.gmra.mrb[0].mxu0 %v3791
      %v3917 = vpop.f32.mrb[0].mxu0
      %v3918 = vadd.f32 %v3804, %v3917
      %v3919 = vpop.f32.mrb[0].mxu0
      %3920 = vmatprep.mubr.f32.mxu0 0.0
      %3921 = vmatmul.mubr.f32.gmra.mrb[0].mxu0 %v3792
      %v3922 = vpop.f32.mrb[0].mxu0
      %v3923 = vadd.f32 %v3804, %v3922
      %v3924 = vpop.f32.mrb[0].mxu0
      %3925 = vmatprep.mubr.f32.mxu0 0.0
      %3926 = vmatmul.mubr.f32.gmra.mrb[0].mxu0 %v3793
      %v3927 = vpop.f32.mrb[0].mxu0
      %v3928 = vadd.f32 %v3804, %v3927
      %v3929 = vpop.f32.mrb[0].mxu0
      %3930 = vmatprep.mubr.f32.mxu0 0.0
      %3931 = vmatmul.mubr.f32.gmra.mrb[0].mxu0 %v3794
      %v3932 = vpop.f32.mrb[0].mxu0
      %v3933 = vadd.f32 %v3804, %v3932
      %v3934 = vpop.f32.mrb[0].mxu0
      %3935 = vmatprep.mubr.f32.mxu0 0.0
      %3936 = vmatmul.mubr.f32.gmra.mrb[0].mxu0 %v3795
      %v3937 = vpop.f32.mrb[0].mxu0
      %v3938 = vadd.f32 %v3804, %v3937
      %v3939 = vpop.f32.mrb[0].mxu0
      %3940 = vmatprep.mubr.f32.mxu0 0.0
      %3941 = vmatmul.mubr.f32.gmra.mrb[0].mxu0 %v3796
      %v3942 = vpop.f32.mrb[0].mxu0
      %v3943 = vadd.f32 %v3804, %v3942
      %v3944 = vpop.f32.mrb[0].mxu0
      %3945 = vmatprep.mubr.f32.mxu0 0.0
      %3946 = vmatmul.mubr.f32.gmra.mrb[0].mxu0 %v3797
      %v3947 = vpop.f32.mrb[0].mxu0
      %v3948 = vadd.f32 %v3804, %v3947
      %v3949 = vpop.f32.mrb[0].mxu0
      %3950 = vdwg.mxu0
      %v3951 = vmax.f32 %v3873, 0.0
      %v3952 = vmax.f32 %v3878, 0.0
      %v3953 = vmax.f32 %v3883, 0.0
      %v3954 = vmax.f32 %v3888, 0.0
      %v3955 = vmax.f32 %v3893, 0.0
      %v3956 = vmax.f32 %v3898, 0.0
      %v3957 = vmax.f32 %v3903, 0.0
      %v3958 = vmax.f32 %v3908, 0.0
      %v3959 = vmax.f32 %v3913, 0.0
      %v3960 = vmax.f32 %v3918, 0.0
      %v3961 = vmax.f32 %v3923, 0.0
      %v3962 = vmax.f32 %v3928, 0.0
      %v3963 = vmax.f32 %v3933, 0.0
      %v3964 = vmax.f32 %v3938, 0.0
      %v3965 = vmax.f32 %v3943, 0.0
      %v3966 = vmax.f32 %v3948, 0.0
      %s3967 = scalar_lea.vmem %s4, 128
      %v3968 = vld [vmem:[%s3967] sm:$0xff]
      %v3969 = vld [vmem:[%s3967 + $0x8] sm:$0xff]
      %v3970 = vld [vmem:[%s3967 + $0x10] sm:$0xff]
      %v3971 = vld [vmem:[%s3967 + $0x18] sm:$0xff]
      %v3972 = vld [vmem:[%s3967 + $0x20] sm:$0xff]
      %v3973 = vld [vmem:[%s3967 + $0x28] sm:$0xff]
      %v3974 = vld [vmem:[%s3967 + $0x30] sm:$0xff]
      %v3975 = vld [vmem:[%s3967 + $0x38] sm:$0xff]
      %s3976 = scalar_lea.vmem %s5, 2
      %v3977 = vld [vmem:[%s3976] sm:$0x1]
      %v3979 = vlaneseq
      %v3980 = vshrl.u32 %v3979, 7
      %v3981 = vsub.s32 0, %v3980
      %v3982 = vrot.slane %v3977, %v3981
      %v3985 = vsel %vm1290, %v3951, 0
      %v3988 = vsel %vm1290, %v3952, 0
      %v3991 = vsel %vm1290, %v3953, 0
      %v3994 = vsel %vm1290, %v3954, 0
      %v3997 = vsel %vm1290, %v3955, 0
      %v4000 = vsel %vm1290, %v3956, 0
      %v4003 = vsel %vm1290, %v3957, 0
      %v4006 = vsel %vm1290, %v3958, 0
      %v4009 = vsel %vm1290, %v3959, 0
      %v4012 = vsel %vm1290, %v3960, 0
      %v4015 = vsel %vm1290, %v3961, 0
      %v4018 = vsel %vm1290, %v3962, 0
      %v4021 = vsel %vm1290, %v3963, 0
      %v4024 = vsel %vm1290, %v3964, 0
      %v4027 = vsel %vm1290, %v3965, 0
      %v4030 = vsel %vm1290, %v3966, 0
      %4032 = vmatprep.subr.mxu0 0.0
      %4033 = vmatpush1.msra.mxu0 %v3968
      %4034 = vmatprep.subr.mxu0 0.0
      %4035 = vmatpush1.msra.mxu0 %v3969
      %4036 = vmatprep.subr.mxu0 0.0
      %4037 = vmatpush1.msra.mxu0 %v3970
      %4038 = vmatprep.subr.mxu0 0.0
      %4039 = vmatpush1.msra.mxu0 %v3971
      %4040 = vmatprep.subr.mxu0 0.0
      %4041 = vmatpush1.msra.mxu0 %v3972
      %4042 = vmatprep.subr.mxu0 0.0
      %4043 = vmatpush1.msra.mxu0 %v3973
      %4044 = vmatprep.subr.mxu0 0.0
      %4045 = vmatpush1.msra.mxu0 %v3974
      %4046 = vmatprep.subr.mxu0 0.0
      %4047 = vmatpush1.msra.mxu0 %v3975
      %4048 = vmatprep.subr.mxu0 0.0
      %4049 = vmatpush1.msra.mxu0 0.0
      %4050 = vmatprep.subr.mxu0 0.0
      %4051 = vmatpush1.msra.mxu0 0.0
      %4052 = vmatprep.subr.mxu0 0.0
      %4053 = vmatpush1.msra.mxu0 0.0
      %4054 = vmatprep.subr.mxu0 0.0
      %4055 = vmatpush1.msra.mxu0 0.0
      %4056 = vmatprep.subr.mxu0 0.0
      %4057 = vmatpush1.msra.mxu0 0.0
      %4058 = vmatprep.subr.mxu0 0.0
      %4059 = vmatpush1.msra.mxu0 0.0
      %4060 = vmatprep.subr.mxu0 0.0
      %4061 = vmatpush1.msra.mxu0 0.0
      %4062 = vmatprep.subr.mxu0 0.0
      %4063 = vmatpush1.msra.mxu0 0.0
      %4064 = vmatprep.subr.mxu0 0.0
      %4065 = vmatpush1.msra.mxu0 0.0
      %4066 = vmatprep.subr.mxu0 0.0
      %4067 = vmatpush1.msra.mxu0 0.0
      %4068 = vmatprep.subr.mxu0 0.0
      %4069 = vmatpush1.msra.mxu0 0.0
      %4070 = vmatprep.subr.mxu0 0.0
      %4071 = vmatpush1.msra.mxu0 0.0
      %4072 = vmatprep.subr.mxu0 0.0
      %4073 = vmatpush1.msra.mxu0 0.0
      %4074 = vmatprep.subr.mxu0 0.0
      %4075 = vmatpush1.msra.mxu0 0.0
      %4076 = vmatprep.subr.mxu0 0.0
      %4077 = vmatpush1.msra.mxu0 0.0
      %4078 = vmatprep.subr.mxu0 0.0
      %4079 = vmatpush1.msra.mxu0 0.0
      %4080 = vmatprep.subr.mxu0 0.0
      %4081 = vmatpush1.msra.mxu0 0.0
      %4082 = vmatprep.subr.mxu0 0.0
      %4083 = vmatpush1.msra.mxu0 0.0
      %4084 = vmatprep.subr.mxu0 0.0
      %4085 = vmatpush1.msra.mxu0 0.0
      %4086 = vmatprep.subr.mxu0 0.0
      %4087 = vmatpush1.msra.mxu0 0.0
      %4088 = vmatprep.subr.mxu0 0.0
      %4089 = vmatpush1.msra.mxu0 0.0
      %4090 = vmatprep.subr.mxu0 0.0
      %4091 = vmatpush1.msra.mxu0 0.0
      %4092 = vmatprep.subr.mxu0 0.0
      %4093 = vmatpush1.msra.mxu0 0.0
      %4094 = vmatprep.subr.mxu0 0.0
      %4095 = vmatpush1.msra.mxu0 0.0
      %4096 = vmatprep.mubr.f32.mxu0 0.0
      %4097 = vmatmul.mubr.f32.gmra.mrb[0].mxu0 %v3985
      %v4098 = vpop.f32.mrb[0].mxu0
      %v4099 = vadd.f32 %v3982, %v4098
      %v4100 = vpop.f32.mrb[0].mxu0
      %4101 = vmatprep.mubr.f32.mxu0 0.0
      %4102 = vmatmul.mubr.f32.gmra.mrb[0].mxu0 %v3988
      %v4103 = vpop.f32.mrb[0].mxu0
      %v4104 = vadd.f32 %v3982, %v4103
      %v4105 = vpop.f32.mrb[0].mxu0
      %4106 = vmatprep.mubr.f32.mxu0 0.0
      %4107 = vmatmul.mubr.f32.gmra.mrb[0].mxu0 %v3991
      %v4108 = vpop.f32.mrb[0].mxu0
      %v4109 = vadd.f32 %v3982, %v4108
      %v4110 = vpop.f32.mrb[0].mxu0
      %4111 = vmatprep.mubr.f32.mxu0 0.0
      %4112 = vmatmul.mubr.f32.gmra.mrb[0].mxu0 %v3994
      %v4113 = vpop.f32.mrb[0].mxu0
      %v4114 = vadd.f32 %v3982, %v4113
      %v4115 = vpop.f32.mrb[0].mxu0
      %4116 = vmatprep.mubr.f32.mxu0 0.0
      %4117 = vmatmul.mubr.f32.gmra.mrb[0].mxu0 %v3997
      %v4118 = vpop.f32.mrb[0].mxu0
      %v4119 = vadd.f32 %v3982, %v4118
      %v4120 = vpop.f32.mrb[0].mxu0
      %4121 = vmatprep.mubr.f32.mxu0 0.0
      %4122 = vmatmul.mubr.f32.gmra.mrb[0].mxu0 %v4000
      %v4123 = vpop.f32.mrb[0].mxu0
      %v4124 = vadd.f32 %v3982, %v4123
      %v4125 = vpop.f32.mrb[0].mxu0
      %4126 = vmatprep.mubr.f32.mxu0 0.0
      %4127 = vmatmul.mubr.f32.gmra.mrb[0].mxu0 %v4003
      %v4128 = vpop.f32.mrb[0].mxu0
      %v4129 = vadd.f32 %v3982, %v4128
      %v4130 = vpop.f32.mrb[0].mxu0
      %4131 = vmatprep.mubr.f32.mxu0 0.0
      %4132 = vmatmul.mubr.f32.gmra.mrb[0].mxu0 %v4006
      %v4133 = vpop.f32.mrb[0].mxu0
      %v4134 = vadd.f32 %v3982, %v4133
      %v4135 = vpop.f32.mrb[0].mxu0
      %4136 = vmatprep.mubr.f32.mxu0 0.0
      %4137 = vmatmul.mubr.f32.gmra.mrb[0].mxu0 %v4009
      %v4138 = vpop.f32.mrb[0].mxu0
      %v4139 = vadd.f32 %v3982, %v4138
      %v4140 = vpop.f32.mrb[0].mxu0
      %4141 = vmatprep.mubr.f32.mxu0 0.0
      %4142 = vmatmul.mubr.f32.gmra.mrb[0].mxu0 %v4012
      %v4143 = vpop.f32.mrb[0].mxu0
      %v4144 = vadd.f32 %v3982, %v4143
      %v4145 = vpop.f32.mrb[0].mxu0
      %4146 = vmatprep.mubr.f32.mxu0 0.0
      %4147 = vmatmul.mubr.f32.gmra.mrb[0].mxu0 %v4015
      %v4148 = vpop.f32.mrb[0].mxu0
      %v4149 = vadd.f32 %v3982, %v4148
      %v4150 = vpop.f32.mrb[0].mxu0
      %4151 = vmatprep.mubr.f32.mxu0 0.0
      %4152 = vmatmul.mubr.f32.gmra.mrb[0].mxu0 %v4018
      %v4153 = vpop.f32.mrb[0].mxu0
      %v4154 = vadd.f32 %v3982, %v4153
      %v4155 = vpop.f32.mrb[0].mxu0
      %4156 = vmatprep.mubr.f32.mxu0 0.0
      %4157 = vmatmul.mubr.f32.gmra.mrb[0].mxu0 %v4021
      %v4158 = vpop.f32.mrb[0].mxu0
      %v4159 = vadd.f32 %v3982, %v4158
      %v4160 = vpop.f32.mrb[0].mxu0
      %4161 = vmatprep.mubr.f32.mxu0 0.0
      %4162 = vmatmul.mubr.f32.gmra.mrb[0].mxu0 %v4024
      %v4163 = vpop.f32.mrb[0].mxu0
      %v4164 = vadd.f32 %v3982, %v4163
      %v4165 = vpop.f32.mrb[0].mxu0
      %4166 = vmatprep.mubr.f32.mxu0 0.0
      %4167 = vmatmul.mubr.f32.gmra.mrb[0].mxu0 %v4027
      %v4168 = vpop.f32.mrb[0].mxu0
      %v4169 = vadd.f32 %v3982, %v4168
      %v4170 = vpop.f32.mrb[0].mxu0
      %4171 = vmatprep.mubr.f32.mxu0 0.0
      %4172 = vmatmul.mubr.f32.gmra.mrb[0].mxu0 %v4030
      %v4173 = vpop.f32.mrb[0].mxu0
      %v4174 = vadd.f32 %v3982, %v4173
      %v4175 = vpop.f32.mrb[0].mxu0
      %4176 = vdwg.mxu0
      %4177 = vst.msk [vmem:[#allocation3] sm:$0xff] %vm1484, %v4099
      %4178 = vst.msk [vmem:[#allocation3 + $0x8] sm:$0xff] %vm1484, %v4104
      %4179 = vst.msk [vmem:[#allocation3 + $0x10] sm:$0xff] %vm1484, %v4109
      %4180 = vst.msk [vmem:[#allocation3 + $0x18] sm:$0xff] %vm1484, %v4114
      %4181 = vst.msk [vmem:[#allocation3 + $0x20] sm:$0xff] %vm1484, %v4119
      %4182 = vst.msk [vmem:[#allocation3 + $0x28] sm:$0xff] %vm1484, %v4124
      %4183 = vst.msk [vmem:[#allocation3 + $0x30] sm:$0xff] %vm1484, %v4129
      %4184 = vst.msk [vmem:[#allocation3 + $0x38] sm:$0xff] %vm1484, %v4134
      %4185 = vst.msk [vmem:[#allocation3 + $0x40] sm:$0xff] %vm1484, %v4139
      %4186 = vst.msk [vmem:[#allocation3 + $0x48] sm:$0xff] %vm1484, %v4144
      %4187 = vst.msk [vmem:[#allocation3 + $0x50] sm:$0xff] %vm1484, %v4149
      %4188 = vst.msk [vmem:[#allocation3 + $0x58] sm:$0xff] %vm1484, %v4154
      %4189 = vst.msk [vmem:[#allocation3 + $0x60] sm:$0xff] %vm1484, %v4159
      %4190 = vst.msk [vmem:[#allocation3 + $0x68] sm:$0xff] %vm1484, %v4164
      %4191 = vst.msk [vmem:[#allocation3 + $0x70] sm:$0xff] %vm1484, %v4169
      %4192 = vst.msk [vmem:[#allocation3 + $0x78] sm:$0xff] %vm1484, %v4174
      %v4193 = vld [vmem:[%s6 + $0x20] sm:$0xff]
      %v4194 = vld [vmem:[%s6 + $0x28] sm:$0xff]
      %v4196 = vsel %vm1484, %v4099, 0
      %v4199 = vsel %vm1484, %v4104, 0
      %v4202 = vsel %vm1484, %v4109, 0
      %v4205 = vsel %vm1484, %v4114, 0
      %v4208 = vsel %vm1484, %v4119, 0
      %v4211 = vsel %vm1484, %v4124, 0
      %v4214 = vsel %vm1484, %v4129, 0
      %v4217 = vsel %vm1484, %v4134, 0
      %v4220 = vsel %vm1484, %v4139, 0
      %v4223 = vsel %vm1484, %v4144, 0
      %v4226 = vsel %vm1484, %v4149, 0
      %v4229 = vsel %vm1484, %v4154, 0
      %v4232 = vsel %vm1484, %v4159, 0
      %v4235 = vsel %vm1484, %v4164, 0
      %v4238 = vsel %vm1484, %v4169, 0
      %v4241 = vsel %vm1484, %v4174, 0
      %4243 = vmatprep.subr.mxu0 0.0
      %4244 = vmatpush1.msra.mxu0 %v4193
      %4245 = vmatprep.subr.mxu0 0.0
      %4246 = vmatpush1.msra.mxu0 %v4194
      %4247 = vmatprep.subr.mxu0 0.0
      %4248 = vmatpush1.msra.mxu0 0.0
      %4249 = vmatprep.subr.mxu0 0.0
      %4250 = vmatpush1.msra.mxu0 0.0
      %4251 = vmatprep.subr.mxu0 0.0
      %4252 = vmatpush1.msra.mxu0 0.0
      %4253 = vmatprep.subr.mxu0 0.0
      %4254 = vmatpush1.msra.mxu0 0.0
      %4255 = vmatprep.subr.mxu0 0.0
      %4256 = vmatpush1.msra.mxu0 0.0
      %4257 = vmatprep.subr.mxu0 0.0
      %4258 = vmatpush1.msra.mxu0 0.0
      %4259 = vmatprep.subr.mxu0 0.0
      %4260 = vmatpush1.msra.mxu0 0.0
      %4261 = vmatprep.subr.mxu0 0.0
      %4262 = vmatpush1.msra.mxu0 0.0
      %4263 = vmatprep.subr.mxu0 0.0
      %4264 = vmatpush1.msra.mxu0 0.0
      %4265 = vmatprep.subr.mxu0 0.0
      %4266 = vmatpush1.msra.mxu0 0.0
      %4267 = vmatprep.subr.mxu0 0.0
      %4268 = vmatpush1.msra.mxu0 0.0
      %4269 = vmatprep.subr.mxu0 0.0
      %4270 = vmatpush1.msra.mxu0 0.0
      %4271 = vmatprep.subr.mxu0 0.0
      %4272 = vmatpush1.msra.mxu0 0.0
      %4273 = vmatprep.subr.mxu0 0.0
      %4274 = vmatpush1.msra.mxu0 0.0
      %4275 = vmatprep.subr.mxu0 0.0
      %4276 = vmatpush1.msra.mxu0 0.0
      %4277 = vmatprep.subr.mxu0 0.0
      %4278 = vmatpush1.msra.mxu0 0.0
      %4279 = vmatprep.subr.mxu0 0.0
      %4280 = vmatpush1.msra.mxu0 0.0
      %4281 = vmatprep.subr.mxu0 0.0
      %4282 = vmatpush1.msra.mxu0 0.0
      %4283 = vmatprep.subr.mxu0 0.0
      %4284 = vmatpush1.msra.mxu0 0.0
      %4285 = vmatprep.subr.mxu0 0.0
      %4286 = vmatpush1.msra.mxu0 0.0
      %4287 = vmatprep.subr.mxu0 0.0
      %4288 = vmatpush1.msra.mxu0 0.0
      %4289 = vmatprep.subr.mxu0 0.0
      %4290 = vmatpush1.msra.mxu0 0.0
      %4291 = vmatprep.subr.mxu0 0.0
      %4292 = vmatpush1.msra.mxu0 0.0
      %4293 = vmatprep.subr.mxu0 0.0
      %4294 = vmatpush1.msra.mxu0 0.0
      %4295 = vmatprep.subr.mxu0 0.0
      %4296 = vmatpush1.msra.mxu0 0.0
      %4297 = vmatprep.subr.mxu0 0.0
      %4298 = vmatpush1.msra.mxu0 0.0
      %4299 = vmatprep.subr.mxu0 0.0
      %4300 = vmatpush1.msra.mxu0 0.0
      %4301 = vmatprep.subr.mxu0 0.0
      %4302 = vmatpush1.msra.mxu0 0.0
      %4303 = vmatprep.subr.mxu0 0.0
      %4304 = vmatpush1.msra.mxu0 0.0
      %4305 = vmatprep.subr.mxu0 0.0
      %4306 = vmatpush1.msra.mxu0 0.0
      %4307 = vmatprep.mubr.f32.mxu0 0.0
      %4308 = vmatmul.mubr.f32.gmra.mrb[0].mxu0 %v4196
      %v4309 = vpop.f32.mrb[0].mxu0
      %v4310 = vadd.f32 0.0, %v4309
      %v4311 = vpop.f32.mrb[0].mxu0
      %4312 = vmatprep.mubr.f32.mxu0 0.0
      %4313 = vmatmul.mubr.f32.gmra.mrb[0].mxu0 %v4199
      %v4314 = vpop.f32.mrb[0].mxu0
      %v4315 = vadd.f32 0.0, %v4314
      %v4316 = vpop.f32.mrb[0].mxu0
      %4317 = vmatprep.mubr.f32.mxu0 0.0
      %4318 = vmatmul.mubr.f32.gmra.mrb[0].mxu0 %v4202
      %v4319 = vpop.f32.mrb[0].mxu0
      %v4320 = vadd.f32 0.0, %v4319
      %v4321 = vpop.f32.mrb[0].mxu0
      %4322 = vmatprep.mubr.f32.mxu0 0.0
      %4323 = vmatmul.mubr.f32.gmra.mrb[0].mxu0 %v4205
      %v4324 = vpop.f32.mrb[0].mxu0
      %v4325 = vadd.f32 0.0, %v4324
      %v4326 = vpop.f32.mrb[0].mxu0
      %4327 = vmatprep.mubr.f32.mxu0 0.0
      %4328 = vmatmul.mubr.f32.gmra.mrb[0].mxu0 %v4208
      %v4329 = vpop.f32.mrb[0].mxu0
      %v4330 = vadd.f32 0.0, %v4329
      %v4331 = vpop.f32.mrb[0].mxu0
      %4332 = vmatprep.mubr.f32.mxu0 0.0
      %4333 = vmatmul.mubr.f32.gmra.mrb[0].mxu0 %v4211
      %v4334 = vpop.f32.mrb[0].mxu0
      %v4335 = vadd.f32 0.0, %v4334
      %v4336 = vpop.f32.mrb[0].mxu0
      %4337 = vmatprep.mubr.f32.mxu0 0.0
      %4338 = vmatmul.mubr.f32.gmra.mrb[0].mxu0 %v4214
      %v4339 = vpop.f32.mrb[0].mxu0
      %v4340 = vadd.f32 0.0, %v4339
      %v4341 = vpop.f32.mrb[0].mxu0
      %4342 = vmatprep.mubr.f32.mxu0 0.0
      %4343 = vmatmul.mubr.f32.gmra.mrb[0].mxu0 %v4217
      %v4344 = vpop.f32.mrb[0].mxu0
      %v4345 = vadd.f32 0.0, %v4344
      %v4346 = vpop.f32.mrb[0].mxu0
      %4347 = vmatprep.mubr.f32.mxu0 0.0
      %4348 = vmatmul.mubr.f32.gmra.mrb[0].mxu0 %v4220
      %v4349 = vpop.f32.mrb[0].mxu0
      %v4350 = vadd.f32 0.0, %v4349
      %v4351 = vpop.f32.mrb[0].mxu0
      %4352 = vmatprep.mubr.f32.mxu0 0.0
      %4353 = vmatmul.mubr.f32.gmra.mrb[0].mxu0 %v4223
      %v4354 = vpop.f32.mrb[0].mxu0
      %v4355 = vadd.f32 0.0, %v4354
      %v4356 = vpop.f32.mrb[0].mxu0
      %4357 = vmatprep.mubr.f32.mxu0 0.0
      %4358 = vmatmul.mubr.f32.gmra.mrb[0].mxu0 %v4226
      %v4359 = vpop.f32.mrb[0].mxu0
      %v4360 = vadd.f32 0.0, %v4359
      %v4361 = vpop.f32.mrb[0].mxu0
      %4362 = vmatprep.mubr.f32.mxu0 0.0
      %4363 = vmatmul.mubr.f32.gmra.mrb[0].mxu0 %v4229
      %v4364 = vpop.f32.mrb[0].mxu0
      %v4365 = vadd.f32 0.0, %v4364
      %v4366 = vpop.f32.mrb[0].mxu0
      %4367 = vmatprep.mubr.f32.mxu0 0.0
      %4368 = vmatmul.mubr.f32.gmra.mrb[0].mxu0 %v4232
      %v4369 = vpop.f32.mrb[0].mxu0
      %v4370 = vadd.f32 0.0, %v4369
      %v4371 = vpop.f32.mrb[0].mxu0
      %4372 = vmatprep.mubr.f32.mxu0 0.0
      %4373 = vmatmul.mubr.f32.gmra.mrb[0].mxu0 %v4235
      %v4374 = vpop.f32.mrb[0].mxu0
      %v4375 = vadd.f32 0.0, %v4374
      %v4376 = vpop.f32.mrb[0].mxu0
      %4377 = vmatprep.mubr.f32.mxu0 0.0
      %4378 = vmatmul.mubr.f32.gmra.mrb[0].mxu0 %v4238
      %v4379 = vpop.f32.mrb[0].mxu0
      %v4380 = vadd.f32 0.0, %v4379
      %v4381 = vpop.f32.mrb[0].mxu0
      %4382 = vmatprep.mubr.f32.mxu0 0.0
      %4383 = vmatmul.mubr.f32.gmra.mrb[0].mxu0 %v4241
      %v4384 = vpop.f32.mrb[0].mxu0
      %v4385 = vadd.f32 0.0, %v4384
      %v4386 = vpop.f32.mrb[0].mxu0
      %4387 = vdwg.mxu0
      %v4388 = vadd.f32 %v2975, %v4310
      %v4389 = vadd.f32 %v2980, %v4315
      %v4390 = vadd.f32 %v2985, %v4320
      %v4391 = vadd.f32 %v2990, %v4325
      %v4392 = vadd.f32 %v2995, %v4330
      %v4393 = vadd.f32 %v3000, %v4335
      %v4394 = vadd.f32 %v3005, %v4340
      %v4395 = vadd.f32 %v3010, %v4345
      %v4396 = vadd.f32 %v3015, %v4350
      %v4397 = vadd.f32 %v3020, %v4355
      %v4398 = vadd.f32 %v3025, %v4360
      %v4399 = vadd.f32 %v3030, %v4365
      %v4400 = vadd.f32 %v3035, %v4370
      %v4401 = vadd.f32 %v3040, %v4375
      %v4402 = vadd.f32 %v3045, %v4380
      %v4403 = vadd.f32 %v3050, %v4385
      %4404 = vst.msk [vmem:[#allocation2] sm:$0xff] %vm1484, 0.0
      %4405 = vst.msk [vmem:[#allocation2 + $0x8] sm:$0xff] %vm1484, 0.0
      %4406 = vst.msk [vmem:[#allocation2 + $0x10] sm:$0xff] %vm1484, 0.0
      %vm4407 = vcmask 125952
      %4408 = vst.msk [vmem:[#allocation2 + $0x18] sm:$0xf] %vm4407, 0.0
      %v4409 = vld [vmem:[#allocation3] sm:$0xff]
      %v4410 = vld [vmem:[#allocation3 + $0x8] sm:$0xff]
      %v4411 = vld [vmem:[#allocation3 + $0x10] sm:$0xff]
      %v4412 = vld [vmem:[#allocation3 + $0x18] sm:$0xff]
      %v4413 = vld [vmem:[#allocation3 + $0x20] sm:$0xff]
      %v4414 = vld [vmem:[#allocation3 + $0x28] sm:$0xff]
      %v4415 = vld [vmem:[#allocation3 + $0x30] sm:$0xff]
      %v4416 = vld [vmem:[#allocation3 + $0x38] sm:$0xff]
      %v4417 = vld [vmem:[#allocation3 + $0x40] sm:$0xff]
      %v4418 = vld [vmem:[#allocation3 + $0x48] sm:$0xff]
      %v4419 = vld [vmem:[#allocation3 + $0x50] sm:$0xff]
      %v4420 = vld [vmem:[#allocation3 + $0x58] sm:$0xff]
      %v4421 = vld [vmem:[#allocation3 + $0x60] sm:$0xf]
      %4422 = vst.msk [vmem:[#allocation2 + $0x1c] sm:$0xff] %vm1484, %v4409
      %4423 = vst.msk [vmem:[#allocation2 + $0x24] sm:$0xff] %vm1484, %v4410
      %4424 = vst.msk [vmem:[#allocation2 + $0x2c] sm:$0xff] %vm1484, %v4411
      %4425 = vst.msk [vmem:[#allocation2 + $0x34] sm:$0xff] %vm1484, %v4412
      %4426 = vst.msk [vmem:[#allocation2 + $0x3c] sm:$0xff] %vm1484, %v4413
      %4427 = vst.msk [vmem:[#allocation2 + $0x44] sm:$0xff] %vm1484, %v4414
      %4428 = vst.msk [vmem:[#allocation2 + $0x4c] sm:$0xff] %vm1484, %v4415
      %4429 = vst.msk [vmem:[#allocation2 + $0x54] sm:$0xff] %vm1484, %v4416
      %4430 = vst.msk [vmem:[#allocation2 + $0x5c] sm:$0xff] %vm1484, %v4417
      %4431 = vst.msk [vmem:[#allocation2 + $0x64] sm:$0xff] %vm1484, %v4418
      %4432 = vst.msk [vmem:[#allocation2 + $0x6c] sm:$0xff] %vm1484, %v4419
      %4433 = vst.msk [vmem:[#allocation2 + $0x74] sm:$0xff] %vm1484, %v4420
      %4434 = vst.msk [vmem:[#allocation2 + $0x7c] sm:$0xf] %vm4407, %v4421
      %4435 = vst.msk [vmem:[#allocation2] sm:$0xff] %vm1620, 0.0
      %4436 = vst.msk [vmem:[#allocation2 + $0x8] sm:$0xff] %vm1620, 0.0
      %vm4437 = vcmask 257152
      %4438 = vst.msk [vmem:[#allocation2 + $0x10] sm:$0xf] %vm4437, 0.0
      %v4439 = vld [vmem:[#allocation3] sm:$0xff]
      %v4440 = vld [vmem:[#allocation3 + $0x8] sm:$0xff]
      %v4441 = vld [vmem:[#allocation3 + $0x10] sm:$0xff]
      %v4442 = vld [vmem:[#allocation3 + $0x18] sm:$0xff]
      %v4443 = vld [vmem:[#allocation3 + $0x20] sm:$0xff]
      %v4444 = vld [vmem:[#allocation3 + $0x28] sm:$0xff]
      %v4445 = vld [vmem:[#allocation3 + $0x30] sm:$0xff]
      %v4446 = vld [vmem:[#allocation3 + $0x38] sm:$0xff]
      %v4447 = vld [vmem:[#allocation3 + $0x40] sm:$0xff]
      %v4448 = vld [vmem:[#allocation3 + $0x48] sm:$0xff]
      %v4449 = vld [vmem:[#allocation3 + $0x50] sm:$0xff]
      %v4450 = vld [vmem:[#allocation3 + $0x58] sm:$0xff]
      %v4451 = vld [vmem:[#allocation3 + $0x60] sm:$0xff]
      %v4452 = vld [vmem:[#allocation3 + $0x68] sm:$0xf]
      %4467 = vrot.lane.b32.xlu0 %v4439, 16
      %v4468 = vpop.permute.xlu0 %4467
      %4469 = vrot.lane.b32.xlu0 %v4440, 16
      %v4470 = vpop.permute.xlu0 %4469
      %4471 = vrot.lane.b32.xlu0 %v4441, 16
      %v4472 = vpop.permute.xlu0 %4471
      %4473 = vrot.lane.b32.xlu0 %v4442, 16
      %v4474 = vpop.permute.xlu0 %4473
      %4475 = vrot.lane.b32.xlu0 %v4443, 16
      %v4476 = vpop.permute.xlu0 %4475
      %4477 = vrot.lane.b32.xlu0 %v4444, 16
      %v4478 = vpop.permute.xlu0 %4477
      %4479 = vrot.lane.b32.xlu0 %v4445, 16
      %v4480 = vpop.permute.xlu0 %4479
      %4481 = vrot.lane.b32.xlu0 %v4446, 16
      %v4482 = vpop.permute.xlu0 %4481
      %4483 = vrot.lane.b32.xlu0 %v4447, 16
      %v4484 = vpop.permute.xlu0 %4483
      %4485 = vrot.lane.b32.xlu0 %v4448, 16
      %v4486 = vpop.permute.xlu0 %4485
      %4487 = vrot.lane.b32.xlu0 %v4449, 16
      %v4488 = vpop.permute.xlu0 %4487
      %4489 = vrot.lane.b32.xlu0 %v4450, 16
      %v4490 = vpop.permute.xlu0 %4489
      %4491 = vrot.lane.b32.xlu0 %v4451, 16
      %v4492 = vpop.permute.xlu0 %4491
      %4493 = vrot.lane.b32.xlu0 %v4452, 16
      %v4494 = vpop.permute.xlu0 %4493
      %4509 = vst.msk [vmem:[#allocation2 + $0x14] sm:$0xff] %vm1620, %v4468
      %4510 = vst.msk [vmem:[#allocation2 + $0x1c] sm:$0xff] %vm1620, %v4470
      %4511 = vst.msk [vmem:[#allocation2 + $0x24] sm:$0xff] %vm1620, %v4472
      %4512 = vst.msk [vmem:[#allocation2 + $0x2c] sm:$0xff] %vm1620, %v4474
      %4513 = vst.msk [vmem:[#allocation2 + $0x34] sm:$0xff] %vm1620, %v4476
      %4514 = vst.msk [vmem:[#allocation2 + $0x3c] sm:$0xff] %vm1620, %v4478
      %4515 = vst.msk [vmem:[#allocation2 + $0x44] sm:$0xff] %vm1620, %v4480
      %4516 = vst.msk [vmem:[#allocation2 + $0x4c] sm:$0xff] %vm1620, %v4482
      %4517 = vst.msk [vmem:[#allocation2 + $0x54] sm:$0xff] %vm1620, %v4484
      %4518 = vst.msk [vmem:[#allocation2 + $0x5c] sm:$0xff] %vm1620, %v4486
      %4519 = vst.msk [vmem:[#allocation2 + $0x64] sm:$0xff] %vm1620, %v4488
      %4520 = vst.msk [vmem:[#allocation2 + $0x6c] sm:$0xff] %vm1620, %v4490
      %4521 = vst.msk [vmem:[#allocation2 + $0x74] sm:$0xff] %vm1620, %v4492
      %4522 = vst.msk [vmem:[#allocation2 + $0x7c] sm:$0xf] %vm4437, %v4494
      %4523 = vst.msk [vmem:[#allocation2] sm:$0xff] %vm1720, 0.0
      %vm4524 = vcmask 388352
      %4525 = vst.msk [vmem:[#allocation2 + $0x8] sm:$0xf] %vm4524, 0.0
      %v4526 = vld [vmem:[#allocation3] sm:$0xff]
      %v4527 = vld [vmem:[#allocation3 + $0x8] sm:$0xff]
      %v4528 = vld [vmem:[#allocation3 + $0x10] sm:$0xff]
      %v4529 = vld [vmem:[#allocation3 + $0x18] sm:$0xff]
      %v4530 = vld [vmem:[#allocation3 + $0x20] sm:$0xff]
      %v4531 = vld [vmem:[#allocation3 + $0x28] sm:$0xff]
      %v4532 = vld [vmem:[#allocation3 + $0x30] sm:$0xff]
      %v4533 = vld [vmem:[#allocation3 + $0x38] sm:$0xff]
      %v4534 = vld [vmem:[#allocation3 + $0x40] sm:$0xff]
      %v4535 = vld [vmem:[#allocation3 + $0x48] sm:$0xff]
      %v4536 = vld [vmem:[#allocation3 + $0x50] sm:$0xff]
      %v4537 = vld [vmem:[#allocation3 + $0x58] sm:$0xff]
      %v4538 = vld [vmem:[#allocation3 + $0x60] sm:$0xff]
      %v4539 = vld [vmem:[#allocation3 + $0x68] sm:$0xff]
      %v4540 = vld [vmem:[#allocation3 + $0x70] sm:$0xf]
      %4556 = vrot.lane.b32.xlu0 %v4526, 32
      %v4557 = vpop.permute.xlu0 %4556
      %4558 = vrot.lane.b32.xlu0 %v4527, 32
      %v4559 = vpop.permute.xlu0 %4558
      %4560 = vrot.lane.b32.xlu0 %v4528, 32
      %v4561 = vpop.permute.xlu0 %4560
      %4562 = vrot.lane.b32.xlu0 %v4529, 32
      %v4563 = vpop.permute.xlu0 %4562
      %4564 = vrot.lane.b32.xlu0 %v4530, 32
      %v4565 = vpop.permute.xlu0 %4564
      %4566 = vrot.lane.b32.xlu0 %v4531, 32
      %v4567 = vpop.permute.xlu0 %4566
      %4568 = vrot.lane.b32.xlu0 %v4532, 32
      %v4569 = vpop.permute.xlu0 %4568
      %4570 = vrot.lane.b32.xlu0 %v4533, 32
      %v4571 = vpop.permute.xlu0 %4570
      %4572 = vrot.lane.b32.xlu0 %v4534, 32
      %v4573 = vpop.permute.xlu0 %4572
      %4574 = vrot.lane.b32.xlu0 %v4535, 32
      %v4575 = vpop.permute.xlu0 %4574
      %4576 = vrot.lane.b32.xlu0 %v4536, 32
      %v4577 = vpop.permute.xlu0 %4576
      %4578 = vrot.lane.b32.xlu0 %v4537, 32
      %v4579 = vpop.permute.xlu0 %4578
      %4580 = vrot.lane.b32.xlu0 %v4538, 32
      %v4581 = vpop.permute.xlu0 %4580
      %4582 = vrot.lane.b32.xlu0 %v4539, 32
      %v4583 = vpop.permute.xlu0 %4582
      %4584 = vrot.lane.b32.xlu0 %v4540, 32
      %v4585 = vpop.permute.xlu0 %4584
      %4601 = vst.msk [vmem:[#allocation2 + $0xc] sm:$0xff] %vm1720, %v4557
      %4602 = vst.msk [vmem:[#allocation2 + $0x14] sm:$0xff] %vm1720, %v4559
      %4603 = vst.msk [vmem:[#allocation2 + $0x1c] sm:$0xff] %vm1720, %v4561
      %4604 = vst.msk [vmem:[#allocation2 + $0x24] sm:$0xff] %vm1720, %v4563
      %4605 = vst.msk [vmem:[#allocation2 + $0x2c] sm:$0xff] %vm1720, %v4565
      %4606 = vst.msk [vmem:[#allocation2 + $0x34] sm:$0xff] %vm1720, %v4567
      %4607 = vst.msk [vmem:[#allocation2 + $0x3c] sm:$0xff] %vm1720, %v4569
      %4608 = vst.msk [vmem:[#allocation2 + $0x44] sm:$0xff] %vm1720, %v4571
      %4609 = vst.msk [vmem:[#allocation2 + $0x4c] sm:$0xff] %vm1720, %v4573
      %4610 = vst.msk [vmem:[#allocation2 + $0x54] sm:$0xff] %vm1720, %v4575
      %4611 = vst.msk [vmem:[#allocation2 + $0x5c] sm:$0xff] %vm1720, %v4577
      %4612 = vst.msk [vmem:[#allocation2 + $0x64] sm:$0xff] %vm1720, %v4579
      %4613 = vst.msk [vmem:[#allocation2 + $0x6c] sm:$0xff] %vm1720, %v4581
      %4614 = vst.msk [vmem:[#allocation2 + $0x74] sm:$0xff] %vm1720, %v4583
      %4615 = vst.msk [vmem:[#allocation2 + $0x7c] sm:$0xf] %vm4524, %v4585
      %vm4616 = vcmask 519552
      %4617 = vst.msk [vmem:[#allocation2] sm:$0xf] %vm4616, 0.0
      %v4618 = vld [vmem:[#allocation3] sm:$0xff]
      %v4619 = vld [vmem:[#allocation3 + $0x8] sm:$0xff]
      %v4620 = vld [vmem:[#allocation3 + $0x10] sm:$0xff]
      %v4621 = vld [vmem:[#allocation3 + $0x18] sm:$0xff]
      %v4622 = vld [vmem:[#allocation3 + $0x20] sm:$0xff]
      %v4623 = vld [vmem:[#allocation3 + $0x28] sm:$0xff]
      %v4624 = vld [vmem:[#allocation3 + $0x30] sm:$0xff]
      %v4625 = vld [vmem:[#allocation3 + $0x38] sm:$0xff]
      %v4626 = vld [vmem:[#allocation3 + $0x40] sm:$0xff]
      %v4627 = vld [vmem:[#allocation3 + $0x48] sm:$0xff]
      %v4628 = vld [vmem:[#allocation3 + $0x50] sm:$0xff]
      %v4629 = vld [vmem:[#allocation3 + $0x58] sm:$0xff]
      %v4630 = vld [vmem:[#allocation3 + $0x60] sm:$0xff]
      %v4631 = vld [vmem:[#allocation3 + $0x68] sm:$0xff]
      %v4632 = vld [vmem:[#allocation3 + $0x70] sm:$0xff]
      %v4633 = vld [vmem:[#allocation3 + $0x78] sm:$0xf]
      %4650 = vrot.lane.b32.xlu0 %v4618, 48
      %v4651 = vpop.permute.xlu0 %4650
      %4652 = vrot.lane.b32.xlu0 %v4619, 48
      %v4653 = vpop.permute.xlu0 %4652
      %4654 = vrot.lane.b32.xlu0 %v4620, 48
      %v4655 = vpop.permute.xlu0 %4654
      %4656 = vrot.lane.b32.xlu0 %v4621, 48
      %v4657 = vpop.permute.xlu0 %4656
      %4658 = vrot.lane.b32.xlu0 %v4622, 48
      %v4659 = vpop.permute.xlu0 %4658
      %4660 = vrot.lane.b32.xlu0 %v4623, 48
      %v4661 = vpop.permute.xlu0 %4660
      %4662 = vrot.lane.b32.xlu0 %v4624, 48
      %v4663 = vpop.permute.xlu0 %4662
      %4664 = vrot.lane.b32.xlu0 %v4625, 48
      %v4665 = vpop.permute.xlu0 %4664
      %4666 = vrot.lane.b32.xlu0 %v4626, 48
      %v4667 = vpop.permute.xlu0 %4666
      %4668 = vrot.lane.b32.xlu0 %v4627, 48
      %v4669 = vpop.permute.xlu0 %4668
      %4670 = vrot.lane.b32.xlu0 %v4628, 48
      %v4671 = vpop.permute.xlu0 %4670
      %4672 = vrot.lane.b32.xlu0 %v4629, 48
      %v4673 = vpop.permute.xlu0 %4672
      %4674 = vrot.lane.b32.xlu0 %v4630, 48
      %v4675 = vpop.permute.xlu0 %4674
      %4676 = vrot.lane.b32.xlu0 %v4631, 48
      %v4677 = vpop.permute.xlu0 %4676
      %4678 = vrot.lane.b32.xlu0 %v4632, 48
      %v4679 = vpop.permute.xlu0 %4678
      %4680 = vrot.lane.b32.xlu0 %v4633, 48
      %v4681 = vpop.permute.xlu0 %4680
      %4698 = vst.msk [vmem:[#allocation2 + $0x4] sm:$0xff] %vm1820, %v4651
      %4699 = vst.msk [vmem:[#allocation2 + $0xc] sm:$0xff] %vm1820, %v4653
      %4700 = vst.msk [vmem:[#allocation2 + $0x14] sm:$0xff] %vm1820, %v4655
      %4701 = vst.msk [vmem:[#allocation2 + $0x1c] sm:$0xff] %vm1820, %v4657
      %4702 = vst.msk [vmem:[#allocation2 + $0x24] sm:$0xff] %vm1820, %v4659
      %4703 = vst.msk [vmem:[#allocation2 + $0x2c] sm:$0xff] %vm1820, %v4661
      %4704 = vst.msk [vmem:[#allocation2 + $0x34] sm:$0xff] %vm1820, %v4663
      %4705 = vst.msk [vmem:[#allocation2 + $0x3c] sm:$0xff] %vm1820, %v4665
      %4706 = vst.msk [vmem:[#allocation2 + $0x44] sm:$0xff] %vm1820, %v4667
      %4707 = vst.msk [vmem:[#allocation2 + $0x4c] sm:$0xff] %vm1820, %v4669
      %4708 = vst.msk [vmem:[#allocation2 + $0x54] sm:$0xff] %vm1820, %v4671
      %4709 = vst.msk [vmem:[#allocation2 + $0x5c] sm:$0xff] %vm1820, %v4673
      %4710 = vst.msk [vmem:[#allocation2 + $0x64] sm:$0xff] %vm1820, %v4675
      %4711 = vst.msk [vmem:[#allocation2 + $0x6c] sm:$0xff] %vm1820, %v4677
      %4712 = vst.msk [vmem:[#allocation2 + $0x74] sm:$0xff] %vm1820, %v4679
      %4713 = vst.msk [vmem:[#allocation2 + $0x7c] sm:$0xf] %vm4616, %v4681
      %vm4714 = vcmask 650752
      %4715 = vst.msk [vmem:[#allocation2 + $0x7c] sm:$0xf] %vm4714, 0.0
      %v4716 = vld [vmem:[#allocation3 + $0x4] sm:$0xff]
      %v4717 = vld [vmem:[#allocation3 + $0xc] sm:$0xff]
      %v4718 = vld [vmem:[#allocation3 + $0x14] sm:$0xff]
      %v4719 = vld [vmem:[#allocation3 + $0x1c] sm:$0xff]
      %v4720 = vld [vmem:[#allocation3 + $0x24] sm:$0xff]
      %v4721 = vld [vmem:[#allocation3 + $0x2c] sm:$0xff]
      %v4722 = vld [vmem:[#allocation3 + $0x34] sm:$0xff]
      %v4723 = vld [vmem:[#allocation3 + $0x3c] sm:$0xff]
      %v4724 = vld [vmem:[#allocation3 + $0x44] sm:$0xff]
      %v4725 = vld [vmem:[#allocation3 + $0x4c] sm:$0xff]
      %v4726 = vld [vmem:[#allocation3 + $0x54] sm:$0xff]
      %v4727 = vld [vmem:[#allocation3 + $0x5c] sm:$0xff]
      %v4728 = vld [vmem:[#allocation3 + $0x64] sm:$0xff]
      %v4729 = vld [vmem:[#allocation3 + $0x6c] sm:$0xff]
      %v4730 = vld [vmem:[#allocation3 + $0x74] sm:$0xff]
      %v4731 = vld [vmem:[#allocation3 + $0x7c] sm:$0xf]
      %4748 = vrot.lane.b32.xlu0 %v4716, 64
      %v4749 = vpop.permute.xlu0 %4748
      %4750 = vrot.lane.b32.xlu0 %v4717, 64
      %v4751 = vpop.permute.xlu0 %4750
      %4752 = vrot.lane.b32.xlu0 %v4718, 64
      %v4753 = vpop.permute.xlu0 %4752
      %4754 = vrot.lane.b32.xlu0 %v4719, 64
      %v4755 = vpop.permute.xlu0 %4754
      %4756 = vrot.lane.b32.xlu0 %v4720, 64
      %v4757 = vpop.permute.xlu0 %4756
      %4758 = vrot.lane.b32.xlu0 %v4721, 64
      %v4759 = vpop.permute.xlu0 %4758
      %4760 = vrot.lane.b32.xlu0 %v4722, 64
      %v4761 = vpop.permute.xlu0 %4760
      %4762 = vrot.lane.b32.xlu0 %v4723, 64
      %v4763 = vpop.permute.xlu0 %4762
      %4764 = vrot.lane.b32.xlu0 %v4724, 64
      %v4765 = vpop.permute.xlu0 %4764
      %4766 = vrot.lane.b32.xlu0 %v4725, 64
      %v4767 = vpop.permute.xlu0 %4766
      %4768 = vrot.lane.b32.xlu0 %v4726, 64
      %v4769 = vpop.permute.xlu0 %4768
      %4770 = vrot.lane.b32.xlu0 %v4727, 64
      %v4771 = vpop.permute.xlu0 %4770
      %4772 = vrot.lane.b32.xlu0 %v4728, 64
      %v4773 = vpop.permute.xlu0 %4772
      %4774 = vrot.lane.b32.xlu0 %v4729, 64
      %v4775 = vpop.permute.xlu0 %4774
      %4776 = vrot.lane.b32.xlu0 %v4730, 64
      %v4777 = vpop.permute.xlu0 %4776
      %4778 = vrot.lane.b32.xlu0 %v4731, 64
      %v4779 = vpop.permute.xlu0 %4778
      %4796 = vst.msk [vmem:[#allocation2] sm:$0xff] %vm1920, %v4749
      %4797 = vst.msk [vmem:[#allocation2 + $0x8] sm:$0xff] %vm1920, %v4751
      %4798 = vst.msk [vmem:[#allocation2 + $0x10] sm:$0xff] %vm1920, %v4753
      %4799 = vst.msk [vmem:[#allocation2 + $0x18] sm:$0xff] %vm1920, %v4755
      %4800 = vst.msk [vmem:[#allocation2 + $0x20] sm:$0xff] %vm1920, %v4757
      %4801 = vst.msk [vmem:[#allocation2 + $0x28] sm:$0xff] %vm1920, %v4759
      %4802 = vst.msk [vmem:[#allocation2 + $0x30] sm:$0xff] %vm1920, %v4761
      %4803 = vst.msk [vmem:[#allocation2 + $0x38] sm:$0xff] %vm1920, %v4763
      %4804 = vst.msk [vmem:[#allocation2 + $0x40] sm:$0xff] %vm1920, %v4765
      %4805 = vst.msk [vmem:[#allocation2 + $0x48] sm:$0xff] %vm1920, %v4767
      %4806 = vst.msk [vmem:[#allocation2 + $0x50] sm:$0xff] %vm1920, %v4769
      %4807 = vst.msk [vmem:[#allocation2 + $0x58] sm:$0xff] %vm1920, %v4771
      %4808 = vst.msk [vmem:[#allocation2 + $0x60] sm:$0xff] %vm1920, %v4773
      %4809 = vst.msk [vmem:[#allocation2 + $0x68] sm:$0xff] %vm1920, %v4775
      %4810 = vst.msk [vmem:[#allocation2 + $0x70] sm:$0xff] %vm1920, %v4777
      %4811 = vst.msk [vmem:[#allocation2 + $0x78] sm:$0xf] %vm4714, %v4779
      %4812 = vst.msk [vmem:[#allocation2 + $0x74] sm:$0xff] %vm2020, 0.0
      %vm4813 = vcmask 781952
      %4814 = vst.msk [vmem:[#allocation2 + $0x7c] sm:$0xf] %vm4813, 0.0
      %v4815 = vld [vmem:[#allocation3 + $0xc] sm:$0xff]
      %v4816 = vld [vmem:[#allocation3 + $0x14] sm:$0xff]
      %v4817 = vld [vmem:[#allocation3 + $0x1c] sm:$0xff]
      %v4818 = vld [vmem:[#allocation3 + $0x24] sm:$0xff]
      %v4819 = vld [vmem:[#allocation3 + $0x2c] sm:$0xff]
      %v4820 = vld [vmem:[#allocation3 + $0x34] sm:$0xff]
      %v4821 = vld [vmem:[#allocation3 + $0x3c] sm:$0xff]
      %v4822 = vld [vmem:[#allocation3 + $0x44] sm:$0xff]
      %v4823 = vld [vmem:[#allocation3 + $0x4c] sm:$0xff]
      %v4824 = vld [vmem:[#allocation3 + $0x54] sm:$0xff]
      %v4825 = vld [vmem:[#allocation3 + $0x5c] sm:$0xff]
      %v4826 = vld [vmem:[#allocation3 + $0x64] sm:$0xff]
      %v4827 = vld [vmem:[#allocation3 + $0x6c] sm:$0xff]
      %v4828 = vld [vmem:[#allocation3 + $0x74] sm:$0xff]
      %v4829 = vld [vmem:[#allocation3 + $0x7c] sm:$0xf]
      %4845 = vrot.lane.b32.xlu0 %v4815, 80
      %v4846 = vpop.permute.xlu0 %4845
      %4847 = vrot.lane.b32.xlu0 %v4816, 80
      %v4848 = vpop.permute.xlu0 %4847
      %4849 = vrot.lane.b32.xlu0 %v4817, 80
      %v4850 = vpop.permute.xlu0 %4849
      %4851 = vrot.lane.b32.xlu0 %v4818, 80
      %v4852 = vpop.permute.xlu0 %4851
      %4853 = vrot.lane.b32.xlu0 %v4819, 80
      %v4854 = vpop.permute.xlu0 %4853
      %4855 = vrot.lane.b32.xlu0 %v4820, 80
      %v4856 = vpop.permute.xlu0 %4855
      %4857 = vrot.lane.b32.xlu0 %v4821, 80
      %v4858 = vpop.permute.xlu0 %4857
      %4859 = vrot.lane.b32.xlu0 %v4822, 80
      %v4860 = vpop.permute.xlu0 %4859
      %4861 = vrot.lane.b32.xlu0 %v4823, 80
      %v4862 = vpop.permute.xlu0 %4861
      %4863 = vrot.lane.b32.xlu0 %v4824, 80
      %v4864 = vpop.permute.xlu0 %4863
      %4865 = vrot.lane.b32.xlu0 %v4825, 80
      %v4866 = vpop.permute.xlu0 %4865
      %4867 = vrot.lane.b32.xlu0 %v4826, 80
      %v4868 = vpop.permute.xlu0 %4867
      %4869 = vrot.lane.b32.xlu0 %v4827, 80
      %v4870 = vpop.permute.xlu0 %4869
      %4871 = vrot.lane.b32.xlu0 %v4828, 80
      %v4872 = vpop.permute.xlu0 %4871
      %4873 = vrot.lane.b32.xlu0 %v4829, 80
      %v4874 = vpop.permute.xlu0 %4873
      %4890 = vst.msk [vmem:[#allocation2] sm:$0xff] %vm2020, %v4846
      %4891 = vst.msk [vmem:[#allocation2 + $0x8] sm:$0xff] %vm2020, %v4848
      %4892 = vst.msk [vmem:[#allocation2 + $0x10] sm:$0xff] %vm2020, %v4850
      %4893 = vst.msk [vmem:[#allocation2 + $0x18] sm:$0xff] %vm2020, %v4852
      %4894 = vst.msk [vmem:[#allocation2 + $0x20] sm:$0xff] %vm2020, %v4854
      %4895 = vst.msk [vmem:[#allocation2 + $0x28] sm:$0xff] %vm2020, %v4856
      %4896 = vst.msk [vmem:[#allocation2 + $0x30] sm:$0xff] %vm2020, %v4858
      %4897 = vst.msk [vmem:[#allocation2 + $0x38] sm:$0xff] %vm2020, %v4860
      %4898 = vst.msk [vmem:[#allocation2 + $0x40] sm:$0xff] %vm2020, %v4862
      %4899 = vst.msk [vmem:[#allocation2 + $0x48] sm:$0xff] %vm2020, %v4864
      %4900 = vst.msk [vmem:[#allocation2 + $0x50] sm:$0xff] %vm2020, %v4866
      %4901 = vst.msk [vmem:[#allocation2 + $0x58] sm:$0xff] %vm2020, %v4868
      %4902 = vst.msk [vmem:[#allocation2 + $0x60] sm:$0xff] %vm2020, %v4870
      %4903 = vst.msk [vmem:[#allocation2 + $0x68] sm:$0xff] %vm2020, %v4872
      %4904 = vst.msk [vmem:[#allocation2 + $0x70] sm:$0xf] %vm4813, %v4874
      %4905 = vst.msk [vmem:[#allocation2 + $0x6c] sm:$0xff] %vm2120, 0.0
      %4906 = vst.msk [vmem:[#allocation2 + $0x74] sm:$0xff] %vm2120, 0.0
      %vm4907 = vcmask 913152
      %4908 = vst.msk [vmem:[#allocation2 + $0x7c] sm:$0xf] %vm4907, 0.0
      %v4909 = vld [vmem:[#allocation3 + $0x14] sm:$0xff]
      %v4910 = vld [vmem:[#allocation3 + $0x1c] sm:$0xff]
      %v4911 = vld [vmem:[#allocation3 + $0x24] sm:$0xff]
      %v4912 = vld [vmem:[#allocation3 + $0x2c] sm:$0xff]
      %v4913 = vld [vmem:[#allocation3 + $0x34] sm:$0xff]
      %v4914 = vld [vmem:[#allocation3 + $0x3c] sm:$0xff]
      %v4915 = vld [vmem:[#allocation3 + $0x44] sm:$0xff]
      %v4916 = vld [vmem:[#allocation3 + $0x4c] sm:$0xff]
      %v4917 = vld [vmem:[#allocation3 + $0x54] sm:$0xff]
      %v4918 = vld [vmem:[#allocation3 + $0x5c] sm:$0xff]
      %v4919 = vld [vmem:[#allocation3 + $0x64] sm:$0xff]
      %v4920 = vld [vmem:[#allocation3 + $0x6c] sm:$0xff]
      %v4921 = vld [vmem:[#allocation3 + $0x74] sm:$0xff]
      %v4922 = vld [vmem:[#allocation3 + $0x7c] sm:$0xf]
      %4937 = vrot.lane.b32.xlu0 %v4909, 96
      %v4938 = vpop.permute.xlu0 %4937
      %4939 = vrot.lane.b32.xlu0 %v4910, 96
      %v4940 = vpop.permute.xlu0 %4939
      %4941 = vrot.lane.b32.xlu0 %v4911, 96
      %v4942 = vpop.permute.xlu0 %4941
      %4943 = vrot.lane.b32.xlu0 %v4912, 96
      %v4944 = vpop.permute.xlu0 %4943
      %4945 = vrot.lane.b32.xlu0 %v4913, 96
      %v4946 = vpop.permute.xlu0 %4945
      %4947 = vrot.lane.b32.xlu0 %v4914, 96
      %v4948 = vpop.permute.xlu0 %4947
      %4949 = vrot.lane.b32.xlu0 %v4915, 96
      %v4950 = vpop.permute.xlu0 %4949
      %4951 = vrot.lane.b32.xlu0 %v4916, 96
      %v4952 = vpop.permute.xlu0 %4951
      %4953 = vrot.lane.b32.xlu0 %v4917, 96
      %v4954 = vpop.permute.xlu0 %4953
      %4955 = vrot.lane.b32.xlu0 %v4918, 96
      %v4956 = vpop.permute.xlu0 %4955
      %4957 = vrot.lane.b32.xlu0 %v4919, 96
      %v4958 = vpop.permute.xlu0 %4957
      %4959 = vrot.lane.b32.xlu0 %v4920, 96
      %v4960 = vpop.permute.xlu0 %4959
      %4961 = vrot.lane.b32.xlu0 %v4921, 96
      %v4962 = vpop.permute.xlu0 %4961
      %4963 = vrot.lane.b32.xlu0 %v4922, 96
      %v4964 = vpop.permute.xlu0 %4963
      %4979 = vst.msk [vmem:[#allocation2] sm:$0xff] %vm2120, %v4938
      %4980 = vst.msk [vmem:[#allocation2 + $0x8] sm:$0xff] %vm2120, %v4940
      %4981 = vst.msk [vmem:[#allocation2 + $0x10] sm:$0xff] %vm2120, %v4942
      %4982 = vst.msk [vmem:[#allocation2 + $0x18] sm:$0xff] %vm2120, %v4944
      %4983 = vst.msk [vmem:[#allocation2 + $0x20] sm:$0xff] %vm2120, %v4946
      %4984 = vst.msk [vmem:[#allocation2 + $0x28] sm:$0xff] %vm2120, %v4948
      %4985 = vst.msk [vmem:[#allocation2 + $0x30] sm:$0xff] %vm2120, %v4950
      %4986 = vst.msk [vmem:[#allocation2 + $0x38] sm:$0xff] %vm2120, %v4952
      %4987 = vst.msk [vmem:[#allocation2 + $0x40] sm:$0xff] %vm2120, %v4954
      %4988 = vst.msk [vmem:[#allocation2 + $0x48] sm:$0xff] %vm2120, %v4956
      %4989 = vst.msk [vmem:[#allocation2 + $0x50] sm:$0xff] %vm2120, %v4958
      %4990 = vst.msk [vmem:[#allocation2 + $0x58] sm:$0xff] %vm2120, %v4960
      %4991 = vst.msk [vmem:[#allocation2 + $0x60] sm:$0xff] %vm2120, %v4962
      %4992 = vst.msk [vmem:[#allocation2 + $0x68] sm:$0xf] %vm4907, %v4964
      %4993 = vst.msk [vmem:[#allocation2 + $0x64] sm:$0xff] %vm2220, 0.0
      %4994 = vst.msk [vmem:[#allocation2 + $0x6c] sm:$0xff] %vm2220, 0.0
      %4995 = vst.msk [vmem:[#allocation2 + $0x74] sm:$0xff] %vm2220, 0.0
      %vm4996 = vcmask 1044352
      %4997 = vst.msk [vmem:[#allocation2 + $0x7c] sm:$0xf] %vm4996, 0.0
      %v4998 = vld [vmem:[#allocation3 + $0x1c] sm:$0xff]
      %v4999 = vld [vmem:[#allocation3 + $0x24] sm:$0xff]
      %v5000 = vld [vmem:[#allocation3 + $0x2c] sm:$0xff]
      %v5001 = vld [vmem:[#allocation3 + $0x34] sm:$0xff]
      %v5002 = vld [vmem:[#allocation3 + $0x3c] sm:$0xff]
      %v5003 = vld [vmem:[#allocation3 + $0x44] sm:$0xff]
      %v5004 = vld [vmem:[#allocation3 + $0x4c] sm:$0xff]
      %v5005 = vld [vmem:[#allocation3 + $0x54] sm:$0xff]
      %v5006 = vld [vmem:[#allocation3 + $0x5c] sm:$0xff]
      %v5007 = vld [vmem:[#allocation3 + $0x64] sm:$0xff]
      %v5008 = vld [vmem:[#allocation3 + $0x6c] sm:$0xff]
      %v5009 = vld [vmem:[#allocation3 + $0x74] sm:$0xff]
      %v5010 = vld [vmem:[#allocation3 + $0x7c] sm:$0xf]
      %5024 = vrot.lane.b32.xlu0 %v4998, 112
      %v5025 = vpop.permute.xlu0 %5024
      %5026 = vrot.lane.b32.xlu0 %v4999, 112
      %v5027 = vpop.permute.xlu0 %5026
      %5028 = vrot.lane.b32.xlu0 %v5000, 112
      %v5029 = vpop.permute.xlu0 %5028
      %5030 = vrot.lane.b32.xlu0 %v5001, 112
      %v5031 = vpop.permute.xlu0 %5030
      %5032 = vrot.lane.b32.xlu0 %v5002, 112
      %v5033 = vpop.permute.xlu0 %5032
      %5034 = vrot.lane.b32.xlu0 %v5003, 112
      %v5035 = vpop.permute.xlu0 %5034
      %5036 = vrot.lane.b32.xlu0 %v5004, 112
      %v5037 = vpop.permute.xlu0 %5036
      %5038 = vrot.lane.b32.xlu0 %v5005, 112
      %v5039 = vpop.permute.xlu0 %5038
      %5040 = vrot.lane.b32.xlu0 %v5006, 112
      %v5041 = vpop.permute.xlu0 %5040
      %5042 = vrot.lane.b32.xlu0 %v5007, 112
      %v5043 = vpop.permute.xlu0 %5042
      %5044 = vrot.lane.b32.xlu0 %v5008, 112
      %v5045 = vpop.permute.xlu0 %5044
      %5046 = vrot.lane.b32.xlu0 %v5009, 112
      %v5047 = vpop.permute.xlu0 %5046
      %5048 = vrot.lane.b32.xlu0 %v5010, 112
      %v5049 = vpop.permute.xlu0 %5048
      %5063 = vst.msk [vmem:[#allocation2] sm:$0xff] %vm2220, %v5025
      %5064 = vst.msk [vmem:[#allocation2 + $0x8] sm:$0xff] %vm2220, %v5027
      %5065 = vst.msk [vmem:[#allocation2 + $0x10] sm:$0xff] %vm2220, %v5029
      %5066 = vst.msk [vmem:[#allocation2 + $0x18] sm:$0xff] %vm2220, %v5031
      %5067 = vst.msk [vmem:[#allocation2 + $0x20] sm:$0xff] %vm2220, %v5033
      %5068 = vst.msk [vmem:[#allocation2 + $0x28] sm:$0xff] %vm2220, %v5035
      %5069 = vst.msk [vmem:[#allocation2 + $0x30] sm:$0xff] %vm2220, %v5037
      %5070 = vst.msk [vmem:[#allocation2 + $0x38] sm:$0xff] %vm2220, %v5039
      %5071 = vst.msk [vmem:[#allocation2 + $0x40] sm:$0xff] %vm2220, %v5041
      %5072 = vst.msk [vmem:[#allocation2 + $0x48] sm:$0xff] %vm2220, %v5043
      %5073 = vst.msk [vmem:[#allocation2 + $0x50] sm:$0xff] %vm2220, %v5045
      %5074 = vst.msk [vmem:[#allocation2 + $0x58] sm:$0xff] %vm2220, %v5047
      %5075 = vst.msk [vmem:[#allocation2 + $0x60] sm:$0xf] %vm4996, %v5049
      %s5076 = scalar_lea.vmem %s2, 256
      %v5077 = vld [vmem:[%s5076] sm:$0xff]
      %v5078 = vld [vmem:[%s5076 + $0x8] sm:$0xff]
      %v5079 = vld [vmem:[%s5076 + $0x10] sm:$0xff]
      %v5080 = vld [vmem:[%s5076 + $0x18] sm:$0xff]
      %v5081 = vld [vmem:[%s5076 + $0x20] sm:$0xff]
      %v5082 = vld [vmem:[%s5076 + $0x28] sm:$0xff]
      %v5083 = vld [vmem:[%s5076 + $0x30] sm:$0xff]
      %v5084 = vld [vmem:[%s5076 + $0x38] sm:$0xff]
      %v5085 = vld [vmem:[%s5076 + $0x40] sm:$0xff]
      %v5086 = vld [vmem:[%s5076 + $0x48] sm:$0xff]
      %v5087 = vld [vmem:[%s5076 + $0x50] sm:$0xff]
      %v5088 = vld [vmem:[%s5076 + $0x58] sm:$0xff]
      %v5089 = vld [vmem:[%s5076 + $0x60] sm:$0xff]
      %v5090 = vld [vmem:[%s5076 + $0x68] sm:$0xff]
      %v5091 = vld [vmem:[%s5076 + $0x70] sm:$0xff]
      %v5092 = vld [vmem:[%s5076 + $0x78] sm:$0xff]
      %v5093 = vld [vmem:[#allocation2] sm:$0xff]
      %v5094 = vld [vmem:[#allocation2 + $0x8] sm:$0xff]
      %v5095 = vld [vmem:[#allocation2 + $0x10] sm:$0xff]
      %v5096 = vld [vmem:[#allocation2 + $0x18] sm:$0xff]
      %v5097 = vld [vmem:[#allocation2 + $0x20] sm:$0xff]
      %v5098 = vld [vmem:[#allocation2 + $0x28] sm:$0xff]
      %v5099 = vld [vmem:[#allocation2 + $0x30] sm:$0xff]
      %v5100 = vld [vmem:[#allocation2 + $0x38] sm:$0xff]
      %v5101 = vld [vmem:[#allocation2 + $0x40] sm:$0xff]
      %v5102 = vld [vmem:[#allocation2 + $0x48] sm:$0xff]
      %v5103 = vld [vmem:[#allocation2 + $0x50] sm:$0xff]
      %v5104 = vld [vmem:[#allocation2 + $0x58] sm:$0xff]
      %v5105 = vld [vmem:[#allocation2 + $0x60] sm:$0xff]
      %v5106 = vld [vmem:[#allocation2 + $0x68] sm:$0xff]
      %v5107 = vld [vmem:[#allocation2 + $0x70] sm:$0xff]
      %v5108 = vld [vmem:[#allocation2 + $0x78] sm:$0xff]
      %s5109 = scalar_lea.vmem %s3, 3
      %v5110 = vld [vmem:[%s5109] sm:$0x1]
      %v5112 = vlaneseq
      %v5113 = vshrl.u32 %v5112, 7
      %v5114 = vsub.s32 0, %v5113
      %v5115 = vrot.slane %v5110, %v5114
      %5117 = vmatprep.subr.mxu0 0.0
      %5118 = vmatpush1.msra.mxu0 %v5077
      %5119 = vmatprep.subr.mxu0 0.0
      %5120 = vmatpush1.msra.mxu0 %v5078
      %5121 = vmatprep.subr.mxu0 0.0
      %5122 = vmatpush1.msra.mxu0 %v5079
      %5123 = vmatprep.subr.mxu0 0.0
      %5124 = vmatpush1.msra.mxu0 %v5080
      %5125 = vmatprep.subr.mxu0 0.0
      %5126 = vmatpush1.msra.mxu0 %v5081
      %5127 = vmatprep.subr.mxu0 0.0
      %5128 = vmatpush1.msra.mxu0 %v5082
      %5129 = vmatprep.subr.mxu0 0.0
      %5130 = vmatpush1.msra.mxu0 %v5083
      %5131 = vmatprep.subr.mxu0 0.0
      %5132 = vmatpush1.msra.mxu0 %v5084
      %5133 = vmatprep.subr.mxu0 0.0
      %5134 = vmatpush1.msra.mxu0 %v5085
      %5135 = vmatprep.subr.mxu0 0.0
      %5136 = vmatpush1.msra.mxu0 %v5086
      %5137 = vmatprep.subr.mxu0 0.0
      %5138 = vmatpush1.msra.mxu0 %v5087
      %5139 = vmatprep.subr.mxu0 0.0
      %5140 = vmatpush1.msra.mxu0 %v5088
      %5141 = vmatprep.subr.mxu0 0.0
      %5142 = vmatpush1.msra.mxu0 %v5089
      %5143 = vmatprep.subr.mxu0 0.0
      %5144 = vmatpush1.msra.mxu0 %v5090
      %5145 = vmatprep.subr.mxu0 0.0
      %5146 = vmatpush1.msra.mxu0 %v5091
      %5147 = vmatprep.subr.mxu0 0.0
      %5148 = vmatpush1.msra.mxu0 %v5092
      %5149 = vmatprep.subr.mxu0 0.0
      %5150 = vmatpush1.msra.mxu0 0.0
      %5151 = vmatprep.subr.mxu0 0.0
      %5152 = vmatpush1.msra.mxu0 0.0
      %5153 = vmatprep.subr.mxu0 0.0
      %5154 = vmatpush1.msra.mxu0 0.0
      %5155 = vmatprep.subr.mxu0 0.0
      %5156 = vmatpush1.msra.mxu0 0.0
      %5157 = vmatprep.subr.mxu0 0.0
      %5158 = vmatpush1.msra.mxu0 0.0
      %5159 = vmatprep.subr.mxu0 0.0
      %5160 = vmatpush1.msra.mxu0 0.0
      %5161 = vmatprep.subr.mxu0 0.0
      %5162 = vmatpush1.msra.mxu0 0.0
      %5163 = vmatprep.subr.mxu0 0.0
      %5164 = vmatpush1.msra.mxu0 0.0
      %5165 = vmatprep.subr.mxu0 0.0
      %5166 = vmatpush1.msra.mxu0 0.0
      %5167 = vmatprep.subr.mxu0 0.0
      %5168 = vmatpush1.msra.mxu0 0.0
      %5169 = vmatprep.subr.mxu0 0.0
      %5170 = vmatpush1.msra.mxu0 0.0
      %5171 = vmatprep.subr.mxu0 0.0
      %5172 = vmatpush1.msra.mxu0 0.0
      %5173 = vmatprep.subr.mxu0 0.0
      %5174 = vmatpush1.msra.mxu0 0.0
      %5175 = vmatprep.subr.mxu0 0.0
      %5176 = vmatpush1.msra.mxu0 0.0
      %5177 = vmatprep.subr.mxu0 0.0
      %5178 = vmatpush1.msra.mxu0 0.0
      %5179 = vmatprep.subr.mxu0 0.0
      %5180 = vmatpush1.msra.mxu0 0.0
      %5181 = vmatprep.mubr.f32.mxu0 0.0
      %5182 = vmatmul.mubr.f32.gmra.mrb[0].mxu0 %v5093
      %v5183 = vpop.f32.mrb[0].mxu0
      %v5184 = vadd.f32 %v5115, %v5183
      %v5185 = vpop.f32.mrb[0].mxu0
      %5186 = vmatprep.mubr.f32.mxu0 0.0
      %5187 = vmatmul.mubr.f32.gmra.mrb[0].mxu0 %v5094
      %v5188 = vpop.f32.mrb[0].mxu0
      %v5189 = vadd.f32 %v5115, %v5188
      %v5190 = vpop.f32.mrb[0].mxu0
      %5191 = vmatprep.mubr.f32.mxu0 0.0
      %5192 = vmatmul.mubr.f32.gmra.mrb[0].mxu0 %v5095
      %v5193 = vpop.f32.mrb[0].mxu0
      %v5194 = vadd.f32 %v5115, %v5193
      %v5195 = vpop.f32.mrb[0].mxu0
      %5196 = vmatprep.mubr.f32.mxu0 0.0
      %5197 = vmatmul.mubr.f32.gmra.mrb[0].mxu0 %v5096
      %v5198 = vpop.f32.mrb[0].mxu0
      %v5199 = vadd.f32 %v5115, %v5198
      %v5200 = vpop.f32.mrb[0].mxu0
      %5201 = vmatprep.mubr.f32.mxu0 0.0
      %5202 = vmatmul.mubr.f32.gmra.mrb[0].mxu0 %v5097
      %v5203 = vpop.f32.mrb[0].mxu0
      %v5204 = vadd.f32 %v5115, %v5203
      %v5205 = vpop.f32.mrb[0].mxu0
      %5206 = vmatprep.mubr.f32.mxu0 0.0
      %5207 = vmatmul.mubr.f32.gmra.mrb[0].mxu0 %v5098
      %v5208 = vpop.f32.mrb[0].mxu0
      %v5209 = vadd.f32 %v5115, %v5208
      %v5210 = vpop.f32.mrb[0].mxu0
      %5211 = vmatprep.mubr.f32.mxu0 0.0
      %5212 = vmatmul.mubr.f32.gmra.mrb[0].mxu0 %v5099
      %v5213 = vpop.f32.mrb[0].mxu0
      %v5214 = vadd.f32 %v5115, %v5213
      %v5215 = vpop.f32.mrb[0].mxu0
      %5216 = vmatprep.mubr.f32.mxu0 0.0
      %5217 = vmatmul.mubr.f32.gmra.mrb[0].mxu0 %v5100
      %v5218 = vpop.f32.mrb[0].mxu0
      %v5219 = vadd.f32 %v5115, %v5218
      %v5220 = vpop.f32.mrb[0].mxu0
      %5221 = vmatprep.mubr.f32.mxu0 0.0
      %5222 = vmatmul.mubr.f32.gmra.mrb[0].mxu0 %v5101
      %v5223 = vpop.f32.mrb[0].mxu0
      %v5224 = vadd.f32 %v5115, %v5223
      %v5225 = vpop.f32.mrb[0].mxu0
      %5226 = vmatprep.mubr.f32.mxu0 0.0
      %5227 = vmatmul.mubr.f32.gmra.mrb[0].mxu0 %v5102
      %v5228 = vpop.f32.mrb[0].mxu0
      %v5229 = vadd.f32 %v5115, %v5228
      %v5230 = vpop.f32.mrb[0].mxu0
      %5231 = vmatprep.mubr.f32.mxu0 0.0
      %5232 = vmatmul.mubr.f32.gmra.mrb[0].mxu0 %v5103
      %v5233 = vpop.f32.mrb[0].mxu0
      %v5234 = vadd.f32 %v5115, %v5233
      %v5235 = vpop.f32.mrb[0].mxu0
      %5236 = vmatprep.mubr.f32.mxu0 0.0
      %5237 = vmatmul.mubr.f32.gmra.mrb[0].mxu0 %v5104
      %v5238 = vpop.f32.mrb[0].mxu0
      %v5239 = vadd.f32 %v5115, %v5238
      %v5240 = vpop.f32.mrb[0].mxu0
      %5241 = vmatprep.mubr.f32.mxu0 0.0
      %5242 = vmatmul.mubr.f32.gmra.mrb[0].mxu0 %v5105
      %v5243 = vpop.f32.mrb[0].mxu0
      %v5244 = vadd.f32 %v5115, %v5243
      %v5245 = vpop.f32.mrb[0].mxu0
      %5246 = vmatprep.mubr.f32.mxu0 0.0
      %5247 = vmatmul.mubr.f32.gmra.mrb[0].mxu0 %v5106
      %v5248 = vpop.f32.mrb[0].mxu0
      %v5249 = vadd.f32 %v5115, %v5248
      %v5250 = vpop.f32.mrb[0].mxu0
      %5251 = vmatprep.mubr.f32.mxu0 0.0
      %5252 = vmatmul.mubr.f32.gmra.mrb[0].mxu0 %v5107
      %v5253 = vpop.f32.mrb[0].mxu0
      %v5254 = vadd.f32 %v5115, %v5253
      %v5255 = vpop.f32.mrb[0].mxu0
      %5256 = vmatprep.mubr.f32.mxu0 0.0
      %5257 = vmatmul.mubr.f32.gmra.mrb[0].mxu0 %v5108
      %v5258 = vpop.f32.mrb[0].mxu0
      %v5259 = vadd.f32 %v5115, %v5258
      %v5260 = vpop.f32.mrb[0].mxu0
      %5261 = vdwg.mxu0
      %v5262 = vmax.f32 %v5184, 0.0
      %v5263 = vmax.f32 %v5189, 0.0
      %v5264 = vmax.f32 %v5194, 0.0
      %v5265 = vmax.f32 %v5199, 0.0
      %v5266 = vmax.f32 %v5204, 0.0
      %v5267 = vmax.f32 %v5209, 0.0
      %v5268 = vmax.f32 %v5214, 0.0
      %v5269 = vmax.f32 %v5219, 0.0
      %v5270 = vmax.f32 %v5224, 0.0
      %v5271 = vmax.f32 %v5229, 0.0
      %v5272 = vmax.f32 %v5234, 0.0
      %v5273 = vmax.f32 %v5239, 0.0
      %v5274 = vmax.f32 %v5244, 0.0
      %v5275 = vmax.f32 %v5249, 0.0
      %v5276 = vmax.f32 %v5254, 0.0
      %v5277 = vmax.f32 %v5259, 0.0
      %s5278 = scalar_lea.vmem %s4, 192
      %v5279 = vld [vmem:[%s5278] sm:$0xff]
      %v5280 = vld [vmem:[%s5278 + $0x8] sm:$0xff]
      %v5281 = vld [vmem:[%s5278 + $0x10] sm:$0xff]
      %v5282 = vld [vmem:[%s5278 + $0x18] sm:$0xff]
      %v5283 = vld [vmem:[%s5278 + $0x20] sm:$0xff]
      %v5284 = vld [vmem:[%s5278 + $0x28] sm:$0xff]
      %v5285 = vld [vmem:[%s5278 + $0x30] sm:$0xff]
      %v5286 = vld [vmem:[%s5278 + $0x38] sm:$0xff]
      %s5287 = scalar_lea.vmem %s5, 3
      %v5288 = vld [vmem:[%s5287] sm:$0x1]
      %v5290 = vlaneseq
      %v5291 = vshrl.u32 %v5290, 7
      %v5292 = vsub.s32 0, %v5291
      %v5293 = vrot.slane %v5288, %v5292
      %v5296 = vsel %vm1290, %v5262, 0
      %v5299 = vsel %vm1290, %v5263, 0
      %v5302 = vsel %vm1290, %v5264, 0
      %v5305 = vsel %vm1290, %v5265, 0
      %v5308 = vsel %vm1290, %v5266, 0
      %v5311 = vsel %vm1290, %v5267, 0
      %v5314 = vsel %vm1290, %v5268, 0
      %v5317 = vsel %vm1290, %v5269, 0
      %v5320 = vsel %vm1290, %v5270, 0
      %v5323 = vsel %vm1290, %v5271, 0
      %v5326 = vsel %vm1290, %v5272, 0
      %v5329 = vsel %vm1290, %v5273, 0
      %v5332 = vsel %vm1290, %v5274, 0
      %v5335 = vsel %vm1290, %v5275, 0
      %v5338 = vsel %vm1290, %v5276, 0
      %v5341 = vsel %vm1290, %v5277, 0
      %5343 = vmatprep.subr.mxu0 0.0
      %5344 = vmatpush1.msra.mxu0 %v5279
      %5345 = vmatprep.subr.mxu0 0.0
      %5346 = vmatpush1.msra.mxu0 %v5280
      %5347 = vmatprep.subr.mxu0 0.0
      %5348 = vmatpush1.msra.mxu0 %v5281
      %5349 = vmatprep.subr.mxu0 0.0
      %5350 = vmatpush1.msra.mxu0 %v5282
      %5351 = vmatprep.subr.mxu0 0.0
      %5352 = vmatpush1.msra.mxu0 %v5283
      %5353 = vmatprep.subr.mxu0 0.0
      %5354 = vmatpush1.msra.mxu0 %v5284
      %5355 = vmatprep.subr.mxu0 0.0
      %5356 = vmatpush1.msra.mxu0 %v5285
      %5357 = vmatprep.subr.mxu0 0.0
      %5358 = vmatpush1.msra.mxu0 %v5286
      %5359 = vmatprep.subr.mxu0 0.0
      %5360 = vmatpush1.msra.mxu0 0.0
      %5361 = vmatprep.subr.mxu0 0.0
      %5362 = vmatpush1.msra.mxu0 0.0
      %5363 = vmatprep.subr.mxu0 0.0
      %5364 = vmatpush1.msra.mxu0 0.0
      %5365 = vmatprep.subr.mxu0 0.0
      %5366 = vmatpush1.msra.mxu0 0.0
      %5367 = vmatprep.subr.mxu0 0.0
      %5368 = vmatpush1.msra.mxu0 0.0
      %5369 = vmatprep.subr.mxu0 0.0
      %5370 = vmatpush1.msra.mxu0 0.0
      %5371 = vmatprep.subr.mxu0 0.0
      %5372 = vmatpush1.msra.mxu0 0.0
      %5373 = vmatprep.subr.mxu0 0.0
      %5374 = vmatpush1.msra.mxu0 0.0
      %5375 = vmatprep.subr.mxu0 0.0
      %5376 = vmatpush1.msra.mxu0 0.0
      %5377 = vmatprep.subr.mxu0 0.0
      %5378 = vmatpush1.msra.mxu0 0.0
      %5379 = vmatprep.subr.mxu0 0.0
      %5380 = vmatpush1.msra.mxu0 0.0
      %5381 = vmatprep.subr.mxu0 0.0
      %5382 = vmatpush1.msra.mxu0 0.0
      %5383 = vmatprep.subr.mxu0 0.0
      %5384 = vmatpush1.msra.mxu0 0.0
      %5385 = vmatprep.subr.mxu0 0.0
      %5386 = vmatpush1.msra.mxu0 0.0
      %5387 = vmatprep.subr.mxu0 0.0
      %5388 = vmatpush1.msra.mxu0 0.0
      %5389 = vmatprep.subr.mxu0 0.0
      %5390 = vmatpush1.msra.mxu0 0.0
      %5391 = vmatprep.subr.mxu0 0.0
      %5392 = vmatpush1.msra.mxu0 0.0
      %5393 = vmatprep.subr.mxu0 0.0
      %5394 = vmatpush1.msra.mxu0 0.0
      %5395 = vmatprep.subr.mxu0 0.0
      %5396 = vmatpush1.msra.mxu0 0.0
      %5397 = vmatprep.subr.mxu0 0.0
      %5398 = vmatpush1.msra.mxu0 0.0
      %5399 = vmatprep.subr.mxu0 0.0
      %5400 = vmatpush1.msra.mxu0 0.0
      %5401 = vmatprep.subr.mxu0 0.0
      %5402 = vmatpush1.msra.mxu0 0.0
      %5403 = vmatprep.subr.mxu0 0.0
      %5404 = vmatpush1.msra.mxu0 0.0
      %5405 = vmatprep.subr.mxu0 0.0
      %5406 = vmatpush1.msra.mxu0 0.0
      %5407 = vmatprep.mubr.f32.mxu0 0.0
      %5408 = vmatmul.mubr.f32.gmra.mrb[0].mxu0 %v5296
      %v5409 = vpop.f32.mrb[0].mxu0
      %v5410 = vadd.f32 %v5293, %v5409
      %v5411 = vpop.f32.mrb[0].mxu0
      %5412 = vmatprep.mubr.f32.mxu0 0.0
      %5413 = vmatmul.mubr.f32.gmra.mrb[0].mxu0 %v5299
      %v5414 = vpop.f32.mrb[0].mxu0
      %v5415 = vadd.f32 %v5293, %v5414
      %v5416 = vpop.f32.mrb[0].mxu0
      %5417 = vmatprep.mubr.f32.mxu0 0.0
      %5418 = vmatmul.mubr.f32.gmra.mrb[0].mxu0 %v5302
      %v5419 = vpop.f32.mrb[0].mxu0
      %v5420 = vadd.f32 %v5293, %v5419
      %v5421 = vpop.f32.mrb[0].mxu0
      %5422 = vmatprep.mubr.f32.mxu0 0.0
      %5423 = vmatmul.mubr.f32.gmra.mrb[0].mxu0 %v5305
      %v5424 = vpop.f32.mrb[0].mxu0
      %v5425 = vadd.f32 %v5293, %v5424
      %v5426 = vpop.f32.mrb[0].mxu0
      %5427 = vmatprep.mubr.f32.mxu0 0.0
      %5428 = vmatmul.mubr.f32.gmra.mrb[0].mxu0 %v5308
      %v5429 = vpop.f32.mrb[0].mxu0
      %v5430 = vadd.f32 %v5293, %v5429
      %v5431 = vpop.f32.mrb[0].mxu0
      %5432 = vmatprep.mubr.f32.mxu0 0.0
      %5433 = vmatmul.mubr.f32.gmra.mrb[0].mxu0 %v5311
      %v5434 = vpop.f32.mrb[0].mxu0
      %v5435 = vadd.f32 %v5293, %v5434
      %v5436 = vpop.f32.mrb[0].mxu0
      %5437 = vmatprep.mubr.f32.mxu0 0.0
      %5438 = vmatmul.mubr.f32.gmra.mrb[0].mxu0 %v5314
      %v5439 = vpop.f32.mrb[0].mxu0
      %v5440 = vadd.f32 %v5293, %v5439
      %v5441 = vpop.f32.mrb[0].mxu0
      %5442 = vmatprep.mubr.f32.mxu0 0.0
      %5443 = vmatmul.mubr.f32.gmra.mrb[0].mxu0 %v5317
      %v5444 = vpop.f32.mrb[0].mxu0
      %v5445 = vadd.f32 %v5293, %v5444
      %v5446 = vpop.f32.mrb[0].mxu0
      %5447 = vmatprep.mubr.f32.mxu0 0.0
      %5448 = vmatmul.mubr.f32.gmra.mrb[0].mxu0 %v5320
      %v5449 = vpop.f32.mrb[0].mxu0
      %v5450 = vadd.f32 %v5293, %v5449
      %v5451 = vpop.f32.mrb[0].mxu0
      %5452 = vmatprep.mubr.f32.mxu0 0.0
      %5453 = vmatmul.mubr.f32.gmra.mrb[0].mxu0 %v5323
      %v5454 = vpop.f32.mrb[0].mxu0
      %v5455 = vadd.f32 %v5293, %v5454
      %v5456 = vpop.f32.mrb[0].mxu0
      %5457 = vmatprep.mubr.f32.mxu0 0.0
      %5458 = vmatmul.mubr.f32.gmra.mrb[0].mxu0 %v5326
      %v5459 = vpop.f32.mrb[0].mxu0
      %v5460 = vadd.f32 %v5293, %v5459
      %v5461 = vpop.f32.mrb[0].mxu0
      %5462 = vmatprep.mubr.f32.mxu0 0.0
      %5463 = vmatmul.mubr.f32.gmra.mrb[0].mxu0 %v5329
      %v5464 = vpop.f32.mrb[0].mxu0
      %v5465 = vadd.f32 %v5293, %v5464
      %v5466 = vpop.f32.mrb[0].mxu0
      %5467 = vmatprep.mubr.f32.mxu0 0.0
      %5468 = vmatmul.mubr.f32.gmra.mrb[0].mxu0 %v5332
      %v5469 = vpop.f32.mrb[0].mxu0
      %v5470 = vadd.f32 %v5293, %v5469
      %v5471 = vpop.f32.mrb[0].mxu0
      %5472 = vmatprep.mubr.f32.mxu0 0.0
      %5473 = vmatmul.mubr.f32.gmra.mrb[0].mxu0 %v5335
      %v5474 = vpop.f32.mrb[0].mxu0
      %v5475 = vadd.f32 %v5293, %v5474
      %v5476 = vpop.f32.mrb[0].mxu0
      %5477 = vmatprep.mubr.f32.mxu0 0.0
      %5478 = vmatmul.mubr.f32.gmra.mrb[0].mxu0 %v5338
      %v5479 = vpop.f32.mrb[0].mxu0
      %v5480 = vadd.f32 %v5293, %v5479
      %v5481 = vpop.f32.mrb[0].mxu0
      %5482 = vmatprep.mubr.f32.mxu0 0.0
      %5483 = vmatmul.mubr.f32.gmra.mrb[0].mxu0 %v5341
      %v5484 = vpop.f32.mrb[0].mxu0
      %v5485 = vadd.f32 %v5293, %v5484
      %v5486 = vpop.f32.mrb[0].mxu0
      %5487 = vdwg.mxu0
      %5488 = vst.msk [vmem:[#allocation3] sm:$0xff] %vm1484, %v5410
      %5489 = vst.msk [vmem:[#allocation3 + $0x8] sm:$0xff] %vm1484, %v5415
      %5490 = vst.msk [vmem:[#allocation3 + $0x10] sm:$0xff] %vm1484, %v5420
      %5491 = vst.msk [vmem:[#allocation3 + $0x18] sm:$0xff] %vm1484, %v5425
      %5492 = vst.msk [vmem:[#allocation3 + $0x20] sm:$0xff] %vm1484, %v5430
      %5493 = vst.msk [vmem:[#allocation3 + $0x28] sm:$0xff] %vm1484, %v5435
      %5494 = vst.msk [vmem:[#allocation3 + $0x30] sm:$0xff] %vm1484, %v5440
      %5495 = vst.msk [vmem:[#allocation3 + $0x38] sm:$0xff] %vm1484, %v5445
      %5496 = vst.msk [vmem:[#allocation3 + $0x40] sm:$0xff] %vm1484, %v5450
      %5497 = vst.msk [vmem:[#allocation3 + $0x48] sm:$0xff] %vm1484, %v5455
      %5498 = vst.msk [vmem:[#allocation3 + $0x50] sm:$0xff] %vm1484, %v5460
      %5499 = vst.msk [vmem:[#allocation3 + $0x58] sm:$0xff] %vm1484, %v5465
      %5500 = vst.msk [vmem:[#allocation3 + $0x60] sm:$0xff] %vm1484, %v5470
      %5501 = vst.msk [vmem:[#allocation3 + $0x68] sm:$0xff] %vm1484, %v5475
      %5502 = vst.msk [vmem:[#allocation3 + $0x70] sm:$0xff] %vm1484, %v5480
      %5503 = vst.msk [vmem:[#allocation3 + $0x78] sm:$0xff] %vm1484, %v5485
      %v5504 = vld [vmem:[%s6 + $0x30] sm:$0xff]
      %v5505 = vld [vmem:[%s6 + $0x38] sm:$0xff]
      %v5507 = vsel %vm1484, %v5410, 0
      %v5510 = vsel %vm1484, %v5415, 0
      %v5513 = vsel %vm1484, %v5420, 0
      %v5516 = vsel %vm1484, %v5425, 0
      %v5519 = vsel %vm1484, %v5430, 0
      %v5522 = vsel %vm1484, %v5435, 0
      %v5525 = vsel %vm1484, %v5440, 0
      %v5528 = vsel %vm1484, %v5445, 0
      %v5531 = vsel %vm1484, %v5450, 0
      %v5534 = vsel %vm1484, %v5455, 0
      %v5537 = vsel %vm1484, %v5460, 0
      %v5540 = vsel %vm1484, %v5465, 0
      %v5543 = vsel %vm1484, %v5470, 0
      %v5546 = vsel %vm1484, %v5475, 0
      %v5549 = vsel %vm1484, %v5480, 0
      %v5552 = vsel %vm1484, %v5485, 0
      %5554 = vmatprep.subr.mxu0 0.0
      %5555 = vmatpush1.msra.mxu0 %v5504
      %5556 = vmatprep.subr.mxu0 0.0
      %5557 = vmatpush1.msra.mxu0 %v5505
      %5558 = vmatprep.subr.mxu0 0.0
      %5559 = vmatpush1.msra.mxu0 0.0
      %5560 = vmatprep.subr.mxu0 0.0
      %5561 = vmatpush1.msra.mxu0 0.0
      %5562 = vmatprep.subr.mxu0 0.0
      %5563 = vmatpush1.msra.mxu0 0.0
      %5564 = vmatprep.subr.mxu0 0.0
      %5565 = vmatpush1.msra.mxu0 0.0
      %5566 = vmatprep.subr.mxu0 0.0
      %5567 = vmatpush1.msra.mxu0 0.0
      %5568 = vmatprep.subr.mxu0 0.0
      %5569 = vmatpush1.msra.mxu0 0.0
      %5570 = vmatprep.subr.mxu0 0.0
      %5571 = vmatpush1.msra.mxu0 0.0
      %5572 = vmatprep.subr.mxu0 0.0
      %5573 = vmatpush1.msra.mxu0 0.0
      %5574 = vmatprep.subr.mxu0 0.0
      %5575 = vmatpush1.msra.mxu0 0.0
      %5576 = vmatprep.subr.mxu0 0.0
      %5577 = vmatpush1.msra.mxu0 0.0
      %5578 = vmatprep.subr.mxu0 0.0
      %5579 = vmatpush1.msra.mxu0 0.0
      %5580 = vmatprep.subr.mxu0 0.0
      %5581 = vmatpush1.msra.mxu0 0.0
      %5582 = vmatprep.subr.mxu0 0.0
      %5583 = vmatpush1.msra.mxu0 0.0
      %5584 = vmatprep.subr.mxu0 0.0
      %5585 = vmatpush1.msra.mxu0 0.0
      %5586 = vmatprep.subr.mxu0 0.0
      %5587 = vmatpush1.msra.mxu0 0.0
      %5588 = vmatprep.subr.mxu0 0.0
      %5589 = vmatpush1.msra.mxu0 0.0
      %5590 = vmatprep.subr.mxu0 0.0
      %5591 = vmatpush1.msra.mxu0 0.0
      %5592 = vmatprep.subr.mxu0 0.0
      %5593 = vmatpush1.msra.mxu0 0.0
      %5594 = vmatprep.subr.mxu0 0.0
      %5595 = vmatpush1.msra.mxu0 0.0
      %5596 = vmatprep.subr.mxu0 0.0
      %5597 = vmatpush1.msra.mxu0 0.0
      %5598 = vmatprep.subr.mxu0 0.0
      %5599 = vmatpush1.msra.mxu0 0.0
      %5600 = vmatprep.subr.mxu0 0.0
      %5601 = vmatpush1.msra.mxu0 0.0
      %5602 = vmatprep.subr.mxu0 0.0
      %5603 = vmatpush1.msra.mxu0 0.0
      %5604 = vmatprep.subr.mxu0 0.0
      %5605 = vmatpush1.msra.mxu0 0.0
      %5606 = vmatprep.subr.mxu0 0.0
      %5607 = vmatpush1.msra.mxu0 0.0
      %5608 = vmatprep.subr.mxu0 0.0
      %5609 = vmatpush1.msra.mxu0 0.0
      %5610 = vmatprep.subr.mxu0 0.0
      %5611 = vmatpush1.msra.mxu0 0.0
      %5612 = vmatprep.subr.mxu0 0.0
      %5613 = vmatpush1.msra.mxu0 0.0
      %5614 = vmatprep.subr.mxu0 0.0
      %5615 = vmatpush1.msra.mxu0 0.0
      %5616 = vmatprep.subr.mxu0 0.0
      %5617 = vmatpush1.msra.mxu0 0.0
      %5618 = vmatprep.mubr.f32.mxu0 0.0
      %5619 = vmatmul.mubr.f32.gmra.mrb[0].mxu0 %v5507
      %v5620 = vpop.f32.mrb[0].mxu0
      %v5621 = vadd.f32 0.0, %v5620
      %v5622 = vpop.f32.mrb[0].mxu0
      %5623 = vmatprep.mubr.f32.mxu0 0.0
      %5624 = vmatmul.mubr.f32.gmra.mrb[0].mxu0 %v5510
      %v5625 = vpop.f32.mrb[0].mxu0
      %v5626 = vadd.f32 0.0, %v5625
      %v5627 = vpop.f32.mrb[0].mxu0
      %5628 = vmatprep.mubr.f32.mxu0 0.0
      %5629 = vmatmul.mubr.f32.gmra.mrb[0].mxu0 %v5513
      %v5630 = vpop.f32.mrb[0].mxu0
      %v5631 = vadd.f32 0.0, %v5630
      %v5632 = vpop.f32.mrb[0].mxu0
      %5633 = vmatprep.mubr.f32.mxu0 0.0
      %5634 = vmatmul.mubr.f32.gmra.mrb[0].mxu0 %v5516
      %v5635 = vpop.f32.mrb[0].mxu0
      %v5636 = vadd.f32 0.0, %v5635
      %v5637 = vpop.f32.mrb[0].mxu0
      %5638 = vmatprep.mubr.f32.mxu0 0.0
      %5639 = vmatmul.mubr.f32.gmra.mrb[0].mxu0 %v5519
      %v5640 = vpop.f32.mrb[0].mxu0
      %v5641 = vadd.f32 0.0, %v5640
      %v5642 = vpop.f32.mrb[0].mxu0
      %5643 = vmatprep.mubr.f32.mxu0 0.0
      %5644 = vmatmul.mubr.f32.gmra.mrb[0].mxu0 %v5522
      %v5645 = vpop.f32.mrb[0].mxu0
      %v5646 = vadd.f32 0.0, %v5645
      %v5647 = vpop.f32.mrb[0].mxu0
      %5648 = vmatprep.mubr.f32.mxu0 0.0
      %5649 = vmatmul.mubr.f32.gmra.mrb[0].mxu0 %v5525
      %v5650 = vpop.f32.mrb[0].mxu0
      %v5651 = vadd.f32 0.0, %v5650
      %v5652 = vpop.f32.mrb[0].mxu0
      %5653 = vmatprep.mubr.f32.mxu0 0.0
      %5654 = vmatmul.mubr.f32.gmra.mrb[0].mxu0 %v5528
      %v5655 = vpop.f32.mrb[0].mxu0
      %v5656 = vadd.f32 0.0, %v5655
      %v5657 = vpop.f32.mrb[0].mxu0
      %5658 = vmatprep.mubr.f32.mxu0 0.0
      %5659 = vmatmul.mubr.f32.gmra.mrb[0].mxu0 %v5531
      %v5660 = vpop.f32.mrb[0].mxu0
      %v5661 = vadd.f32 0.0, %v5660
      %v5662 = vpop.f32.mrb[0].mxu0
      %5663 = vmatprep.mubr.f32.mxu0 0.0
      %5664 = vmatmul.mubr.f32.gmra.mrb[0].mxu0 %v5534
      %v5665 = vpop.f32.mrb[0].mxu0
      %v5666 = vadd.f32 0.0, %v5665
      %v5667 = vpop.f32.mrb[0].mxu0
      %5668 = vmatprep.mubr.f32.mxu0 0.0
      %5669 = vmatmul.mubr.f32.gmra.mrb[0].mxu0 %v5537
      %v5670 = vpop.f32.mrb[0].mxu0
      %v5671 = vadd.f32 0.0, %v5670
      %v5672 = vpop.f32.mrb[0].mxu0
      %5673 = vmatprep.mubr.f32.mxu0 0.0
      %5674 = vmatmul.mubr.f32.gmra.mrb[0].mxu0 %v5540
      %v5675 = vpop.f32.mrb[0].mxu0
      %v5676 = vadd.f32 0.0, %v5675
      %v5677 = vpop.f32.mrb[0].mxu0
      %5678 = vmatprep.mubr.f32.mxu0 0.0
      %5679 = vmatmul.mubr.f32.gmra.mrb[0].mxu0 %v5543
      %v5680 = vpop.f32.mrb[0].mxu0
      %v5681 = vadd.f32 0.0, %v5680
      %v5682 = vpop.f32.mrb[0].mxu0
      %5683 = vmatprep.mubr.f32.mxu0 0.0
      %5684 = vmatmul.mubr.f32.gmra.mrb[0].mxu0 %v5546
      %v5685 = vpop.f32.mrb[0].mxu0
      %v5686 = vadd.f32 0.0, %v5685
      %v5687 = vpop.f32.mrb[0].mxu0
      %5688 = vmatprep.mubr.f32.mxu0 0.0
      %5689 = vmatmul.mubr.f32.gmra.mrb[0].mxu0 %v5549
      %v5690 = vpop.f32.mrb[0].mxu0
      %v5691 = vadd.f32 0.0, %v5690
      %v5692 = vpop.f32.mrb[0].mxu0
      %5693 = vmatprep.mubr.f32.mxu0 0.0
      %5694 = vmatmul.mubr.f32.gmra.mrb[0].mxu0 %v5552
      %v5695 = vpop.f32.mrb[0].mxu0
      %v5696 = vadd.f32 0.0, %v5695
      %v5697 = vpop.f32.mrb[0].mxu0
      %5698 = vdwg.mxu0
      %v5699 = vadd.f32 %v4388, %v5621
      %v5700 = vadd.f32 %v4389, %v5626
      %v5701 = vadd.f32 %v4390, %v5631
      %v5702 = vadd.f32 %v4391, %v5636
      %v5703 = vadd.f32 %v4392, %v5641
      %v5704 = vadd.f32 %v4393, %v5646
      %v5705 = vadd.f32 %v4394, %v5651
      %v5706 = vadd.f32 %v4395, %v5656
      %v5707 = vadd.f32 %v4396, %v5661
      %v5708 = vadd.f32 %v4397, %v5666
      %v5709 = vadd.f32 %v4398, %v5671
      %v5710 = vadd.f32 %v4399, %v5676
      %v5711 = vadd.f32 %v4400, %v5681
      %v5712 = vadd.f32 %v4401, %v5686
      %v5713 = vadd.f32 %v4402, %v5691
      %v5714 = vadd.f32 %v4403, %v5696
      %5715 = vst.msk [vmem:[#allocation2] sm:$0xff] %vm1484, 0.0
      %5716 = vst.msk [vmem:[#allocation2 + $0x8] sm:$0xff] %vm1484, 0.0
      %5717 = vst.msk [vmem:[#allocation2 + $0x10] sm:$0xff] %vm1484, 0.0
      %5718 = vst.msk [vmem:[#allocation2 + $0x18] sm:$0xff] %vm1484, 0.0
      %5719 = vst.msk [vmem:[#allocation2 + $0x20] sm:$0xff] %vm1484, 0.0
      %5720 = vst.msk [vmem:[#allocation2 + $0x28] sm:$0xff] %vm1484, 0.0
      %5721 = vst.msk [vmem:[#allocation2 + $0x30] sm:$0xff] %vm1484, 0.0
      %v5722 = vld [vmem:[#allocation3] sm:$0xff]
      %v5723 = vld [vmem:[#allocation3 + $0x8] sm:$0xff]
      %v5724 = vld [vmem:[#allocation3 + $0x10] sm:$0xff]
      %v5725 = vld [vmem:[#allocation3 + $0x18] sm:$0xff]
      %v5726 = vld [vmem:[#allocation3 + $0x20] sm:$0xff]
      %v5727 = vld [vmem:[#allocation3 + $0x28] sm:$0xff]
      %v5728 = vld [vmem:[#allocation3 + $0x30] sm:$0xff]
      %v5729 = vld [vmem:[#allocation3 + $0x38] sm:$0xff]
      %v5730 = vld [vmem:[#allocation3 + $0x40] sm:$0xff]
      %5731 = vst.msk [vmem:[#allocation2 + $0x38] sm:$0xff] %vm1484, %v5722
      %5732 = vst.msk [vmem:[#allocation2 + $0x40] sm:$0xff] %vm1484, %v5723
      %5733 = vst.msk [vmem:[#allocation2 + $0x48] sm:$0xff] %vm1484, %v5724
      %5734 = vst.msk [vmem:[#allocation2 + $0x50] sm:$0xff] %vm1484, %v5725
      %5735 = vst.msk [vmem:[#allocation2 + $0x58] sm:$0xff] %vm1484, %v5726
      %5736 = vst.msk [vmem:[#allocation2 + $0x60] sm:$0xff] %vm1484, %v5727
      %5737 = vst.msk [vmem:[#allocation2 + $0x68] sm:$0xff] %vm1484, %v5728
      %5738 = vst.msk [vmem:[#allocation2 + $0x70] sm:$0xff] %vm1484, %v5729
      %5739 = vst.msk [vmem:[#allocation2 + $0x78] sm:$0xff] %vm1484, %v5730
      %5740 = vst.msk [vmem:[#allocation2] sm:$0xff] %vm1620, 0.0
      %5741 = vst.msk [vmem:[#allocation2 + $0x8] sm:$0xff] %vm1620, 0.0
      %5742 = vst.msk [vmem:[#allocation2 + $0x10] sm:$0xff] %vm1620, 0.0
      %5743 = vst.msk [vmem:[#allocation2 + $0x18] sm:$0xff] %vm1620, 0.0
      %5744 = vst.msk [vmem:[#allocation2 + $0x20] sm:$0xff] %vm1620, 0.0
      %v5745 = vld [vmem:[#allocation3] sm:$0xff]
      %v5746 = vld [vmem:[#allocation3 + $0x8] sm:$0xff]
      %v5747 = vld [vmem:[#allocation3 + $0x10] sm:$0xff]
      %v5748 = vld [vmem:[#allocation3 + $0x18] sm:$0xff]
      %v5749 = vld [vmem:[#allocation3 + $0x20] sm:$0xff]
      %v5750 = vld [vmem:[#allocation3 + $0x28] sm:$0xff]
      %v5751 = vld [vmem:[#allocation3 + $0x30] sm:$0xff]
      %v5752 = vld [vmem:[#allocation3 + $0x38] sm:$0xff]
      %v5753 = vld [vmem:[#allocation3 + $0x40] sm:$0xff]
      %v5754 = vld [vmem:[#allocation3 + $0x48] sm:$0xff]
      %v5755 = vld [vmem:[#allocation3 + $0x50] sm:$0xff]
      %5767 = vrot.lane.b32.xlu0 %v5745, 16
      %v5768 = vpop.permute.xlu0 %5767
      %5769 = vrot.lane.b32.xlu0 %v5746, 16
      %v5770 = vpop.permute.xlu0 %5769
      %5771 = vrot.lane.b32.xlu0 %v5747, 16
      %v5772 = vpop.permute.xlu0 %5771
      %5773 = vrot.lane.b32.xlu0 %v5748, 16
      %v5774 = vpop.permute.xlu0 %5773
      %5775 = vrot.lane.b32.xlu0 %v5749, 16
      %v5776 = vpop.permute.xlu0 %5775
      %5777 = vrot.lane.b32.xlu0 %v5750, 16
      %v5778 = vpop.permute.xlu0 %5777
      %5779 = vrot.lane.b32.xlu0 %v5751, 16
      %v5780 = vpop.permute.xlu0 %5779
      %5781 = vrot.lane.b32.xlu0 %v5752, 16
      %v5782 = vpop.permute.xlu0 %5781
      %5783 = vrot.lane.b32.xlu0 %v5753, 16
      %v5784 = vpop.permute.xlu0 %5783
      %5785 = vrot.lane.b32.xlu0 %v5754, 16
      %v5786 = vpop.permute.xlu0 %5785
      %5787 = vrot.lane.b32.xlu0 %v5755, 16
      %v5788 = vpop.permute.xlu0 %5787
      %5800 = vst.msk [vmem:[#allocation2 + $0x28] sm:$0xff] %vm1620, %v5768
      %5801 = vst.msk [vmem:[#allocation2 + $0x30] sm:$0xff] %vm1620, %v5770
      %5802 = vst.msk [vmem:[#allocation2 + $0x38] sm:$0xff] %vm1620, %v5772
      %5803 = vst.msk [vmem:[#allocation2 + $0x40] sm:$0xff] %vm1620, %v5774
      %5804 = vst.msk [vmem:[#allocation2 + $0x48] sm:$0xff] %vm1620, %v5776
      %5805 = vst.msk [vmem:[#allocation2 + $0x50] sm:$0xff] %vm1620, %v5778
      %5806 = vst.msk [vmem:[#allocation2 + $0x58] sm:$0xff] %vm1620, %v5780
      %5807 = vst.msk [vmem:[#allocation2 + $0x60] sm:$0xff] %vm1620, %v5782
      %5808 = vst.msk [vmem:[#allocation2 + $0x68] sm:$0xff] %vm1620, %v5784
      %5809 = vst.msk [vmem:[#allocation2 + $0x70] sm:$0xff] %vm1620, %v5786
      %5810 = vst.msk [vmem:[#allocation2 + $0x78] sm:$0xff] %vm1620, %v5788
      %5811 = vst.msk [vmem:[#allocation2] sm:$0xff] %vm1720, 0.0
      %5812 = vst.msk [vmem:[#allocation2 + $0x8] sm:$0xff] %vm1720, 0.0
      %5813 = vst.msk [vmem:[#allocation2 + $0x10] sm:$0xff] %vm1720, 0.0
      %v5814 = vld [vmem:[#allocation3] sm:$0xff]
      %v5815 = vld [vmem:[#allocation3 + $0x8] sm:$0xff]
      %v5816 = vld [vmem:[#allocation3 + $0x10] sm:$0xff]
      %v5817 = vld [vmem:[#allocation3 + $0x18] sm:$0xff]
      %v5818 = vld [vmem:[#allocation3 + $0x20] sm:$0xff]
      %v5819 = vld [vmem:[#allocation3 + $0x28] sm:$0xff]
      %v5820 = vld [vmem:[#allocation3 + $0x30] sm:$0xff]
      %v5821 = vld [vmem:[#allocation3 + $0x38] sm:$0xff]
      %v5822 = vld [vmem:[#allocation3 + $0x40] sm:$0xff]
      %v5823 = vld [vmem:[#allocation3 + $0x48] sm:$0xff]
      %v5824 = vld [vmem:[#allocation3 + $0x50] sm:$0xff]
      %v5825 = vld [vmem:[#allocation3 + $0x58] sm:$0xff]
      %v5826 = vld [vmem:[#allocation3 + $0x60] sm:$0xff]
      %5840 = vrot.lane.b32.xlu0 %v5814, 32
      %v5841 = vpop.permute.xlu0 %5840
      %5842 = vrot.lane.b32.xlu0 %v5815, 32
      %v5843 = vpop.permute.xlu0 %5842
      %5844 = vrot.lane.b32.xlu0 %v5816, 32
      %v5845 = vpop.permute.xlu0 %5844
      %5846 = vrot.lane.b32.xlu0 %v5817, 32
      %v5847 = vpop.permute.xlu0 %5846
      %5848 = vrot.lane.b32.xlu0 %v5818, 32
      %v5849 = vpop.permute.xlu0 %5848
      %5850 = vrot.lane.b32.xlu0 %v5819, 32
      %v5851 = vpop.permute.xlu0 %5850
      %5852 = vrot.lane.b32.xlu0 %v5820, 32
      %v5853 = vpop.permute.xlu0 %5852
      %5854 = vrot.lane.b32.xlu0 %v5821, 32
      %v5855 = vpop.permute.xlu0 %5854
      %5856 = vrot.lane.b32.xlu0 %v5822, 32
      %v5857 = vpop.permute.xlu0 %5856
      %5858 = vrot.lane.b32.xlu0 %v5823, 32
      %v5859 = vpop.permute.xlu0 %5858
      %5860 = vrot.lane.b32.xlu0 %v5824, 32
      %v5861 = vpop.permute.xlu0 %5860
      %5862 = vrot.lane.b32.xlu0 %v5825, 32
      %v5863 = vpop.permute.xlu0 %5862
      %5864 = vrot.lane.b32.xlu0 %v5826, 32
      %v5865 = vpop.permute.xlu0 %5864
      %5879 = vst.msk [vmem:[#allocation2 + $0x18] sm:$0xff] %vm1720, %v5841
      %5880 = vst.msk [vmem:[#allocation2 + $0x20] sm:$0xff] %vm1720, %v5843
      %5881 = vst.msk [vmem:[#allocation2 + $0x28] sm:$0xff] %vm1720, %v5845
      %5882 = vst.msk [vmem:[#allocation2 + $0x30] sm:$0xff] %vm1720, %v5847
      %5883 = vst.msk [vmem:[#allocation2 + $0x38] sm:$0xff] %vm1720, %v5849
      %5884 = vst.msk [vmem:[#allocation2 + $0x40] sm:$0xff] %vm1720, %v5851
      %5885 = vst.msk [vmem:[#allocation2 + $0x48] sm:$0xff] %vm1720, %v5853
      %5886 = vst.msk [vmem:[#allocation2 + $0x50] sm:$0xff] %vm1720, %v5855
      %5887 = vst.msk [vmem:[#allocation2 + $0x58] sm:$0xff] %vm1720, %v5857
      %5888 = vst.msk [vmem:[#allocation2 + $0x60] sm:$0xff] %vm1720, %v5859
      %5889 = vst.msk [vmem:[#allocation2 + $0x68] sm:$0xff] %vm1720, %v5861
      %5890 = vst.msk [vmem:[#allocation2 + $0x70] sm:$0xff] %vm1720, %v5863
      %5891 = vst.msk [vmem:[#allocation2 + $0x78] sm:$0xff] %vm1720, %v5865
      %5892 = vst.msk [vmem:[#allocation2] sm:$0xff] %vm1820, 0.0
      %v5893 = vld [vmem:[#allocation3] sm:$0xff]
      %v5894 = vld [vmem:[#allocation3 + $0x8] sm:$0xff]
      %v5895 = vld [vmem:[#allocation3 + $0x10] sm:$0xff]
      %v5896 = vld [vmem:[#allocation3 + $0x18] sm:$0xff]
      %v5897 = vld [vmem:[#allocation3 + $0x20] sm:$0xff]
      %v5898 = vld [vmem:[#allocation3 + $0x28] sm:$0xff]
      %v5899 = vld [vmem:[#allocation3 + $0x30] sm:$0xff]
      %v5900 = vld [vmem:[#allocation3 + $0x38] sm:$0xff]
      %v5901 = vld [vmem:[#allocation3 + $0x40] sm:$0xff]
      %v5902 = vld [vmem:[#allocation3 + $0x48] sm:$0xff]
      %v5903 = vld [vmem:[#allocation3 + $0x50] sm:$0xff]
      %v5904 = vld [vmem:[#allocation3 + $0x58] sm:$0xff]
      %v5905 = vld [vmem:[#allocation3 + $0x60] sm:$0xff]
      %v5906 = vld [vmem:[#allocation3 + $0x68] sm:$0xff]
      %v5907 = vld [vmem:[#allocation3 + $0x70] sm:$0xff]
      %5923 = vrot.lane.b32.xlu0 %v5893, 48
      %v5924 = vpop.permute.xlu0 %5923
      %5925 = vrot.lane.b32.xlu0 %v5894, 48
      %v5926 = vpop.permute.xlu0 %5925
      %5927 = vrot.lane.b32.xlu0 %v5895, 48
      %v5928 = vpop.permute.xlu0 %5927
      %5929 = vrot.lane.b32.xlu0 %v5896, 48
      %v5930 = vpop.permute.xlu0 %5929
      %5931 = vrot.lane.b32.xlu0 %v5897, 48
      %v5932 = vpop.permute.xlu0 %5931
      %5933 = vrot.lane.b32.xlu0 %v5898, 48
      %v5934 = vpop.permute.xlu0 %5933
      %5935 = vrot.lane.b32.xlu0 %v5899, 48
      %v5936 = vpop.permute.xlu0 %5935
      %5937 = vrot.lane.b32.xlu0 %v5900, 48
      %v5938 = vpop.permute.xlu0 %5937
      %5939 = vrot.lane.b32.xlu0 %v5901, 48
      %v5940 = vpop.permute.xlu0 %5939
      %5941 = vrot.lane.b32.xlu0 %v5902, 48
      %v5942 = vpop.permute.xlu0 %5941
      %5943 = vrot.lane.b32.xlu0 %v5903, 48
      %v5944 = vpop.permute.xlu0 %5943
      %5945 = vrot.lane.b32.xlu0 %v5904, 48
      %v5946 = vpop.permute.xlu0 %5945
      %5947 = vrot.lane.b32.xlu0 %v5905, 48
      %v5948 = vpop.permute.xlu0 %5947
      %5949 = vrot.lane.b32.xlu0 %v5906, 48
      %v5950 = vpop.permute.xlu0 %5949
      %5951 = vrot.lane.b32.xlu0 %v5907, 48
      %v5952 = vpop.permute.xlu0 %5951
      %5968 = vst.msk [vmem:[#allocation2 + $0x8] sm:$0xff] %vm1820, %v5924
      %5969 = vst.msk [vmem:[#allocation2 + $0x10] sm:$0xff] %vm1820, %v5926
      %5970 = vst.msk [vmem:[#allocation2 + $0x18] sm:$0xff] %vm1820, %v5928
      %5971 = vst.msk [vmem:[#allocation2 + $0x20] sm:$0xff] %vm1820, %v5930
      %5972 = vst.msk [vmem:[#allocation2 + $0x28] sm:$0xff] %vm1820, %v5932
      %5973 = vst.msk [vmem:[#allocation2 + $0x30] sm:$0xff] %vm1820, %v5934
      %5974 = vst.msk [vmem:[#allocation2 + $0x38] sm:$0xff] %vm1820, %v5936
      %5975 = vst.msk [vmem:[#allocation2 + $0x40] sm:$0xff] %vm1820, %v5938
      %5976 = vst.msk [vmem:[#allocation2 + $0x48] sm:$0xff] %vm1820, %v5940
      %5977 = vst.msk [vmem:[#allocation2 + $0x50] sm:$0xff] %vm1820, %v5942
      %5978 = vst.msk [vmem:[#allocation2 + $0x58] sm:$0xff] %vm1820, %v5944
      %5979 = vst.msk [vmem:[#allocation2 + $0x60] sm:$0xff] %vm1820, %v5946
      %5980 = vst.msk [vmem:[#allocation2 + $0x68] sm:$0xff] %vm1820, %v5948
      %5981 = vst.msk [vmem:[#allocation2 + $0x70] sm:$0xff] %vm1820, %v5950
      %5982 = vst.msk [vmem:[#allocation2 + $0x78] sm:$0xff] %vm1820, %v5952
      %5983 = vst.msk [vmem:[#allocation2 + $0x78] sm:$0xff] %vm1920, 0.0
      %v5984 = vld [vmem:[#allocation3 + $0x8] sm:$0xff]
      %v5985 = vld [vmem:[#allocation3 + $0x10] sm:$0xff]
      %v5986 = vld [vmem:[#allocation3 + $0x18] sm:$0xff]
      %v5987 = vld [vmem:[#allocation3 + $0x20] sm:$0xff]
      %v5988 = vld [vmem:[#allocation3 + $0x28] sm:$0xff]
      %v5989 = vld [vmem:[#allocation3 + $0x30] sm:$0xff]
      %v5990 = vld [vmem:[#allocation3 + $0x38] sm:$0xff]
      %v5991 = vld [vmem:[#allocation3 + $0x40] sm:$0xff]
      %v5992 = vld [vmem:[#allocation3 + $0x48] sm:$0xff]
      %v5993 = vld [vmem:[#allocation3 + $0x50] sm:$0xff]
      %v5994 = vld [vmem:[#allocation3 + $0x58] sm:$0xff]
      %v5995 = vld [vmem:[#allocation3 + $0x60] sm:$0xff]
      %v5996 = vld [vmem:[#allocation3 + $0x68] sm:$0xff]
      %v5997 = vld [vmem:[#allocation3 + $0x70] sm:$0xff]
      %v5998 = vld [vmem:[#allocation3 + $0x78] sm:$0xff]
      %6014 = vrot.lane.b32.xlu0 %v5984, 64
      %v6015 = vpop.permute.xlu0 %6014
      %6016 = vrot.lane.b32.xlu0 %v5985, 64
      %v6017 = vpop.permute.xlu0 %6016
      %6018 = vrot.lane.b32.xlu0 %v5986, 64
      %v6019 = vpop.permute.xlu0 %6018
      %6020 = vrot.lane.b32.xlu0 %v5987, 64
      %v6021 = vpop.permute.xlu0 %6020
      %6022 = vrot.lane.b32.xlu0 %v5988, 64
      %v6023 = vpop.permute.xlu0 %6022
      %6024 = vrot.lane.b32.xlu0 %v5989, 64
      %v6025 = vpop.permute.xlu0 %6024
      %6026 = vrot.lane.b32.xlu0 %v5990, 64
      %v6027 = vpop.permute.xlu0 %6026
      %6028 = vrot.lane.b32.xlu0 %v5991, 64
      %v6029 = vpop.permute.xlu0 %6028
      %6030 = vrot.lane.b32.xlu0 %v5992, 64
      %v6031 = vpop.permute.xlu0 %6030
      %6032 = vrot.lane.b32.xlu0 %v5993, 64
      %v6033 = vpop.permute.xlu0 %6032
      %6034 = vrot.lane.b32.xlu0 %v5994, 64
      %v6035 = vpop.permute.xlu0 %6034
      %6036 = vrot.lane.b32.xlu0 %v5995, 64
      %v6037 = vpop.permute.xlu0 %6036
      %6038 = vrot.lane.b32.xlu0 %v5996, 64
      %v6039 = vpop.permute.xlu0 %6038
      %6040 = vrot.lane.b32.xlu0 %v5997, 64
      %v6041 = vpop.permute.xlu0 %6040
      %6042 = vrot.lane.b32.xlu0 %v5998, 64
      %v6043 = vpop.permute.xlu0 %6042
      %6059 = vst.msk [vmem:[#allocation2] sm:$0xff] %vm1920, %v6015
      %6060 = vst.msk [vmem:[#allocation2 + $0x8] sm:$0xff] %vm1920, %v6017
      %6061 = vst.msk [vmem:[#allocation2 + $0x10] sm:$0xff] %vm1920, %v6019
      %6062 = vst.msk [vmem:[#allocation2 + $0x18] sm:$0xff] %vm1920, %v6021
      %6063 = vst.msk [vmem:[#allocation2 + $0x20] sm:$0xff] %vm1920, %v6023
      %6064 = vst.msk [vmem:[#allocation2 + $0x28] sm:$0xff] %vm1920, %v6025
      %6065 = vst.msk [vmem:[#allocation2 + $0x30] sm:$0xff] %vm1920, %v6027
      %6066 = vst.msk [vmem:[#allocation2 + $0x38] sm:$0xff] %vm1920, %v6029
      %6067 = vst.msk [vmem:[#allocation2 + $0x40] sm:$0xff] %vm1920, %v6031
      %6068 = vst.msk [vmem:[#allocation2 + $0x48] sm:$0xff] %vm1920, %v6033
      %6069 = vst.msk [vmem:[#allocation2 + $0x50] sm:$0xff] %vm1920, %v6035
      %6070 = vst.msk [vmem:[#allocation2 + $0x58] sm:$0xff] %vm1920, %v6037
      %6071 = vst.msk [vmem:[#allocation2 + $0x60] sm:$0xff] %vm1920, %v6039
      %6072 = vst.msk [vmem:[#allocation2 + $0x68] sm:$0xff] %vm1920, %v6041
      %6073 = vst.msk [vmem:[#allocation2 + $0x70] sm:$0xff] %vm1920, %v6043
      %6074 = vst.msk [vmem:[#allocation2 + $0x68] sm:$0xff] %vm2020, 0.0
      %6075 = vst.msk [vmem:[#allocation2 + $0x70] sm:$0xff] %vm2020, 0.0
      %6076 = vst.msk [vmem:[#allocation2 + $0x78] sm:$0xff] %vm2020, 0.0
      %v6077 = vld [vmem:[#allocation3 + $0x18] sm:$0xff]
      %v6078 = vld [vmem:[#allocation3 + $0x20] sm:$0xff]
      %v6079 = vld [vmem:[#allocation3 + $0x28] sm:$0xff]
      %v6080 = vld [vmem:[#allocation3 + $0x30] sm:$0xff]
      %v6081 = vld [vmem:[#allocation3 + $0x38] sm:$0xff]
      %v6082 = vld [vmem:[#allocation3 + $0x40] sm:$0xff]
      %v6083 = vld [vmem:[#allocation3 + $0x48] sm:$0xff]
      %v6084 = vld [vmem:[#allocation3 + $0x50] sm:$0xff]
      %v6085 = vld [vmem:[#allocation3 + $0x58] sm:$0xff]
      %v6086 = vld [vmem:[#allocation3 + $0x60] sm:$0xff]
      %v6087 = vld [vmem:[#allocation3 + $0x68] sm:$0xff]
      %v6088 = vld [vmem:[#allocation3 + $0x70] sm:$0xff]
      %v6089 = vld [vmem:[#allocation3 + $0x78] sm:$0xff]
      %6103 = vrot.lane.b32.xlu0 %v6077, 80
      %v6104 = vpop.permute.xlu0 %6103
      %6105 = vrot.lane.b32.xlu0 %v6078, 80
      %v6106 = vpop.permute.xlu0 %6105
      %6107 = vrot.lane.b32.xlu0 %v6079, 80
      %v6108 = vpop.permute.xlu0 %6107
      %6109 = vrot.lane.b32.xlu0 %v6080, 80
      %v6110 = vpop.permute.xlu0 %6109
      %6111 = vrot.lane.b32.xlu0 %v6081, 80
      %v6112 = vpop.permute.xlu0 %6111
      %6113 = vrot.lane.b32.xlu0 %v6082, 80
      %v6114 = vpop.permute.xlu0 %6113
      %6115 = vrot.lane.b32.xlu0 %v6083, 80
      %v6116 = vpop.permute.xlu0 %6115
      %6117 = vrot.lane.b32.xlu0 %v6084, 80
      %v6118 = vpop.permute.xlu0 %6117
      %6119 = vrot.lane.b32.xlu0 %v6085, 80
      %v6120 = vpop.permute.xlu0 %6119
      %6121 = vrot.lane.b32.xlu0 %v6086, 80
      %v6122 = vpop.permute.xlu0 %6121
      %6123 = vrot.lane.b32.xlu0 %v6087, 80
      %v6124 = vpop.permute.xlu0 %6123
      %6125 = vrot.lane.b32.xlu0 %v6088, 80
      %v6126 = vpop.permute.xlu0 %6125
      %6127 = vrot.lane.b32.xlu0 %v6089, 80
      %v6128 = vpop.permute.xlu0 %6127
      %6142 = vst.msk [vmem:[#allocation2] sm:$0xff] %vm2020, %v6104
      %6143 = vst.msk [vmem:[#allocation2 + $0x8] sm:$0xff] %vm2020, %v6106
      %6144 = vst.msk [vmem:[#allocation2 + $0x10] sm:$0xff] %vm2020, %v6108
      %6145 = vst.msk [vmem:[#allocation2 + $0x18] sm:$0xff] %vm2020, %v6110
      %6146 = vst.msk [vmem:[#allocation2 + $0x20] sm:$0xff] %vm2020, %v6112
      %6147 = vst.msk [vmem:[#allocation2 + $0x28] sm:$0xff] %vm2020, %v6114
      %6148 = vst.msk [vmem:[#allocation2 + $0x30] sm:$0xff] %vm2020, %v6116
      %6149 = vst.msk [vmem:[#allocation2 + $0x38] sm:$0xff] %vm2020, %v6118
      %6150 = vst.msk [vmem:[#allocation2 + $0x40] sm:$0xff] %vm2020, %v6120
      %6151 = vst.msk [vmem:[#allocation2 + $0x48] sm:$0xff] %vm2020, %v6122
      %6152 = vst.msk [vmem:[#allocation2 + $0x50] sm:$0xff] %vm2020, %v6124
      %6153 = vst.msk [vmem:[#allocation2 + $0x58] sm:$0xff] %vm2020, %v6126
      %6154 = vst.msk [vmem:[#allocation2 + $0x60] sm:$0xff] %vm2020, %v6128
      %6155 = vst.msk [vmem:[#allocation2 + $0x58] sm:$0xff] %vm2120, 0.0
      %6156 = vst.msk [vmem:[#allocation2 + $0x60] sm:$0xff] %vm2120, 0.0
      %6157 = vst.msk [vmem:[#allocation2 + $0x68] sm:$0xff] %vm2120, 0.0
      %6158 = vst.msk [vmem:[#allocation2 + $0x70] sm:$0xff] %vm2120, 0.0
      %6159 = vst.msk [vmem:[#allocation2 + $0x78] sm:$0xff] %vm2120, 0.0
      %v6160 = vld [vmem:[#allocation3 + $0x28] sm:$0xff]
      %v6161 = vld [vmem:[#allocation3 + $0x30] sm:$0xff]
      %v6162 = vld [vmem:[#allocation3 + $0x38] sm:$0xff]
      %v6163 = vld [vmem:[#allocation3 + $0x40] sm:$0xff]
      %v6164 = vld [vmem:[#allocation3 + $0x48] sm:$0xff]
      %v6165 = vld [vmem:[#allocation3 + $0x50] sm:$0xff]
      %v6166 = vld [vmem:[#allocation3 + $0x58] sm:$0xff]
      %v6167 = vld [vmem:[#allocation3 + $0x60] sm:$0xff]
      %v6168 = vld [vmem:[#allocation3 + $0x68] sm:$0xff]
      %v6169 = vld [vmem:[#allocation3 + $0x70] sm:$0xff]
      %v6170 = vld [vmem:[#allocation3 + $0x78] sm:$0xff]
      %6182 = vrot.lane.b32.xlu0 %v6160, 96
      %v6183 = vpop.permute.xlu0 %6182
      %6184 = vrot.lane.b32.xlu0 %v6161, 96
      %v6185 = vpop.permute.xlu0 %6184
      %6186 = vrot.lane.b32.xlu0 %v6162, 96
      %v6187 = vpop.permute.xlu0 %6186
      %6188 = vrot.lane.b32.xlu0 %v6163, 96
      %v6189 = vpop.permute.xlu0 %6188
      %6190 = vrot.lane.b32.xlu0 %v6164, 96
      %v6191 = vpop.permute.xlu0 %6190
      %6192 = vrot.lane.b32.xlu0 %v6165, 96
      %v6193 = vpop.permute.xlu0 %6192
      %6194 = vrot.lane.b32.xlu0 %v6166, 96
      %v6195 = vpop.permute.xlu0 %6194
      %6196 = vrot.lane.b32.xlu0 %v6167, 96
      %v6197 = vpop.permute.xlu0 %6196
      %6198 = vrot.lane.b32.xlu0 %v6168, 96
      %v6199 = vpop.permute.xlu0 %6198
      %6200 = vrot.lane.b32.xlu0 %v6169, 96
      %v6201 = vpop.permute.xlu0 %6200
      %6202 = vrot.lane.b32.xlu0 %v6170, 96
      %v6203 = vpop.permute.xlu0 %6202
      %6215 = vst.msk [vmem:[#allocation2] sm:$0xff] %vm2120, %v6183
      %6216 = vst.msk [vmem:[#allocation2 + $0x8] sm:$0xff] %vm2120, %v6185
      %6217 = vst.msk [vmem:[#allocation2 + $0x10] sm:$0xff] %vm2120, %v6187
      %6218 = vst.msk [vmem:[#allocation2 + $0x18] sm:$0xff] %vm2120, %v6189
      %6219 = vst.msk [vmem:[#allocation2 + $0x20] sm:$0xff] %vm2120, %v6191
      %6220 = vst.msk [vmem:[#allocation2 + $0x28] sm:$0xff] %vm2120, %v6193
      %6221 = vst.msk [vmem:[#allocation2 + $0x30] sm:$0xff] %vm2120, %v6195
      %6222 = vst.msk [vmem:[#allocation2 + $0x38] sm:$0xff] %vm2120, %v6197
      %6223 = vst.msk [vmem:[#allocation2 + $0x40] sm:$0xff] %vm2120, %v6199
      %6224 = vst.msk [vmem:[#allocation2 + $0x48] sm:$0xff] %vm2120, %v6201
      %6225 = vst.msk [vmem:[#allocation2 + $0x50] sm:$0xff] %vm2120, %v6203
      %6226 = vst.msk [vmem:[#allocation2 + $0x48] sm:$0xff] %vm2220, 0.0
      %6227 = vst.msk [vmem:[#allocation2 + $0x50] sm:$0xff] %vm2220, 0.0
      %6228 = vst.msk [vmem:[#allocation2 + $0x58] sm:$0xff] %vm2220, 0.0
      %6229 = vst.msk [vmem:[#allocation2 + $0x60] sm:$0xff] %vm2220, 0.0
      %6230 = vst.msk [vmem:[#allocation2 + $0x68] sm:$0xff] %vm2220, 0.0
      %6231 = vst.msk [vmem:[#allocation2 + $0x70] sm:$0xff] %vm2220, 0.0
      %6232 = vst.msk [vmem:[#allocation2 + $0x78] sm:$0xff] %vm2220, 0.0
      %v6233 = vld [vmem:[#allocation3 + $0x38] sm:$0xff]
      %v6234 = vld [vmem:[#allocation3 + $0x40] sm:$0xff]
      %v6235 = vld [vmem:[#allocation3 + $0x48] sm:$0xff]
      %v6236 = vld [vmem:[#allocation3 + $0x50] sm:$0xff]
      %v6237 = vld [vmem:[#allocation3 + $0x58] sm:$0xff]
      %v6238 = vld [vmem:[#allocation3 + $0x60] sm:$0xff]
      %v6239 = vld [vmem:[#allocation3 + $0x68] sm:$0xff]
      %v6240 = vld [vmem:[#allocation3 + $0x70] sm:$0xff]
      %v6241 = vld [vmem:[#allocation3 + $0x78] sm:$0xff]
      %6251 = vrot.lane.b32.xlu0 %v6233, 112
      %v6252 = vpop.permute.xlu0 %6251
      %6253 = vrot.lane.b32.xlu0 %v6234, 112
      %v6254 = vpop.permute.xlu0 %6253
      %6255 = vrot.lane.b32.xlu0 %v6235, 112
      %v6256 = vpop.permute.xlu0 %6255
      %6257 = vrot.lane.b32.xlu0 %v6236, 112
      %v6258 = vpop.permute.xlu0 %6257
      %6259 = vrot.lane.b32.xlu0 %v6237, 112
      %v6260 = vpop.permute.xlu0 %6259
      %6261 = vrot.lane.b32.xlu0 %v6238, 112
      %v6262 = vpop.permute.xlu0 %6261
      %6263 = vrot.lane.b32.xlu0 %v6239, 112
      %v6264 = vpop.permute.xlu0 %6263
      %6265 = vrot.lane.b32.xlu0 %v6240, 112
      %v6266 = vpop.permute.xlu0 %6265
      %6267 = vrot.lane.b32.xlu0 %v6241, 112
      %v6268 = vpop.permute.xlu0 %6267
      %6278 = vst.msk [vmem:[#allocation2] sm:$0xff] %vm2220, %v6252
      %6279 = vst.msk [vmem:[#allocation2 + $0x8] sm:$0xff] %vm2220, %v6254
      %6280 = vst.msk [vmem:[#allocation2 + $0x10] sm:$0xff] %vm2220, %v6256
      %6281 = vst.msk [vmem:[#allocation2 + $0x18] sm:$0xff] %vm2220, %v6258
      %6282 = vst.msk [vmem:[#allocation2 + $0x20] sm:$0xff] %vm2220, %v6260
      %6283 = vst.msk [vmem:[#allocation2 + $0x28] sm:$0xff] %vm2220, %v6262
      %6284 = vst.msk [vmem:[#allocation2 + $0x30] sm:$0xff] %vm2220, %v6264
      %6285 = vst.msk [vmem:[#allocation2 + $0x38] sm:$0xff] %vm2220, %v6266
      %6286 = vst.msk [vmem:[#allocation2 + $0x40] sm:$0xff] %vm2220, %v6268
      %s6287 = scalar_lea.vmem %s2, 384
      %v6288 = vld [vmem:[%s6287] sm:$0xff]
      %v6289 = vld [vmem:[%s6287 + $0x8] sm:$0xff]
      %v6290 = vld [vmem:[%s6287 + $0x10] sm:$0xff]
      %v6291 = vld [vmem:[%s6287 + $0x18] sm:$0xff]
      %v6292 = vld [vmem:[%s6287 + $0x20] sm:$0xff]
      %v6293 = vld [vmem:[%s6287 + $0x28] sm:$0xff]
      %v6294 = vld [vmem:[%s6287 + $0x30] sm:$0xff]
      %v6295 = vld [vmem:[%s6287 + $0x38] sm:$0xff]
      %v6296 = vld [vmem:[%s6287 + $0x40] sm:$0xff]
      %v6297 = vld [vmem:[%s6287 + $0x48] sm:$0xff]
      %v6298 = vld [vmem:[%s6287 + $0x50] sm:$0xff]
      %v6299 = vld [vmem:[%s6287 + $0x58] sm:$0xff]
      %v6300 = vld [vmem:[%s6287 + $0x60] sm:$0xff]
      %v6301 = vld [vmem:[%s6287 + $0x68] sm:$0xff]
      %v6302 = vld [vmem:[%s6287 + $0x70] sm:$0xff]
      %v6303 = vld [vmem:[%s6287 + $0x78] sm:$0xff]
      %v6304 = vld [vmem:[#allocation2] sm:$0xff]
      %v6305 = vld [vmem:[#allocation2 + $0x8] sm:$0xff]
      %v6306 = vld [vmem:[#allocation2 + $0x10] sm:$0xff]
      %v6307 = vld [vmem:[#allocation2 + $0x18] sm:$0xff]
      %v6308 = vld [vmem:[#allocation2 + $0x20] sm:$0xff]
      %v6309 = vld [vmem:[#allocation2 + $0x28] sm:$0xff]
      %v6310 = vld [vmem:[#allocation2 + $0x30] sm:$0xff]
      %v6311 = vld [vmem:[#allocation2 + $0x38] sm:$0xff]
      %v6312 = vld [vmem:[#allocation2 + $0x40] sm:$0xff]
      %v6313 = vld [vmem:[#allocation2 + $0x48] sm:$0xff]
      %v6314 = vld [vmem:[#allocation2 + $0x50] sm:$0xff]
      %v6315 = vld [vmem:[#allocation2 + $0x58] sm:$0xff]
      %v6316 = vld [vmem:[#allocation2 + $0x60] sm:$0xff]
      %v6317 = vld [vmem:[#allocation2 + $0x68] sm:$0xff]
      %v6318 = vld [vmem:[#allocation2 + $0x70] sm:$0xff]
      %v6319 = vld [vmem:[#allocation2 + $0x78] sm:$0xff]
      %s6320 = scalar_lea.vmem %s3, 4
      %v6321 = vld [vmem:[%s6320] sm:$0x1]
      %v6323 = vlaneseq
      %v6324 = vshrl.u32 %v6323, 7
      %v6325 = vsub.s32 0, %v6324
      %v6326 = vrot.slane %v6321, %v6325
      %6328 = vmatprep.subr.mxu0 0.0
      %6329 = vmatpush1.msra.mxu0 %v6288
      %6330 = vmatprep.subr.mxu0 0.0
      %6331 = vmatpush1.msra.mxu0 %v6289
      %6332 = vmatprep.subr.mxu0 0.0
      %6333 = vmatpush1.msra.mxu0 %v6290
      %6334 = vmatprep.subr.mxu0 0.0
      %6335 = vmatpush1.msra.mxu0 %v6291
      %6336 = vmatprep.subr.mxu0 0.0
      %6337 = vmatpush1.msra.mxu0 %v6292
      %6338 = vmatprep.subr.mxu0 0.0
      %6339 = vmatpush1.msra.mxu0 %v6293
      %6340 = vmatprep.subr.mxu0 0.0
      %6341 = vmatpush1.msra.mxu0 %v6294
      %6342 = vmatprep.subr.mxu0 0.0
      %6343 = vmatpush1.msra.mxu0 %v6295
      %6344 = vmatprep.subr.mxu0 0.0
      %6345 = vmatpush1.msra.mxu0 %v6296
      %6346 = vmatprep.subr.mxu0 0.0
      %6347 = vmatpush1.msra.mxu0 %v6297
      %6348 = vmatprep.subr.mxu0 0.0
      %6349 = vmatpush1.msra.mxu0 %v6298
      %6350 = vmatprep.subr.mxu0 0.0
      %6351 = vmatpush1.msra.mxu0 %v6299
      %6352 = vmatprep.subr.mxu0 0.0
      %6353 = vmatpush1.msra.mxu0 %v6300
      %6354 = vmatprep.subr.mxu0 0.0
      %6355 = vmatpush1.msra.mxu0 %v6301
      %6356 = vmatprep.subr.mxu0 0.0
      %6357 = vmatpush1.msra.mxu0 %v6302
      %6358 = vmatprep.subr.mxu0 0.0
      %6359 = vmatpush1.msra.mxu0 %v6303
      %6360 = vmatprep.subr.mxu0 0.0
      %6361 = vmatpush1.msra.mxu0 0.0
      %6362 = vmatprep.subr.mxu0 0.0
      %6363 = vmatpush1.msra.mxu0 0.0
      %6364 = vmatprep.subr.mxu0 0.0
      %6365 = vmatpush1.msra.mxu0 0.0
      %6366 = vmatprep.subr.mxu0 0.0
      %6367 = vmatpush1.msra.mxu0 0.0
      %6368 = vmatprep.subr.mxu0 0.0
      %6369 = vmatpush1.msra.mxu0 0.0
      %6370 = vmatprep.subr.mxu0 0.0
      %6371 = vmatpush1.msra.mxu0 0.0
      %6372 = vmatprep.subr.mxu0 0.0
      %6373 = vmatpush1.msra.mxu0 0.0
      %6374 = vmatprep.subr.mxu0 0.0
      %6375 = vmatpush1.msra.mxu0 0.0
      %6376 = vmatprep.subr.mxu0 0.0
      %6377 = vmatpush1.msra.mxu0 0.0
      %6378 = vmatprep.subr.mxu0 0.0
      %6379 = vmatpush1.msra.mxu0 0.0
      %6380 = vmatprep.subr.mxu0 0.0
      %6381 = vmatpush1.msra.mxu0 0.0
      %6382 = vmatprep.subr.mxu0 0.0
      %6383 = vmatpush1.msra.mxu0 0.0
      %6384 = vmatprep.subr.mxu0 0.0
      %6385 = vmatpush1.msra.mxu0 0.0
      %6386 = vmatprep.subr.mxu0 0.0
      %6387 = vmatpush1.msra.mxu0 0.0
      %6388 = vmatprep.subr.mxu0 0.0
      %6389 = vmatpush1.msra.mxu0 0.0
      %6390 = vmatprep.subr.mxu0 0.0
      %6391 = vmatpush1.msra.mxu0 0.0
      %6392 = vmatprep.mubr.f32.mxu0 0.0
      %6393 = vmatmul.mubr.f32.gmra.mrb[0].mxu0 %v6304
      %v6394 = vpop.f32.mrb[0].mxu0
      %v6395 = vadd.f32 %v6326, %v6394
      %v6396 = vpop.f32.mrb[0].mxu0
      %6397 = vmatprep.mubr.f32.mxu0 0.0
      %6398 = vmatmul.mubr.f32.gmra.mrb[0].mxu0 %v6305
      %v6399 = vpop.f32.mrb[0].mxu0
      %v6400 = vadd.f32 %v6326, %v6399
      %v6401 = vpop.f32.mrb[0].mxu0
      %6402 = vmatprep.mubr.f32.mxu0 0.0
      %6403 = vmatmul.mubr.f32.gmra.mrb[0].mxu0 %v6306
      %v6404 = vpop.f32.mrb[0].mxu0
      %v6405 = vadd.f32 %v6326, %v6404
      %v6406 = vpop.f32.mrb[0].mxu0
      %6407 = vmatprep.mubr.f32.mxu0 0.0
      %6408 = vmatmul.mubr.f32.gmra.mrb[0].mxu0 %v6307
      %v6409 = vpop.f32.mrb[0].mxu0
      %v6410 = vadd.f32 %v6326, %v6409
      %v6411 = vpop.f32.mrb[0].mxu0
      %6412 = vmatprep.mubr.f32.mxu0 0.0
      %6413 = vmatmul.mubr.f32.gmra.mrb[0].mxu0 %v6308
      %v6414 = vpop.f32.mrb[0].mxu0
      %v6415 = vadd.f32 %v6326, %v6414
      %v6416 = vpop.f32.mrb[0].mxu0
      %6417 = vmatprep.mubr.f32.mxu0 0.0
      %6418 = vmatmul.mubr.f32.gmra.mrb[0].mxu0 %v6309
      %v6419 = vpop.f32.mrb[0].mxu0
      %v6420 = vadd.f32 %v6326, %v6419
      %v6421 = vpop.f32.mrb[0].mxu0
      %6422 = vmatprep.mubr.f32.mxu0 0.0
      %6423 = vmatmul.mubr.f32.gmra.mrb[0].mxu0 %v6310
      %v6424 = vpop.f32.mrb[0].mxu0
      %v6425 = vadd.f32 %v6326, %v6424
      %v6426 = vpop.f32.mrb[0].mxu0
      %6427 = vmatprep.mubr.f32.mxu0 0.0
      %6428 = vmatmul.mubr.f32.gmra.mrb[0].mxu0 %v6311
      %v6429 = vpop.f32.mrb[0].mxu0
      %v6430 = vadd.f32 %v6326, %v6429
      %v6431 = vpop.f32.mrb[0].mxu0
      %6432 = vmatprep.mubr.f32.mxu0 0.0
      %6433 = vmatmul.mubr.f32.gmra.mrb[0].mxu0 %v6312
      %v6434 = vpop.f32.mrb[0].mxu0
      %v6435 = vadd.f32 %v6326, %v6434
      %v6436 = vpop.f32.mrb[0].mxu0
      %6437 = vmatprep.mubr.f32.mxu0 0.0
      %6438 = vmatmul.mubr.f32.gmra.mrb[0].mxu0 %v6313
      %v6439 = vpop.f32.mrb[0].mxu0
      %v6440 = vadd.f32 %v6326, %v6439
      %v6441 = vpop.f32.mrb[0].mxu0
      %6442 = vmatprep.mubr.f32.mxu0 0.0
      %6443 = vmatmul.mubr.f32.gmra.mrb[0].mxu0 %v6314
      %v6444 = vpop.f32.mrb[0].mxu0
      %v6445 = vadd.f32 %v6326, %v6444
      %v6446 = vpop.f32.mrb[0].mxu0
      %6447 = vmatprep.mubr.f32.mxu0 0.0
      %6448 = vmatmul.mubr.f32.gmra.mrb[0].mxu0 %v6315
      %v6449 = vpop.f32.mrb[0].mxu0
      %v6450 = vadd.f32 %v6326, %v6449
      %v6451 = vpop.f32.mrb[0].mxu0
      %6452 = vmatprep.mubr.f32.mxu0 0.0
      %6453 = vmatmul.mubr.f32.gmra.mrb[0].mxu0 %v6316
      %v6454 = vpop.f32.mrb[0].mxu0
      %v6455 = vadd.f32 %v6326, %v6454
      %v6456 = vpop.f32.mrb[0].mxu0
      %6457 = vmatprep.mubr.f32.mxu0 0.0
      %6458 = vmatmul.mubr.f32.gmra.mrb[0].mxu0 %v6317
      %v6459 = vpop.f32.mrb[0].mxu0
      %v6460 = vadd.f32 %v6326, %v6459
      %v6461 = vpop.f32.mrb[0].mxu0
      %6462 = vmatprep.mubr.f32.mxu0 0.0
      %6463 = vmatmul.mubr.f32.gmra.mrb[0].mxu0 %v6318
      %v6464 = vpop.f32.mrb[0].mxu0
      %v6465 = vadd.f32 %v6326, %v6464
      %v6466 = vpop.f32.mrb[0].mxu0
      %6467 = vmatprep.mubr.f32.mxu0 0.0
      %6468 = vmatmul.mubr.f32.gmra.mrb[0].mxu0 %v6319
      %v6469 = vpop.f32.mrb[0].mxu0
      %v6470 = vadd.f32 %v6326, %v6469
      %v6471 = vpop.f32.mrb[0].mxu0
      %6472 = vdwg.mxu0
      %v6473 = vmax.f32 %v6395, 0.0
      %v6474 = vmax.f32 %v6400, 0.0
      %v6475 = vmax.f32 %v6405, 0.0
      %v6476 = vmax.f32 %v6410, 0.0
      %v6477 = vmax.f32 %v6415, 0.0
      %v6478 = vmax.f32 %v6420, 0.0
      %v6479 = vmax.f32 %v6425, 0.0
      %v6480 = vmax.f32 %v6430, 0.0
      %v6481 = vmax.f32 %v6435, 0.0
      %v6482 = vmax.f32 %v6440, 0.0
      %v6483 = vmax.f32 %v6445, 0.0
      %v6484 = vmax.f32 %v6450, 0.0
      %v6485 = vmax.f32 %v6455, 0.0
      %v6486 = vmax.f32 %v6460, 0.0
      %v6487 = vmax.f32 %v6465, 0.0
      %v6488 = vmax.f32 %v6470, 0.0
      %s6489 = scalar_lea.vmem %s4, 256
      %v6490 = vld [vmem:[%s6489] sm:$0xff]
      %v6491 = vld [vmem:[%s6489 + $0x8] sm:$0xff]
      %v6492 = vld [vmem:[%s6489 + $0x10] sm:$0xff]
      %v6493 = vld [vmem:[%s6489 + $0x18] sm:$0xff]
      %v6494 = vld [vmem:[%s6489 + $0x20] sm:$0xff]
      %v6495 = vld [vmem:[%s6489 + $0x28] sm:$0xff]
      %v6496 = vld [vmem:[%s6489 + $0x30] sm:$0xff]
      %v6497 = vld [vmem:[%s6489 + $0x38] sm:$0xff]
      %s6498 = scalar_lea.vmem %s5, 4
      %v6499 = vld [vmem:[%s6498] sm:$0x1]
      %v6501 = vlaneseq
      %v6502 = vshrl.u32 %v6501, 7
      %v6503 = vsub.s32 0, %v6502
      %v6504 = vrot.slane %v6499, %v6503
      %v6507 = vsel %vm1290, %v6473, 0
      %v6510 = vsel %vm1290, %v6474, 0
      %v6513 = vsel %vm1290, %v6475, 0
      %v6516 = vsel %vm1290, %v6476, 0
      %v6519 = vsel %vm1290, %v6477, 0
      %v6522 = vsel %vm1290, %v6478, 0
      %v6525 = vsel %vm1290, %v6479, 0
      %v6528 = vsel %vm1290, %v6480, 0
      %v6531 = vsel %vm1290, %v6481, 0
      %v6534 = vsel %vm1290, %v6482, 0
      %v6537 = vsel %vm1290, %v6483, 0
      %v6540 = vsel %vm1290, %v6484, 0
      %v6543 = vsel %vm1290, %v6485, 0
      %v6546 = vsel %vm1290, %v6486, 0
      %v6549 = vsel %vm1290, %v6487, 0
      %v6552 = vsel %vm1290, %v6488, 0
      %6554 = vmatprep.subr.mxu0 0.0
      %6555 = vmatpush1.msra.mxu0 %v6490
      %6556 = vmatprep.subr.mxu0 0.0
      %6557 = vmatpush1.msra.mxu0 %v6491
      %6558 = vmatprep.subr.mxu0 0.0
      %6559 = vmatpush1.msra.mxu0 %v6492
      %6560 = vmatprep.subr.mxu0 0.0
      %6561 = vmatpush1.msra.mxu0 %v6493
      %6562 = vmatprep.subr.mxu0 0.0
      %6563 = vmatpush1.msra.mxu0 %v6494
      %6564 = vmatprep.subr.mxu0 0.0
      %6565 = vmatpush1.msra.mxu0 %v6495
      %6566 = vmatprep.subr.mxu0 0.0
      %6567 = vmatpush1.msra.mxu0 %v6496
      %6568 = vmatprep.subr.mxu0 0.0
      %6569 = vmatpush1.msra.mxu0 %v6497
      %6570 = vmatprep.subr.mxu0 0.0
      %6571 = vmatpush1.msra.mxu0 0.0
      %6572 = vmatprep.subr.mxu0 0.0
      %6573 = vmatpush1.msra.mxu0 0.0
      %6574 = vmatprep.subr.mxu0 0.0
      %6575 = vmatpush1.msra.mxu0 0.0
      %6576 = vmatprep.subr.mxu0 0.0
      %6577 = vmatpush1.msra.mxu0 0.0
      %6578 = vmatprep.subr.mxu0 0.0
      %6579 = vmatpush1.msra.mxu0 0.0
      %6580 = vmatprep.subr.mxu0 0.0
      %6581 = vmatpush1.msra.mxu0 0.0
      %6582 = vmatprep.subr.mxu0 0.0
      %6583 = vmatpush1.msra.mxu0 0.0
      %6584 = vmatprep.subr.mxu0 0.0
      %6585 = vmatpush1.msra.mxu0 0.0
      %6586 = vmatprep.subr.mxu0 0.0
      %6587 = vmatpush1.msra.mxu0 0.0
      %6588 = vmatprep.subr.mxu0 0.0
      %6589 = vmatpush1.msra.mxu0 0.0
      %6590 = vmatprep.subr.mxu0 0.0
      %6591 = vmatpush1.msra.mxu0 0.0
      %6592 = vmatprep.subr.mxu0 0.0
      %6593 = vmatpush1.msra.mxu0 0.0
      %6594 = vmatprep.subr.mxu0 0.0
      %6595 = vmatpush1.msra.mxu0 0.0
      %6596 = vmatprep.subr.mxu0 0.0
      %6597 = vmatpush1.msra.mxu0 0.0
      %6598 = vmatprep.subr.mxu0 0.0
      %6599 = vmatpush1.msra.mxu0 0.0
      %6600 = vmatprep.subr.mxu0 0.0
      %6601 = vmatpush1.msra.mxu0 0.0
      %6602 = vmatprep.subr.mxu0 0.0
      %6603 = vmatpush1.msra.mxu0 0.0
      %6604 = vmatprep.subr.mxu0 0.0
      %6605 = vmatpush1.msra.mxu0 0.0
      %6606 = vmatprep.subr.mxu0 0.0
      %6607 = vmatpush1.msra.mxu0 0.0
      %6608 = vmatprep.subr.mxu0 0.0
      %6609 = vmatpush1.msra.mxu0 0.0
      %6610 = vmatprep.subr.mxu0 0.0
      %6611 = vmatpush1.msra.mxu0 0.0
      %6612 = vmatprep.subr.mxu0 0.0
      %6613 = vmatpush1.msra.mxu0 0.0
      %6614 = vmatprep.subr.mxu0 0.0
      %6615 = vmatpush1.msra.mxu0 0.0
      %6616 = vmatprep.subr.mxu0 0.0
      %6617 = vmatpush1.msra.mxu0 0.0
      %6618 = vmatprep.mubr.f32.mxu0 0.0
      %6619 = vmatmul.mubr.f32.gmra.mrb[0].mxu0 %v6507
      %v6620 = vpop.f32.mrb[0].mxu0
      %v6621 = vadd.f32 %v6504, %v6620
      %v6622 = vpop.f32.mrb[0].mxu0
      %6623 = vmatprep.mubr.f32.mxu0 0.0
      %6624 = vmatmul.mubr.f32.gmra.mrb[0].mxu0 %v6510
      %v6625 = vpop.f32.mrb[0].mxu0
      %v6626 = vadd.f32 %v6504, %v6625
      %v6627 = vpop.f32.mrb[0].mxu0
      %6628 = vmatprep.mubr.f32.mxu0 0.0
      %6629 = vmatmul.mubr.f32.gmra.mrb[0].mxu0 %v6513
      %v6630 = vpop.f32.mrb[0].mxu0
      %v6631 = vadd.f32 %v6504, %v6630
      %v6632 = vpop.f32.mrb[0].mxu0
      %6633 = vmatprep.mubr.f32.mxu0 0.0
      %6634 = vmatmul.mubr.f32.gmra.mrb[0].mxu0 %v6516
      %v6635 = vpop.f32.mrb[0].mxu0
      %v6636 = vadd.f32 %v6504, %v6635
      %v6637 = vpop.f32.mrb[0].mxu0
      %6638 = vmatprep.mubr.f32.mxu0 0.0
      %6639 = vmatmul.mubr.f32.gmra.mrb[0].mxu0 %v6519
      %v6640 = vpop.f32.mrb[0].mxu0
      %v6641 = vadd.f32 %v6504, %v6640
      %v6642 = vpop.f32.mrb[0].mxu0
      %6643 = vmatprep.mubr.f32.mxu0 0.0
      %6644 = vmatmul.mubr.f32.gmra.mrb[0].mxu0 %v6522
      %v6645 = vpop.f32.mrb[0].mxu0
      %v6646 = vadd.f32 %v6504, %v6645
      %v6647 = vpop.f32.mrb[0].mxu0
      %6648 = vmatprep.mubr.f32.mxu0 0.0
      %6649 = vmatmul.mubr.f32.gmra.mrb[0].mxu0 %v6525
      %v6650 = vpop.f32.mrb[0].mxu0
      %v6651 = vadd.f32 %v6504, %v6650
      %v6652 = vpop.f32.mrb[0].mxu0
      %6653 = vmatprep.mubr.f32.mxu0 0.0
      %6654 = vmatmul.mubr.f32.gmra.mrb[0].mxu0 %v6528
      %v6655 = vpop.f32.mrb[0].mxu0
      %v6656 = vadd.f32 %v6504, %v6655
      %v6657 = vpop.f32.mrb[0].mxu0
      %6658 = vmatprep.mubr.f32.mxu0 0.0
      %6659 = vmatmul.mubr.f32.gmra.mrb[0].mxu0 %v6531
      %v6660 = vpop.f32.mrb[0].mxu0
      %v6661 = vadd.f32 %v6504, %v6660
      %v6662 = vpop.f32.mrb[0].mxu0
      %6663 = vmatprep.mubr.f32.mxu0 0.0
      %6664 = vmatmul.mubr.f32.gmra.mrb[0].mxu0 %v6534
      %v6665 = vpop.f32.mrb[0].mxu0
      %v6666 = vadd.f32 %v6504, %v6665
      %v6667 = vpop.f32.mrb[0].mxu0
      %6668 = vmatprep.mubr.f32.mxu0 0.0
      %6669 = vmatmul.mubr.f32.gmra.mrb[0].mxu0 %v6537
      %v6670 = vpop.f32.mrb[0].mxu0
      %v6671 = vadd.f32 %v6504, %v6670
      %v6672 = vpop.f32.mrb[0].mxu0
      %6673 = vmatprep.mubr.f32.mxu0 0.0
      %6674 = vmatmul.mubr.f32.gmra.mrb[0].mxu0 %v6540
      %v6675 = vpop.f32.mrb[0].mxu0
      %v6676 = vadd.f32 %v6504, %v6675
      %v6677 = vpop.f32.mrb[0].mxu0
      %6678 = vmatprep.mubr.f32.mxu0 0.0
      %6679 = vmatmul.mubr.f32.gmra.mrb[0].mxu0 %v6543
      %v6680 = vpop.f32.mrb[0].mxu0
      %v6681 = vadd.f32 %v6504, %v6680
      %v6682 = vpop.f32.mrb[0].mxu0
      %6683 = vmatprep.mubr.f32.mxu0 0.0
      %6684 = vmatmul.mubr.f32.gmra.mrb[0].mxu0 %v6546
      %v6685 = vpop.f32.mrb[0].mxu0
      %v6686 = vadd.f32 %v6504, %v6685
      %v6687 = vpop.f32.mrb[0].mxu0
      %6688 = vmatprep.mubr.f32.mxu0 0.0
      %6689 = vmatmul.mubr.f32.gmra.mrb[0].mxu0 %v6549
      %v6690 = vpop.f32.mrb[0].mxu0
      %v6691 = vadd.f32 %v6504, %v6690
      %v6692 = vpop.f32.mrb[0].mxu0
      %6693 = vmatprep.mubr.f32.mxu0 0.0
      %6694 = vmatmul.mubr.f32.gmra.mrb[0].mxu0 %v6552
      %v6695 = vpop.f32.mrb[0].mxu0
      %v6696 = vadd.f32 %v6504, %v6695
      %v6697 = vpop.f32.mrb[0].mxu0
      %6698 = vdwg.mxu0
      %6699 = vst.msk [vmem:[#allocation3] sm:$0xff] %vm1484, %v6621
      %6700 = vst.msk [vmem:[#allocation3 + $0x8] sm:$0xff] %vm1484, %v6626
      %6701 = vst.msk [vmem:[#allocation3 + $0x10] sm:$0xff] %vm1484, %v6631
      %6702 = vst.msk [vmem:[#allocation3 + $0x18] sm:$0xff] %vm1484, %v6636
      %6703 = vst.msk [vmem:[#allocation3 + $0x20] sm:$0xff] %vm1484, %v6641
      %6704 = vst.msk [vmem:[#allocation3 + $0x28] sm:$0xff] %vm1484, %v6646
      %6705 = vst.msk [vmem:[#allocation3 + $0x30] sm:$0xff] %vm1484, %v6651
      %6706 = vst.msk [vmem:[#allocation3 + $0x38] sm:$0xff] %vm1484, %v6656
      %6707 = vst.msk [vmem:[#allocation3 + $0x40] sm:$0xff] %vm1484, %v6661
      %6708 = vst.msk [vmem:[#allocation3 + $0x48] sm:$0xff] %vm1484, %v6666
      %6709 = vst.msk [vmem:[#allocation3 + $0x50] sm:$0xff] %vm1484, %v6671
      %6710 = vst.msk [vmem:[#allocation3 + $0x58] sm:$0xff] %vm1484, %v6676
      %6711 = vst.msk [vmem:[#allocation3 + $0x60] sm:$0xff] %vm1484, %v6681
      %6712 = vst.msk [vmem:[#allocation3 + $0x68] sm:$0xff] %vm1484, %v6686
      %6713 = vst.msk [vmem:[#allocation3 + $0x70] sm:$0xff] %vm1484, %v6691
      %6714 = vst.msk [vmem:[#allocation3 + $0x78] sm:$0xff] %vm1484, %v6696
      %v6715 = vld [vmem:[%s6 + $0x40] sm:$0xff]
      %v6716 = vld [vmem:[%s6 + $0x48] sm:$0xff]
      %v6718 = vsel %vm1484, %v6621, 0
      %v6721 = vsel %vm1484, %v6626, 0
      %v6724 = vsel %vm1484, %v6631, 0
      %v6727 = vsel %vm1484, %v6636, 0
      %v6730 = vsel %vm1484, %v6641, 0
      %v6733 = vsel %vm1484, %v6646, 0
      %v6736 = vsel %vm1484, %v6651, 0
      %v6739 = vsel %vm1484, %v6656, 0
      %v6742 = vsel %vm1484, %v6661, 0
      %v6745 = vsel %vm1484, %v6666, 0
      %v6748 = vsel %vm1484, %v6671, 0
      %v6751 = vsel %vm1484, %v6676, 0
      %v6754 = vsel %vm1484, %v6681, 0
      %v6757 = vsel %vm1484, %v6686, 0
      %v6760 = vsel %vm1484, %v6691, 0
      %v6763 = vsel %vm1484, %v6696, 0
      %6765 = vmatprep.subr.mxu0 0.0
      %6766 = vmatpush1.msra.mxu0 %v6715
      %6767 = vmatprep.subr.mxu0 0.0
      %6768 = vmatpush1.msra.mxu0 %v6716
      %6769 = vmatprep.subr.mxu0 0.0
      %6770 = vmatpush1.msra.mxu0 0.0
      %6771 = vmatprep.subr.mxu0 0.0
      %6772 = vmatpush1.msra.mxu0 0.0
      %6773 = vmatprep.subr.mxu0 0.0
      %6774 = vmatpush1.msra.mxu0 0.0
      %6775 = vmatprep.subr.mxu0 0.0
      %6776 = vmatpush1.msra.mxu0 0.0
      %6777 = vmatprep.subr.mxu0 0.0
      %6778 = vmatpush1.msra.mxu0 0.0
      %6779 = vmatprep.subr.mxu0 0.0
      %6780 = vmatpush1.msra.mxu0 0.0
      %6781 = vmatprep.subr.mxu0 0.0
      %6782 = vmatpush1.msra.mxu0 0.0
      %6783 = vmatprep.subr.mxu0 0.0
      %6784 = vmatpush1.msra.mxu0 0.0
      %6785 = vmatprep.subr.mxu0 0.0
      %6786 = vmatpush1.msra.mxu0 0.0
      %6787 = vmatprep.subr.mxu0 0.0
      %6788 = vmatpush1.msra.mxu0 0.0
      %6789 = vmatprep.subr.mxu0 0.0
      %6790 = vmatpush1.msra.mxu0 0.0
      %6791 = vmatprep.subr.mxu0 0.0
      %6792 = vmatpush1.msra.mxu0 0.0
      %6793 = vmatprep.subr.mxu0 0.0
      %6794 = vmatpush1.msra.mxu0 0.0
      %6795 = vmatprep.subr.mxu0 0.0
      %6796 = vmatpush1.msra.mxu0 0.0
      %6797 = vmatprep.subr.mxu0 0.0
      %6798 = vmatpush1.msra.mxu0 0.0
      %6799 = vmatprep.subr.mxu0 0.0
      %6800 = vmatpush1.msra.mxu0 0.0
      %6801 = vmatprep.subr.mxu0 0.0
      %6802 = vmatpush1.msra.mxu0 0.0
      %6803 = vmatprep.subr.mxu0 0.0
      %6804 = vmatpush1.msra.mxu0 0.0
      %6805 = vmatprep.subr.mxu0 0.0
      %6806 = vmatpush1.msra.mxu0 0.0
      %6807 = vmatprep.subr.mxu0 0.0
      %6808 = vmatpush1.msra.mxu0 0.0
      %6809 = vmatprep.subr.mxu0 0.0
      %6810 = vmatpush1.msra.mxu0 0.0
      %6811 = vmatprep.subr.mxu0 0.0
      %6812 = vmatpush1.msra.mxu0 0.0
      %6813 = vmatprep.subr.mxu0 0.0
      %6814 = vmatpush1.msra.mxu0 0.0
      %6815 = vmatprep.subr.mxu0 0.0
      %6816 = vmatpush1.msra.mxu0 0.0
      %6817 = vmatprep.subr.mxu0 0.0
      %6818 = vmatpush1.msra.mxu0 0.0
      %6819 = vmatprep.subr.mxu0 0.0
      %6820 = vmatpush1.msra.mxu0 0.0
      %6821 = vmatprep.subr.mxu0 0.0
      %6822 = vmatpush1.msra.mxu0 0.0
      %6823 = vmatprep.subr.mxu0 0.0
      %6824 = vmatpush1.msra.mxu0 0.0
      %6825 = vmatprep.subr.mxu0 0.0
      %6826 = vmatpush1.msra.mxu0 0.0
      %6827 = vmatprep.subr.mxu0 0.0
      %6828 = vmatpush1.msra.mxu0 0.0
      %6829 = vmatprep.mubr.f32.mxu0 0.0
      %6830 = vmatmul.mubr.f32.gmra.mrb[0].mxu0 %v6718
      %v6831 = vpop.f32.mrb[0].mxu0
      %v6832 = vadd.f32 0.0, %v6831
      %v6833 = vpop.f32.mrb[0].mxu0
      %6834 = vmatprep.mubr.f32.mxu0 0.0
      %6835 = vmatmul.mubr.f32.gmra.mrb[0].mxu0 %v6721
      %v6836 = vpop.f32.mrb[0].mxu0
      %v6837 = vadd.f32 0.0, %v6836
      %v6838 = vpop.f32.mrb[0].mxu0
      %6839 = vmatprep.mubr.f32.mxu0 0.0
      %6840 = vmatmul.mubr.f32.gmra.mrb[0].mxu0 %v6724
      %v6841 = vpop.f32.mrb[0].mxu0
      %v6842 = vadd.f32 0.0, %v6841
      %v6843 = vpop.f32.mrb[0].mxu0
      %6844 = vmatprep.mubr.f32.mxu0 0.0
      %6845 = vmatmul.mubr.f32.gmra.mrb[0].mxu0 %v6727
      %v6846 = vpop.f32.mrb[0].mxu0
      %v6847 = vadd.f32 0.0, %v6846
      %v6848 = vpop.f32.mrb[0].mxu0
      %6849 = vmatprep.mubr.f32.mxu0 0.0
      %6850 = vmatmul.mubr.f32.gmra.mrb[0].mxu0 %v6730
      %v6851 = vpop.f32.mrb[0].mxu0
      %v6852 = vadd.f32 0.0, %v6851
      %v6853 = vpop.f32.mrb[0].mxu0
      %6854 = vmatprep.mubr.f32.mxu0 0.0
      %6855 = vmatmul.mubr.f32.gmra.mrb[0].mxu0 %v6733
      %v6856 = vpop.f32.mrb[0].mxu0
      %v6857 = vadd.f32 0.0, %v6856
      %v6858 = vpop.f32.mrb[0].mxu0
      %6859 = vmatprep.mubr.f32.mxu0 0.0
      %6860 = vmatmul.mubr.f32.gmra.mrb[0].mxu0 %v6736
      %v6861 = vpop.f32.mrb[0].mxu0
      %v6862 = vadd.f32 0.0, %v6861
      %v6863 = vpop.f32.mrb[0].mxu0
      %6864 = vmatprep.mubr.f32.mxu0 0.0
      %6865 = vmatmul.mubr.f32.gmra.mrb[0].mxu0 %v6739
      %v6866 = vpop.f32.mrb[0].mxu0
      %v6867 = vadd.f32 0.0, %v6866
      %v6868 = vpop.f32.mrb[0].mxu0
      %6869 = vmatprep.mubr.f32.mxu0 0.0
      %6870 = vmatmul.mubr.f32.gmra.mrb[0].mxu0 %v6742
      %v6871 = vpop.f32.mrb[0].mxu0
      %v6872 = vadd.f32 0.0, %v6871
      %v6873 = vpop.f32.mrb[0].mxu0
      %6874 = vmatprep.mubr.f32.mxu0 0.0
      %6875 = vmatmul.mubr.f32.gmra.mrb[0].mxu0 %v6745
      %v6876 = vpop.f32.mrb[0].mxu0
      %v6877 = vadd.f32 0.0, %v6876
      %v6878 = vpop.f32.mrb[0].mxu0
      %6879 = vmatprep.mubr.f32.mxu0 0.0
      %6880 = vmatmul.mubr.f32.gmra.mrb[0].mxu0 %v6748
      %v6881 = vpop.f32.mrb[0].mxu0
      %v6882 = vadd.f32 0.0, %v6881
      %v6883 = vpop.f32.mrb[0].mxu0
      %6884 = vmatprep.mubr.f32.mxu0 0.0
      %6885 = vmatmul.mubr.f32.gmra.mrb[0].mxu0 %v6751
      %v6886 = vpop.f32.mrb[0].mxu0
      %v6887 = vadd.f32 0.0, %v6886
      %v6888 = vpop.f32.mrb[0].mxu0
      %6889 = vmatprep.mubr.f32.mxu0 0.0
      %6890 = vmatmul.mubr.f32.gmra.mrb[0].mxu0 %v6754
      %v6891 = vpop.f32.mrb[0].mxu0
      %v6892 = vadd.f32 0.0, %v6891
      %v6893 = vpop.f32.mrb[0].mxu0
      %6894 = vmatprep.mubr.f32.mxu0 0.0
      %6895 = vmatmul.mubr.f32.gmra.mrb[0].mxu0 %v6757
      %v6896 = vpop.f32.mrb[0].mxu0
      %v6897 = vadd.f32 0.0, %v6896
      %v6898 = vpop.f32.mrb[0].mxu0
      %6899 = vmatprep.mubr.f32.mxu0 0.0
      %6900 = vmatmul.mubr.f32.gmra.mrb[0].mxu0 %v6760
      %v6901 = vpop.f32.mrb[0].mxu0
      %v6902 = vadd.f32 0.0, %v6901
      %v6903 = vpop.f32.mrb[0].mxu0
      %6904 = vmatprep.mubr.f32.mxu0 0.0
      %6905 = vmatmul.mubr.f32.gmra.mrb[0].mxu0 %v6763
      %v6906 = vpop.f32.mrb[0].mxu0
      %v6907 = vadd.f32 0.0, %v6906
      %v6908 = vpop.f32.mrb[0].mxu0
      %6909 = vdwg.mxu0
      %v6910 = vadd.f32 %v5699, %v6832
      %v6911 = vadd.f32 %v5700, %v6837
      %v6912 = vadd.f32 %v5701, %v6842
      %v6913 = vadd.f32 %v5702, %v6847
      %v6914 = vadd.f32 %v5703, %v6852
      %v6915 = vadd.f32 %v5704, %v6857
      %v6916 = vadd.f32 %v5705, %v6862
      %v6917 = vadd.f32 %v5706, %v6867
      %v6918 = vadd.f32 %v5707, %v6872
      %v6919 = vadd.f32 %v5708, %v6877
      %v6920 = vadd.f32 %v5709, %v6882
      %v6921 = vadd.f32 %v5710, %v6887
      %v6922 = vadd.f32 %v5711, %v6892
      %v6923 = vadd.f32 %v5712, %v6897
      %v6924 = vadd.f32 %v5713, %v6902
      %v6925 = vadd.f32 %v5714, %v6907
      %6926 = vst.msk [vmem:[#allocation2] sm:$0xff] %vm1484, 0.0
      %6927 = vst.msk [vmem:[#allocation2 + $0x8] sm:$0xff] %vm1484, 0.0
      %6928 = vst.msk [vmem:[#allocation2 + $0x10] sm:$0xff] %vm1484, 0.0
      %6929 = vst.msk [vmem:[#allocation2 + $0x18] sm:$0xff] %vm1484, 0.0
      %6930 = vst.msk [vmem:[#allocation2 + $0x20] sm:$0xff] %vm1484, 0.0
      %6931 = vst.msk [vmem:[#allocation2 + $0x28] sm:$0xff] %vm1484, 0.0
      %6932 = vst.msk [vmem:[#allocation2 + $0x30] sm:$0xff] %vm1484, 0.0
      %6933 = vst.msk [vmem:[#allocation2 + $0x38] sm:$0xff] %vm1484, 0.0
      %6934 = vst.msk [vmem:[#allocation2 + $0x40] sm:$0xff] %vm1484, 0.0
      %6935 = vst.msk [vmem:[#allocation2 + $0x48] sm:$0xff] %vm1484, 0.0
      %6936 = vst.msk [vmem:[#allocation2 + $0x50] sm:$0xff] %vm1484, 0.0
      %6937 = vst.msk [vmem:[#allocation2 + $0x58] sm:$0xff] %vm1484, 0.0
      %6938 = vst.msk [vmem:[#allocation2 + $0x60] sm:$0xff] %vm1484, 0.0
      %6939 = vst.msk [vmem:[#allocation2 + $0x68] sm:$0xff] %vm1484, 0.0
      %v6940 = vld [vmem:[#allocation3] sm:$0xff]
      %v6941 = vld [vmem:[#allocation3 + $0x8] sm:$0xff]
      %6942 = vst.msk [vmem:[#allocation2 + $0x70] sm:$0xff] %vm1484, %v6940
      %6943 = vst.msk [vmem:[#allocation2 + $0x78] sm:$0xff] %vm1484, %v6941
      %6944 = vst.msk [vmem:[#allocation2] sm:$0xff] %vm1620, 0.0
      %6945 = vst.msk [vmem:[#allocation2 + $0x8] sm:$0xff] %vm1620, 0.0
      %6946 = vst.msk [vmem:[#allocation2 + $0x10] sm:$0xff] %vm1620, 0.0
      %6947 = vst.msk [vmem:[#allocation2 + $0x18] sm:$0xff] %vm1620, 0.0
      %6948 = vst.msk [vmem:[#allocation2 + $0x20] sm:$0xff] %vm1620, 0.0
      %6949 = vst.msk [vmem:[#allocation2 + $0x28] sm:$0xff] %vm1620, 0.0
      %6950 = vst.msk [vmem:[#allocation2 + $0x30] sm:$0xff] %vm1620, 0.0
      %6951 = vst.msk [vmem:[#allocation2 + $0x38] sm:$0xff] %vm1620, 0.0
      %6952 = vst.msk [vmem:[#allocation2 + $0x40] sm:$0xff] %vm1620, 0.0
      %6953 = vst.msk [vmem:[#allocation2 + $0x48] sm:$0xff] %vm1620, 0.0
      %v6954 = vld [vmem:[#allocation3] sm:$0xff]
      %v6955 = vld [vmem:[#allocation3 + $0x8] sm:$0xff]
      %v6956 = vld [vmem:[#allocation3 + $0x10] sm:$0xff]
      %v6957 = vld [vmem:[#allocation3 + $0x18] sm:$0xff]
      %v6958 = vld [vmem:[#allocation3 + $0x20] sm:$0xff]
      %v6959 = vld [vmem:[#allocation3 + $0x28] sm:$0xff]
      %6966 = vrot.lane.b32.xlu0 %v6954, 16
      %v6967 = vpop.permute.xlu0 %6966
      %6968 = vrot.lane.b32.xlu0 %v6955, 16
      %v6969 = vpop.permute.xlu0 %6968
      %6970 = vrot.lane.b32.xlu0 %v6956, 16
      %v6971 = vpop.permute.xlu0 %6970
      %6972 = vrot.lane.b32.xlu0 %v6957, 16
      %v6973 = vpop.permute.xlu0 %6972
      %6974 = vrot.lane.b32.xlu0 %v6958, 16
      %v6975 = vpop.permute.xlu0 %6974
      %6976 = vrot.lane.b32.xlu0 %v6959, 16
      %v6977 = vpop.permute.xlu0 %6976
      %6984 = vst.msk [vmem:[#allocation2 + $0x50] sm:$0xff] %vm1620, %v6967
      %6985 = vst.msk [vmem:[#allocation2 + $0x58] sm:$0xff] %vm1620, %v6969
      %6986 = vst.msk [vmem:[#allocation2 + $0x60] sm:$0xff] %vm1620, %v6971
      %6987 = vst.msk [vmem:[#allocation2 + $0x68] sm:$0xff] %vm1620, %v6973
      %6988 = vst.msk [vmem:[#allocation2 + $0x70] sm:$0xff] %vm1620, %v6975
      %6989 = vst.msk [vmem:[#allocation2 + $0x78] sm:$0xff] %vm1620, %v6977
      %6990 = vst.msk [vmem:[#allocation2] sm:$0xff] %vm1720, 0.0
      %6991 = vst.msk [vmem:[#allocation2 + $0x8] sm:$0xff] %vm1720, 0.0
      %6992 = vst.msk [vmem:[#allocation2 + $0x10] sm:$0xff] %vm1720, 0.0
      %6993 = vst.msk [vmem:[#allocation2 + $0x18] sm:$0xff] %vm1720, 0.0
      %6994 = vst.msk [vmem:[#allocation2 + $0x20] sm:$0xff] %vm1720, 0.0
      %6995 = vst.msk [vmem:[#allocation2 + $0x28] sm:$0xff] %vm1720, 0.0
      %v6996 = vld [vmem:[#allocation3] sm:$0xff]
      %v6997 = vld [vmem:[#allocation3 + $0x8] sm:$0xff]
      %v6998 = vld [vmem:[#allocation3 + $0x10] sm:$0xff]
      %v6999 = vld [vmem:[#allocation3 + $0x18] sm:$0xff]
      %v7000 = vld [vmem:[#allocation3 + $0x20] sm:$0xff]
      %v7001 = vld [vmem:[#allocation3 + $0x28] sm:$0xff]
      %v7002 = vld [vmem:[#allocation3 + $0x30] sm:$0xff]
      %v7003 = vld [vmem:[#allocation3 + $0x38] sm:$0xff]
      %v7004 = vld [vmem:[#allocation3 + $0x40] sm:$0xff]
      %v7005 = vld [vmem:[#allocation3 + $0x48] sm:$0xff]
      %7016 = vrot.lane.b32.xlu0 %v6996, 32
      %v7017 = vpop.permute.xlu0 %7016
      %7018 = vrot.lane.b32.xlu0 %v6997, 32
      %v7019 = vpop.permute.xlu0 %7018
      %7020 = vrot.lane.b32.xlu0 %v6998, 32
      %v7021 = vpop.permute.xlu0 %7020
      %7022 = vrot.lane.b32.xlu0 %v6999, 32
      %v7023 = vpop.permute.xlu0 %7022
      %7024 = vrot.lane.b32.xlu0 %v7000, 32
      %v7025 = vpop.permute.xlu0 %7024
      %7026 = vrot.lane.b32.xlu0 %v7001, 32
      %v7027 = vpop.permute.xlu0 %7026
      %7028 = vrot.lane.b32.xlu0 %v7002, 32
      %v7029 = vpop.permute.xlu0 %7028
      %7030 = vrot.lane.b32.xlu0 %v7003, 32
      %v7031 = vpop.permute.xlu0 %7030
      %7032 = vrot.lane.b32.xlu0 %v7004, 32
      %v7033 = vpop.permute.xlu0 %7032
      %7034 = vrot.lane.b32.xlu0 %v7005, 32
      %v7035 = vpop.permute.xlu0 %7034
      %7046 = vst.msk [vmem:[#allocation2 + $0x30] sm:$0xff] %vm1720, %v7017
      %7047 = vst.msk [vmem:[#allocation2 + $0x38] sm:$0xff] %vm1720, %v7019
      %7048 = vst.msk [vmem:[#allocation2 + $0x40] sm:$0xff] %vm1720, %v7021
      %7049 = vst.msk [vmem:[#allocation2 + $0x48] sm:$0xff] %vm1720, %v7023
      %7050 = vst.msk [vmem:[#allocation2 + $0x50] sm:$0xff] %vm1720, %v7025
      %7051 = vst.msk [vmem:[#allocation2 + $0x58] sm:$0xff] %vm1720, %v7027
      %7052 = vst.msk [vmem:[#allocation2 + $0x60] sm:$0xff] %vm1720, %v7029
      %7053 = vst.msk [vmem:[#allocation2 + $0x68] sm:$0xff] %vm1720, %v7031
      %7054 = vst.msk [vmem:[#allocation2 + $0x70] sm:$0xff] %vm1720, %v7033
      %7055 = vst.msk [vmem:[#allocation2 + $0x78] sm:$0xff] %vm1720, %v7035
      %7056 = vst.msk [vmem:[#allocation2] sm:$0xff] %vm1820, 0.0
      %7057 = vst.msk [vmem:[#allocation2 + $0x8] sm:$0xff] %vm1820, 0.0
      %v7058 = vld [vmem:[#allocation3] sm:$0xff]
      %v7059 = vld [vmem:[#allocation3 + $0x8] sm:$0xff]
      %v7060 = vld [vmem:[#allocation3 + $0x10] sm:$0xff]
      %v7061 = vld [vmem:[#allocation3 + $0x18] sm:$0xff]
      %v7062 = vld [vmem:[#allocation3 + $0x20] sm:$0xff]
      %v7063 = vld [vmem:[#allocation3 + $0x28] sm:$0xff]
      %v7064 = vld [vmem:[#allocation3 + $0x30] sm:$0xff]
      %v7065 = vld [vmem:[#allocation3 + $0x38] sm:$0xff]
      %v7066 = vld [vmem:[#allocation3 + $0x40] sm:$0xff]
      %v7067 = vld [vmem:[#allocation3 + $0x48] sm:$0xff]
      %v7068 = vld [vmem:[#allocation3 + $0x50] sm:$0xff]
      %v7069 = vld [vmem:[#allocation3 + $0x58] sm:$0xff]
      %v7070 = vld [vmem:[#allocation3 + $0x60] sm:$0xff]
      %v7071 = vld [vmem:[#allocation3 + $0x68] sm:$0xff]
      %7086 = vrot.lane.b32.xlu0 %v7058, 48
      %v7087 = vpop.permute.xlu0 %7086
      %7088 = vrot.lane.b32.xlu0 %v7059, 48
      %v7089 = vpop.permute.xlu0 %7088
      %7090 = vrot.lane.b32.xlu0 %v7060, 48
      %v7091 = vpop.permute.xlu0 %7090
      %7092 = vrot.lane.b32.xlu0 %v7061, 48
      %v7093 = vpop.permute.xlu0 %7092
      %7094 = vrot.lane.b32.xlu0 %v7062, 48
      %v7095 = vpop.permute.xlu0 %7094
      %7096 = vrot.lane.b32.xlu0 %v7063, 48
      %v7097 = vpop.permute.xlu0 %7096
      %7098 = vrot.lane.b32.xlu0 %v7064, 48
      %v7099 = vpop.permute.xlu0 %7098
      %7100 = vrot.lane.b32.xlu0 %v7065, 48
      %v7101 = vpop.permute.xlu0 %7100
      %7102 = vrot.lane.b32.xlu0 %v7066, 48
      %v7103 = vpop.permute.xlu0 %7102
      %7104 = vrot.lane.b32.xlu0 %v7067, 48
      %v7105 = vpop.permute.xlu0 %7104
      %7106 = vrot.lane.b32.xlu0 %v7068, 48
      %v7107 = vpop.permute.xlu0 %7106
      %7108 = vrot.lane.b32.xlu0 %v7069, 48
      %v7109 = vpop.permute.xlu0 %7108
      %7110 = vrot.lane.b32.xlu0 %v7070, 48
      %v7111 = vpop.permute.xlu0 %7110
      %7112 = vrot.lane.b32.xlu0 %v7071, 48
      %v7113 = vpop.permute.xlu0 %7112
      %7128 = vst.msk [vmem:[#allocation2 + $0x10] sm:$0xff] %vm1820, %v7087
      %7129 = vst.msk [vmem:[#allocation2 + $0x18] sm:$0xff] %vm1820, %v7089
      %7130 = vst.msk [vmem:[#allocation2 + $0x20] sm:$0xff] %vm1820, %v7091
      %7131 = vst.msk [vmem:[#allocation2 + $0x28] sm:$0xff] %vm1820, %v7093
      %7132 = vst.msk [vmem:[#allocation2 + $0x30] sm:$0xff] %vm1820, %v7095
      %7133 = vst.msk [vmem:[#allocation2 + $0x38] sm:$0xff] %vm1820, %v7097
      %7134 = vst.msk [vmem:[#allocation2 + $0x40] sm:$0xff] %vm1820, %v7099
      %7135 = vst.msk [vmem:[#allocation2 + $0x48] sm:$0xff] %vm1820, %v7101
      %7136 = vst.msk [vmem:[#allocation2 + $0x50] sm:$0xff] %vm1820, %v7103
      %7137 = vst.msk [vmem:[#allocation2 + $0x58] sm:$0xff] %vm1820, %v7105
      %7138 = vst.msk [vmem:[#allocation2 + $0x60] sm:$0xff] %vm1820, %v7107
      %7139 = vst.msk [vmem:[#allocation2 + $0x68] sm:$0xff] %vm1820, %v7109
      %7140 = vst.msk [vmem:[#allocation2 + $0x70] sm:$0xff] %vm1820, %v7111
      %7141 = vst.msk [vmem:[#allocation2 + $0x78] sm:$0xff] %vm1820, %v7113
      %7142 = vst.msk [vmem:[#allocation2 + $0x70] sm:$0xff] %vm1920, 0.0
      %7143 = vst.msk [vmem:[#allocation2 + $0x78] sm:$0xff] %vm1920, 0.0
      %v7144 = vld [vmem:[#allocation3 + $0x10] sm:$0xff]
      %v7145 = vld [vmem:[#allocation3 + $0x18] sm:$0xff]
      %v7146 = vld [vmem:[#allocation3 + $0x20] sm:$0xff]
      %v7147 = vld [vmem:[#allocation3 + $0x28] sm:$0xff]
      %v7148 = vld [vmem:[#allocation3 + $0x30] sm:$0xff]
      %v7149 = vld [vmem:[#allocation3 + $0x38] sm:$0xff]
      %v7150 = vld [vmem:[#allocation3 + $0x40] sm:$0xff]
      %v7151 = vld [vmem:[#allocation3 + $0x48] sm:$0xff]
      %v7152 = vld [vmem:[#allocation3 + $0x50] sm:$0xff]
      %v7153 = vld [vmem:[#allocation3 + $0x58] sm:$0xff]
      %v7154 = vld [vmem:[#allocation3 + $0x60] sm:$0xff]
      %v7155 = vld [vmem:[#allocation3 + $0x68] sm:$0xff]
      %v7156 = vld [vmem:[#allocation3 + $0x70] sm:$0xff]
      %v7157 = vld [vmem:[#allocation3 + $0x78] sm:$0xff]
      %7172 = vrot.lane.b32.xlu0 %v7144, 64
      %v7173 = vpop.permute.xlu0 %7172
      %7174 = vrot.lane.b32.xlu0 %v7145, 64
      %v7175 = vpop.permute.xlu0 %7174
      %7176 = vrot.lane.b32.xlu0 %v7146, 64
      %v7177 = vpop.permute.xlu0 %7176
      %7178 = vrot.lane.b32.xlu0 %v7147, 64
      %v7179 = vpop.permute.xlu0 %7178
      %7180 = vrot.lane.b32.xlu0 %v7148, 64
      %v7181 = vpop.permute.xlu0 %7180
      %7182 = vrot.lane.b32.xlu0 %v7149, 64
      %v7183 = vpop.permute.xlu0 %7182
      %7184 = vrot.lane.b32.xlu0 %v7150, 64
      %v7185 = vpop.permute.xlu0 %7184
      %7186 = vrot.lane.b32.xlu0 %v7151, 64
      %v7187 = vpop.permute.xlu0 %7186
      %7188 = vrot.lane.b32.xlu0 %v7152, 64
      %v7189 = vpop.permute.xlu0 %7188
      %7190 = vrot.lane.b32.xlu0 %v7153, 64
      %v7191 = vpop.permute.xlu0 %7190
      %7192 = vrot.lane.b32.xlu0 %v7154, 64
      %v7193 = vpop.permute.xlu0 %7192
      %7194 = vrot.lane.b32.xlu0 %v7155, 64
      %v7195 = vpop.permute.xlu0 %7194
      %7196 = vrot.lane.b32.xlu0 %v7156, 64
      %v7197 = vpop.permute.xlu0 %7196
      %7198 = vrot.lane.b32.xlu0 %v7157, 64
      %v7199 = vpop.permute.xlu0 %7198
      %7214 = vst.msk [vmem:[#allocation2] sm:$0xff] %vm1920, %v7173
      %7215 = vst.msk [vmem:[#allocation2 + $0x8] sm:$0xff] %vm1920, %v7175
      %7216 = vst.msk [vmem:[#allocation2 + $0x10] sm:$0xff] %vm1920, %v7177
      %7217 = vst.msk [vmem:[#allocation2 + $0x18] sm:$0xff] %vm1920, %v7179
      %7218 = vst.msk [vmem:[#allocation2 + $0x20] sm:$0xff] %vm1920, %v7181
      %7219 = vst.msk [vmem:[#allocation2 + $0x28] sm:$0xff] %vm1920, %v7183
      %7220 = vst.msk [vmem:[#allocation2 + $0x30] sm:$0xff] %vm1920, %v7185
      %7221 = vst.msk [vmem:[#allocation2 + $0x38] sm:$0xff] %vm1920, %v7187
      %7222 = vst.msk [vmem:[#allocation2 + $0x40] sm:$0xff] %vm1920, %v7189
      %7223 = vst.msk [vmem:[#allocation2 + $0x48] sm:$0xff] %vm1920, %v7191
      %7224 = vst.msk [vmem:[#allocation2 + $0x50] sm:$0xff] %vm1920, %v7193
      %7225 = vst.msk [vmem:[#allocation2 + $0x58] sm:$0xff] %vm1920, %v7195
      %7226 = vst.msk [vmem:[#allocation2 + $0x60] sm:$0xff] %vm1920, %v7197
      %7227 = vst.msk [vmem:[#allocation2 + $0x68] sm:$0xff] %vm1920, %v7199
      %7228 = vst.msk [vmem:[#allocation2 + $0x50] sm:$0xff] %vm2020, 0.0
      %7229 = vst.msk [vmem:[#allocation2 + $0x58] sm:$0xff] %vm2020, 0.0
      %7230 = vst.msk [vmem:[#allocation2 + $0x60] sm:$0xff] %vm2020, 0.0
      %7231 = vst.msk [vmem:[#allocation2 + $0x68] sm:$0xff] %vm2020, 0.0
      %7232 = vst.msk [vmem:[#allocation2 + $0x70] sm:$0xff] %vm2020, 0.0
      %7233 = vst.msk [vmem:[#allocation2 + $0x78] sm:$0xff] %vm2020, 0.0
      %v7234 = vld [vmem:[#allocation3 + $0x30] sm:$0xff]
      %v7235 = vld [vmem:[#allocation3 + $0x38] sm:$0xff]
      %v7236 = vld [vmem:[#allocation3 + $0x40] sm:$0xff]
      %v7237 = vld [vmem:[#allocation3 + $0x48] sm:$0xff]
      %v7238 = vld [vmem:[#allocation3 + $0x50] sm:$0xff]
      %v7239 = vld [vmem:[#allocation3 + $0x58] sm:$0xff]
      %v7240 = vld [vmem:[#allocation3 + $0x60] sm:$0xff]
      %v7241 = vld [vmem:[#allocation3 + $0x68] sm:$0xff]
      %v7242 = vld [vmem:[#allocation3 + $0x70] sm:$0xff]
      %v7243 = vld [vmem:[#allocation3 + $0x78] sm:$0xff]
      %7254 = vrot.lane.b32.xlu0 %v7234, 80
      %v7255 = vpop.permute.xlu0 %7254
      %7256 = vrot.lane.b32.xlu0 %v7235, 80
      %v7257 = vpop.permute.xlu0 %7256
      %7258 = vrot.lane.b32.xlu0 %v7236, 80
      %v7259 = vpop.permute.xlu0 %7258
      %7260 = vrot.lane.b32.xlu0 %v7237, 80
      %v7261 = vpop.permute.xlu0 %7260
      %7262 = vrot.lane.b32.xlu0 %v7238, 80
      %v7263 = vpop.permute.xlu0 %7262
      %7264 = vrot.lane.b32.xlu0 %v7239, 80
      %v7265 = vpop.permute.xlu0 %7264
      %7266 = vrot.lane.b32.xlu0 %v7240, 80
      %v7267 = vpop.permute.xlu0 %7266
      %7268 = vrot.lane.b32.xlu0 %v7241, 80
      %v7269 = vpop.permute.xlu0 %7268
      %7270 = vrot.lane.b32.xlu0 %v7242, 80
      %v7271 = vpop.permute.xlu0 %7270
      %7272 = vrot.lane.b32.xlu0 %v7243, 80
      %v7273 = vpop.permute.xlu0 %7272
      %7284 = vst.msk [vmem:[#allocation2] sm:$0xff] %vm2020, %v7255
      %7285 = vst.msk [vmem:[#allocation2 + $0x8] sm:$0xff] %vm2020, %v7257
      %7286 = vst.msk [vmem:[#allocation2 + $0x10] sm:$0xff] %vm2020, %v7259
      %7287 = vst.msk [vmem:[#allocation2 + $0x18] sm:$0xff] %vm2020, %v7261
      %7288 = vst.msk [vmem:[#allocation2 + $0x20] sm:$0xff] %vm2020, %v7263
      %7289 = vst.msk [vmem:[#allocation2 + $0x28] sm:$0xff] %vm2020, %v7265
      %7290 = vst.msk [vmem:[#allocation2 + $0x30] sm:$0xff] %vm2020, %v7267
      %7291 = vst.msk [vmem:[#allocation2 + $0x38] sm:$0xff] %vm2020, %v7269
      %7292 = vst.msk [vmem:[#allocation2 + $0x40] sm:$0xff] %vm2020, %v7271
      %7293 = vst.msk [vmem:[#allocation2 + $0x48] sm:$0xff] %vm2020, %v7273
      %7294 = vst.msk [vmem:[#allocation2 + $0x30] sm:$0xff] %vm2120, 0.0
      %7295 = vst.msk [vmem:[#allocation2 + $0x38] sm:$0xff] %vm2120, 0.0
      %7296 = vst.msk [vmem:[#allocation2 + $0x40] sm:$0xff] %vm2120, 0.0
      %7297 = vst.msk [vmem:[#allocation2 + $0x48] sm:$0xff] %vm2120, 0.0
      %7298 = vst.msk [vmem:[#allocation2 + $0x50] sm:$0xff] %vm2120, 0.0
      %7299 = vst.msk [vmem:[#allocation2 + $0x58] sm:$0xff] %vm2120, 0.0
      %7300 = vst.msk [vmem:[#allocation2 + $0x60] sm:$0xff] %vm2120, 0.0
      %7301 = vst.msk [vmem:[#allocation2 + $0x68] sm:$0xff] %vm2120, 0.0
      %7302 = vst.msk [vmem:[#allocation2 + $0x70] sm:$0xff] %vm2120, 0.0
      %7303 = vst.msk [vmem:[#allocation2 + $0x78] sm:$0xff] %vm2120, 0.0
      %v7304 = vld [vmem:[#allocation3 + $0x50] sm:$0xff]
      %v7305 = vld [vmem:[#allocation3 + $0x58] sm:$0xff]
      %v7306 = vld [vmem:[#allocation3 + $0x60] sm:$0xff]
      %v7307 = vld [vmem:[#allocation3 + $0x68] sm:$0xff]
      %v7308 = vld [vmem:[#allocation3 + $0x70] sm:$0xff]
      %v7309 = vld [vmem:[#allocation3 + $0x78] sm:$0xff]
      %7316 = vrot.lane.b32.xlu0 %v7304, 96
      %v7317 = vpop.permute.xlu0 %7316
      %7318 = vrot.lane.b32.xlu0 %v7305, 96
      %v7319 = vpop.permute.xlu0 %7318
      %7320 = vrot.lane.b32.xlu0 %v7306, 96
      %v7321 = vpop.permute.xlu0 %7320
      %7322 = vrot.lane.b32.xlu0 %v7307, 96
      %v7323 = vpop.permute.xlu0 %7322
      %7324 = vrot.lane.b32.xlu0 %v7308, 96
      %v7325 = vpop.permute.xlu0 %7324
      %7326 = vrot.lane.b32.xlu0 %v7309, 96
      %v7327 = vpop.permute.xlu0 %7326
      %7334 = vst.msk [vmem:[#allocation2] sm:$0xff] %vm2120, %v7317
      %7335 = vst.msk [vmem:[#allocation2 + $0x8] sm:$0xff] %vm2120, %v7319
      %7336 = vst.msk [vmem:[#allocation2 + $0x10] sm:$0xff] %vm2120, %v7321
      %7337 = vst.msk [vmem:[#allocation2 + $0x18] sm:$0xff] %vm2120, %v7323
      %7338 = vst.msk [vmem:[#allocation2 + $0x20] sm:$0xff] %vm2120, %v7325
      %7339 = vst.msk [vmem:[#allocation2 + $0x28] sm:$0xff] %vm2120, %v7327
      %7340 = vst.msk [vmem:[#allocation2 + $0x10] sm:$0xff] %vm2220, 0.0
      %7341 = vst.msk [vmem:[#allocation2 + $0x18] sm:$0xff] %vm2220, 0.0
      %7342 = vst.msk [vmem:[#allocation2 + $0x20] sm:$0xff] %vm2220, 0.0
      %7343 = vst.msk [vmem:[#allocation2 + $0x28] sm:$0xff] %vm2220, 0.0
      %7344 = vst.msk [vmem:[#allocation2 + $0x30] sm:$0xff] %vm2220, 0.0
      %7345 = vst.msk [vmem:[#allocation2 + $0x38] sm:$0xff] %vm2220, 0.0
      %7346 = vst.msk [vmem:[#allocation2 + $0x40] sm:$0xff] %vm2220, 0.0
      %7347 = vst.msk [vmem:[#allocation2 + $0x48] sm:$0xff] %vm2220, 0.0
      %7348 = vst.msk [vmem:[#allocation2 + $0x50] sm:$0xff] %vm2220, 0.0
      %7349 = vst.msk [vmem:[#allocation2 + $0x58] sm:$0xff] %vm2220, 0.0
      %7350 = vst.msk [vmem:[#allocation2 + $0x60] sm:$0xff] %vm2220, 0.0
      %7351 = vst.msk [vmem:[#allocation2 + $0x68] sm:$0xff] %vm2220, 0.0
      %7352 = vst.msk [vmem:[#allocation2 + $0x70] sm:$0xff] %vm2220, 0.0
      %7353 = vst.msk [vmem:[#allocation2 + $0x78] sm:$0xff] %vm2220, 0.0
      %v7354 = vld [vmem:[#allocation3 + $0x70] sm:$0xff]
      %v7355 = vld [vmem:[#allocation3 + $0x78] sm:$0xff]
      %7358 = vrot.lane.b32.xlu0 %v7354, 112
      %v7359 = vpop.permute.xlu0 %7358
      %7360 = vrot.lane.b32.xlu0 %v7355, 112
      %v7361 = vpop.permute.xlu0 %7360
      %7364 = vst.msk [vmem:[#allocation2] sm:$0xff] %vm2220, %v7359
      %7365 = vst.msk [vmem:[#allocation2 + $0x8] sm:$0xff] %vm2220, %v7361
      %s7366 = scalar_lea.vmem %s2, 512
      %v7367 = vld [vmem:[%s7366] sm:$0xff]
      %v7368 = vld [vmem:[%s7366 + $0x8] sm:$0xff]
      %v7369 = vld [vmem:[%s7366 + $0x10] sm:$0xff]
      %v7370 = vld [vmem:[%s7366 + $0x18] sm:$0xff]
      %v7371 = vld [vmem:[%s7366 + $0x20] sm:$0xff]
      %v7372 = vld [vmem:[%s7366 + $0x28] sm:$0xff]
      %v7373 = vld [vmem:[%s7366 + $0x30] sm:$0xff]
      %v7374 = vld [vmem:[%s7366 + $0x38] sm:$0xff]
      %v7375 = vld [vmem:[%s7366 + $0x40] sm:$0xff]
      %v7376 = vld [vmem:[%s7366 + $0x48] sm:$0xff]
      %v7377 = vld [vmem:[%s7366 + $0x50] sm:$0xff]
      %v7378 = vld [vmem:[%s7366 + $0x58] sm:$0xff]
      %v7379 = vld [vmem:[%s7366 + $0x60] sm:$0xff]
      %v7380 = vld [vmem:[%s7366 + $0x68] sm:$0xff]
      %v7381 = vld [vmem:[%s7366 + $0x70] sm:$0xff]
      %v7382 = vld [vmem:[%s7366 + $0x78] sm:$0xff]
      %v7383 = vld [vmem:[#allocation2] sm:$0xff]
      %v7384 = vld [vmem:[#allocation2 + $0x8] sm:$0xff]
      %v7385 = vld [vmem:[#allocation2 + $0x10] sm:$0xff]
      %v7386 = vld [vmem:[#allocation2 + $0x18] sm:$0xff]
      %v7387 = vld [vmem:[#allocation2 + $0x20] sm:$0xff]
      %v7388 = vld [vmem:[#allocation2 + $0x28] sm:$0xff]
      %v7389 = vld [vmem:[#allocation2 + $0x30] sm:$0xff]
      %v7390 = vld [vmem:[#allocation2 + $0x38] sm:$0xff]
      %v7391 = vld [vmem:[#allocation2 + $0x40] sm:$0xff]
      %v7392 = vld [vmem:[#allocation2 + $0x48] sm:$0xff]
      %v7393 = vld [vmem:[#allocation2 + $0x50] sm:$0xff]
      %v7394 = vld [vmem:[#allocation2 + $0x58] sm:$0xff]
      %v7395 = vld [vmem:[#allocation2 + $0x60] sm:$0xff]
      %v7396 = vld [vmem:[#allocation2 + $0x68] sm:$0xff]
      %v7397 = vld [vmem:[#allocation2 + $0x70] sm:$0xff]
      %v7398 = vld [vmem:[#allocation2 + $0x78] sm:$0xff]
      %s7399 = scalar_lea.vmem %s3, 5
      %v7400 = vld [vmem:[%s7399] sm:$0x1]
      %v7402 = vlaneseq
      %v7403 = vshrl.u32 %v7402, 7
      %v7404 = vsub.s32 0, %v7403
      %v7405 = vrot.slane %v7400, %v7404
      %7407 = vmatprep.subr.mxu0 0.0
      %7408 = vmatpush1.msra.mxu0 %v7367
      %7409 = vmatprep.subr.mxu0 0.0
      %7410 = vmatpush1.msra.mxu0 %v7368
      %7411 = vmatprep.subr.mxu0 0.0
      %7412 = vmatpush1.msra.mxu0 %v7369
      %7413 = vmatprep.subr.mxu0 0.0
      %7414 = vmatpush1.msra.mxu0 %v7370
      %7415 = vmatprep.subr.mxu0 0.0
      %7416 = vmatpush1.msra.mxu0 %v7371
      %7417 = vmatprep.subr.mxu0 0.0
      %7418 = vmatpush1.msra.mxu0 %v7372
      %7419 = vmatprep.subr.mxu0 0.0
      %7420 = vmatpush1.msra.mxu0 %v7373
      %7421 = vmatprep.subr.mxu0 0.0
      %7422 = vmatpush1.msra.mxu0 %v7374
      %7423 = vmatprep.subr.mxu0 0.0
      %7424 = vmatpush1.msra.mxu0 %v7375
      %7425 = vmatprep.subr.mxu0 0.0
      %7426 = vmatpush1.msra.mxu0 %v7376
      %7427 = vmatprep.subr.mxu0 0.0
      %7428 = vmatpush1.msra.mxu0 %v7377
      %7429 = vmatprep.subr.mxu0 0.0
      %7430 = vmatpush1.msra.mxu0 %v7378
      %7431 = vmatprep.subr.mxu0 0.0
      %7432 = vmatpush1.msra.mxu0 %v7379
      %7433 = vmatprep.subr.mxu0 0.0
      %7434 = vmatpush1.msra.mxu0 %v7380
      %7435 = vmatprep.subr.mxu0 0.0
      %7436 = vmatpush1.msra.mxu0 %v7381
      %7437 = vmatprep.subr.mxu0 0.0
      %7438 = vmatpush1.msra.mxu0 %v7382
      %7439 = vmatprep.subr.mxu0 0.0
      %7440 = vmatpush1.msra.mxu0 0.0
      %7441 = vmatprep.subr.mxu0 0.0
      %7442 = vmatpush1.msra.mxu0 0.0
      %7443 = vmatprep.subr.mxu0 0.0
      %7444 = vmatpush1.msra.mxu0 0.0
      %7445 = vmatprep.subr.mxu0 0.0
      %7446 = vmatpush1.msra.mxu0 0.0
      %7447 = vmatprep.subr.mxu0 0.0
      %7448 = vmatpush1.msra.mxu0 0.0
      %7449 = vmatprep.subr.mxu0 0.0
      %7450 = vmatpush1.msra.mxu0 0.0
      %7451 = vmatprep.subr.mxu0 0.0
      %7452 = vmatpush1.msra.mxu0 0.0
      %7453 = vmatprep.subr.mxu0 0.0
      %7454 = vmatpush1.msra.mxu0 0.0
      %7455 = vmatprep.subr.mxu0 0.0
      %7456 = vmatpush1.msra.mxu0 0.0
      %7457 = vmatprep.subr.mxu0 0.0
      %7458 = vmatpush1.msra.mxu0 0.0
      %7459 = vmatprep.subr.mxu0 0.0
      %7460 = vmatpush1.msra.mxu0 0.0
      %7461 = vmatprep.subr.mxu0 0.0
      %7462 = vmatpush1.msra.mxu0 0.0
      %7463 = vmatprep.subr.mxu0 0.0
      %7464 = vmatpush1.msra.mxu0 0.0
      %7465 = vmatprep.subr.mxu0 0.0
      %7466 = vmatpush1.msra.mxu0 0.0
      %7467 = vmatprep.subr.mxu0 0.0
      %7468 = vmatpush1.msra.mxu0 0.0
      %7469 = vmatprep.subr.mxu0 0.0
      %7470 = vmatpush1.msra.mxu0 0.0
      %7471 = vmatprep.mubr.f32.mxu0 0.0
      %7472 = vmatmul.mubr.f32.gmra.mrb[0].mxu0 %v7383
      %v7473 = vpop.f32.mrb[0].mxu0
      %v7474 = vadd.f32 %v7405, %v7473
      %v7475 = vpop.f32.mrb[0].mxu0
      %7476 = vmatprep.mubr.f32.mxu0 0.0
      %7477 = vmatmul.mubr.f32.gmra.mrb[0].mxu0 %v7384
      %v7478 = vpop.f32.mrb[0].mxu0
      %v7479 = vadd.f32 %v7405, %v7478
      %v7480 = vpop.f32.mrb[0].mxu0
      %7481 = vmatprep.mubr.f32.mxu0 0.0
      %7482 = vmatmul.mubr.f32.gmra.mrb[0].mxu0 %v7385
      %v7483 = vpop.f32.mrb[0].mxu0
      %v7484 = vadd.f32 %v7405, %v7483
      %v7485 = vpop.f32.mrb[0].mxu0
      %7486 = vmatprep.mubr.f32.mxu0 0.0
      %7487 = vmatmul.mubr.f32.gmra.mrb[0].mxu0 %v7386
      %v7488 = vpop.f32.mrb[0].mxu0
      %v7489 = vadd.f32 %v7405, %v7488
      %v7490 = vpop.f32.mrb[0].mxu0
      %7491 = vmatprep.mubr.f32.mxu0 0.0
      %7492 = vmatmul.mubr.f32.gmra.mrb[0].mxu0 %v7387
      %v7493 = vpop.f32.mrb[0].mxu0
      %v7494 = vadd.f32 %v7405, %v7493
      %v7495 = vpop.f32.mrb[0].mxu0
      %7496 = vmatprep.mubr.f32.mxu0 0.0
      %7497 = vmatmul.mubr.f32.gmra.mrb[0].mxu0 %v7388
      %v7498 = vpop.f32.mrb[0].mxu0
      %v7499 = vadd.f32 %v7405, %v7498
      %v7500 = vpop.f32.mrb[0].mxu0
      %7501 = vmatprep.mubr.f32.mxu0 0.0
      %7502 = vmatmul.mubr.f32.gmra.mrb[0].mxu0 %v7389
      %v7503 = vpop.f32.mrb[0].mxu0
      %v7504 = vadd.f32 %v7405, %v7503
      %v7505 = vpop.f32.mrb[0].mxu0
      %7506 = vmatprep.mubr.f32.mxu0 0.0
      %7507 = vmatmul.mubr.f32.gmra.mrb[0].mxu0 %v7390
      %v7508 = vpop.f32.mrb[0].mxu0
      %v7509 = vadd.f32 %v7405, %v7508
      %v7510 = vpop.f32.mrb[0].mxu0
      %7511 = vmatprep.mubr.f32.mxu0 0.0
      %7512 = vmatmul.mubr.f32.gmra.mrb[0].mxu0 %v7391
      %v7513 = vpop.f32.mrb[0].mxu0
      %v7514 = vadd.f32 %v7405, %v7513
      %v7515 = vpop.f32.mrb[0].mxu0
      %7516 = vmatprep.mubr.f32.mxu0 0.0
      %7517 = vmatmul.mubr.f32.gmra.mrb[0].mxu0 %v7392
      %v7518 = vpop.f32.mrb[0].mxu0
      %v7519 = vadd.f32 %v7405, %v7518
      %v7520 = vpop.f32.mrb[0].mxu0
      %7521 = vmatprep.mubr.f32.mxu0 0.0
      %7522 = vmatmul.mubr.f32.gmra.mrb[0].mxu0 %v7393
      %v7523 = vpop.f32.mrb[0].mxu0
      %v7524 = vadd.f32 %v7405, %v7523
      %v7525 = vpop.f32.mrb[0].mxu0
      %7526 = vmatprep.mubr.f32.mxu0 0.0
      %7527 = vmatmul.mubr.f32.gmra.mrb[0].mxu0 %v7394
      %v7528 = vpop.f32.mrb[0].mxu0
      %v7529 = vadd.f32 %v7405, %v7528
      %v7530 = vpop.f32.mrb[0].mxu0
      %7531 = vmatprep.mubr.f32.mxu0 0.0
      %7532 = vmatmul.mubr.f32.gmra.mrb[0].mxu0 %v7395
      %v7533 = vpop.f32.mrb[0].mxu0
      %v7534 = vadd.f32 %v7405, %v7533
      %v7535 = vpop.f32.mrb[0].mxu0
      %7536 = vmatprep.mubr.f32.mxu0 0.0
      %7537 = vmatmul.mubr.f32.gmra.mrb[0].mxu0 %v7396
      %v7538 = vpop.f32.mrb[0].mxu0
      %v7539 = vadd.f32 %v7405, %v7538
      %v7540 = vpop.f32.mrb[0].mxu0
      %7541 = vmatprep.mubr.f32.mxu0 0.0
      %7542 = vmatmul.mubr.f32.gmra.mrb[0].mxu0 %v7397
      %v7543 = vpop.f32.mrb[0].mxu0
      %v7544 = vadd.f32 %v7405, %v7543
      %v7545 = vpop.f32.mrb[0].mxu0
      %7546 = vmatprep.mubr.f32.mxu0 0.0
      %7547 = vmatmul.mubr.f32.gmra.mrb[0].mxu0 %v7398
      %v7548 = vpop.f32.mrb[0].mxu0
      %v7549 = vadd.f32 %v7405, %v7548
      %v7550 = vpop.f32.mrb[0].mxu0
      %7551 = vdwg.mxu0
      %v7552 = vmax.f32 %v7474, 0.0
      %v7553 = vmax.f32 %v7479, 0.0
      %v7554 = vmax.f32 %v7484, 0.0
      %v7555 = vmax.f32 %v7489, 0.0
      %v7556 = vmax.f32 %v7494, 0.0
      %v7557 = vmax.f32 %v7499, 0.0
      %v7558 = vmax.f32 %v7504, 0.0
      %v7559 = vmax.f32 %v7509, 0.0
      %v7560 = vmax.f32 %v7514, 0.0
      %v7561 = vmax.f32 %v7519, 0.0
      %v7562 = vmax.f32 %v7524, 0.0
      %v7563 = vmax.f32 %v7529, 0.0
      %v7564 = vmax.f32 %v7534, 0.0
      %v7565 = vmax.f32 %v7539, 0.0
      %v7566 = vmax.f32 %v7544, 0.0
      %v7567 = vmax.f32 %v7549, 0.0
      %s7568 = scalar_lea.vmem %s4, 320
      %v7569 = vld [vmem:[%s7568] sm:$0xff]
      %v7570 = vld [vmem:[%s7568 + $0x8] sm:$0xff]
      %v7571 = vld [vmem:[%s7568 + $0x10] sm:$0xff]
      %v7572 = vld [vmem:[%s7568 + $0x18] sm:$0xff]
      %v7573 = vld [vmem:[%s7568 + $0x20] sm:$0xff]
      %v7574 = vld [vmem:[%s7568 + $0x28] sm:$0xff]
      %v7575 = vld [vmem:[%s7568 + $0x30] sm:$0xff]
      %v7576 = vld [vmem:[%s7568 + $0x38] sm:$0xff]
      %s7577 = scalar_lea.vmem %s5, 5
      %v7578 = vld [vmem:[%s7577] sm:$0x1]
      %v7580 = vlaneseq
      %v7581 = vshrl.u32 %v7580, 7
      %v7582 = vsub.s32 0, %v7581
      %v7583 = vrot.slane %v7578, %v7582
      %v7586 = vsel %vm1290, %v7552, 0
      %v7589 = vsel %vm1290, %v7553, 0
      %v7592 = vsel %vm1290, %v7554, 0
      %v7595 = vsel %vm1290, %v7555, 0
      %v7598 = vsel %vm1290, %v7556, 0
      %v7601 = vsel %vm1290, %v7557, 0
      %v7604 = vsel %vm1290, %v7558, 0
      %v7607 = vsel %vm1290, %v7559, 0
      %v7610 = vsel %vm1290, %v7560, 0
      %v7613 = vsel %vm1290, %v7561, 0
      %v7616 = vsel %vm1290, %v7562, 0
      %v7619 = vsel %vm1290, %v7563, 0
      %v7622 = vsel %vm1290, %v7564, 0
      %v7625 = vsel %vm1290, %v7565, 0
      %v7628 = vsel %vm1290, %v7566, 0
      %v7631 = vsel %vm1290, %v7567, 0
      %7633 = vmatprep.subr.mxu0 0.0
      %7634 = vmatpush1.msra.mxu0 %v7569
      %7635 = vmatprep.subr.mxu0 0.0
      %7636 = vmatpush1.msra.mxu0 %v7570
      %7637 = vmatprep.subr.mxu0 0.0
      %7638 = vmatpush1.msra.mxu0 %v7571
      %7639 = vmatprep.subr.mxu0 0.0
      %7640 = vmatpush1.msra.mxu0 %v7572
      %7641 = vmatprep.subr.mxu0 0.0
      %7642 = vmatpush1.msra.mxu0 %v7573
      %7643 = vmatprep.subr.mxu0 0.0
      %7644 = vmatpush1.msra.mxu0 %v7574
      %7645 = vmatprep.subr.mxu0 0.0
      %7646 = vmatpush1.msra.mxu0 %v7575
      %7647 = vmatprep.subr.mxu0 0.0
      %7648 = vmatpush1.msra.mxu0 %v7576
      %7649 = vmatprep.subr.mxu0 0.0
      %7650 = vmatpush1.msra.mxu0 0.0
      %7651 = vmatprep.subr.mxu0 0.0
      %7652 = vmatpush1.msra.mxu0 0.0
      %7653 = vmatprep.subr.mxu0 0.0
      %7654 = vmatpush1.msra.mxu0 0.0
      %7655 = vmatprep.subr.mxu0 0.0
      %7656 = vmatpush1.msra.mxu0 0.0
      %7657 = vmatprep.subr.mxu0 0.0
      %7658 = vmatpush1.msra.mxu0 0.0
      %7659 = vmatprep.subr.mxu0 0.0
      %7660 = vmatpush1.msra.mxu0 0.0
      %7661 = vmatprep.subr.mxu0 0.0
      %7662 = vmatpush1.msra.mxu0 0.0
      %7663 = vmatprep.subr.mxu0 0.0
      %7664 = vmatpush1.msra.mxu0 0.0
      %7665 = vmatprep.subr.mxu0 0.0
      %7666 = vmatpush1.msra.mxu0 0.0
      %7667 = vmatprep.subr.mxu0 0.0
      %7668 = vmatpush1.msra.mxu0 0.0
      %7669 = vmatprep.subr.mxu0 0.0
      %7670 = vmatpush1.msra.mxu0 0.0
      %7671 = vmatprep.subr.mxu0 0.0
      %7672 = vmatpush1.msra.mxu0 0.0
      %7673 = vmatprep.subr.mxu0 0.0
      %7674 = vmatpush1.msra.mxu0 0.0
      %7675 = vmatprep.subr.mxu0 0.0
      %7676 = vmatpush1.msra.mxu0 0.0
      %7677 = vmatprep.subr.mxu0 0.0
      %7678 = vmatpush1.msra.mxu0 0.0
      %7679 = vmatprep.subr.mxu0 0.0
      %7680 = vmatpush1.msra.mxu0 0.0
      %7681 = vmatprep.subr.mxu0 0.0
      %7682 = vmatpush1.msra.mxu0 0.0
      %7683 = vmatprep.subr.mxu0 0.0
      %7684 = vmatpush1.msra.mxu0 0.0
      %7685 = vmatprep.subr.mxu0 0.0
      %7686 = vmatpush1.msra.mxu0 0.0
      %7687 = vmatprep.subr.mxu0 0.0
      %7688 = vmatpush1.msra.mxu0 0.0
      %7689 = vmatprep.subr.mxu0 0.0
      %7690 = vmatpush1.msra.mxu0 0.0
      %7691 = vmatprep.subr.mxu0 0.0
      %7692 = vmatpush1.msra.mxu0 0.0
      %7693 = vmatprep.subr.mxu0 0.0
      %7694 = vmatpush1.msra.mxu0 0.0
      %7695 = vmatprep.subr.mxu0 0.0
      %7696 = vmatpush1.msra.mxu0 0.0
      %7697 = vmatprep.mubr.f32.mxu0 0.0
      %7698 = vmatmul.mubr.f32.gmra.mrb[0].mxu0 %v7586
      %v7699 = vpop.f32.mrb[0].mxu0
      %v7700 = vadd.f32 %v7583, %v7699
      %v7701 = vpop.f32.mrb[0].mxu0
      %7702 = vmatprep.mubr.f32.mxu0 0.0
      %7703 = vmatmul.mubr.f32.gmra.mrb[0].mxu0 %v7589
      %v7704 = vpop.f32.mrb[0].mxu0
      %v7705 = vadd.f32 %v7583, %v7704
      %v7706 = vpop.f32.mrb[0].mxu0
      %7707 = vmatprep.mubr.f32.mxu0 0.0
      %7708 = vmatmul.mubr.f32.gmra.mrb[0].mxu0 %v7592
      %v7709 = vpop.f32.mrb[0].mxu0
      %v7710 = vadd.f32 %v7583, %v7709
      %v7711 = vpop.f32.mrb[0].mxu0
      %7712 = vmatprep.mubr.f32.mxu0 0.0
      %7713 = vmatmul.mubr.f32.gmra.mrb[0].mxu0 %v7595
      %v7714 = vpop.f32.mrb[0].mxu0
      %v7715 = vadd.f32 %v7583, %v7714
      %v7716 = vpop.f32.mrb[0].mxu0
      %7717 = vmatprep.mubr.f32.mxu0 0.0
      %7718 = vmatmul.mubr.f32.gmra.mrb[0].mxu0 %v7598
      %v7719 = vpop.f32.mrb[0].mxu0
      %v7720 = vadd.f32 %v7583, %v7719
      %v7721 = vpop.f32.mrb[0].mxu0
      %7722 = vmatprep.mubr.f32.mxu0 0.0
      %7723 = vmatmul.mubr.f32.gmra.mrb[0].mxu0 %v7601
      %v7724 = vpop.f32.mrb[0].mxu0
      %v7725 = vadd.f32 %v7583, %v7724
      %v7726 = vpop.f32.mrb[0].mxu0
      %7727 = vmatprep.mubr.f32.mxu0 0.0
      %7728 = vmatmul.mubr.f32.gmra.mrb[0].mxu0 %v7604
      %v7729 = vpop.f32.mrb[0].mxu0
      %v7730 = vadd.f32 %v7583, %v7729
      %v7731 = vpop.f32.mrb[0].mxu0
      %7732 = vmatprep.mubr.f32.mxu0 0.0
      %7733 = vmatmul.mubr.f32.gmra.mrb[0].mxu0 %v7607
      %v7734 = vpop.f32.mrb[0].mxu0
      %v7735 = vadd.f32 %v7583, %v7734
      %v7736 = vpop.f32.mrb[0].mxu0
      %7737 = vmatprep.mubr.f32.mxu0 0.0
      %7738 = vmatmul.mubr.f32.gmra.mrb[0].mxu0 %v7610
      %v7739 = vpop.f32.mrb[0].mxu0
      %v7740 = vadd.f32 %v7583, %v7739
      %v7741 = vpop.f32.mrb[0].mxu0
      %7742 = vmatprep.mubr.f32.mxu0 0.0
      %7743 = vmatmul.mubr.f32.gmra.mrb[0].mxu0 %v7613
      %v7744 = vpop.f32.mrb[0].mxu0
      %v7745 = vadd.f32 %v7583, %v7744
      %v7746 = vpop.f32.mrb[0].mxu0
      %7747 = vmatprep.mubr.f32.mxu0 0.0
      %7748 = vmatmul.mubr.f32.gmra.mrb[0].mxu0 %v7616
      %v7749 = vpop.f32.mrb[0].mxu0
      %v7750 = vadd.f32 %v7583, %v7749
      %v7751 = vpop.f32.mrb[0].mxu0
      %7752 = vmatprep.mubr.f32.mxu0 0.0
      %7753 = vmatmul.mubr.f32.gmra.mrb[0].mxu0 %v7619
      %v7754 = vpop.f32.mrb[0].mxu0
      %v7755 = vadd.f32 %v7583, %v7754
      %v7756 = vpop.f32.mrb[0].mxu0
      %7757 = vmatprep.mubr.f32.mxu0 0.0
      %7758 = vmatmul.mubr.f32.gmra.mrb[0].mxu0 %v7622
      %v7759 = vpop.f32.mrb[0].mxu0
      %v7760 = vadd.f32 %v7583, %v7759
      %v7761 = vpop.f32.mrb[0].mxu0
      %7762 = vmatprep.mubr.f32.mxu0 0.0
      %7763 = vmatmul.mubr.f32.gmra.mrb[0].mxu0 %v7625
      %v7764 = vpop.f32.mrb[0].mxu0
      %v7765 = vadd.f32 %v7583, %v7764
      %v7766 = vpop.f32.mrb[0].mxu0
      %7767 = vmatprep.mubr.f32.mxu0 0.0
      %7768 = vmatmul.mubr.f32.gmra.mrb[0].mxu0 %v7628
      %v7769 = vpop.f32.mrb[0].mxu0
      %v7770 = vadd.f32 %v7583, %v7769
      %v7771 = vpop.f32.mrb[0].mxu0
      %7772 = vmatprep.mubr.f32.mxu0 0.0
      %7773 = vmatmul.mubr.f32.gmra.mrb[0].mxu0 %v7631
      %v7774 = vpop.f32.mrb[0].mxu0
      %v7775 = vadd.f32 %v7583, %v7774
      %v7776 = vpop.f32.mrb[0].mxu0
      %7777 = vdwg.mxu0
      %7778 = vst.msk [vmem:[#allocation3] sm:$0xff] %vm1484, %v7700
      %7779 = vst.msk [vmem:[#allocation3 + $0x8] sm:$0xff] %vm1484, %v7705
      %7780 = vst.msk [vmem:[#allocation3 + $0x10] sm:$0xff] %vm1484, %v7710
      %7781 = vst.msk [vmem:[#allocation3 + $0x18] sm:$0xff] %vm1484, %v7715
      %7782 = vst.msk [vmem:[#allocation3 + $0x20] sm:$0xff] %vm1484, %v7720
      %7783 = vst.msk [vmem:[#allocation3 + $0x28] sm:$0xff] %vm1484, %v7725
      %7784 = vst.msk [vmem:[#allocation3 + $0x30] sm:$0xff] %vm1484, %v7730
      %7785 = vst.msk [vmem:[#allocation3 + $0x38] sm:$0xff] %vm1484, %v7735
      %7786 = vst.msk [vmem:[#allocation3 + $0x40] sm:$0xff] %vm1484, %v7740
      %7787 = vst.msk [vmem:[#allocation3 + $0x48] sm:$0xff] %vm1484, %v7745
      %7788 = vst.msk [vmem:[#allocation3 + $0x50] sm:$0xff] %vm1484, %v7750
      %7789 = vst.msk [vmem:[#allocation3 + $0x58] sm:$0xff] %vm1484, %v7755
      %7790 = vst.msk [vmem:[#allocation3 + $0x60] sm:$0xff] %vm1484, %v7760
      %7791 = vst.msk [vmem:[#allocation3 + $0x68] sm:$0xff] %vm1484, %v7765
      %7792 = vst.msk [vmem:[#allocation3 + $0x70] sm:$0xff] %vm1484, %v7770
      %7793 = vst.msk [vmem:[#allocation3 + $0x78] sm:$0xff] %vm1484, %v7775
      %v7794 = vld [vmem:[%s6 + $0x50] sm:$0xff]
      %v7795 = vld [vmem:[%s6 + $0x58] sm:$0xff]
      %v7797 = vsel %vm1484, %v7700, 0
      %v7800 = vsel %vm1484, %v7705, 0
      %v7803 = vsel %vm1484, %v7710, 0
      %v7806 = vsel %vm1484, %v7715, 0
      %v7809 = vsel %vm1484, %v7720, 0
      %v7812 = vsel %vm1484, %v7725, 0
      %v7815 = vsel %vm1484, %v7730, 0
      %v7818 = vsel %vm1484, %v7735, 0
      %v7821 = vsel %vm1484, %v7740, 0
      %v7824 = vsel %vm1484, %v7745, 0
      %v7827 = vsel %vm1484, %v7750, 0
      %v7830 = vsel %vm1484, %v7755, 0
      %v7833 = vsel %vm1484, %v7760, 0
      %v7836 = vsel %vm1484, %v7765, 0
      %v7839 = vsel %vm1484, %v7770, 0
      %v7842 = vsel %vm1484, %v7775, 0
      %7844 = vmatprep.subr.mxu0 0.0
      %7845 = vmatpush1.msra.mxu0 %v7794
      %7846 = vmatprep.subr.mxu0 0.0
      %7847 = vmatpush1.msra.mxu0 %v7795
      %7848 = vmatprep.subr.mxu0 0.0
      %7849 = vmatpush1.msra.mxu0 0.0
      %7850 = vmatprep.subr.mxu0 0.0
      %7851 = vmatpush1.msra.mxu0 0.0
      %7852 = vmatprep.subr.mxu0 0.0
      %7853 = vmatpush1.msra.mxu0 0.0
      %7854 = vmatprep.subr.mxu0 0.0
      %7855 = vmatpush1.msra.mxu0 0.0
      %7856 = vmatprep.subr.mxu0 0.0
      %7857 = vmatpush1.msra.mxu0 0.0
      %7858 = vmatprep.subr.mxu0 0.0
      %7859 = vmatpush1.msra.mxu0 0.0
      %7860 = vmatprep.subr.mxu0 0.0
      %7861 = vmatpush1.msra.mxu0 0.0
      %7862 = vmatprep.subr.mxu0 0.0
      %7863 = vmatpush1.msra.mxu0 0.0
      %7864 = vmatprep.subr.mxu0 0.0
      %7865 = vmatpush1.msra.mxu0 0.0
      %7866 = vmatprep.subr.mxu0 0.0
      %7867 = vmatpush1.msra.mxu0 0.0
      %7868 = vmatprep.subr.mxu0 0.0
      %7869 = vmatpush1.msra.mxu0 0.0
      %7870 = vmatprep.subr.mxu0 0.0
      %7871 = vmatpush1.msra.mxu0 0.0
      %7872 = vmatprep.subr.mxu0 0.0
      %7873 = vmatpush1.msra.mxu0 0.0
      %7874 = vmatprep.subr.mxu0 0.0
      %7875 = vmatpush1.msra.mxu0 0.0
      %7876 = vmatprep.subr.mxu0 0.0
      %7877 = vmatpush1.msra.mxu0 0.0
      %7878 = vmatprep.subr.mxu0 0.0
      %7879 = vmatpush1.msra.mxu0 0.0
      %7880 = vmatprep.subr.mxu0 0.0
      %7881 = vmatpush1.msra.mxu0 0.0
      %7882 = vmatprep.subr.mxu0 0.0
      %7883 = vmatpush1.msra.mxu0 0.0
      %7884 = vmatprep.subr.mxu0 0.0
      %7885 = vmatpush1.msra.mxu0 0.0
      %7886 = vmatprep.subr.mxu0 0.0
      %7887 = vmatpush1.msra.mxu0 0.0
      %7888 = vmatprep.subr.mxu0 0.0
      %7889 = vmatpush1.msra.mxu0 0.0
      %7890 = vmatprep.subr.mxu0 0.0
      %7891 = vmatpush1.msra.mxu0 0.0
      %7892 = vmatprep.subr.mxu0 0.0
      %7893 = vmatpush1.msra.mxu0 0.0
      %7894 = vmatprep.subr.mxu0 0.0
      %7895 = vmatpush1.msra.mxu0 0.0
      %7896 = vmatprep.subr.mxu0 0.0
      %7897 = vmatpush1.msra.mxu0 0.0
      %7898 = vmatprep.subr.mxu0 0.0
      %7899 = vmatpush1.msra.mxu0 0.0
      %7900 = vmatprep.subr.mxu0 0.0
      %7901 = vmatpush1.msra.mxu0 0.0
      %7902 = vmatprep.subr.mxu0 0.0
      %7903 = vmatpush1.msra.mxu0 0.0
      %7904 = vmatprep.subr.mxu0 0.0
      %7905 = vmatpush1.msra.mxu0 0.0
      %7906 = vmatprep.subr.mxu0 0.0
      %7907 = vmatpush1.msra.mxu0 0.0
      %7908 = vmatprep.mubr.f32.mxu0 0.0
      %7909 = vmatmul.mubr.f32.gmra.mrb[0].mxu0 %v7797
      %v7910 = vpop.f32.mrb[0].mxu0
      %v7911 = vadd.f32 0.0, %v7910
      %v7912 = vpop.f32.mrb[0].mxu0
      %7913 = vmatprep.mubr.f32.mxu0 0.0
      %7914 = vmatmul.mubr.f32.gmra.mrb[0].mxu0 %v7800
      %v7915 = vpop.f32.mrb[0].mxu0
      %v7916 = vadd.f32 0.0, %v7915
      %v7917 = vpop.f32.mrb[0].mxu0
      %7918 = vmatprep.mubr.f32.mxu0 0.0
      %7919 = vmatmul.mubr.f32.gmra.mrb[0].mxu0 %v7803
      %v7920 = vpop.f32.mrb[0].mxu0
      %v7921 = vadd.f32 0.0, %v7920
      %v7922 = vpop.f32.mrb[0].mxu0
      %7923 = vmatprep.mubr.f32.mxu0 0.0
      %7924 = vmatmul.mubr.f32.gmra.mrb[0].mxu0 %v7806
      %v7925 = vpop.f32.mrb[0].mxu0
      %v7926 = vadd.f32 0.0, %v7925
      %v7927 = vpop.f32.mrb[0].mxu0
      %7928 = vmatprep.mubr.f32.mxu0 0.0
      %7929 = vmatmul.mubr.f32.gmra.mrb[0].mxu0 %v7809
      %v7930 = vpop.f32.mrb[0].mxu0
      %v7931 = vadd.f32 0.0, %v7930
      %v7932 = vpop.f32.mrb[0].mxu0
      %7933 = vmatprep.mubr.f32.mxu0 0.0
      %7934 = vmatmul.mubr.f32.gmra.mrb[0].mxu0 %v7812
      %v7935 = vpop.f32.mrb[0].mxu0
      %v7936 = vadd.f32 0.0, %v7935
      %v7937 = vpop.f32.mrb[0].mxu0
      %7938 = vmatprep.mubr.f32.mxu0 0.0
      %7939 = vmatmul.mubr.f32.gmra.mrb[0].mxu0 %v7815
      %v7940 = vpop.f32.mrb[0].mxu0
      %v7941 = vadd.f32 0.0, %v7940
      %v7942 = vpop.f32.mrb[0].mxu0
      %7943 = vmatprep.mubr.f32.mxu0 0.0
      %7944 = vmatmul.mubr.f32.gmra.mrb[0].mxu0 %v7818
      %v7945 = vpop.f32.mrb[0].mxu0
      %v7946 = vadd.f32 0.0, %v7945
      %v7947 = vpop.f32.mrb[0].mxu0
      %7948 = vmatprep.mubr.f32.mxu0 0.0
      %7949 = vmatmul.mubr.f32.gmra.mrb[0].mxu0 %v7821
      %v7950 = vpop.f32.mrb[0].mxu0
      %v7951 = vadd.f32 0.0, %v7950
      %v7952 = vpop.f32.mrb[0].mxu0
      %7953 = vmatprep.mubr.f32.mxu0 0.0
      %7954 = vmatmul.mubr.f32.gmra.mrb[0].mxu0 %v7824
      %v7955 = vpop.f32.mrb[0].mxu0
      %v7956 = vadd.f32 0.0, %v7955
      %v7957 = vpop.f32.mrb[0].mxu0
      %7958 = vmatprep.mubr.f32.mxu0 0.0
      %7959 = vmatmul.mubr.f32.gmra.mrb[0].mxu0 %v7827
      %v7960 = vpop.f32.mrb[0].mxu0
      %v7961 = vadd.f32 0.0, %v7960
      %v7962 = vpop.f32.mrb[0].mxu0
      %7963 = vmatprep.mubr.f32.mxu0 0.0
      %7964 = vmatmul.mubr.f32.gmra.mrb[0].mxu0 %v7830
      %v7965 = vpop.f32.mrb[0].mxu0
      %v7966 = vadd.f32 0.0, %v7965
      %v7967 = vpop.f32.mrb[0].mxu0
      %7968 = vmatprep.mubr.f32.mxu0 0.0
      %7969 = vmatmul.mubr.f32.gmra.mrb[0].mxu0 %v7833
      %v7970 = vpop.f32.mrb[0].mxu0
      %v7971 = vadd.f32 0.0, %v7970
      %v7972 = vpop.f32.mrb[0].mxu0
      %7973 = vmatprep.mubr.f32.mxu0 0.0
      %7974 = vmatmul.mubr.f32.gmra.mrb[0].mxu0 %v7836
      %v7975 = vpop.f32.mrb[0].mxu0
      %v7976 = vadd.f32 0.0, %v7975
      %v7977 = vpop.f32.mrb[0].mxu0
      %7978 = vmatprep.mubr.f32.mxu0 0.0
      %7979 = vmatmul.mubr.f32.gmra.mrb[0].mxu0 %v7839
      %v7980 = vpop.f32.mrb[0].mxu0
      %v7981 = vadd.f32 0.0, %v7980
      %v7982 = vpop.f32.mrb[0].mxu0
      %7983 = vmatprep.mubr.f32.mxu0 0.0
      %7984 = vmatmul.mubr.f32.gmra.mrb[0].mxu0 %v7842
      %v7985 = vpop.f32.mrb[0].mxu0
      %v7986 = vadd.f32 0.0, %v7985
      %v7987 = vpop.f32.mrb[0].mxu0
      %7988 = vdwg.mxu0
      %v7989 = vadd.f32 %v6910, %v7911
      %v7990 = vadd.f32 %v6911, %v7916
      %v7991 = vadd.f32 %v6912, %v7921
      %v7992 = vadd.f32 %v6913, %v7926
      %v7993 = vadd.f32 %v6914, %v7931
      %v7994 = vadd.f32 %v6915, %v7936
      %v7995 = vadd.f32 %v6916, %v7941
      %v7996 = vadd.f32 %v6917, %v7946
      %v7997 = vadd.f32 %v6918, %v7951
      %v7998 = vadd.f32 %v6919, %v7956
      %v7999 = vadd.f32 %v6920, %v7961
      %v8000 = vadd.f32 %v6921, %v7966
      %v8001 = vadd.f32 %v6922, %v7971
      %v8002 = vadd.f32 %v6923, %v7976
      %v8003 = vadd.f32 %v6924, %v7981
      %v8004 = vadd.f32 %v6925, %v7986
      %8005 = vst.msk [vmem:[#allocation2] sm:$0xff] %vm1484, 0.0
      %8006 = vst.msk [vmem:[#allocation2 + $0x8] sm:$0xff] %vm1484, 0.0
      %8007 = vst.msk [vmem:[#allocation2 + $0x10] sm:$0xff] %vm1484, 0.0
      %8008 = vst.msk [vmem:[#allocation2 + $0x18] sm:$0xff] %vm1484, 0.0
      %8009 = vst.msk [vmem:[#allocation2 + $0x20] sm:$0xff] %vm1484, 0.0
      %8010 = vst.msk [vmem:[#allocation2 + $0x28] sm:$0xff] %vm1484, 0.0
      %8011 = vst.msk [vmem:[#allocation2 + $0x30] sm:$0xff] %vm1484, 0.0
      %8012 = vst.msk [vmem:[#allocation2 + $0x38] sm:$0xff] %vm1484, 0.0
      %8013 = vst.msk [vmem:[#allocation2 + $0x40] sm:$0xff] %vm1484, 0.0
      %8014 = vst.msk [vmem:[#allocation2 + $0x48] sm:$0xff] %vm1484, 0.0
      %8015 = vst.msk [vmem:[#allocation2 + $0x50] sm:$0xff] %vm1484, 0.0
      %8016 = vst.msk [vmem:[#allocation2 + $0x58] sm:$0xff] %vm1484, 0.0
      %8017 = vst.msk [vmem:[#allocation2 + $0x60] sm:$0xff] %vm1484, 0.0
      %8018 = vst.msk [vmem:[#allocation2 + $0x68] sm:$0xff] %vm1484, 0.0
      %8019 = vst.msk [vmem:[#allocation2 + $0x70] sm:$0xff] %vm1484, 0.0
      %8020 = vst.msk [vmem:[#allocation2 + $0x78] sm:$0xff] %vm1484, 0.0
      %8021 = vst.msk [vmem:[#allocation2] sm:$0xff] %vm1620, 0.0
      %8022 = vst.msk [vmem:[#allocation2 + $0x8] sm:$0xff] %vm1620, 0.0
      %8023 = vst.msk [vmem:[#allocation2 + $0x10] sm:$0xff] %vm1620, 0.0
      %8024 = vst.msk [vmem:[#allocation2 + $0x18] sm:$0xff] %vm1620, 0.0
      %8025 = vst.msk [vmem:[#allocation2 + $0x20] sm:$0xff] %vm1620, 0.0
      %8026 = vst.msk [vmem:[#allocation2 + $0x28] sm:$0xff] %vm1620, 0.0
      %8027 = vst.msk [vmem:[#allocation2 + $0x30] sm:$0xff] %vm1620, 0.0
      %8028 = vst.msk [vmem:[#allocation2 + $0x38] sm:$0xff] %vm1620, 0.0
      %8029 = vst.msk [vmem:[#allocation2 + $0x40] sm:$0xff] %vm1620, 0.0
      %8030 = vst.msk [vmem:[#allocation2 + $0x48] sm:$0xff] %vm1620, 0.0
      %8031 = vst.msk [vmem:[#allocation2 + $0x50] sm:$0xff] %vm1620, 0.0
      %8032 = vst.msk [vmem:[#allocation2 + $0x58] sm:$0xff] %vm1620, 0.0
      %8033 = vst.msk [vmem:[#allocation2 + $0x60] sm:$0xff] %vm1620, 0.0
      %8034 = vst.msk [vmem:[#allocation2 + $0x68] sm:$0xff] %vm1620, 0.0
      %8035 = vst.msk [vmem:[#allocation2 + $0x70] sm:$0xff] %vm1620, 0.0
      %8036 = vst.msk [vmem:[#allocation2 + $0x78] sm:$0xff] %vm1620, 0.0
      %8037 = vst.msk [vmem:[#allocation2] sm:$0xff] %vm1720, 0.0
      %8038 = vst.msk [vmem:[#allocation2 + $0x8] sm:$0xff] %vm1720, 0.0
      %8039 = vst.msk [vmem:[#allocation2 + $0x10] sm:$0xff] %vm1720, 0.0
      %8040 = vst.msk [vmem:[#allocation2 + $0x18] sm:$0xff] %vm1720, 0.0
      %8041 = vst.msk [vmem:[#allocation2 + $0x20] sm:$0xff] %vm1720, 0.0
      %8042 = vst.msk [vmem:[#allocation2 + $0x28] sm:$0xff] %vm1720, 0.0
      %8043 = vst.msk [vmem:[#allocation2 + $0x30] sm:$0xff] %vm1720, 0.0
      %8044 = vst.msk [vmem:[#allocation2 + $0x38] sm:$0xff] %vm1720, 0.0
      %8045 = vst.msk [vmem:[#allocation2 + $0x40] sm:$0xff] %vm1720, 0.0
      %8046 = vst.msk [vmem:[#allocation2 + $0x48] sm:$0xff] %vm1720, 0.0
      %8047 = vst.msk [vmem:[#allocation2 + $0x50] sm:$0xff] %vm1720, 0.0
      %8048 = vst.msk [vmem:[#allocation2 + $0x58] sm:$0xff] %vm1720, 0.0
      %v8049 = vld [vmem:[#allocation3] sm:$0xff]
      %v8050 = vld [vmem:[#allocation3 + $0x8] sm:$0xff]
      %v8051 = vld [vmem:[#allocation3 + $0x10] sm:$0xff]
      %v8052 = vld [vmem:[#allocation3 + $0x18] sm:$0xff]
      %8057 = vrot.lane.b32.xlu0 %v8049, 32
      %v8058 = vpop.permute.xlu0 %8057
      %8059 = vrot.lane.b32.xlu0 %v8050, 32
      %v8060 = vpop.permute.xlu0 %8059
      %8061 = vrot.lane.b32.xlu0 %v8051, 32
      %v8062 = vpop.permute.xlu0 %8061
      %8063 = vrot.lane.b32.xlu0 %v8052, 32
      %v8064 = vpop.permute.xlu0 %8063
      %8069 = vst.msk [vmem:[#allocation2 + $0x60] sm:$0xff] %vm1720, %v8058
      %8070 = vst.msk [vmem:[#allocation2 + $0x68] sm:$0xff] %vm1720, %v8060
      %8071 = vst.msk [vmem:[#allocation2 + $0x70] sm:$0xff] %vm1720, %v8062
      %8072 = vst.msk [vmem:[#allocation2 + $0x78] sm:$0xff] %vm1720, %v8064
      %8073 = vst.msk [vmem:[#allocation2] sm:$0xff] %vm1820, 0.0
      %8074 = vst.msk [vmem:[#allocation2 + $0x8] sm:$0xff] %vm1820, 0.0
      %8075 = vst.msk [vmem:[#allocation2 + $0x10] sm:$0xff] %vm1820, 0.0
      %8076 = vst.msk [vmem:[#allocation2 + $0x18] sm:$0xff] %vm1820, 0.0
      %v8077 = vld [vmem:[#allocation3] sm:$0xff]
      %v8078 = vld [vmem:[#allocation3 + $0x8] sm:$0xff]
      %v8079 = vld [vmem:[#allocation3 + $0x10] sm:$0xff]
      %v8080 = vld [vmem:[#allocation3 + $0x18] sm:$0xff]
      %v8081 = vld [vmem:[#allocation3 + $0x20] sm:$0xff]
      %v8082 = vld [vmem:[#allocation3 + $0x28] sm:$0xff]
      %v8083 = vld [vmem:[#allocation3 + $0x30] sm:$0xff]
      %v8084 = vld [vmem:[#allocation3 + $0x38] sm:$0xff]
      %v8085 = vld [vmem:[#allocation3 + $0x40] sm:$0xff]
      %v8086 = vld [vmem:[#allocation3 + $0x48] sm:$0xff]
      %v8087 = vld [vmem:[#allocation3 + $0x50] sm:$0xff]
      %v8088 = vld [vmem:[#allocation3 + $0x58] sm:$0xff]
      %8101 = vrot.lane.b32.xlu0 %v8077, 48
      %v8102 = vpop.permute.xlu0 %8101
      %8103 = vrot.lane.b32.xlu0 %v8078, 48
      %v8104 = vpop.permute.xlu0 %8103
      %8105 = vrot.lane.b32.xlu0 %v8079, 48
      %v8106 = vpop.permute.xlu0 %8105
      %8107 = vrot.lane.b32.xlu0 %v8080, 48
      %v8108 = vpop.permute.xlu0 %8107
      %8109 = vrot.lane.b32.xlu0 %v8081, 48
      %v8110 = vpop.permute.xlu0 %8109
      %8111 = vrot.lane.b32.xlu0 %v8082, 48
      %v8112 = vpop.permute.xlu0 %8111
      %8113 = vrot.lane.b32.xlu0 %v8083, 48
      %v8114 = vpop.permute.xlu0 %8113
      %8115 = vrot.lane.b32.xlu0 %v8084, 48
      %v8116 = vpop.permute.xlu0 %8115
      %8117 = vrot.lane.b32.xlu0 %v8085, 48
      %v8118 = vpop.permute.xlu0 %8117
      %8119 = vrot.lane.b32.xlu0 %v8086, 48
      %v8120 = vpop.permute.xlu0 %8119
      %8121 = vrot.lane.b32.xlu0 %v8087, 48
      %v8122 = vpop.permute.xlu0 %8121
      %8123 = vrot.lane.b32.xlu0 %v8088, 48
      %v8124 = vpop.permute.xlu0 %8123
      %8137 = vst.msk [vmem:[#allocation2 + $0x20] sm:$0xff] %vm1820, %v8102
      %8138 = vst.msk [vmem:[#allocation2 + $0x28] sm:$0xff] %vm1820, %v8104
      %8139 = vst.msk [vmem:[#allocation2 + $0x30] sm:$0xff] %vm1820, %v8106
      %8140 = vst.msk [vmem:[#allocation2 + $0x38] sm:$0xff] %vm1820, %v8108
      %8141 = vst.msk [vmem:[#allocation2 + $0x40] sm:$0xff] %vm1820, %v8110
      %8142 = vst.msk [vmem:[#allocation2 + $0x48] sm:$0xff] %vm1820, %v8112
      %8143 = vst.msk [vmem:[#allocation2 + $0x50] sm:$0xff] %vm1820, %v8114
      %8144 = vst.msk [vmem:[#allocation2 + $0x58] sm:$0xff] %vm1820, %v8116
      %8145 = vst.msk [vmem:[#allocation2 + $0x60] sm:$0xff] %vm1820, %v8118
      %8146 = vst.msk [vmem:[#allocation2 + $0x68] sm:$0xff] %vm1820, %v8120
      %8147 = vst.msk [vmem:[#allocation2 + $0x70] sm:$0xff] %vm1820, %v8122
      %8148 = vst.msk [vmem:[#allocation2 + $0x78] sm:$0xff] %vm1820, %v8124
      %8149 = vst.msk [vmem:[#allocation2 + $0x60] sm:$0xff] %vm1920, 0.0
      %8150 = vst.msk [vmem:[#allocation2 + $0x68] sm:$0xff] %vm1920, 0.0
      %8151 = vst.msk [vmem:[#allocation2 + $0x70] sm:$0xff] %vm1920, 0.0
      %8152 = vst.msk [vmem:[#allocation2 + $0x78] sm:$0xff] %vm1920, 0.0
      %v8153 = vld [vmem:[#allocation3 + $0x20] sm:$0xff]
      %v8154 = vld [vmem:[#allocation3 + $0x28] sm:$0xff]
      %v8155 = vld [vmem:[#allocation3 + $0x30] sm:$0xff]
      %v8156 = vld [vmem:[#allocation3 + $0x38] sm:$0xff]
      %v8157 = vld [vmem:[#allocation3 + $0x40] sm:$0xff]
      %v8158 = vld [vmem:[#allocation3 + $0x48] sm:$0xff]
      %v8159 = vld [vmem:[#allocation3 + $0x50] sm:$0xff]
      %v8160 = vld [vmem:[#allocation3 + $0x58] sm:$0xff]
      %v8161 = vld [vmem:[#allocation3 + $0x60] sm:$0xff]
      %v8162 = vld [vmem:[#allocation3 + $0x68] sm:$0xff]
      %v8163 = vld [vmem:[#allocation3 + $0x70] sm:$0xff]
      %v8164 = vld [vmem:[#allocation3 + $0x78] sm:$0xff]
      %8177 = vrot.lane.b32.xlu0 %v8153, 64
      %v8178 = vpop.permute.xlu0 %8177
      %8179 = vrot.lane.b32.xlu0 %v8154, 64
      %v8180 = vpop.permute.xlu0 %8179
      %8181 = vrot.lane.b32.xlu0 %v8155, 64
      %v8182 = vpop.permute.xlu0 %8181
      %8183 = vrot.lane.b32.xlu0 %v8156, 64
      %v8184 = vpop.permute.xlu0 %8183
      %8185 = vrot.lane.b32.xlu0 %v8157, 64
      %v8186 = vpop.permute.xlu0 %8185
      %8187 = vrot.lane.b32.xlu0 %v8158, 64
      %v8188 = vpop.permute.xlu0 %8187
      %8189 = vrot.lane.b32.xlu0 %v8159, 64
      %v8190 = vpop.permute.xlu0 %8189
      %8191 = vrot.lane.b32.xlu0 %v8160, 64
      %v8192 = vpop.permute.xlu0 %8191
      %8193 = vrot.lane.b32.xlu0 %v8161, 64
      %v8194 = vpop.permute.xlu0 %8193
      %8195 = vrot.lane.b32.xlu0 %v8162, 64
      %v8196 = vpop.permute.xlu0 %8195
      %8197 = vrot.lane.b32.xlu0 %v8163, 64
      %v8198 = vpop.permute.xlu0 %8197
      %8199 = vrot.lane.b32.xlu0 %v8164, 64
      %v8200 = vpop.permute.xlu0 %8199
      %8213 = vst.msk [vmem:[#allocation2] sm:$0xff] %vm1920, %v8178
      %8214 = vst.msk [vmem:[#allocation2 + $0x8] sm:$0xff] %vm1920, %v8180
      %8215 = vst.msk [vmem:[#allocation2 + $0x10] sm:$0xff] %vm1920, %v8182
      %8216 = vst.msk [vmem:[#allocation2 + $0x18] sm:$0xff] %vm1920, %v8184
      %8217 = vst.msk [vmem:[#allocation2 + $0x20] sm:$0xff] %vm1920, %v8186
      %8218 = vst.msk [vmem:[#allocation2 + $0x28] sm:$0xff] %vm1920, %v8188
      %8219 = vst.msk [vmem:[#allocation2 + $0x30] sm:$0xff] %vm1920, %v8190
      %8220 = vst.msk [vmem:[#allocation2 + $0x38] sm:$0xff] %vm1920, %v8192
      %8221 = vst.msk [vmem:[#allocation2 + $0x40] sm:$0xff] %vm1920, %v8194
      %8222 = vst.msk [vmem:[#allocation2 + $0x48] sm:$0xff] %vm1920, %v8196
      %8223 = vst.msk [vmem:[#allocation2 + $0x50] sm:$0xff] %vm1920, %v8198
      %8224 = vst.msk [vmem:[#allocation2 + $0x58] sm:$0xff] %vm1920, %v8200
      %8225 = vst.msk [vmem:[#allocation2 + $0x20] sm:$0xff] %vm2020, 0.0
      %8226 = vst.msk [vmem:[#allocation2 + $0x28] sm:$0xff] %vm2020, 0.0
      %8227 = vst.msk [vmem:[#allocation2 + $0x30] sm:$0xff] %vm2020, 0.0
      %8228 = vst.msk [vmem:[#allocation2 + $0x38] sm:$0xff] %vm2020, 0.0
      %8229 = vst.msk [vmem:[#allocation2 + $0x40] sm:$0xff] %vm2020, 0.0
      %8230 = vst.msk [vmem:[#allocation2 + $0x48] sm:$0xff] %vm2020, 0.0
      %8231 = vst.msk [vmem:[#allocation2 + $0x50] sm:$0xff] %vm2020, 0.0
      %8232 = vst.msk [vmem:[#allocation2 + $0x58] sm:$0xff] %vm2020, 0.0
      %8233 = vst.msk [vmem:[#allocation2 + $0x60] sm:$0xff] %vm2020, 0.0
      %8234 = vst.msk [vmem:[#allocation2 + $0x68] sm:$0xff] %vm2020, 0.0
      %8235 = vst.msk [vmem:[#allocation2 + $0x70] sm:$0xff] %vm2020, 0.0
      %8236 = vst.msk [vmem:[#allocation2 + $0x78] sm:$0xff] %vm2020, 0.0
      %v8237 = vld [vmem:[#allocation3 + $0x60] sm:$0xff]
      %v8238 = vld [vmem:[#allocation3 + $0x68] sm:$0xff]
      %v8239 = vld [vmem:[#allocation3 + $0x70] sm:$0xff]
      %v8240 = vld [vmem:[#allocation3 + $0x78] sm:$0xff]
      %8245 = vrot.lane.b32.xlu0 %v8237, 80
      %v8246 = vpop.permute.xlu0 %8245
      %8247 = vrot.lane.b32.xlu0 %v8238, 80
      %v8248 = vpop.permute.xlu0 %8247
      %8249 = vrot.lane.b32.xlu0 %v8239, 80
      %v8250 = vpop.permute.xlu0 %8249
      %8251 = vrot.lane.b32.xlu0 %v8240, 80
      %v8252 = vpop.permute.xlu0 %8251
      %8257 = vst.msk [vmem:[#allocation2] sm:$0xff] %vm2020, %v8246
      %8258 = vst.msk [vmem:[#allocation2 + $0x8] sm:$0xff] %vm2020, %v8248
      %8259 = vst.msk [vmem:[#allocation2 + $0x10] sm:$0xff] %vm2020, %v8250
      %8260 = vst.msk [vmem:[#allocation2 + $0x18] sm:$0xff] %vm2020, %v8252
      %8261 = vst.msk [vmem:[#allocation2] sm:$0xff] %vm2120, 0.0
      %8262 = vst.msk [vmem:[#allocation2 + $0x8] sm:$0xff] %vm2120, 0.0
      %8263 = vst.msk [vmem:[#allocation2 + $0x10] sm:$0xff] %vm2120, 0.0
      %8264 = vst.msk [vmem:[#allocation2 + $0x18] sm:$0xff] %vm2120, 0.0
      %8265 = vst.msk [vmem:[#allocation2 + $0x20] sm:$0xff] %vm2120, 0.0
      %8266 = vst.msk [vmem:[#allocation2 + $0x28] sm:$0xff] %vm2120, 0.0
      %8267 = vst.msk [vmem:[#allocation2 + $0x30] sm:$0xff] %vm2120, 0.0
      %8268 = vst.msk [vmem:[#allocation2 + $0x38] sm:$0xff] %vm2120, 0.0
      %8269 = vst.msk [vmem:[#allocation2 + $0x40] sm:$0xff] %vm2120, 0.0
      %8270 = vst.msk [vmem:[#allocation2 + $0x48] sm:$0xff] %vm2120, 0.0
      %8271 = vst.msk [vmem:[#allocation2 + $0x50] sm:$0xff] %vm2120, 0.0
      %8272 = vst.msk [vmem:[#allocation2 + $0x58] sm:$0xff] %vm2120, 0.0
      %8273 = vst.msk [vmem:[#allocation2 + $0x60] sm:$0xff] %vm2120, 0.0
      %8274 = vst.msk [vmem:[#allocation2 + $0x68] sm:$0xff] %vm2120, 0.0
      %8275 = vst.msk [vmem:[#allocation2 + $0x70] sm:$0xff] %vm2120, 0.0
      %8276 = vst.msk [vmem:[#allocation2 + $0x78] sm:$0xff] %vm2120, 0.0
      %8277 = vst.msk [vmem:[#allocation2] sm:$0xff] %vm2220, 0.0
      %8278 = vst.msk [vmem:[#allocation2 + $0x8] sm:$0xff] %vm2220, 0.0
      %8279 = vst.msk [vmem:[#allocation2 + $0x10] sm:$0xff] %vm2220, 0.0
      %8280 = vst.msk [vmem:[#allocation2 + $0x18] sm:$0xff] %vm2220, 0.0
      %8281 = vst.msk [vmem:[#allocation2 + $0x20] sm:$0xff] %vm2220, 0.0
      %8282 = vst.msk [vmem:[#allocation2 + $0x28] sm:$0xff] %vm2220, 0.0
      %8283 = vst.msk [vmem:[#allocation2 + $0x30] sm:$0xff] %vm2220, 0.0
      %8284 = vst.msk [vmem:[#allocation2 + $0x38] sm:$0xff] %vm2220, 0.0
      %8285 = vst.msk [vmem:[#allocation2 + $0x40] sm:$0xff] %vm2220, 0.0
      %8286 = vst.msk [vmem:[#allocation2 + $0x48] sm:$0xff] %vm2220, 0.0
      %8287 = vst.msk [vmem:[#allocation2 + $0x50] sm:$0xff] %vm2220, 0.0
      %8288 = vst.msk [vmem:[#allocation2 + $0x58] sm:$0xff] %vm2220, 0.0
      %8289 = vst.msk [vmem:[#allocation2 + $0x60] sm:$0xff] %vm2220, 0.0
      %8290 = vst.msk [vmem:[#allocation2 + $0x68] sm:$0xff] %vm2220, 0.0
      %8291 = vst.msk [vmem:[#allocation2 + $0x70] sm:$0xff] %vm2220, 0.0
      %8292 = vst.msk [vmem:[#allocation2 + $0x78] sm:$0xff] %vm2220, 0.0
      %s8293 = scalar_lea.vmem %s2, 640
      %v8294 = vld [vmem:[%s8293] sm:$0xff]
      %v8295 = vld [vmem:[%s8293 + $0x8] sm:$0xff]
      %v8296 = vld [vmem:[%s8293 + $0x10] sm:$0xff]
      %v8297 = vld [vmem:[%s8293 + $0x18] sm:$0xff]
      %v8298 = vld [vmem:[%s8293 + $0x20] sm:$0xff]
      %v8299 = vld [vmem:[%s8293 + $0x28] sm:$0xff]
      %v8300 = vld [vmem:[%s8293 + $0x30] sm:$0xff]
      %v8301 = vld [vmem:[%s8293 + $0x38] sm:$0xff]
      %v8302 = vld [vmem:[%s8293 + $0x40] sm:$0xff]
      %v8303 = vld [vmem:[%s8293 + $0x48] sm:$0xff]
      %v8304 = vld [vmem:[%s8293 + $0x50] sm:$0xff]
      %v8305 = vld [vmem:[%s8293 + $0x58] sm:$0xff]
      %v8306 = vld [vmem:[%s8293 + $0x60] sm:$0xff]
      %v8307 = vld [vmem:[%s8293 + $0x68] sm:$0xff]
      %v8308 = vld [vmem:[%s8293 + $0x70] sm:$0xff]
      %v8309 = vld [vmem:[%s8293 + $0x78] sm:$0xff]
      %v8310 = vld [vmem:[#allocation2] sm:$0xff]
      %v8311 = vld [vmem:[#allocation2 + $0x8] sm:$0xff]
      %v8312 = vld [vmem:[#allocation2 + $0x10] sm:$0xff]
      %v8313 = vld [vmem:[#allocation2 + $0x18] sm:$0xff]
      %v8314 = vld [vmem:[#allocation2 + $0x20] sm:$0xff]
      %v8315 = vld [vmem:[#allocation2 + $0x28] sm:$0xff]
      %v8316 = vld [vmem:[#allocation2 + $0x30] sm:$0xff]
      %v8317 = vld [vmem:[#allocation2 + $0x38] sm:$0xff]
      %v8318 = vld [vmem:[#allocation2 + $0x40] sm:$0xff]
      %v8319 = vld [vmem:[#allocation2 + $0x48] sm:$0xff]
      %v8320 = vld [vmem:[#allocation2 + $0x50] sm:$0xff]
      %v8321 = vld [vmem:[#allocation2 + $0x58] sm:$0xff]
      %v8322 = vld [vmem:[#allocation2 + $0x60] sm:$0xff]
      %v8323 = vld [vmem:[#allocation2 + $0x68] sm:$0xff]
      %v8324 = vld [vmem:[#allocation2 + $0x70] sm:$0xff]
      %v8325 = vld [vmem:[#allocation2 + $0x78] sm:$0xff]
      %s8326 = scalar_lea.vmem %s3, 6
      %v8327 = vld [vmem:[%s8326] sm:$0x1]
      %v8329 = vlaneseq
      %v8330 = vshrl.u32 %v8329, 7
      %v8331 = vsub.s32 0, %v8330
      %v8332 = vrot.slane %v8327, %v8331
      %8334 = vmatprep.subr.mxu0 0.0
      %8335 = vmatpush1.msra.mxu0 %v8294
      %8336 = vmatprep.subr.mxu0 0.0
      %8337 = vmatpush1.msra.mxu0 %v8295
      %8338 = vmatprep.subr.mxu0 0.0
      %8339 = vmatpush1.msra.mxu0 %v8296
      %8340 = vmatprep.subr.mxu0 0.0
      %8341 = vmatpush1.msra.mxu0 %v8297
      %8342 = vmatprep.subr.mxu0 0.0
      %8343 = vmatpush1.msra.mxu0 %v8298
      %8344 = vmatprep.subr.mxu0 0.0
      %8345 = vmatpush1.msra.mxu0 %v8299
      %8346 = vmatprep.subr.mxu0 0.0
      %8347 = vmatpush1.msra.mxu0 %v8300
      %8348 = vmatprep.subr.mxu0 0.0
      %8349 = vmatpush1.msra.mxu0 %v8301
      %8350 = vmatprep.subr.mxu0 0.0
      %8351 = vmatpush1.msra.mxu0 %v8302
      %8352 = vmatprep.subr.mxu0 0.0
      %8353 = vmatpush1.msra.mxu0 %v8303
      %8354 = vmatprep.subr.mxu0 0.0
      %8355 = vmatpush1.msra.mxu0 %v8304
      %8356 = vmatprep.subr.mxu0 0.0
      %8357 = vmatpush1.msra.mxu0 %v8305
      %8358 = vmatprep.subr.mxu0 0.0
      %8359 = vmatpush1.msra.mxu0 %v8306
      %8360 = vmatprep.subr.mxu0 0.0
      %8361 = vmatpush1.msra.mxu0 %v8307
      %8362 = vmatprep.subr.mxu0 0.0
      %8363 = vmatpush1.msra.mxu0 %v8308
      %8364 = vmatprep.subr.mxu0 0.0
      %8365 = vmatpush1.msra.mxu0 %v8309
      %8366 = vmatprep.subr.mxu0 0.0
      %8367 = vmatpush1.msra.mxu0 0.0
      %8368 = vmatprep.subr.mxu0 0.0
      %8369 = vmatpush1.msra.mxu0 0.0
      %8370 = vmatprep.subr.mxu0 0.0
      %8371 = vmatpush1.msra.mxu0 0.0
      %8372 = vmatprep.subr.mxu0 0.0
      %8373 = vmatpush1.msra.mxu0 0.0
      %8374 = vmatprep.subr.mxu0 0.0
      %8375 = vmatpush1.msra.mxu0 0.0
      %8376 = vmatprep.subr.mxu0 0.0
      %8377 = vmatpush1.msra.mxu0 0.0
      %8378 = vmatprep.subr.mxu0 0.0
      %8379 = vmatpush1.msra.mxu0 0.0
      %8380 = vmatprep.subr.mxu0 0.0
      %8381 = vmatpush1.msra.mxu0 0.0
      %8382 = vmatprep.subr.mxu0 0.0
      %8383 = vmatpush1.msra.mxu0 0.0
      %8384 = vmatprep.subr.mxu0 0.0
      %8385 = vmatpush1.msra.mxu0 0.0
      %8386 = vmatprep.subr.mxu0 0.0
      %8387 = vmatpush1.msra.mxu0 0.0
      %8388 = vmatprep.subr.mxu0 0.0
      %8389 = vmatpush1.msra.mxu0 0.0
      %8390 = vmatprep.subr.mxu0 0.0
      %8391 = vmatpush1.msra.mxu0 0.0
      %8392 = vmatprep.subr.mxu0 0.0
      %8393 = vmatpush1.msra.mxu0 0.0
      %8394 = vmatprep.subr.mxu0 0.0
      %8395 = vmatpush1.msra.mxu0 0.0
      %8396 = vmatprep.subr.mxu0 0.0
      %8397 = vmatpush1.msra.mxu0 0.0
      %8398 = vmatprep.mubr.f32.mxu0 0.0
      %8399 = vmatmul.mubr.f32.gmra.mrb[0].mxu0 %v8310
      %v8400 = vpop.f32.mrb[0].mxu0
      %v8401 = vadd.f32 %v8332, %v8400
      %v8402 = vpop.f32.mrb[0].mxu0
      %8403 = vmatprep.mubr.f32.mxu0 0.0
      %8404 = vmatmul.mubr.f32.gmra.mrb[0].mxu0 %v8311
      %v8405 = vpop.f32.mrb[0].mxu0
      %v8406 = vadd.f32 %v8332, %v8405
      %v8407 = vpop.f32.mrb[0].mxu0
      %8408 = vmatprep.mubr.f32.mxu0 0.0
      %8409 = vmatmul.mubr.f32.gmra.mrb[0].mxu0 %v8312
      %v8410 = vpop.f32.mrb[0].mxu0
      %v8411 = vadd.f32 %v8332, %v8410
      %v8412 = vpop.f32.mrb[0].mxu0
      %8413 = vmatprep.mubr.f32.mxu0 0.0
      %8414 = vmatmul.mubr.f32.gmra.mrb[0].mxu0 %v8313
      %v8415 = vpop.f32.mrb[0].mxu0
      %v8416 = vadd.f32 %v8332, %v8415
      %v8417 = vpop.f32.mrb[0].mxu0
      %8418 = vmatprep.mubr.f32.mxu0 0.0
      %8419 = vmatmul.mubr.f32.gmra.mrb[0].mxu0 %v8314
      %v8420 = vpop.f32.mrb[0].mxu0
      %v8421 = vadd.f32 %v8332, %v8420
      %v8422 = vpop.f32.mrb[0].mxu0
      %8423 = vmatprep.mubr.f32.mxu0 0.0
      %8424 = vmatmul.mubr.f32.gmra.mrb[0].mxu0 %v8315
      %v8425 = vpop.f32.mrb[0].mxu0
      %v8426 = vadd.f32 %v8332, %v8425
      %v8427 = vpop.f32.mrb[0].mxu0
      %8428 = vmatprep.mubr.f32.mxu0 0.0
      %8429 = vmatmul.mubr.f32.gmra.mrb[0].mxu0 %v8316
      %v8430 = vpop.f32.mrb[0].mxu0
      %v8431 = vadd.f32 %v8332, %v8430
      %v8432 = vpop.f32.mrb[0].mxu0
      %8433 = vmatprep.mubr.f32.mxu0 0.0
      %8434 = vmatmul.mubr.f32.gmra.mrb[0].mxu0 %v8317
      %v8435 = vpop.f32.mrb[0].mxu0
      %v8436 = vadd.f32 %v8332, %v8435
      %v8437 = vpop.f32.mrb[0].mxu0
      %8438 = vmatprep.mubr.f32.mxu0 0.0
      %8439 = vmatmul.mubr.f32.gmra.mrb[0].mxu0 %v8318
      %v8440 = vpop.f32.mrb[0].mxu0
      %v8441 = vadd.f32 %v8332, %v8440
      %v8442 = vpop.f32.mrb[0].mxu0
      %8443 = vmatprep.mubr.f32.mxu0 0.0
      %8444 = vmatmul.mubr.f32.gmra.mrb[0].mxu0 %v8319
      %v8445 = vpop.f32.mrb[0].mxu0
      %v8446 = vadd.f32 %v8332, %v8445
      %v8447 = vpop.f32.mrb[0].mxu0
      %8448 = vmatprep.mubr.f32.mxu0 0.0
      %8449 = vmatmul.mubr.f32.gmra.mrb[0].mxu0 %v8320
      %v8450 = vpop.f32.mrb[0].mxu0
      %v8451 = vadd.f32 %v8332, %v8450
      %v8452 = vpop.f32.mrb[0].mxu0
      %8453 = vmatprep.mubr.f32.mxu0 0.0
      %8454 = vmatmul.mubr.f32.gmra.mrb[0].mxu0 %v8321
      %v8455 = vpop.f32.mrb[0].mxu0
      %v8456 = vadd.f32 %v8332, %v8455
      %v8457 = vpop.f32.mrb[0].mxu0
      %8458 = vmatprep.mubr.f32.mxu0 0.0
      %8459 = vmatmul.mubr.f32.gmra.mrb[0].mxu0 %v8322
      %v8460 = vpop.f32.mrb[0].mxu0
      %v8461 = vadd.f32 %v8332, %v8460
      %v8462 = vpop.f32.mrb[0].mxu0
      %8463 = vmatprep.mubr.f32.mxu0 0.0
      %8464 = vmatmul.mubr.f32.gmra.mrb[0].mxu0 %v8323
      %v8465 = vpop.f32.mrb[0].mxu0
      %v8466 = vadd.f32 %v8332, %v8465
      %v8467 = vpop.f32.mrb[0].mxu0
      %8468 = vmatprep.mubr.f32.mxu0 0.0
      %8469 = vmatmul.mubr.f32.gmra.mrb[0].mxu0 %v8324
      %v8470 = vpop.f32.mrb[0].mxu0
      %v8471 = vadd.f32 %v8332, %v8470
      %v8472 = vpop.f32.mrb[0].mxu0
      %8473 = vmatprep.mubr.f32.mxu0 0.0
      %8474 = vmatmul.mubr.f32.gmra.mrb[0].mxu0 %v8325
      %v8475 = vpop.f32.mrb[0].mxu0
      %v8476 = vadd.f32 %v8332, %v8475
      %v8477 = vpop.f32.mrb[0].mxu0
      %8478 = vdwg.mxu0
      %v8479 = vmax.f32 %v8401, 0.0
      %v8480 = vmax.f32 %v8406, 0.0
      %v8481 = vmax.f32 %v8411, 0.0
      %v8482 = vmax.f32 %v8416, 0.0
      %v8483 = vmax.f32 %v8421, 0.0
      %v8484 = vmax.f32 %v8426, 0.0
      %v8485 = vmax.f32 %v8431, 0.0
      %v8486 = vmax.f32 %v8436, 0.0
      %v8487 = vmax.f32 %v8441, 0.0
      %v8488 = vmax.f32 %v8446, 0.0
      %v8489 = vmax.f32 %v8451, 0.0
      %v8490 = vmax.f32 %v8456, 0.0
      %v8491 = vmax.f32 %v8461, 0.0
      %v8492 = vmax.f32 %v8466, 0.0
      %v8493 = vmax.f32 %v8471, 0.0
      %v8494 = vmax.f32 %v8476, 0.0
      %s8495 = scalar_lea.vmem %s4, 384
      %v8496 = vld [vmem:[%s8495] sm:$0xff]
      %v8497 = vld [vmem:[%s8495 + $0x8] sm:$0xff]
      %v8498 = vld [vmem:[%s8495 + $0x10] sm:$0xff]
      %v8499 = vld [vmem:[%s8495 + $0x18] sm:$0xff]
      %v8500 = vld [vmem:[%s8495 + $0x20] sm:$0xff]
      %v8501 = vld [vmem:[%s8495 + $0x28] sm:$0xff]
      %v8502 = vld [vmem:[%s8495 + $0x30] sm:$0xff]
      %v8503 = vld [vmem:[%s8495 + $0x38] sm:$0xff]
      %s8504 = scalar_lea.vmem %s5, 6
      %v8505 = vld [vmem:[%s8504] sm:$0x1]
      %v8507 = vlaneseq
      %v8508 = vshrl.u32 %v8507, 7
      %v8509 = vsub.s32 0, %v8508
      %v8510 = vrot.slane %v8505, %v8509
      %v8513 = vsel %vm1290, %v8479, 0
      %v8516 = vsel %vm1290, %v8480, 0
      %v8519 = vsel %vm1290, %v8481, 0
      %v8522 = vsel %vm1290, %v8482, 0
      %v8525 = vsel %vm1290, %v8483, 0
      %v8528 = vsel %vm1290, %v8484, 0
      %v8531 = vsel %vm1290, %v8485, 0
      %v8534 = vsel %vm1290, %v8486, 0
      %v8537 = vsel %vm1290, %v8487, 0
      %v8540 = vsel %vm1290, %v8488, 0
      %v8543 = vsel %vm1290, %v8489, 0
      %v8546 = vsel %vm1290, %v8490, 0
      %v8549 = vsel %vm1290, %v8491, 0
      %v8552 = vsel %vm1290, %v8492, 0
      %v8555 = vsel %vm1290, %v8493, 0
      %v8558 = vsel %vm1290, %v8494, 0
      %8560 = vmatprep.subr.mxu0 0.0
      %8561 = vmatpush1.msra.mxu0 %v8496
      %8562 = vmatprep.subr.mxu0 0.0
      %8563 = vmatpush1.msra.mxu0 %v8497
      %8564 = vmatprep.subr.mxu0 0.0
      %8565 = vmatpush1.msra.mxu0 %v8498
      %8566 = vmatprep.subr.mxu0 0.0
      %8567 = vmatpush1.msra.mxu0 %v8499
      %8568 = vmatprep.subr.mxu0 0.0
      %8569 = vmatpush1.msra.mxu0 %v8500
      %8570 = vmatprep.subr.mxu0 0.0
      %8571 = vmatpush1.msra.mxu0 %v8501
      %8572 = vmatprep.subr.mxu0 0.0
      %8573 = vmatpush1.msra.mxu0 %v8502
      %8574 = vmatprep.subr.mxu0 0.0
      %8575 = vmatpush1.msra.mxu0 %v8503
      %8576 = vmatprep.subr.mxu0 0.0
      %8577 = vmatpush1.msra.mxu0 0.0
      %8578 = vmatprep.subr.mxu0 0.0
      %8579 = vmatpush1.msra.mxu0 0.0
      %8580 = vmatprep.subr.mxu0 0.0
      %8581 = vmatpush1.msra.mxu0 0.0
      %8582 = vmatprep.subr.mxu0 0.0
      %8583 = vmatpush1.msra.mxu0 0.0
      %8584 = vmatprep.subr.mxu0 0.0
      %8585 = vmatpush1.msra.mxu0 0.0
      %8586 = vmatprep.subr.mxu0 0.0
      %8587 = vmatpush1.msra.mxu0 0.0
      %8588 = vmatprep.subr.mxu0 0.0
      %8589 = vmatpush1.msra.mxu0 0.0
      %8590 = vmatprep.subr.mxu0 0.0
      %8591 = vmatpush1.msra.mxu0 0.0
      %8592 = vmatprep.subr.mxu0 0.0
      %8593 = vmatpush1.msra.mxu0 0.0
      %8594 = vmatprep.subr.mxu0 0.0
      %8595 = vmatpush1.msra.mxu0 0.0
      %8596 = vmatprep.subr.mxu0 0.0
      %8597 = vmatpush1.msra.mxu0 0.0
      %8598 = vmatprep.subr.mxu0 0.0
      %8599 = vmatpush1.msra.mxu0 0.0
      %8600 = vmatprep.subr.mxu0 0.0
      %8601 = vmatpush1.msra.mxu0 0.0
      %8602 = vmatprep.subr.mxu0 0.0
      %8603 = vmatpush1.msra.mxu0 0.0
      %8604 = vmatprep.subr.mxu0 0.0
      %8605 = vmatpush1.msra.mxu0 0.0
      %8606 = vmatprep.subr.mxu0 0.0
      %8607 = vmatpush1.msra.mxu0 0.0
      %8608 = vmatprep.subr.mxu0 0.0
      %8609 = vmatpush1.msra.mxu0 0.0
      %8610 = vmatprep.subr.mxu0 0.0
      %8611 = vmatpush1.msra.mxu0 0.0
      %8612 = vmatprep.subr.mxu0 0.0
      %8613 = vmatpush1.msra.mxu0 0.0
      %8614 = vmatprep.subr.mxu0 0.0
      %8615 = vmatpush1.msra.mxu0 0.0
      %8616 = vmatprep.subr.mxu0 0.0
      %8617 = vmatpush1.msra.mxu0 0.0
      %8618 = vmatprep.subr.mxu0 0.0
      %8619 = vmatpush1.msra.mxu0 0.0
      %8620 = vmatprep.subr.mxu0 0.0
      %8621 = vmatpush1.msra.mxu0 0.0
      %8622 = vmatprep.subr.mxu0 0.0
      %8623 = vmatpush1.msra.mxu0 0.0
      %8624 = vmatprep.mubr.f32.mxu0 0.0
      %8625 = vmatmul.mubr.f32.gmra.mrb[0].mxu0 %v8513
      %v8626 = vpop.f32.mrb[0].mxu0
      %v8627 = vadd.f32 %v8510, %v8626
      %v8628 = vpop.f32.mrb[0].mxu0
      %8629 = vmatprep.mubr.f32.mxu0 0.0
      %8630 = vmatmul.mubr.f32.gmra.mrb[0].mxu0 %v8516
      %v8631 = vpop.f32.mrb[0].mxu0
      %v8632 = vadd.f32 %v8510, %v8631
      %v8633 = vpop.f32.mrb[0].mxu0
      %8634 = vmatprep.mubr.f32.mxu0 0.0
      %8635 = vmatmul.mubr.f32.gmra.mrb[0].mxu0 %v8519
      %v8636 = vpop.f32.mrb[0].mxu0
      %v8637 = vadd.f32 %v8510, %v8636
      %v8638 = vpop.f32.mrb[0].mxu0
      %8639 = vmatprep.mubr.f32.mxu0 0.0
      %8640 = vmatmul.mubr.f32.gmra.mrb[0].mxu0 %v8522
      %v8641 = vpop.f32.mrb[0].mxu0
      %v8642 = vadd.f32 %v8510, %v8641
      %v8643 = vpop.f32.mrb[0].mxu0
      %8644 = vmatprep.mubr.f32.mxu0 0.0
      %8645 = vmatmul.mubr.f32.gmra.mrb[0].mxu0 %v8525
      %v8646 = vpop.f32.mrb[0].mxu0
      %v8647 = vadd.f32 %v8510, %v8646
      %v8648 = vpop.f32.mrb[0].mxu0
      %8649 = vmatprep.mubr.f32.mxu0 0.0
      %8650 = vmatmul.mubr.f32.gmra.mrb[0].mxu0 %v8528
      %v8651 = vpop.f32.mrb[0].mxu0
      %v8652 = vadd.f32 %v8510, %v8651
      %v8653 = vpop.f32.mrb[0].mxu0
      %8654 = vmatprep.mubr.f32.mxu0 0.0
      %8655 = vmatmul.mubr.f32.gmra.mrb[0].mxu0 %v8531
      %v8656 = vpop.f32.mrb[0].mxu0
      %v8657 = vadd.f32 %v8510, %v8656
      %v8658 = vpop.f32.mrb[0].mxu0
      %8659 = vmatprep.mubr.f32.mxu0 0.0
      %8660 = vmatmul.mubr.f32.gmra.mrb[0].mxu0 %v8534
      %v8661 = vpop.f32.mrb[0].mxu0
      %v8662 = vadd.f32 %v8510, %v8661
      %v8663 = vpop.f32.mrb[0].mxu0
      %8664 = vmatprep.mubr.f32.mxu0 0.0
      %8665 = vmatmul.mubr.f32.gmra.mrb[0].mxu0 %v8537
      %v8666 = vpop.f32.mrb[0].mxu0
      %v8667 = vadd.f32 %v8510, %v8666
      %v8668 = vpop.f32.mrb[0].mxu0
      %8669 = vmatprep.mubr.f32.mxu0 0.0
      %8670 = vmatmul.mubr.f32.gmra.mrb[0].mxu0 %v8540
      %v8671 = vpop.f32.mrb[0].mxu0
      %v8672 = vadd.f32 %v8510, %v8671
      %v8673 = vpop.f32.mrb[0].mxu0
      %8674 = vmatprep.mubr.f32.mxu0 0.0
      %8675 = vmatmul.mubr.f32.gmra.mrb[0].mxu0 %v8543
      %v8676 = vpop.f32.mrb[0].mxu0
      %v8677 = vadd.f32 %v8510, %v8676
      %v8678 = vpop.f32.mrb[0].mxu0
      %8679 = vmatprep.mubr.f32.mxu0 0.0
      %8680 = vmatmul.mubr.f32.gmra.mrb[0].mxu0 %v8546
      %v8681 = vpop.f32.mrb[0].mxu0
      %v8682 = vadd.f32 %v8510, %v8681
      %v8683 = vpop.f32.mrb[0].mxu0
      %8684 = vmatprep.mubr.f32.mxu0 0.0
      %8685 = vmatmul.mubr.f32.gmra.mrb[0].mxu0 %v8549
      %v8686 = vpop.f32.mrb[0].mxu0
      %v8687 = vadd.f32 %v8510, %v8686
      %v8688 = vpop.f32.mrb[0].mxu0
      %8689 = vmatprep.mubr.f32.mxu0 0.0
      %8690 = vmatmul.mubr.f32.gmra.mrb[0].mxu0 %v8552
      %v8691 = vpop.f32.mrb[0].mxu0
      %v8692 = vadd.f32 %v8510, %v8691
      %v8693 = vpop.f32.mrb[0].mxu0
      %8694 = vmatprep.mubr.f32.mxu0 0.0
      %8695 = vmatmul.mubr.f32.gmra.mrb[0].mxu0 %v8555
      %v8696 = vpop.f32.mrb[0].mxu0
      %v8697 = vadd.f32 %v8510, %v8696
      %v8698 = vpop.f32.mrb[0].mxu0
      %8699 = vmatprep.mubr.f32.mxu0 0.0
      %8700 = vmatmul.mubr.f32.gmra.mrb[0].mxu0 %v8558
      %v8701 = vpop.f32.mrb[0].mxu0
      %v8702 = vadd.f32 %v8510, %v8701
      %v8703 = vpop.f32.mrb[0].mxu0
      %8704 = vdwg.mxu0
      %v8705 = vld [vmem:[%s6 + $0x60] sm:$0xff]
      %v8706 = vld [vmem:[%s6 + $0x68] sm:$0xff]
      %v8708 = vsel %vm1484, %v8627, 0
      %v8711 = vsel %vm1484, %v8632, 0
      %v8714 = vsel %vm1484, %v8637, 0
      %v8717 = vsel %vm1484, %v8642, 0
      %v8720 = vsel %vm1484, %v8647, 0
      %v8723 = vsel %vm1484, %v8652, 0
      %v8726 = vsel %vm1484, %v8657, 0
      %v8729 = vsel %vm1484, %v8662, 0
      %v8732 = vsel %vm1484, %v8667, 0
      %v8735 = vsel %vm1484, %v8672, 0
      %v8738 = vsel %vm1484, %v8677, 0
      %v8741 = vsel %vm1484, %v8682, 0
      %v8744 = vsel %vm1484, %v8687, 0
      %v8747 = vsel %vm1484, %v8692, 0
      %v8750 = vsel %vm1484, %v8697, 0
      %v8753 = vsel %vm1484, %v8702, 0
      %8755 = vmatprep.subr.mxu0 0.0
      %8756 = vmatpush1.msra.mxu0 %v8705
      %8757 = vmatprep.subr.mxu0 0.0
      %8758 = vmatpush1.msra.mxu0 %v8706
      %8759 = vmatprep.subr.mxu0 0.0
      %8760 = vmatpush1.msra.mxu0 0.0
      %8761 = vmatprep.subr.mxu0 0.0
      %8762 = vmatpush1.msra.mxu0 0.0
      %8763 = vmatprep.subr.mxu0 0.0
      %8764 = vmatpush1.msra.mxu0 0.0
      %8765 = vmatprep.subr.mxu0 0.0
      %8766 = vmatpush1.msra.mxu0 0.0
      %8767 = vmatprep.subr.mxu0 0.0
      %8768 = vmatpush1.msra.mxu0 0.0
      %8769 = vmatprep.subr.mxu0 0.0
      %8770 = vmatpush1.msra.mxu0 0.0
      %8771 = vmatprep.subr.mxu0 0.0
      %8772 = vmatpush1.msra.mxu0 0.0
      %8773 = vmatprep.subr.mxu0 0.0
      %8774 = vmatpush1.msra.mxu0 0.0
      %8775 = vmatprep.subr.mxu0 0.0
      %8776 = vmatpush1.msra.mxu0 0.0
      %8777 = vmatprep.subr.mxu0 0.0
      %8778 = vmatpush1.msra.mxu0 0.0
      %8779 = vmatprep.subr.mxu0 0.0
      %8780 = vmatpush1.msra.mxu0 0.0
      %8781 = vmatprep.subr.mxu0 0.0
      %8782 = vmatpush1.msra.mxu0 0.0
      %8783 = vmatprep.subr.mxu0 0.0
      %8784 = vmatpush1.msra.mxu0 0.0
      %8785 = vmatprep.subr.mxu0 0.0
      %8786 = vmatpush1.msra.mxu0 0.0
      %8787 = vmatprep.subr.mxu0 0.0
      %8788 = vmatpush1.msra.mxu0 0.0
      %8789 = vmatprep.subr.mxu0 0.0
      %8790 = vmatpush1.msra.mxu0 0.0
      %8791 = vmatprep.subr.mxu0 0.0
      %8792 = vmatpush1.msra.mxu0 0.0
      %8793 = vmatprep.subr.mxu0 0.0
      %8794 = vmatpush1.msra.mxu0 0.0
      %8795 = vmatprep.subr.mxu0 0.0
      %8796 = vmatpush1.msra.mxu0 0.0
      %8797 = vmatprep.subr.mxu0 0.0
      %8798 = vmatpush1.msra.mxu0 0.0
      %8799 = vmatprep.subr.mxu0 0.0
      %8800 = vmatpush1.msra.mxu0 0.0
      %8801 = vmatprep.subr.mxu0 0.0
      %8802 = vmatpush1.msra.mxu0 0.0
      %8803 = vmatprep.subr.mxu0 0.0
      %8804 = vmatpush1.msra.mxu0 0.0
      %8805 = vmatprep.subr.mxu0 0.0
      %8806 = vmatpush1.msra.mxu0 0.0
      %8807 = vmatprep.subr.mxu0 0.0
      %8808 = vmatpush1.msra.mxu0 0.0
      %8809 = vmatprep.subr.mxu0 0.0
      %8810 = vmatpush1.msra.mxu0 0.0
      %8811 = vmatprep.subr.mxu0 0.0
      %8812 = vmatpush1.msra.mxu0 0.0
      %8813 = vmatprep.subr.mxu0 0.0
      %8814 = vmatpush1.msra.mxu0 0.0
      %8815 = vmatprep.subr.mxu0 0.0
      %8816 = vmatpush1.msra.mxu0 0.0
      %8817 = vmatprep.subr.mxu0 0.0
      %8818 = vmatpush1.msra.mxu0 0.0
      %8819 = vmatprep.mubr.f32.mxu0 0.0
      %8820 = vmatmul.mubr.f32.gmra.mrb[0].mxu0 %v8708
      %v8821 = vpop.f32.mrb[0].mxu0
      %v8822 = vadd.f32 0.0, %v8821
      %v8823 = vpop.f32.mrb[0].mxu0
      %8824 = vmatprep.mubr.f32.mxu0 0.0
      %8825 = vmatmul.mubr.f32.gmra.mrb[0].mxu0 %v8711
      %v8826 = vpop.f32.mrb[0].mxu0
      %v8827 = vadd.f32 0.0, %v8826
      %v8828 = vpop.f32.mrb[0].mxu0
      %8829 = vmatprep.mubr.f32.mxu0 0.0
      %8830 = vmatmul.mubr.f32.gmra.mrb[0].mxu0 %v8714
      %v8831 = vpop.f32.mrb[0].mxu0
      %v8832 = vadd.f32 0.0, %v8831
      %v8833 = vpop.f32.mrb[0].mxu0
      %8834 = vmatprep.mubr.f32.mxu0 0.0
      %8835 = vmatmul.mubr.f32.gmra.mrb[0].mxu0 %v8717
      %v8836 = vpop.f32.mrb[0].mxu0
      %v8837 = vadd.f32 0.0, %v8836
      %v8838 = vpop.f32.mrb[0].mxu0
      %8839 = vmatprep.mubr.f32.mxu0 0.0
      %8840 = vmatmul.mubr.f32.gmra.mrb[0].mxu0 %v8720
      %v8841 = vpop.f32.mrb[0].mxu0
      %v8842 = vadd.f32 0.0, %v8841
      %v8843 = vpop.f32.mrb[0].mxu0
      %8844 = vmatprep.mubr.f32.mxu0 0.0
      %8845 = vmatmul.mubr.f32.gmra.mrb[0].mxu0 %v8723
      %v8846 = vpop.f32.mrb[0].mxu0
      %v8847 = vadd.f32 0.0, %v8846
      %v8848 = vpop.f32.mrb[0].mxu0
      %8849 = vmatprep.mubr.f32.mxu0 0.0
      %8850 = vmatmul.mubr.f32.gmra.mrb[0].mxu0 %v8726
      %v8851 = vpop.f32.mrb[0].mxu0
      %v8852 = vadd.f32 0.0, %v8851
      %v8853 = vpop.f32.mrb[0].mxu0
      %8854 = vmatprep.mubr.f32.mxu0 0.0
      %8855 = vmatmul.mubr.f32.gmra.mrb[0].mxu0 %v8729
      %v8856 = vpop.f32.mrb[0].mxu0
      %v8857 = vadd.f32 0.0, %v8856
      %v8858 = vpop.f32.mrb[0].mxu0
      %8859 = vmatprep.mubr.f32.mxu0 0.0
      %8860 = vmatmul.mubr.f32.gmra.mrb[0].mxu0 %v8732
      %v8861 = vpop.f32.mrb[0].mxu0
      %v8862 = vadd.f32 0.0, %v8861
      %v8863 = vpop.f32.mrb[0].mxu0
      %8864 = vmatprep.mubr.f32.mxu0 0.0
      %8865 = vmatmul.mubr.f32.gmra.mrb[0].mxu0 %v8735
      %v8866 = vpop.f32.mrb[0].mxu0
      %v8867 = vadd.f32 0.0, %v8866
      %v8868 = vpop.f32.mrb[0].mxu0
      %8869 = vmatprep.mubr.f32.mxu0 0.0
      %8870 = vmatmul.mubr.f32.gmra.mrb[0].mxu0 %v8738
      %v8871 = vpop.f32.mrb[0].mxu0
      %v8872 = vadd.f32 0.0, %v8871
      %v8873 = vpop.f32.mrb[0].mxu0
      %8874 = vmatprep.mubr.f32.mxu0 0.0
      %8875 = vmatmul.mubr.f32.gmra.mrb[0].mxu0 %v8741
      %v8876 = vpop.f32.mrb[0].mxu0
      %v8877 = vadd.f32 0.0, %v8876
      %v8878 = vpop.f32.mrb[0].mxu0
      %8879 = vmatprep.mubr.f32.mxu0 0.0
      %8880 = vmatmul.mubr.f32.gmra.mrb[0].mxu0 %v8744
      %v8881 = vpop.f32.mrb[0].mxu0
      %v8882 = vadd.f32 0.0, %v8881
      %v8883 = vpop.f32.mrb[0].mxu0
      %8884 = vmatprep.mubr.f32.mxu0 0.0
      %8885 = vmatmul.mubr.f32.gmra.mrb[0].mxu0 %v8747
      %v8886 = vpop.f32.mrb[0].mxu0
      %v8887 = vadd.f32 0.0, %v8886
      %v8888 = vpop.f32.mrb[0].mxu0
      %8889 = vmatprep.mubr.f32.mxu0 0.0
      %8890 = vmatmul.mubr.f32.gmra.mrb[0].mxu0 %v8750
      %v8891 = vpop.f32.mrb[0].mxu0
      %v8892 = vadd.f32 0.0, %v8891
      %v8893 = vpop.f32.mrb[0].mxu0
      %8894 = vmatprep.mubr.f32.mxu0 0.0
      %8895 = vmatmul.mubr.f32.gmra.mrb[0].mxu0 %v8753
      %v8896 = vpop.f32.mrb[0].mxu0
      %v8897 = vadd.f32 0.0, %v8896
      %v8898 = vpop.f32.mrb[0].mxu0
      %8899 = vdwg.mxu0
      %v8900 = vadd.f32 %v7989, %v8822
      %v8901 = vadd.f32 %v7990, %v8827
      %v8902 = vadd.f32 %v7991, %v8832
      %v8903 = vadd.f32 %v7992, %v8837
      %v8904 = vadd.f32 %v7993, %v8842
      %v8905 = vadd.f32 %v7994, %v8847
      %v8906 = vadd.f32 %v7995, %v8852
      %v8907 = vadd.f32 %v7996, %v8857
      %v8908 = vadd.f32 %v7997, %v8862
      %v8909 = vadd.f32 %v7998, %v8867
      %v8910 = vadd.f32 %v7999, %v8872
      %v8911 = vadd.f32 %v8000, %v8877
      %v8912 = vadd.f32 %v8001, %v8882
      %v8913 = vadd.f32 %v8002, %v8887
      %v8914 = vadd.f32 %v8003, %v8892
      %v8915 = vadd.f32 %v8004, %v8897
      %8916 = vst.msk [vmem:[#allocation4] sm:$0xff] %vm324, %v8900
      %8917 = vst.msk [vmem:[#allocation4 + $0x8] sm:$0xff] %vm324, %v8901
      %8918 = vst.msk [vmem:[#allocation4 + $0x10] sm:$0xff] %vm324, %v8902
      %8919 = vst.msk [vmem:[#allocation4 + $0x18] sm:$0xff] %vm324, %v8903
      %8920 = vst.msk [vmem:[#allocation4 + $0x20] sm:$0xff] %vm324, %v8904
      %8921 = vst.msk [vmem:[#allocation4 + $0x28] sm:$0xff] %vm324, %v8905
      %8922 = vst.msk [vmem:[#allocation4 + $0x30] sm:$0xff] %vm324, %v8906
      %8923 = vst.msk [vmem:[#allocation4 + $0x38] sm:$0xff] %vm324, %v8907
      %8924 = vst.msk [vmem:[#allocation4 + $0x40] sm:$0xff] %vm324, %v8908
      %8925 = vst.msk [vmem:[#allocation4 + $0x48] sm:$0xff] %vm324, %v8909
      %8926 = vst.msk [vmem:[#allocation4 + $0x50] sm:$0xff] %vm324, %v8910
      %8927 = vst.msk [vmem:[#allocation4 + $0x58] sm:$0xff] %vm324, %v8911
      %8928 = vst.msk [vmem:[#allocation4 + $0x60] sm:$0xff] %vm324, %v8912
      %8929 = vst.msk [vmem:[#allocation4 + $0x68] sm:$0xff] %vm324, %v8913
      %8930 = vst.msk [vmem:[#allocation4 + $0x70] sm:$0xff] %vm324, %v8914
      %8931 = vst.msk [vmem:[#allocation4 + $0x78] sm:$0xff] %vm324, %v8915
      %v8932 = vld [vmem:[#allocation4] ss:$4 sm:$0xff]
      %s8933 = scalar_lea.vmem [#allocation4], 32
      %v8934 = vld [vmem:[%s8933] ss:$4 sm:$0xff]
      %s8935 = scalar_lea.vmem [#allocation4], 64
      %v8936 = vld [vmem:[%s8935] ss:$4 sm:$0xff]
      %s8937 = scalar_lea.vmem [#allocation4], 96
      %v8938 = vld [vmem:[%s8937] ss:$4 sm:$0xff]
      %s8939 = scalar_lea.vmem [#allocation4], 1
      %v8940 = vld [vmem:[%s8939] ss:$4 sm:$0xff]
      %s8941 = scalar_lea.vmem [#allocation4], 33
      %v8942 = vld [vmem:[%s8941] ss:$4 sm:$0xff]
      %s8943 = scalar_lea.vmem [#allocation4], 65
      %v8944 = vld [vmem:[%s8943] ss:$4 sm:$0xff]
      %s8945 = scalar_lea.vmem [#allocation4], 97
      %v8946 = vld [vmem:[%s8945] ss:$4 sm:$0xff]
      %v8947 = vadd.f32 %v8932, %v8940
      %v8948 = vadd.f32 %v8934, %v8942
      %v8949 = vadd.f32 %v8936, %v8944
      %v8950 = vadd.f32 %v8938, %v8946
      %s8951 = scalar_lea.vmem [#allocation4], 2
      %v8952 = vld [vmem:[%s8951] ss:$4 sm:$0xff]
      %s8953 = scalar_lea.vmem [#allocation4], 34
      %v8954 = vld [vmem:[%s8953] ss:$4 sm:$0xff]
      %s8955 = scalar_lea.vmem [#allocation4], 66
      %v8956 = vld [vmem:[%s8955] ss:$4 sm:$0xff]
      %s8957 = scalar_lea.vmem [#allocation4], 98
      %v8958 = vld [vmem:[%s8957] ss:$4 sm:$0xff]
      %v8959 = vadd.f32 %v8947, %v8952
      %v8960 = vadd.f32 %v8948, %v8954
      %v8961 = vadd.f32 %v8949, %v8956
      %v8962 = vadd.f32 %v8950, %v8958
      %s8963 = scalar_lea.vmem [#allocation4], 3
      %v8964 = vld [vmem:[%s8963] ss:$4 sm:$0xff]
      %s8965 = scalar_lea.vmem [#allocation4], 35
      %v8966 = vld [vmem:[%s8965] ss:$4 sm:$0xff]
      %s8967 = scalar_lea.vmem [#allocation4], 67
      %v8968 = vld [vmem:[%s8967] ss:$4 sm:$0xff]
      %s8969 = scalar_lea.vmem [#allocation4], 99
      %v8970 = vld [vmem:[%s8969] ss:$4 sm:$0xff]
      %v8971 = vadd.f32 %v8959, %v8964
      %v8972 = vadd.f32 %v8960, %v8966
      %v8973 = vadd.f32 %v8961, %v8968
      %v8974 = vadd.f32 %v8962, %v8970
      %v8975 = vmul.f32 %v8971, 0.25
      %v8976 = vmul.f32 %v8972, 0.25
      %v8977 = vmul.f32 %v8973, 0.25
      %v8978 = vmul.f32 %v8974, 0.25
      %v8979 = vld [vmem:[%s7] sm:$0x1]
      %v8981 = vlaneseq
      %v8982 = vshrl.u32 %v8981, 7
      %v8983 = vsub.s32 0, %v8982
      %v8984 = vrot.slane %v8979, %v8983
      %v8986 = vadd.f32 %v8975, %v8984
      %v8987 = vadd.f32 %v8976, %v8984
      %v8988 = vadd.f32 %v8977, %v8984
      %v8989 = vadd.f32 %v8978, %v8984
      %8990 = vst.msk [vmem:[%s305] sm:$0xff] %vm324, %v8986
      %8991 = vst.msk [vmem:[%s305 + $0x8] sm:$0xff] %vm324, %v8987
      %8992 = vst.msk [vmem:[%s305 + $0x10] sm:$0xff] %vm324, %v8988
      %8993 = vst.msk [vmem:[%s305 + $0x18] sm:$0xff] %vm324, %v8989
      %p8994 = scmp.lt.s32.totalorder %s19, 1
      %s8995 = scalar_select %p8994, %s19, 1
      %s8996 = smul.addr %s8995, 4
      %s8997 = smul.addr %s8996, 8
      %s8998 = scalar_lea.vmem %s8, %s8997
      // Predicated region
      $region53: #{tpu_custom_call.1} parent=51 // pred_check
        %p8999 = pneg %p210
      $region54: #{tpu_custom_call.1} parent=51 // pred_check_branch
        %9001 = sbr.rel (%p8999) target = $region56
      $region55: #{tpu_custom_call.1} parent=51 // pred_region
        _
      $region56: #{tpu_custom_call.1} parent=51 // pred_fallthru
        _
    $region52: #{tpu_custom_call.1} parent=5 // pred_fallthru
      _
    %p9002 = scmp.le.s32.totalorder 2, %s14
    // Predicated region
    $region57: #{tpu_custom_call.1} parent=5 // pred_check
      %p9003 = pneg %p9002
    $region58: #{tpu_custom_call.1} parent=5 // pred_check_branch
      %9005 = sbr.rel (%p9003) target = $region60
    $region59: #{tpu_custom_call.1} parent=5 // pred_region
      %s9006 = ssub.s32 %s14, 2
      // Predicated region
      $region61: #{tpu_custom_call.1} parent=59 // pred_check
        %p9007 = pneg %p216
      $region62: #{tpu_custom_call.1} parent=59 // pred_check_branch
        %9009 = sbr.rel (%p9007) target = $region64
      $region63: #{tpu_custom_call.1} parent=59 // pred_region
        %p9010 = scmp.lt.s32.totalorder %s20, 1
        %s9011 = scalar_select %p9010, %s20, 1
        %s9012 = smul.addr %s9011, 4
        %s9013 = smul.addr %s9012, 8
        %s9014 = scalar_lea.vmem %s8, %s9013
      $region64: #{tpu_custom_call.1} parent=59 // pred_fallthru
        _
    $region60: #{tpu_custom_call.1} parent=5 // pred_fallthru
      _
  $region6: #{tpu_custom_call.1} parent=0 // loop_footer
    %s18 = sadd.s32 1, %s14
  $region7: #{tpu_custom_call.1} parent=0 // loop_footer_branch
    %13 = sbr.rel target = $region3
  $region8: #{tpu_custom_call.1} parent=0 // loop_exit
    _

</llo_original>
